<compile_context>
chip_gen: v5e
topology: v5e:2x2
jax: 0.10.0
libtpu: 0.0.40
codegen_flags: <defaults>
</compile_context>

<pallas_src>
import jax
import jax.numpy as jnp
from jax import lax
from jax.experimental import pallas as pl
from jax.experimental.pallas import tpu as pltpu


def _round_up(x, m):
    return (x + m - 1) // m * m


def _make_aspp_kernel(dilations, pmax, H, W, Cin, Cout_pad):
    """Builds the ASPP kernel; one batch element per grid step."""
    dilations = tuple(int(d) for d in dilations)
    K = 9 * Cin * len(dilations)

    def kernel(x_ref, w_ref, b_ref, o_ref, xpad_ref):
        # x_ref:    (1, H, W, Cin)       bf16 unpadded NHWC batch element
        # w_ref:    (K, Cout_pad)        bf16 fused im2col weights (all branches)
        # b_ref:    (1, Cout_pad)        f32  summed biases (zero padded)
        # o_ref:    (1, H, W, Cout_pad)  output tile
        # xpad_ref: (Hp, Wp, Cin)        f32  zero-padded staging slab

        # Build the zero-padded slab in VMEM (replaces a wrapper-side jnp.pad).
        # Re-done every grid step so the kernel stays correct when the
        # "parallel" batch axis is split across TensorCores (each core owns
        # its own scratch).
        xpad_ref[...] = jnp.zeros_like(xpad_ref)
        xpad_ref[pmax:pmax + H, pmax:pmax + W, :] = x_ref[0].astype(jnp.float32)

        # Fused im2col over (branch, kh, kw, ci).  padding == dilation, so
        # output pixel (i, j) of branch `d` reads the padded input at
        # (i + pmax + (kh-1)*d, j + pmax + (kw-1)*d).  All slices are static.
        taps = []
        for d in dilations:
            for kh in range(3):
                for kw in range(3):
                    h0 = pmax + (kh - 1) * d
                    w0 = pmax + (kw - 1) * d
                    taps.append(xpad_ref[h0:h0 + H, w0:w0 + W, :])
        patch = jnp.concatenate(taps, axis=-1)                # (H, W, K)
        patch = patch.reshape(H * W, K).astype(jnp.bfloat16)  # LHS for MXU

        # One MXU matmul for the whole ASPP module; branch sum happens inside
        # the MXU accumulation.  Bias is a broadcast add on the f32 result.
        out = jnp.dot(patch, w_ref[...],
                      preferred_element_type=jnp.float32) + b_ref[...]
        o_ref[0] = out.reshape(H, W, Cout_pad).astype(o_ref.dtype)

    return kernel


def aspp_v2_forward(x_nchw, weights_oihw, biases, dilations, paddings):
    """ASPP_V2 forward.  x_nchw: [N, Cin, H, W].  Returns [N, Cout, H, W]."""
    assert tuple(dilations) == tuple(paddings), (
        "ASPP_V2 uses padding == dilation so spatial dims are preserved")
    N, Cin, H, W = x_nchw.shape
    B = len(dilations)
    Cout = weights_oihw[0].shape[0]
    pmax = int(max(paddings))
    Hp, Wp = H + 2 * pmax, W + 2 * pmax
    Cout_pad = _round_up(Cout, 128)        # lane-dense output
    K = B * 9 * Cin

    # NCHW -> NHWC, bf16 activations (MXU-native, half the HBM traffic).
    x_nhwc = jnp.transpose(x_nchw, (0, 2, 3, 1)).astype(jnp.bfloat16)

    # Weights: OIHW -> HWIO -> (9*Cin, Cout) with rows ordered (kh, kw, ci) to
    # match the tap concatenation in the kernel; concatenate branches along K
    # -> (B*9*Cin, Cout); pad Cout to Cout_pad; bf16.  No in-kernel weight
    # reshapes.
    w_rows = []
    for w in weights_oihw:
        w_rows.append(jnp.transpose(w, (2, 3, 1, 0)).reshape(9 * Cin, Cout))
    w_all = jnp.concatenate(w_rows, axis=0)                      # (K, Cout)
    w_all = jnp.pad(w_all, ((0, 0), (0, Cout_pad - Cout)))
    w_all = w_all.astype(jnp.bfloat16)

    # The forward just sums branch outputs, so biases can be pre-summed.
    b_sum = jnp.sum(jnp.stack(biases, axis=0), axis=0)
    b_sum = jnp.pad(b_sum, (0, Cout_pad - Cout)).reshape(1, Cout_pad)
    b_sum = b_sum.astype(jnp.float32)

    kernel = _make_aspp_kernel(dilations, pmax, H, W, Cin, Cout_pad)

    out_wide = pl.pallas_call(
        kernel,
        out_shape=jax.ShapeDtypeStruct((N, H, W, Cout_pad), x_nchw.dtype),
        grid_spec=pltpu.PrefetchScalarGridSpec(
            num_scalar_prefetch=0,
            grid=(N,),
            in_specs=[
                pl.BlockSpec((1, H, W, Cin), lambda n: (n, 0, 0, 0)),
                pl.BlockSpec((K, Cout_pad), lambda n: (0, 0)),
                pl.BlockSpec((1, Cout_pad), lambda n: (0, 0)),
            ],
            out_specs=pl.BlockSpec((1, H, W, Cout_pad),
                                   lambda n: (n, 0, 0, 0)),
            scratch_shapes=[
                pltpu.VMEM((Hp, Wp, Cin), jnp.float32),   # padded slab
            ],
        ),
        compiler_params=pltpu.CompilerParams(
            dimension_semantics=("parallel",),
            vmem_limit_bytes=32 * 1024 * 1024,
        ),
    )(x_nhwc, w_all, b_sum)

    # Drop the lane padding, NHWC -> NCHW to match the PyTorch module.
    return jnp.transpose(out_wide[..., :Cout], (0, 3, 1, 2))


def aspp_v2_reference(x_nchw, weights_oihw, biases, dilations, paddings):
    """Pure-JAX f32 reference using lax.conv_general_dilated (= nn.Conv2d)."""
    out = None
    for w, b, d, p in zip(weights_oihw, biases, dilations, paddings):
        y = lax.conv_general_dilated(
            x_nchw, w,
            window_strides=(1, 1),
            padding=[(p, p), (p, p)],
            rhs_dilation=(d, d),
            dimension_numbers=("NCHW", "OIHW", "NCHW"),
        ) + b.reshape(1, -1, 1, 1)
        out = y if out is None else out + y
    return out


if __name__ == "__main__":
    # Small, deterministic problem consistent with the module.
    N, Cin, H, W = 2, 4, 16, 16
    Cout = 8
    dilation_series = [6, 12, 18, 24]   # classic DeepLab-v2 ASPP rates
    padding_series = [6, 12, 18, 24]

    key = jax.random.PRNGKey(0)
    kx, *kws = jax.random.split(key, 1 + 2 * len(dilation_series))

    x = jax.random.normal(kx, (N, Cin, H, W), dtype=jnp.float32)

    weights, biases = [], []
    for i in range(len(dilation_series)):
        # m.weight.data.normal_(0, 0.01)
        weights.append(0.01 * jax.random.normal(
            kws[2 * i], (Cout, Cin, 3, 3), dtype=jnp.float32))
        # synthetic deterministic bias (nn.Conv2d default is uniform fan-in)
        biases.append(0.1 * jax.random.normal(
            kws[2 * i + 1], (Cout,), dtype=jnp.float32))

    out = aspp_v2_forward(x, weights, biases, dilation_series, padding_series)
    out = jax.block_until_ready(out)

    ref = aspp_v2_reference(x, weights, biases, dilation_series,
                            padding_series)
    assert out.shape == (N, Cout, H, W), out.shape
    # bf16 MXU inputs (f32 accumulation) -> loosened tolerance vs the f32 ref.
    max_err = float(jnp.max(jnp.abs(out - ref)))
    assert max_err < 1e-2, max_err

    print("KERNEL_OK")
</pallas_src>

<mosaic_0001>
module attributes {stable_mosaic.version = 11 : i64} {
  func.func @kernel(%arg0: i32, %arg1: memref<1x16x16x4xbf16, #tpu.memory_space<vmem>>, %arg2: memref<144x128xbf16, #tpu.memory_space<vmem>>, %arg3: memref<1x128xf32, #tpu.memory_space<vmem>>, %arg4: memref<1x16x16x128xf32, #tpu.memory_space<vmem>>, %arg5: memref<64x64x4xf32, #tpu.memory_space<vmem>>) attributes {dimension_semantics = [#tpu.dimension_semantics<parallel>], iteration_bounds = array<i64: 2>, scalar_prefetch = 0 : i64, scratch_operands = 1 : i64, tpu.core_type = #tpu.core_type<tc>, window_params = [{transform_indices = @transform_0, window_bounds = array<i64: 1, 16, 16, 4>}, {pipeline_mode = #tpu.pipeline_mode<synchronous>, transform_indices = @transform_1, window_bounds = array<i64: 144, 128>}, {pipeline_mode = #tpu.pipeline_mode<synchronous>, transform_indices = @transform_2, window_bounds = array<i64: 1, 128>}, {transform_indices = @transform_3, window_bounds = array<i64: 1, 16, 16, 128>}]} {
    %cst = arith.constant 0.000000e+00 : f32
    %0 = vector.broadcast %cst : f32 to vector<64x64x4xf32>
    %c0 = arith.constant 0 : index
    %c0_0 = arith.constant 0 : index
    %c0_1 = arith.constant 0 : index
    %1 = vector.load %arg5[%c0, %c0_0, %c0_1] : memref<64x64x4xf32, #tpu.memory_space<vmem>>, vector<64x64x4xf32>
    tpu.vector_store %arg5[%c0, %c0_0, %c0_1], %0 {strides = array<i32>} : memref<64x64x4xf32, #tpu.memory_space<vmem>>, vector<64x64x4xf32>,
    %c0_2 = arith.constant 0 : index
    %c0_3 = arith.constant 0 : index
    %c0_4 = arith.constant 0 : index
    %c0_5 = arith.constant 0 : index
    %2 = vector.load %arg1[%c0_2, %c0_3, %c0_4, %c0_5] : memref<1x16x16x4xbf16, #tpu.memory_space<vmem>>, vector<1x16x16x4xbf16>
    %3 = vector.shape_cast %2 : vector<1x16x16x4xbf16> to vector<16x16x4xbf16>
    %4 = arith.extf %3 : vector<16x16x4xbf16> to vector<16x16x4xf32>
    %c24 = arith.constant 24 : index
    %c24_6 = arith.constant 24 : index
    %c0_7 = arith.constant 0 : index
    %5 = vector.load %arg5[%c24, %c24_6, %c0_7] : memref<64x64x4xf32, #tpu.memory_space<vmem>>, vector<16x16x4xf32>
    tpu.vector_store %arg5[%c24, %c24_6, %c0_7], %4 {strides = array<i32>} : memref<64x64x4xf32, #tpu.memory_space<vmem>>, vector<16x16x4xf32>,
    %c18 = arith.constant 18 : index
    %c18_8 = arith.constant 18 : index
    %c0_9 = arith.constant 0 : index
    %6 = vector.load %arg5[%c18, %c18_8, %c0_9] : memref<64x64x4xf32, #tpu.memory_space<vmem>>, vector<16x16x4xf32>
    %c18_10 = arith.constant 18 : index
    %c24_11 = arith.constant 24 : index
    %c0_12 = arith.constant 0 : index
    %7 = vector.load %arg5[%c18_10, %c24_11, %c0_12] : memref<64x64x4xf32, #tpu.memory_space<vmem>>, vector<16x16x4xf32>
    %c18_13 = arith.constant 18 : index
    %c30 = arith.constant 30 : index
    %c0_14 = arith.constant 0 : index
    %8 = vector.load %arg5[%c18_13, %c30, %c0_14] : memref<64x64x4xf32, #tpu.memory_space<vmem>>, vector<16x16x4xf32>
    %c24_15 = arith.constant 24 : index
    %c18_16 = arith.constant 18 : index
    %c0_17 = arith.constant 0 : index
    %9 = vector.load %arg5[%c24_15, %c18_16, %c0_17] : memref<64x64x4xf32, #tpu.memory_space<vmem>>, vector<16x16x4xf32>
    %c24_18 = arith.constant 24 : index
    %c24_19 = arith.constant 24 : index
    %c0_20 = arith.constant 0 : index
    %10 = vector.load %arg5[%c24_18, %c24_19, %c0_20] : memref<64x64x4xf32, #tpu.memory_space<vmem>>, vector<16x16x4xf32>
    %c24_21 = arith.constant 24 : index
    %c30_22 = arith.constant 30 : index
    %c0_23 = arith.constant 0 : index
    %11 = vector.load %arg5[%c24_21, %c30_22, %c0_23] : memref<64x64x4xf32, #tpu.memory_space<vmem>>, vector<16x16x4xf32>
    %c30_24 = arith.constant 30 : index
    %c18_25 = arith.constant 18 : index
    %c0_26 = arith.constant 0 : index
    %12 = vector.load %arg5[%c30_24, %c18_25, %c0_26] : memref<64x64x4xf32, #tpu.memory_space<vmem>>, vector<16x16x4xf32>
    %c30_27 = arith.constant 30 : index
    %c24_28 = arith.constant 24 : index
    %c0_29 = arith.constant 0 : index
    %13 = vector.load %arg5[%c30_27, %c24_28, %c0_29] : memref<64x64x4xf32, #tpu.memory_space<vmem>>, vector<16x16x4xf32>
    %c30_30 = arith.constant 30 : index
    %c30_31 = arith.constant 30 : index
    %c0_32 = arith.constant 0 : index
    %14 = vector.load %arg5[%c30_30, %c30_31, %c0_32] : memref<64x64x4xf32, #tpu.memory_space<vmem>>, vector<16x16x4xf32>
    %c12 = arith.constant 12 : index
    %c12_33 = arith.constant 12 : index
    %c0_34 = arith.constant 0 : index
    %15 = vector.load %arg5[%c12, %c12_33, %c0_34] : memref<64x64x4xf32, #tpu.memory_space<vmem>>, vector<16x16x4xf32>
    %c12_35 = arith.constant 12 : index
    %c24_36 = arith.constant 24 : index
    %c0_37 = arith.constant 0 : index
    %16 = vector.load %arg5[%c12_35, %c24_36, %c0_37] : memref<64x64x4xf32, #tpu.memory_space<vmem>>, vector<16x16x4xf32>
    %c12_38 = arith.constant 12 : index
    %c36 = arith.constant 36 : index
    %c0_39 = arith.constant 0 : index
    %17 = vector.load %arg5[%c12_38, %c36, %c0_39] : memref<64x64x4xf32, #tpu.memory_space<vmem>>, vector<16x16x4xf32>
    %c24_40 = arith.constant 24 : index
    %c12_41 = arith.constant 12 : index
    %c0_42 = arith.constant 0 : index
    %18 = vector.load %arg5[%c24_40, %c12_41, %c0_42] : memref<64x64x4xf32, #tpu.memory_space<vmem>>, vector<16x16x4xf32>
    %c24_43 = arith.constant 24 : index
    %c24_44 = arith.constant 24 : index
    %c0_45 = arith.constant 0 : index
    %19 = vector.load %arg5[%c24_43, %c24_44, %c0_45] : memref<64x64x4xf32, #tpu.memory_space<vmem>>, vector<16x16x4xf32>
    %c24_46 = arith.constant 24 : index
    %c36_47 = arith.constant 36 : index
    %c0_48 = arith.constant 0 : index
    %20 = vector.load %arg5[%c24_46, %c36_47, %c0_48] : memref<64x64x4xf32, #tpu.memory_space<vmem>>, vector<16x16x4xf32>
    %c36_49 = arith.constant 36 : index
    %c12_50 = arith.constant 12 : index
    %c0_51 = arith.constant 0 : index
    %21 = vector.load %arg5[%c36_49, %c12_50, %c0_51] : memref<64x64x4xf32, #tpu.memory_space<vmem>>, vector<16x16x4xf32>
    %c36_52 = arith.constant 36 : index
    %c24_53 = arith.constant 24 : index
    %c0_54 = arith.constant 0 : index
    %22 = vector.load %arg5[%c36_52, %c24_53, %c0_54] : memref<64x64x4xf32, #tpu.memory_space<vmem>>, vector<16x16x4xf32>
    %c36_55 = arith.constant 36 : index
    %c36_56 = arith.constant 36 : index
    %c0_57 = arith.constant 0 : index
    %23 = vector.load %arg5[%c36_55, %c36_56, %c0_57] : memref<64x64x4xf32, #tpu.memory_space<vmem>>, vector<16x16x4xf32>
    %c6 = arith.constant 6 : index
    %c6_58 = arith.constant 6 : index
    %c0_59 = arith.constant 0 : index
    %24 = vector.load %arg5[%c6, %c6_58, %c0_59] : memref<64x64x4xf32, #tpu.memory_space<vmem>>, vector<16x16x4xf32>
    %c6_60 = arith.constant 6 : index
    %c24_61 = arith.constant 24 : index
    %c0_62 = arith.constant 0 : index
    %25 = vector.load %arg5[%c6_60, %c24_61, %c0_62] : memref<64x64x4xf32, #tpu.memory_space<vmem>>, vector<16x16x4xf32>
    %c6_63 = arith.constant 6 : index
    %c42 = arith.constant 42 : index
    %c0_64 = arith.constant 0 : index
    %26 = vector.load %arg5[%c6_63, %c42, %c0_64] : memref<64x64x4xf32, #tpu.memory_space<vmem>>, vector<16x16x4xf32>
    %c24_65 = arith.constant 24 : index
    %c6_66 = arith.constant 6 : index
    %c0_67 = arith.constant 0 : index
    %27 = vector.load %arg5[%c24_65, %c6_66, %c0_67] : memref<64x64x4xf32, #tpu.memory_space<vmem>>, vector<16x16x4xf32>
    %c24_68 = arith.constant 24 : index
    %c24_69 = arith.constant 24 : index
    %c0_70 = arith.constant 0 : index
    %28 = vector.load %arg5[%c24_68, %c24_69, %c0_70] : memref<64x64x4xf32, #tpu.memory_space<vmem>>, vector<16x16x4xf32>
    %c24_71 = arith.constant 24 : index
    %c42_72 = arith.constant 42 : index
    %c0_73 = arith.constant 0 : index
    %29 = vector.load %arg5[%c24_71, %c42_72, %c0_73] : memref<64x64x4xf32, #tpu.memory_space<vmem>>, vector<16x16x4xf32>
    %c42_74 = arith.constant 42 : index
    %c6_75 = arith.constant 6 : index
    %c0_76 = arith.constant 0 : index
    %30 = vector.load %arg5[%c42_74, %c6_75, %c0_76] : memref<64x64x4xf32, #tpu.memory_space<vmem>>, vector<16x16x4xf32>
    %c42_77 = arith.constant 42 : index
    %c24_78 = arith.constant 24 : index
    %c0_79 = arith.constant 0 : index
    %31 = vector.load %arg5[%c42_77, %c24_78, %c0_79] : memref<64x64x4xf32, #tpu.memory_space<vmem>>, vector<16x16x4xf32>
    %c42_80 = arith.constant 42 : index
    %c42_81 = arith.constant 42 : index
    %c0_82 = arith.constant 0 : index
    %32 = vector.load %arg5[%c42_80, %c42_81, %c0_82] : memref<64x64x4xf32, #tpu.memory_space<vmem>>, vector<16x16x4xf32>
    %c0_83 = arith.constant 0 : index
    %c0_84 = arith.constant 0 : index
    %c0_85 = arith.constant 0 : index
    %33 = vector.load %arg5[%c0_83, %c0_84, %c0_85] : memref<64x64x4xf32, #tpu.memory_space<vmem>>, vector<16x16x4xf32>
    %c0_86 = arith.constant 0 : index
    %c24_87 = arith.constant 24 : index
    %c0_88 = arith.constant 0 : index
    %34 = vector.load %arg5[%c0_86, %c24_87, %c0_88] : memref<64x64x4xf32, #tpu.memory_space<vmem>>, vector<16x16x4xf32>
    %c0_89 = arith.constant 0 : index
    %c48 = arith.constant 48 : index
    %c0_90 = arith.constant 0 : index
    %35 = vector.load %arg5[%c0_89, %c48, %c0_90] : memref<64x64x4xf32, #tpu.memory_space<vmem>>, vector<16x16x4xf32>
    %c24_91 = arith.constant 24 : index
    %c0_92 = arith.constant 0 : index
    %c0_93 = arith.constant 0 : index
    %36 = vector.load %arg5[%c24_91, %c0_92, %c0_93] : memref<64x64x4xf32, #tpu.memory_space<vmem>>, vector<16x16x4xf32>
    %c24_94 = arith.constant 24 : index
    %c24_95 = arith.constant 24 : index
    %c0_96 = arith.constant 0 : index
    %37 = vector.load %arg5[%c24_94, %c24_95, %c0_96] : memref<64x64x4xf32, #tpu.memory_space<vmem>>, vector<16x16x4xf32>
    %c24_97 = arith.constant 24 : index
    %c48_98 = arith.constant 48 : index
    %c0_99 = arith.constant 0 : index
    %38 = vector.load %arg5[%c24_97, %c48_98, %c0_99] : memref<64x64x4xf32, #tpu.memory_space<vmem>>, vector<16x16x4xf32>
    %c48_100 = arith.constant 48 : index
    %c0_101 = arith.constant 0 : index
    %c0_102 = arith.constant 0 : index
    %39 = vector.load %arg5[%c48_100, %c0_101, %c0_102] : memref<64x64x4xf32, #tpu.memory_space<vmem>>, vector<16x16x4xf32>
    %c48_103 = arith.constant 48 : index
    %c24_104 = arith.constant 24 : index
    %c0_105 = arith.constant 0 : index
    %40 = vector.load %arg5[%c48_103, %c24_104, %c0_105] : memref<64x64x4xf32, #tpu.memory_space<vmem>>, vector<16x16x4xf32>
    %c48_106 = arith.constant 48 : index
    %c48_107 = arith.constant 48 : index
    %c0_108 = arith.constant 0 : index
    %41 = vector.load %arg5[%c48_106, %c48_107, %c0_108] : memref<64x64x4xf32, #tpu.memory_space<vmem>>, vector<16x16x4xf32>
    %42 = tpu.concatenate %6, %7, %8, %9, %10, %11, %12, %13, %14, %15, %16, %17, %18, %19, %20, %21 in 2 : vector<16x16x4xf32>, vector<16x16x4xf32>, vector<16x16x4xf32>, vector<16x16x4xf32>, vector<16x16x4xf32>, vector<16x16x4xf32>, vector<16x16x4xf32>, vector<16x16x4xf32>, vector<16x16x4xf32>, vector<16x16x4xf32>, vector<16x16x4xf32>, vector<16x16x4xf32>, vector<16x16x4xf32>, vector<16x16x4xf32>, vector<16x16x4xf32>, vector<16x16x4xf32> -> vector<16x16x64xf32>
    %43 = tpu.concatenate %22, %23, %24, %25, %26, %27, %28, %29, %30, %31, %32, %33, %34, %35, %36, %37 in 2 : vector<16x16x4xf32>, vector<16x16x4xf32>, vector<16x16x4xf32>, vector<16x16x4xf32>, vector<16x16x4xf32>, vector<16x16x4xf32>, vector<16x16x4xf32>, vector<16x16x4xf32>, vector<16x16x4xf32>, vector<16x16x4xf32>, vector<16x16x4xf32>, vector<16x16x4xf32>, vector<16x16x4xf32>, vector<16x16x4xf32>, vector<16x16x4xf32>, vector<16x16x4xf32> -> vector<16x16x64xf32>
    %44 = tpu.concatenate %38, %39, %40, %41 in 2 : vector<16x16x4xf32>, vector<16x16x4xf32>, vector<16x16x4xf32>, vector<16x16x4xf32> -> vector<16x16x16xf32>
    %45 = tpu.concatenate %42, %43, %44 in 2 : vector<16x16x64xf32>, vector<16x16x64xf32>, vector<16x16x16xf32> -> vector<16x16x144xf32>
    %46 = vector.shape_cast %45 : vector<16x16x144xf32> to vector<256x144xf32>
    %47 = arith.truncf %46 : vector<256x144xf32> to vector<256x144xbf16>
    %c0_109 = arith.constant 0 : index
    %c0_110 = arith.constant 0 : index
    %48 = vector.load %arg2[%c0_109, %c0_110] : memref<144x128xbf16, #tpu.memory_space<vmem>>, vector<144x128xbf16>
    %cst_111 = arith.constant dense<0.000000e+00> : vector<256x128xf32>
    %49 = tpu.matmul %47, %48, %cst_111 {dimension_numbers = #tpu.dot_dimension_numbers<[1], [0], [0], [1], [0, 0, 1, 1], [], []>} : vector<256x144xbf16>, vector<144x128xbf16>, vector<256x128xf32> -> vector<256x128xf32>
    %c0_112 = arith.constant 0 : index
    %c0_113 = arith.constant 0 : index
    %50 = vector.load %arg3[%c0_112, %c0_113] : memref<1x128xf32, #tpu.memory_space<vmem>>, vector<1x128xf32>
    %51 = vector.broadcast %50 : vector<1x128xf32> to vector<256x128xf32>
    %52 = arith.addf %49, %51 : vector<256x128xf32>
    %53 = vector.shape_cast %52 : vector<256x128xf32> to vector<16x16x128xf32>
    %c0_114 = arith.constant 0 : index
    %c0_115 = arith.constant 0 : index
    %c0_116 = arith.constant 0 : index
    %c0_117 = arith.constant 0 : index
    %54 = vector.load %arg4[%c0_114, %c0_115, %c0_116, %c0_117] : memref<1x16x16x128xf32, #tpu.memory_space<vmem>>, vector<1x16x16x128xf32>
    %55 = vector.shape_cast %54 : vector<1x16x16x128xf32> to vector<16x16x128xf32>
    %56 = vector.shape_cast %53 : vector<16x16x128xf32> to vector<1x16x16x128xf32>
    tpu.vector_store %arg4[%c0_114, %c0_115, %c0_116, %c0_117], %56 {strides = array<i32>} : memref<1x16x16x128xf32, #tpu.memory_space<vmem>>, vector<1x16x16x128xf32>,
    return
  }
  func.func @transform_0(%arg0: i32) -> (i32, i32, i32, i32) {
    %c0_i32 = arith.constant 0 : i32
    %c0_i32_0 = arith.constant 0 : i32
    %c0_i32_1 = arith.constant 0 : i32
    %c0_i32_2 = arith.constant 0 : i32
    return %arg0, %c0_i32, %c0_i32_0, %c0_i32_1 : i32, i32, i32, i32
  }
  func.func @transform_1(%arg0: i32) -> (i32, i32) {
    %c0_i32 = arith.constant 0 : i32
    %c0_i32_0 = arith.constant 0 : i32
    %c0_i32_1 = arith.constant 0 : i32
    return %c0_i32, %c0_i32_0 : i32, i32
  }
  func.func @transform_2(%arg0: i32) -> (i32, i32) {
    %c0_i32 = arith.constant 0 : i32
    %c0_i32_0 = arith.constant 0 : i32
    %c0_i32_1 = arith.constant 0 : i32
    return %c0_i32, %c0_i32_0 : i32, i32
  }
  func.func @transform_3(%arg0: i32) -> (i32, i32, i32, i32) {
    %c0_i32 = arith.constant 0 : i32
    %c0_i32_0 = arith.constant 0 : i32
    %c0_i32_1 = arith.constant 0 : i32
    %c0_i32_2 = arith.constant 0 : i32
    return %arg0, %c0_i32, %c0_i32_0, %c0_i32_1 : i32, i32, i32, i32
  }
}

</mosaic_0001>

<llo_original>
// kernel: tpu_custom_call.1
$region0: #{tpu_custom_call.1}
  #allocation0 [shape = 'u32[]', space=smem, size = 0x4, offset = 0x4, fixed_abs, tag = 'smem constant byte address 0x4 - core index']
  #allocation1 [shape = 'u32[72,128]{1,0:T(1,128)}', space=vmem, size = 0x9000, scoped, tag = 'internal scratch']
  #allocation2 [shape = 'f32[64,64,4]{2,1,0:T(8,128)}', space=vmem, size = 0x200000, scoped, tag = 'scratch operand']
  %s0 = inlined_call_operand.vmem [shape: bf16[2,16,16,4], index: 0, kind: input, shape index: {}]
  %s1 = inlined_call_operand.vmem [shape: bf16[144,128], index: 1, kind: input, shape index: {}]
  %s2 = inlined_call_operand.vmem [shape: f32[1,128], index: 2, kind: input, shape index: {}]
  %s3 = inlined_call_operand.hbm [shape: f32[2,16,16,128], index: 3, kind: output, shape index: {}]
  %s4 = sld [smem:[#allocation0]]
  $region45: #{tpu_custom_call.1} parent=0
    _
  %s6 = ssub.s32 1, %s4
  %s7 = scalar_select 0, %s6, %s4
  $region1: #{tpu_custom_call.1} parent=0
    #allocation3 [shape = 'u8[262144]{0}', space=vmem, size = 0x40000, scoped, tag = 'output window, operand 0']
    #allocation4 [shape = 's32[2]{0}', space=sflag, size = 0x8, scoped, tag = 'scoped memory for tpu_custom_call.1']
    %8 = vsyncpa [#allocation4], 0
    %s9 = scalar_lea.sflag [#allocation4], 1
    %10 = vsyncpa %s9, 0
    loop: start=0, step=1, limit=4
    $region2: #{tpu_custom_call.1} parent=1 // loop_pre_header
      _
    $region3: #{tpu_custom_call.1} parent=1 // loop_header
      %s12 = sphi 0, %s16
      %p13 = scmp.ge.s32.totalorder %s12, 4
      %s22 = sphi 0, %s24
      %s25 = sphi 0, %s22
      %s26 = sphi 0, %s25
      %s42 = sphi 0, %s26
      %s46 = sphi 0, %s46
      %s48 = sphi 0, %s46
      %s49 = sphi 0, %s48
      %s63 = sphi 0, %s49
      %s67 = sphi 0, %s67
      %s69 = sphi 0, %s67
      %s70 = sphi 0, %s69
      %s84 = sphi 0, %s70
      %s90 = sphi 0, %s92
      %s93 = sphi 0, %s90
      %s94 = sphi 0, %s93
      %s110 = sphi 0, %s94
    $region4: #{tpu_custom_call.1} parent=1 // loop_header_branch
      %15 = sbr.rel (%p13) target = $region8
    $region5: #{tpu_custom_call.1} parent=1 // loop_body
      %s17 = ssub.s32 %s12, 1
      %s18 = ssub.s32 %s12, 2
      %s19 = sadd.s32 %s12, 1
      %s20 = ssub.s32 %s12, %s19
      %p21 = scmp.eq.s32.totalorder %s20, 0
      %s23 = sadd.s32 %s22, 1
      %s24 = scalar_select %p21, %s22, %s23
      %p27 = pneg %p21
      %p28 = scmp.eq.s32.totalorder %s12, 1
      %p29 = por %p27, %p28
      %p30 = scmp.ne.s32.totalorder %s22, %s25
      %p31 = scmp.eq.s32.totalorder %s12, 0
      %p32 = por %p30, %p31
      %p33 = scmp.ne.s32.totalorder %s22, %s25
      %p34 = scmp.eq.s32.totalorder %s17, 1
      %p35 = por %p33, %p34
      %p36 = scmp.ne.s32.totalorder %s25, %s26
      %p37 = scmp.eq.s32.totalorder %s17, 0
      %p38 = por %p36, %p37
      %p39 = scmp.ne.s32.totalorder %s25, %s26
      %p40 = scmp.eq.s32.totalorder %s18, 1
      %p41 = por %p39, %p40
      %p43 = scmp.ne.s32.totalorder %s26, %s42
      %p44 = scmp.eq.s32.totalorder %s18, 0
      %p45 = por %p43, %p44
      %s47 = sadd.s32 %s46, 1
      %p50 = scmp.eq.s32.totalorder %s12, 1
      %p51 = scmp.ne.s32.totalorder %s46, %s48
      %p52 = scmp.eq.s32.totalorder %s12, 0
      %p53 = por %p51, %p52
      %p54 = scmp.ne.s32.totalorder %s46, %s48
      %p55 = scmp.eq.s32.totalorder %s17, 1
      %p56 = por %p54, %p55
      %p57 = scmp.ne.s32.totalorder %s48, %s49
      %p58 = scmp.eq.s32.totalorder %s17, 0
      %p59 = por %p57, %p58
      %p60 = scmp.ne.s32.totalorder %s48, %s49
      %p61 = scmp.eq.s32.totalorder %s18, 1
      %p62 = por %p60, %p61
      %p64 = scmp.ne.s32.totalorder %s49, %s63
      %p65 = scmp.eq.s32.totalorder %s18, 0
      %p66 = por %p64, %p65
      %s68 = sadd.s32 %s67, 1
      %p71 = scmp.eq.s32.totalorder %s12, 1
      %p72 = scmp.ne.s32.totalorder %s67, %s69
      %p73 = scmp.eq.s32.totalorder %s12, 0
      %p74 = por %p72, %p73
      %p75 = scmp.ne.s32.totalorder %s67, %s69
      %p76 = scmp.eq.s32.totalorder %s17, 1
      %p77 = por %p75, %p76
      %p78 = scmp.ne.s32.totalorder %s69, %s70
      %p79 = scmp.eq.s32.totalorder %s17, 0
      %p80 = por %p78, %p79
      %p81 = scmp.ne.s32.totalorder %s69, %s70
      %p82 = scmp.eq.s32.totalorder %s18, 1
      %p83 = por %p81, %p82
      %p85 = scmp.ne.s32.totalorder %s70, %s84
      %p86 = scmp.eq.s32.totalorder %s18, 0
      %p87 = por %p85, %p86
      %s88 = ssub.s32 %s12, %s19
      %p89 = scmp.eq.s32.totalorder %s88, 0
      %s91 = sadd.s32 %s90, 1
      %s92 = scalar_select %p89, %s90, %s91
      %p95 = pneg %p89
      %p96 = scmp.eq.s32.totalorder %s12, 1
      %p97 = por %p95, %p96
      %p98 = scmp.ne.s32.totalorder %s90, %s93
      %p99 = scmp.eq.s32.totalorder %s12, 0
      %p100 = por %p98, %p99
      %p101 = scmp.ne.s32.totalorder %s90, %s93
      %p102 = scmp.eq.s32.totalorder %s17, 1
      %p103 = por %p101, %p102
      %p104 = scmp.ne.s32.totalorder %s93, %s94
      %p105 = scmp.eq.s32.totalorder %s17, 0
      %p106 = por %p104, %p105
      %p107 = scmp.ne.s32.totalorder %s93, %s94
      %p108 = scmp.eq.s32.totalorder %s18, 1
      %p109 = por %p107, %p108
      %p111 = scmp.ne.s32.totalorder %s94, %s110
      %p112 = scmp.eq.s32.totalorder %s18, 0
      %p113 = por %p111, %p112
      %p114 = scmp.le.s32.totalorder 1, %s12
      %p115 = scmp.lt.s32.totalorder %s12, 3
      %p116 = pnand %p114, %p115
      %p117 = pneg %p116
      // Predicated region
      $region9: #{tpu_custom_call.1} parent=5 // pred_check
        _
      $region10: #{tpu_custom_call.1} parent=5 // pred_check_branch
        %119 = sbr.rel (%p116) target = $region12
      $region11: #{tpu_custom_call.1} parent=5 // pred_region
        %s120 = ssub.s32 %s12, 1
        // Predicated region
        $region13: #{tpu_custom_call.1} parent=11 // pred_check
          %p121 = pneg %p59
        $region14: #{tpu_custom_call.1} parent=11 // pred_check_branch
          %123 = sbr.rel (%p121) target = $region16
        $region15: #{tpu_custom_call.1} parent=11 // pred_region
          _
        $region16: #{tpu_custom_call.1} parent=11 // pred_fallthru
          _
        // Predicated region
        $region17: #{tpu_custom_call.1} parent=11 // pred_check
          %p124 = pneg %p80
        $region18: #{tpu_custom_call.1} parent=11 // pred_check_branch
          %126 = sbr.rel (%p124) target = $region20
        $region19: #{tpu_custom_call.1} parent=11 // pred_region
          _
        $region20: #{tpu_custom_call.1} parent=11 // pred_fallthru
          _
      $region12: #{tpu_custom_call.1} parent=5 // pred_fallthru
        _
      %p127 = scmp.lt.s32.totalorder %s12, 2
      // Predicated region
      $region21: #{tpu_custom_call.1} parent=5 // pred_check
        %p128 = pneg %p127
      $region22: #{tpu_custom_call.1} parent=5 // pred_check_branch
        %130 = sbr.rel (%p128) target = $region24
      $region23: #{tpu_custom_call.1} parent=5 // pred_region
        // Predicated region
        $region25: #{tpu_custom_call.1} parent=23 // pred_check
          %p131 = pneg %p32
        $region26: #{tpu_custom_call.1} parent=23 // pred_check_branch
          %133 = sbr.rel (%p131) target = $region28
        $region27: #{tpu_custom_call.1} parent=23 // pred_region
          %p134 = scmp.lt.s32.totalorder %s12, 1
          %s135 = scalar_select %p134, %s12, 1
          %s136 = smul.addr %s135, 32
          %s137 = smul.addr %s136, 4
          %s138 = scalar_lea.vmem %s0, %s137
        $region28: #{tpu_custom_call.1} parent=23 // pred_fallthru
          _
      $region24: #{tpu_custom_call.1} parent=5 // pred_fallthru
        _
      %p139 = scmp.le.s32.totalorder 1, %s12
      %p140 = scmp.lt.s32.totalorder %s12, 3
      %p141 = pnand %p139, %p140
      %p142 = pneg %p141
      // Predicated region
      $region29: #{tpu_custom_call.1} parent=5 // pred_check
        _
      $region30: #{tpu_custom_call.1} parent=5 // pred_check_branch
        %144 = sbr.rel (%p141) target = $region32
      $region31: #{tpu_custom_call.1} parent=5 // pred_region
        %s145 = ssub.s32 %s12, 1
        %p146 = scmp.lt.s32.totalorder %s17, 1
        %s147 = scalar_select %p146, %s17, 1
        %s148 = smul.addr %s147, 32
        %s149 = smul.addr %s148, 4
        %s150 = scalar_lea.vmem %s0, %s149
        %p151 = pneg %p38
        %p152 = pneg %p35
        %p153 = pneg %p59
        %p154 = pneg %p56
        %p155 = pneg %p80
        %p156 = pneg %p77
        %p157 = pneg %p106
        %p158 = pneg %p103
        %s159 = sand.u32 %s93, 1
        %s160 = scalar_lea.sflag [#allocation4], %s159
        %s161 = sand.u32 %s93, 1
        %s162 = smul.addr %s161, 256
        %s163 = scalar_lea.vmem [#allocation3], %s162
        %p164 = scmp.lt.s32.totalorder %s17, 1
        %s165 = scalar_select %p164, %s17, 1
        %s166 = smul.addr %s165, 32
        %s167 = smul.addr %s166, 4
        %s168 = scalar_lea.vmem %s0, %s167
        %vm170 = vcmask 31744
        %171 = vst.msk [vmem:[#allocation2] sm:$0xff] %vm170, 0.0
        %172 = vst.msk [vmem:[#allocation2 + $0x8] sm:$0xff] %vm170, 0.0
        %173 = vst.msk [vmem:[#allocation2 + $0x10] sm:$0xff] %vm170, 0.0
        %174 = vst.msk [vmem:[#allocation2 + $0x18] sm:$0xff] %vm170, 0.0
        %175 = vst.msk [vmem:[#allocation2 + $0x20] sm:$0xff] %vm170, 0.0
        %176 = vst.msk [vmem:[#allocation2 + $0x28] sm:$0xff] %vm170, 0.0
        %177 = vst.msk [vmem:[#allocation2 + $0x30] sm:$0xff] %vm170, 0.0
        %178 = vst.msk [vmem:[#allocation2 + $0x38] sm:$0xff] %vm170, 0.0
        %179 = vst.msk [vmem:[#allocation2 + $0x40] sm:$0xff] %vm170, 0.0
        %180 = vst.msk [vmem:[#allocation2 + $0x48] sm:$0xff] %vm170, 0.0
        %181 = vst.msk [vmem:[#allocation2 + $0x50] sm:$0xff] %vm170, 0.0
        %182 = vst.msk [vmem:[#allocation2 + $0x58] sm:$0xff] %vm170, 0.0
        %183 = vst.msk [vmem:[#allocation2 + $0x60] sm:$0xff] %vm170, 0.0
        %184 = vst.msk [vmem:[#allocation2 + $0x68] sm:$0xff] %vm170, 0.0
        %185 = vst.msk [vmem:[#allocation2 + $0x70] sm:$0xff] %vm170, 0.0
        %186 = vst.msk [vmem:[#allocation2 + $0x78] sm:$0xff] %vm170, 0.0
        %187 = vst.msk [vmem:[#allocation2 + $0x80] sm:$0xff] %vm170, 0.0
        %188 = vst.msk [vmem:[#allocation2 + $0x88] sm:$0xff] %vm170, 0.0
        %189 = vst.msk [vmem:[#allocation2 + $0x90] sm:$0xff] %vm170, 0.0
        %190 = vst.msk [vmem:[#allocation2 + $0x98] sm:$0xff] %vm170, 0.0
        %191 = vst.msk [vmem:[#allocation2 + $0xa0] sm:$0xff] %vm170, 0.0
        %192 = vst.msk [vmem:[#allocation2 + $0xa8] sm:$0xff] %vm170, 0.0
        %193 = vst.msk [vmem:[#allocation2 + $0xb0] sm:$0xff] %vm170, 0.0
        %194 = vst.msk [vmem:[#allocation2 + $0xb8] sm:$0xff] %vm170, 0.0
        %195 = vst.msk [vmem:[#allocation2 + $0xc0] sm:$0xff] %vm170, 0.0
        %196 = vst.msk [vmem:[#allocation2 + $0xc8] sm:$0xff] %vm170, 0.0
        %197 = vst.msk [vmem:[#allocation2 + $0xd0] sm:$0xff] %vm170, 0.0
        %198 = vst.msk [vmem:[#allocation2 + $0xd8] sm:$0xff] %vm170, 0.0
        %199 = vst.msk [vmem:[#allocation2 + $0xe0] sm:$0xff] %vm170, 0.0
        %200 = vst.msk [vmem:[#allocation2 + $0xe8] sm:$0xff] %vm170, 0.0
        %201 = vst.msk [vmem:[#allocation2 + $0xf0] sm:$0xff] %vm170, 0.0
        %202 = vst.msk [vmem:[#allocation2 + $0xf8] sm:$0xff] %vm170, 0.0
        %203 = vst.msk [vmem:[#allocation2 + $0x100] sm:$0xff] %vm170, 0.0
        %204 = vst.msk [vmem:[#allocation2 + $0x108] sm:$0xff] %vm170, 0.0
        %205 = vst.msk [vmem:[#allocation2 + $0x110] sm:$0xff] %vm170, 0.0
        %206 = vst.msk [vmem:[#allocation2 + $0x118] sm:$0xff] %vm170, 0.0
        %207 = vst.msk [vmem:[#allocation2 + $0x120] sm:$0xff] %vm170, 0.0
        %208 = vst.msk [vmem:[#allocation2 + $0x128] sm:$0xff] %vm170, 0.0
        %209 = vst.msk [vmem:[#allocation2 + $0x130] sm:$0xff] %vm170, 0.0
        %210 = vst.msk [vmem:[#allocation2 + $0x138] sm:$0xff] %vm170, 0.0
        %211 = vst.msk [vmem:[#allocation2 + $0x140] sm:$0xff] %vm170, 0.0
        %212 = vst.msk [vmem:[#allocation2 + $0x148] sm:$0xff] %vm170, 0.0
        %213 = vst.msk [vmem:[#allocation2 + $0x150] sm:$0xff] %vm170, 0.0
        %214 = vst.msk [vmem:[#allocation2 + $0x158] sm:$0xff] %vm170, 0.0
        %215 = vst.msk [vmem:[#allocation2 + $0x160] sm:$0xff] %vm170, 0.0
        %216 = vst.msk [vmem:[#allocation2 + $0x168] sm:$0xff] %vm170, 0.0
        %217 = vst.msk [vmem:[#allocation2 + $0x170] sm:$0xff] %vm170, 0.0
        %218 = vst.msk [vmem:[#allocation2 + $0x178] sm:$0xff] %vm170, 0.0
        %219 = vst.msk [vmem:[#allocation2 + $0x180] sm:$0xff] %vm170, 0.0
        %220 = vst.msk [vmem:[#allocation2 + $0x188] sm:$0xff] %vm170, 0.0
        %221 = vst.msk [vmem:[#allocation2 + $0x190] sm:$0xff] %vm170, 0.0
        %222 = vst.msk [vmem:[#allocation2 + $0x198] sm:$0xff] %vm170, 0.0
        %223 = vst.msk [vmem:[#allocation2 + $0x1a0] sm:$0xff] %vm170, 0.0
        %224 = vst.msk [vmem:[#allocation2 + $0x1a8] sm:$0xff] %vm170, 0.0
        %225 = vst.msk [vmem:[#allocation2 + $0x1b0] sm:$0xff] %vm170, 0.0
        %226 = vst.msk [vmem:[#allocation2 + $0x1b8] sm:$0xff] %vm170, 0.0
        %227 = vst.msk [vmem:[#allocation2 + $0x1c0] sm:$0xff] %vm170, 0.0
        %228 = vst.msk [vmem:[#allocation2 + $0x1c8] sm:$0xff] %vm170, 0.0
        %229 = vst.msk [vmem:[#allocation2 + $0x1d0] sm:$0xff] %vm170, 0.0
        %230 = vst.msk [vmem:[#allocation2 + $0x1d8] sm:$0xff] %vm170, 0.0
        %231 = vst.msk [vmem:[#allocation2 + $0x1e0] sm:$0xff] %vm170, 0.0
        %232 = vst.msk [vmem:[#allocation2 + $0x1e8] sm:$0xff] %vm170, 0.0
        %233 = vst.msk [vmem:[#allocation2 + $0x1f0] sm:$0xff] %vm170, 0.0
        %234 = vst.msk [vmem:[#allocation2 + $0x1f8] sm:$0xff] %vm170, 0.0
        %235 = vst.msk [vmem:[#allocation2 + $0x200] sm:$0xff] %vm170, 0.0
        %236 = vst.msk [vmem:[#allocation2 + $0x208] sm:$0xff] %vm170, 0.0
        %237 = vst.msk [vmem:[#allocation2 + $0x210] sm:$0xff] %vm170, 0.0
        %238 = vst.msk [vmem:[#allocation2 + $0x218] sm:$0xff] %vm170, 0.0
        %239 = vst.msk [vmem:[#allocation2 + $0x220] sm:$0xff] %vm170, 0.0
        %240 = vst.msk [vmem:[#allocation2 + $0x228] sm:$0xff] %vm170, 0.0
        %241 = vst.msk [vmem:[#allocation2 + $0x230] sm:$0xff] %vm170, 0.0
        %242 = vst.msk [vmem:[#allocation2 + $0x238] sm:$0xff] %vm170, 0.0
        %243 = vst.msk [vmem:[#allocation2 + $0x240] sm:$0xff] %vm170, 0.0
        %244 = vst.msk [vmem:[#allocation2 + $0x248] sm:$0xff] %vm170, 0.0
        %245 = vst.msk [vmem:[#allocation2 + $0x250] sm:$0xff] %vm170, 0.0
        %246 = vst.msk [vmem:[#allocation2 + $0x258] sm:$0xff] %vm170, 0.0
        %247 = vst.msk [vmem:[#allocation2 + $0x260] sm:$0xff] %vm170, 0.0
        %248 = vst.msk [vmem:[#allocation2 + $0x268] sm:$0xff] %vm170, 0.0
        %249 = vst.msk [vmem:[#allocation2 + $0x270] sm:$0xff] %vm170, 0.0
        %250 = vst.msk [vmem:[#allocation2 + $0x278] sm:$0xff] %vm170, 0.0
        %251 = vst.msk [vmem:[#allocation2 + $0x280] sm:$0xff] %vm170, 0.0
        %252 = vst.msk [vmem:[#allocation2 + $0x288] sm:$0xff] %vm170, 0.0
        %253 = vst.msk [vmem:[#allocation2 + $0x290] sm:$0xff] %vm170, 0.0
        %254 = vst.msk [vmem:[#allocation2 + $0x298] sm:$0xff] %vm170, 0.0
        %255 = vst.msk [vmem:[#allocation2 + $0x2a0] sm:$0xff] %vm170, 0.0
        %256 = vst.msk [vmem:[#allocation2 + $0x2a8] sm:$0xff] %vm170, 0.0
        %257 = vst.msk [vmem:[#allocation2 + $0x2b0] sm:$0xff] %vm170, 0.0
        %258 = vst.msk [vmem:[#allocation2 + $0x2b8] sm:$0xff] %vm170, 0.0
        %259 = vst.msk [vmem:[#allocation2 + $0x2c0] sm:$0xff] %vm170, 0.0
        %260 = vst.msk [vmem:[#allocation2 + $0x2c8] sm:$0xff] %vm170, 0.0
        %261 = vst.msk [vmem:[#allocation2 + $0x2d0] sm:$0xff] %vm170, 0.0
        %262 = vst.msk [vmem:[#allocation2 + $0x2d8] sm:$0xff] %vm170, 0.0
        %263 = vst.msk [vmem:[#allocation2 + $0x2e0] sm:$0xff] %vm170, 0.0
        %264 = vst.msk [vmem:[#allocation2 + $0x2e8] sm:$0xff] %vm170, 0.0
        %265 = vst.msk [vmem:[#allocation2 + $0x2f0] sm:$0xff] %vm170, 0.0
        %266 = vst.msk [vmem:[#allocation2 + $0x2f8] sm:$0xff] %vm170, 0.0
        %267 = vst.msk [vmem:[#allocation2 + $0x300] sm:$0xff] %vm170, 0.0
        %268 = vst.msk [vmem:[#allocation2 + $0x308] sm:$0xff] %vm170, 0.0
        %269 = vst.msk [vmem:[#allocation2 + $0x310] sm:$0xff] %vm170, 0.0
        %270 = vst.msk [vmem:[#allocation2 + $0x318] sm:$0xff] %vm170, 0.0
        %271 = vst.msk [vmem:[#allocation2 + $0x320] sm:$0xff] %vm170, 0.0
        %272 = vst.msk [vmem:[#allocation2 + $0x328] sm:$0xff] %vm170, 0.0
        %273 = vst.msk [vmem:[#allocation2 + $0x330] sm:$0xff] %vm170, 0.0
        %274 = vst.msk [vmem:[#allocation2 + $0x338] sm:$0xff] %vm170, 0.0
        %275 = vst.msk [vmem:[#allocation2 + $0x340] sm:$0xff] %vm170, 0.0
        %276 = vst.msk [vmem:[#allocation2 + $0x348] sm:$0xff] %vm170, 0.0
        %277 = vst.msk [vmem:[#allocation2 + $0x350] sm:$0xff] %vm170, 0.0
        %278 = vst.msk [vmem:[#allocation2 + $0x358] sm:$0xff] %vm170, 0.0
        %279 = vst.msk [vmem:[#allocation2 + $0x360] sm:$0xff] %vm170, 0.0
        %280 = vst.msk [vmem:[#allocation2 + $0x368] sm:$0xff] %vm170, 0.0
        %281 = vst.msk [vmem:[#allocation2 + $0x370] sm:$0xff] %vm170, 0.0
        %282 = vst.msk [vmem:[#allocation2 + $0x378] sm:$0xff] %vm170, 0.0
        %283 = vst.msk [vmem:[#allocation2 + $0x380] sm:$0xff] %vm170, 0.0
        %284 = vst.msk [vmem:[#allocation2 + $0x388] sm:$0xff] %vm170, 0.0
        %285 = vst.msk [vmem:[#allocation2 + $0x390] sm:$0xff] %vm170, 0.0
        %286 = vst.msk [vmem:[#allocation2 + $0x398] sm:$0xff] %vm170, 0.0
        %287 = vst.msk [vmem:[#allocation2 + $0x3a0] sm:$0xff] %vm170, 0.0
        %288 = vst.msk [vmem:[#allocation2 + $0x3a8] sm:$0xff] %vm170, 0.0
        %289 = vst.msk [vmem:[#allocation2 + $0x3b0] sm:$0xff] %vm170, 0.0
        %290 = vst.msk [vmem:[#allocation2 + $0x3b8] sm:$0xff] %vm170, 0.0
        %291 = vst.msk [vmem:[#allocation2 + $0x3c0] sm:$0xff] %vm170, 0.0
        %292 = vst.msk [vmem:[#allocation2 + $0x3c8] sm:$0xff] %vm170, 0.0
        %293 = vst.msk [vmem:[#allocation2 + $0x3d0] sm:$0xff] %vm170, 0.0
        %294 = vst.msk [vmem:[#allocation2 + $0x3d8] sm:$0xff] %vm170, 0.0
        %295 = vst.msk [vmem:[#allocation2 + $0x3e0] sm:$0xff] %vm170, 0.0
        %296 = vst.msk [vmem:[#allocation2 + $0x3e8] sm:$0xff] %vm170, 0.0
        %297 = vst.msk [vmem:[#allocation2 + $0x3f0] sm:$0xff] %vm170, 0.0
        %298 = vst.msk [vmem:[#allocation2 + $0x3f8] sm:$0xff] %vm170, 0.0
        %299 = vst.msk [vmem:[#allocation2 + $0x400] sm:$0xff] %vm170, 0.0
        %300 = vst.msk [vmem:[#allocation2 + $0x408] sm:$0xff] %vm170, 0.0
        %301 = vst.msk [vmem:[#allocation2 + $0x410] sm:$0xff] %vm170, 0.0
        %302 = vst.msk [vmem:[#allocation2 + $0x418] sm:$0xff] %vm170, 0.0
        %303 = vst.msk [vmem:[#allocation2 + $0x420] sm:$0xff] %vm170, 0.0
        %304 = vst.msk [vmem:[#allocation2 + $0x428] sm:$0xff] %vm170, 0.0
        %305 = vst.msk [vmem:[#allocation2 + $0x430] sm:$0xff] %vm170, 0.0
        %306 = vst.msk [vmem:[#allocation2 + $0x438] sm:$0xff] %vm170, 0.0
        %307 = vst.msk [vmem:[#allocation2 + $0x440] sm:$0xff] %vm170, 0.0
        %308 = vst.msk [vmem:[#allocation2 + $0x448] sm:$0xff] %vm170, 0.0
        %309 = vst.msk [vmem:[#allocation2 + $0x450] sm:$0xff] %vm170, 0.0
        %310 = vst.msk [vmem:[#allocation2 + $0x458] sm:$0xff] %vm170, 0.0
        %311 = vst.msk [vmem:[#allocation2 + $0x460] sm:$0xff] %vm170, 0.0
        %312 = vst.msk [vmem:[#allocation2 + $0x468] sm:$0xff] %vm170, 0.0
        %313 = vst.msk [vmem:[#allocation2 + $0x470] sm:$0xff] %vm170, 0.0
        %314 = vst.msk [vmem:[#allocation2 + $0x478] sm:$0xff] %vm170, 0.0
        %315 = vst.msk [vmem:[#allocation2 + $0x480] sm:$0xff] %vm170, 0.0
        %316 = vst.msk [vmem:[#allocation2 + $0x488] sm:$0xff] %vm170, 0.0
        %317 = vst.msk [vmem:[#allocation2 + $0x490] sm:$0xff] %vm170, 0.0
        %318 = vst.msk [vmem:[#allocation2 + $0x498] sm:$0xff] %vm170, 0.0
        %319 = vst.msk [vmem:[#allocation2 + $0x4a0] sm:$0xff] %vm170, 0.0
        %320 = vst.msk [vmem:[#allocation2 + $0x4a8] sm:$0xff] %vm170, 0.0
        %321 = vst.msk [vmem:[#allocation2 + $0x4b0] sm:$0xff] %vm170, 0.0
        %322 = vst.msk [vmem:[#allocation2 + $0x4b8] sm:$0xff] %vm170, 0.0
        %323 = vst.msk [vmem:[#allocation2 + $0x4c0] sm:$0xff] %vm170, 0.0
        %324 = vst.msk [vmem:[#allocation2 + $0x4c8] sm:$0xff] %vm170, 0.0
        %325 = vst.msk [vmem:[#allocation2 + $0x4d0] sm:$0xff] %vm170, 0.0
        %326 = vst.msk [vmem:[#allocation2 + $0x4d8] sm:$0xff] %vm170, 0.0
        %327 = vst.msk [vmem:[#allocation2 + $0x4e0] sm:$0xff] %vm170, 0.0
        %328 = vst.msk [vmem:[#allocation2 + $0x4e8] sm:$0xff] %vm170, 0.0
        %329 = vst.msk [vmem:[#allocation2 + $0x4f0] sm:$0xff] %vm170, 0.0
        %330 = vst.msk [vmem:[#allocation2 + $0x4f8] sm:$0xff] %vm170, 0.0
        %331 = vst.msk [vmem:[#allocation2 + $0x500] sm:$0xff] %vm170, 0.0
        %332 = vst.msk [vmem:[#allocation2 + $0x508] sm:$0xff] %vm170, 0.0
        %333 = vst.msk [vmem:[#allocation2 + $0x510] sm:$0xff] %vm170, 0.0
        %334 = vst.msk [vmem:[#allocation2 + $0x518] sm:$0xff] %vm170, 0.0
        %335 = vst.msk [vmem:[#allocation2 + $0x520] sm:$0xff] %vm170, 0.0
        %336 = vst.msk [vmem:[#allocation2 + $0x528] sm:$0xff] %vm170, 0.0
        %337 = vst.msk [vmem:[#allocation2 + $0x530] sm:$0xff] %vm170, 0.0
        %338 = vst.msk [vmem:[#allocation2 + $0x538] sm:$0xff] %vm170, 0.0
        %339 = vst.msk [vmem:[#allocation2 + $0x540] sm:$0xff] %vm170, 0.0
        %340 = vst.msk [vmem:[#allocation2 + $0x548] sm:$0xff] %vm170, 0.0
        %341 = vst.msk [vmem:[#allocation2 + $0x550] sm:$0xff] %vm170, 0.0
        %342 = vst.msk [vmem:[#allocation2 + $0x558] sm:$0xff] %vm170, 0.0
        %343 = vst.msk [vmem:[#allocation2 + $0x560] sm:$0xff] %vm170, 0.0
        %344 = vst.msk [vmem:[#allocation2 + $0x568] sm:$0xff] %vm170, 0.0
        %345 = vst.msk [vmem:[#allocation2 + $0x570] sm:$0xff] %vm170, 0.0
        %346 = vst.msk [vmem:[#allocation2 + $0x578] sm:$0xff] %vm170, 0.0
        %347 = vst.msk [vmem:[#allocation2 + $0x580] sm:$0xff] %vm170, 0.0
        %348 = vst.msk [vmem:[#allocation2 + $0x588] sm:$0xff] %vm170, 0.0
        %349 = vst.msk [vmem:[#allocation2 + $0x590] sm:$0xff] %vm170, 0.0
        %350 = vst.msk [vmem:[#allocation2 + $0x598] sm:$0xff] %vm170, 0.0
        %351 = vst.msk [vmem:[#allocation2 + $0x5a0] sm:$0xff] %vm170, 0.0
        %352 = vst.msk [vmem:[#allocation2 + $0x5a8] sm:$0xff] %vm170, 0.0
        %353 = vst.msk [vmem:[#allocation2 + $0x5b0] sm:$0xff] %vm170, 0.0
        %354 = vst.msk [vmem:[#allocation2 + $0x5b8] sm:$0xff] %vm170, 0.0
        %355 = vst.msk [vmem:[#allocation2 + $0x5c0] sm:$0xff] %vm170, 0.0
        %356 = vst.msk [vmem:[#allocation2 + $0x5c8] sm:$0xff] %vm170, 0.0
        %357 = vst.msk [vmem:[#allocation2 + $0x5d0] sm:$0xff] %vm170, 0.0
        %358 = vst.msk [vmem:[#allocation2 + $0x5d8] sm:$0xff] %vm170, 0.0
        %359 = vst.msk [vmem:[#allocation2 + $0x5e0] sm:$0xff] %vm170, 0.0
        %360 = vst.msk [vmem:[#allocation2 + $0x5e8] sm:$0xff] %vm170, 0.0
        %361 = vst.msk [vmem:[#allocation2 + $0x5f0] sm:$0xff] %vm170, 0.0
        %362 = vst.msk [vmem:[#allocation2 + $0x5f8] sm:$0xff] %vm170, 0.0
        %363 = vst.msk [vmem:[#allocation2 + $0x600] sm:$0xff] %vm170, 0.0
        %364 = vst.msk [vmem:[#allocation2 + $0x608] sm:$0xff] %vm170, 0.0
        %365 = vst.msk [vmem:[#allocation2 + $0x610] sm:$0xff] %vm170, 0.0
        %366 = vst.msk [vmem:[#allocation2 + $0x618] sm:$0xff] %vm170, 0.0
        %367 = vst.msk [vmem:[#allocation2 + $0x620] sm:$0xff] %vm170, 0.0
        %368 = vst.msk [vmem:[#allocation2 + $0x628] sm:$0xff] %vm170, 0.0
        %369 = vst.msk [vmem:[#allocation2 + $0x630] sm:$0xff] %vm170, 0.0
        %370 = vst.msk [vmem:[#allocation2 + $0x638] sm:$0xff] %vm170, 0.0
        %371 = vst.msk [vmem:[#allocation2 + $0x640] sm:$0xff] %vm170, 0.0
        %372 = vst.msk [vmem:[#allocation2 + $0x648] sm:$0xff] %vm170, 0.0
        %373 = vst.msk [vmem:[#allocation2 + $0x650] sm:$0xff] %vm170, 0.0
        %374 = vst.msk [vmem:[#allocation2 + $0x658] sm:$0xff] %vm170, 0.0
        %375 = vst.msk [vmem:[#allocation2 + $0x660] sm:$0xff] %vm170, 0.0
        %376 = vst.msk [vmem:[#allocation2 + $0x668] sm:$0xff] %vm170, 0.0
        %377 = vst.msk [vmem:[#allocation2 + $0x670] sm:$0xff] %vm170, 0.0
        %378 = vst.msk [vmem:[#allocation2 + $0x678] sm:$0xff] %vm170, 0.0
        %379 = vst.msk [vmem:[#allocation2 + $0x680] sm:$0xff] %vm170, 0.0
        %380 = vst.msk [vmem:[#allocation2 + $0x688] sm:$0xff] %vm170, 0.0
        %381 = vst.msk [vmem:[#allocation2 + $0x690] sm:$0xff] %vm170, 0.0
        %382 = vst.msk [vmem:[#allocation2 + $0x698] sm:$0xff] %vm170, 0.0
        %383 = vst.msk [vmem:[#allocation2 + $0x6a0] sm:$0xff] %vm170, 0.0
        %384 = vst.msk [vmem:[#allocation2 + $0x6a8] sm:$0xff] %vm170, 0.0
        %385 = vst.msk [vmem:[#allocation2 + $0x6b0] sm:$0xff] %vm170, 0.0
        %386 = vst.msk [vmem:[#allocation2 + $0x6b8] sm:$0xff] %vm170, 0.0
        %387 = vst.msk [vmem:[#allocation2 + $0x6c0] sm:$0xff] %vm170, 0.0
        %388 = vst.msk [vmem:[#allocation2 + $0x6c8] sm:$0xff] %vm170, 0.0
        %389 = vst.msk [vmem:[#allocation2 + $0x6d0] sm:$0xff] %vm170, 0.0
        %390 = vst.msk [vmem:[#allocation2 + $0x6d8] sm:$0xff] %vm170, 0.0
        %391 = vst.msk [vmem:[#allocation2 + $0x6e0] sm:$0xff] %vm170, 0.0
        %392 = vst.msk [vmem:[#allocation2 + $0x6e8] sm:$0xff] %vm170, 0.0
        %393 = vst.msk [vmem:[#allocation2 + $0x6f0] sm:$0xff] %vm170, 0.0
        %394 = vst.msk [vmem:[#allocation2 + $0x6f8] sm:$0xff] %vm170, 0.0
        %395 = vst.msk [vmem:[#allocation2 + $0x700] sm:$0xff] %vm170, 0.0
        %396 = vst.msk [vmem:[#allocation2 + $0x708] sm:$0xff] %vm170, 0.0
        %397 = vst.msk [vmem:[#allocation2 + $0x710] sm:$0xff] %vm170, 0.0
        %398 = vst.msk [vmem:[#allocation2 + $0x718] sm:$0xff] %vm170, 0.0
        %399 = vst.msk [vmem:[#allocation2 + $0x720] sm:$0xff] %vm170, 0.0
        %400 = vst.msk [vmem:[#allocation2 + $0x728] sm:$0xff] %vm170, 0.0
        %401 = vst.msk [vmem:[#allocation2 + $0x730] sm:$0xff] %vm170, 0.0
        %402 = vst.msk [vmem:[#allocation2 + $0x738] sm:$0xff] %vm170, 0.0
        %403 = vst.msk [vmem:[#allocation2 + $0x740] sm:$0xff] %vm170, 0.0
        %404 = vst.msk [vmem:[#allocation2 + $0x748] sm:$0xff] %vm170, 0.0
        %405 = vst.msk [vmem:[#allocation2 + $0x750] sm:$0xff] %vm170, 0.0
        %406 = vst.msk [vmem:[#allocation2 + $0x758] sm:$0xff] %vm170, 0.0
        %407 = vst.msk [vmem:[#allocation2 + $0x760] sm:$0xff] %vm170, 0.0
        %408 = vst.msk [vmem:[#allocation2 + $0x768] sm:$0xff] %vm170, 0.0
        %409 = vst.msk [vmem:[#allocation2 + $0x770] sm:$0xff] %vm170, 0.0
        %410 = vst.msk [vmem:[#allocation2 + $0x778] sm:$0xff] %vm170, 0.0
        %411 = vst.msk [vmem:[#allocation2 + $0x780] sm:$0xff] %vm170, 0.0
        %412 = vst.msk [vmem:[#allocation2 + $0x788] sm:$0xff] %vm170, 0.0
        %413 = vst.msk [vmem:[#allocation2 + $0x790] sm:$0xff] %vm170, 0.0
        %414 = vst.msk [vmem:[#allocation2 + $0x798] sm:$0xff] %vm170, 0.0
        %415 = vst.msk [vmem:[#allocation2 + $0x7a0] sm:$0xff] %vm170, 0.0
        %416 = vst.msk [vmem:[#allocation2 + $0x7a8] sm:$0xff] %vm170, 0.0
        %417 = vst.msk [vmem:[#allocation2 + $0x7b0] sm:$0xff] %vm170, 0.0
        %418 = vst.msk [vmem:[#allocation2 + $0x7b8] sm:$0xff] %vm170, 0.0
        %419 = vst.msk [vmem:[#allocation2 + $0x7c0] sm:$0xff] %vm170, 0.0
        %420 = vst.msk [vmem:[#allocation2 + $0x7c8] sm:$0xff] %vm170, 0.0
        %421 = vst.msk [vmem:[#allocation2 + $0x7d0] sm:$0xff] %vm170, 0.0
        %422 = vst.msk [vmem:[#allocation2 + $0x7d8] sm:$0xff] %vm170, 0.0
        %423 = vst.msk [vmem:[#allocation2 + $0x7e0] sm:$0xff] %vm170, 0.0
        %424 = vst.msk [vmem:[#allocation2 + $0x7e8] sm:$0xff] %vm170, 0.0
        %425 = vst.msk [vmem:[#allocation2 + $0x7f0] sm:$0xff] %vm170, 0.0
        %426 = vst.msk [vmem:[#allocation2 + $0x7f8] sm:$0xff] %vm170, 0.0
        %427 = vst.msk [vmem:[#allocation2 + $0x800] sm:$0xff] %vm170, 0.0
        %428 = vst.msk [vmem:[#allocation2 + $0x808] sm:$0xff] %vm170, 0.0
        %429 = vst.msk [vmem:[#allocation2 + $0x810] sm:$0xff] %vm170, 0.0
        %430 = vst.msk [vmem:[#allocation2 + $0x818] sm:$0xff] %vm170, 0.0
        %431 = vst.msk [vmem:[#allocation2 + $0x820] sm:$0xff] %vm170, 0.0
        %432 = vst.msk [vmem:[#allocation2 + $0x828] sm:$0xff] %vm170, 0.0
        %433 = vst.msk [vmem:[#allocation2 + $0x830] sm:$0xff] %vm170, 0.0
        %434 = vst.msk [vmem:[#allocation2 + $0x838] sm:$0xff] %vm170, 0.0
        %435 = vst.msk [vmem:[#allocation2 + $0x840] sm:$0xff] %vm170, 0.0
        %436 = vst.msk [vmem:[#allocation2 + $0x848] sm:$0xff] %vm170, 0.0
        %437 = vst.msk [vmem:[#allocation2 + $0x850] sm:$0xff] %vm170, 0.0
        %438 = vst.msk [vmem:[#allocation2 + $0x858] sm:$0xff] %vm170, 0.0
        %439 = vst.msk [vmem:[#allocation2 + $0x860] sm:$0xff] %vm170, 0.0
        %440 = vst.msk [vmem:[#allocation2 + $0x868] sm:$0xff] %vm170, 0.0
        %441 = vst.msk [vmem:[#allocation2 + $0x870] sm:$0xff] %vm170, 0.0
        %442 = vst.msk [vmem:[#allocation2 + $0x878] sm:$0xff] %vm170, 0.0
        %443 = vst.msk [vmem:[#allocation2 + $0x880] sm:$0xff] %vm170, 0.0
        %444 = vst.msk [vmem:[#allocation2 + $0x888] sm:$0xff] %vm170, 0.0
        %445 = vst.msk [vmem:[#allocation2 + $0x890] sm:$0xff] %vm170, 0.0
        %446 = vst.msk [vmem:[#allocation2 + $0x898] sm:$0xff] %vm170, 0.0
        %447 = vst.msk [vmem:[#allocation2 + $0x8a0] sm:$0xff] %vm170, 0.0
        %448 = vst.msk [vmem:[#allocation2 + $0x8a8] sm:$0xff] %vm170, 0.0
        %449 = vst.msk [vmem:[#allocation2 + $0x8b0] sm:$0xff] %vm170, 0.0
        %450 = vst.msk [vmem:[#allocation2 + $0x8b8] sm:$0xff] %vm170, 0.0
        %451 = vst.msk [vmem:[#allocation2 + $0x8c0] sm:$0xff] %vm170, 0.0
        %452 = vst.msk [vmem:[#allocation2 + $0x8c8] sm:$0xff] %vm170, 0.0
        %453 = vst.msk [vmem:[#allocation2 + $0x8d0] sm:$0xff] %vm170, 0.0
        %454 = vst.msk [vmem:[#allocation2 + $0x8d8] sm:$0xff] %vm170, 0.0
        %455 = vst.msk [vmem:[#allocation2 + $0x8e0] sm:$0xff] %vm170, 0.0
        %456 = vst.msk [vmem:[#allocation2 + $0x8e8] sm:$0xff] %vm170, 0.0
        %457 = vst.msk [vmem:[#allocation2 + $0x8f0] sm:$0xff] %vm170, 0.0
        %458 = vst.msk [vmem:[#allocation2 + $0x8f8] sm:$0xff] %vm170, 0.0
        %459 = vst.msk [vmem:[#allocation2 + $0x900] sm:$0xff] %vm170, 0.0
        %460 = vst.msk [vmem:[#allocation2 + $0x908] sm:$0xff] %vm170, 0.0
        %461 = vst.msk [vmem:[#allocation2 + $0x910] sm:$0xff] %vm170, 0.0
        %462 = vst.msk [vmem:[#allocation2 + $0x918] sm:$0xff] %vm170, 0.0
        %463 = vst.msk [vmem:[#allocation2 + $0x920] sm:$0xff] %vm170, 0.0
        %464 = vst.msk [vmem:[#allocation2 + $0x928] sm:$0xff] %vm170, 0.0
        %465 = vst.msk [vmem:[#allocation2 + $0x930] sm:$0xff] %vm170, 0.0
        %466 = vst.msk [vmem:[#allocation2 + $0x938] sm:$0xff] %vm170, 0.0
        %467 = vst.msk [vmem:[#allocation2 + $0x940] sm:$0xff] %vm170, 0.0
        %468 = vst.msk [vmem:[#allocation2 + $0x948] sm:$0xff] %vm170, 0.0
        %469 = vst.msk [vmem:[#allocation2 + $0x950] sm:$0xff] %vm170, 0.0
        %470 = vst.msk [vmem:[#allocation2 + $0x958] sm:$0xff] %vm170, 0.0
        %471 = vst.msk [vmem:[#allocation2 + $0x960] sm:$0xff] %vm170, 0.0
        %472 = vst.msk [vmem:[#allocation2 + $0x968] sm:$0xff] %vm170, 0.0
        %473 = vst.msk [vmem:[#allocation2 + $0x970] sm:$0xff] %vm170, 0.0
        %474 = vst.msk [vmem:[#allocation2 + $0x978] sm:$0xff] %vm170, 0.0
        %475 = vst.msk [vmem:[#allocation2 + $0x980] sm:$0xff] %vm170, 0.0
        %476 = vst.msk [vmem:[#allocation2 + $0x988] sm:$0xff] %vm170, 0.0
        %477 = vst.msk [vmem:[#allocation2 + $0x990] sm:$0xff] %vm170, 0.0
        %478 = vst.msk [vmem:[#allocation2 + $0x998] sm:$0xff] %vm170, 0.0
        %479 = vst.msk [vmem:[#allocation2 + $0x9a0] sm:$0xff] %vm170, 0.0
        %480 = vst.msk [vmem:[#allocation2 + $0x9a8] sm:$0xff] %vm170, 0.0
        %481 = vst.msk [vmem:[#allocation2 + $0x9b0] sm:$0xff] %vm170, 0.0
        %482 = vst.msk [vmem:[#allocation2 + $0x9b8] sm:$0xff] %vm170, 0.0
        %483 = vst.msk [vmem:[#allocation2 + $0x9c0] sm:$0xff] %vm170, 0.0
        %484 = vst.msk [vmem:[#allocation2 + $0x9c8] sm:$0xff] %vm170, 0.0
        %485 = vst.msk [vmem:[#allocation2 + $0x9d0] sm:$0xff] %vm170, 0.0
        %486 = vst.msk [vmem:[#allocation2 + $0x9d8] sm:$0xff] %vm170, 0.0
        %487 = vst.msk [vmem:[#allocation2 + $0x9e0] sm:$0xff] %vm170, 0.0
        %488 = vst.msk [vmem:[#allocation2 + $0x9e8] sm:$0xff] %vm170, 0.0
        %489 = vst.msk [vmem:[#allocation2 + $0x9f0] sm:$0xff] %vm170, 0.0
        %490 = vst.msk [vmem:[#allocation2 + $0x9f8] sm:$0xff] %vm170, 0.0
        %491 = vst.msk [vmem:[#allocation2 + $0xa00] sm:$0xff] %vm170, 0.0
        %492 = vst.msk [vmem:[#allocation2 + $0xa08] sm:$0xff] %vm170, 0.0
        %493 = vst.msk [vmem:[#allocation2 + $0xa10] sm:$0xff] %vm170, 0.0
        %494 = vst.msk [vmem:[#allocation2 + $0xa18] sm:$0xff] %vm170, 0.0
        %495 = vst.msk [vmem:[#allocation2 + $0xa20] sm:$0xff] %vm170, 0.0
        %496 = vst.msk [vmem:[#allocation2 + $0xa28] sm:$0xff] %vm170, 0.0
        %497 = vst.msk [vmem:[#allocation2 + $0xa30] sm:$0xff] %vm170, 0.0
        %498 = vst.msk [vmem:[#allocation2 + $0xa38] sm:$0xff] %vm170, 0.0
        %499 = vst.msk [vmem:[#allocation2 + $0xa40] sm:$0xff] %vm170, 0.0
        %500 = vst.msk [vmem:[#allocation2 + $0xa48] sm:$0xff] %vm170, 0.0
        %501 = vst.msk [vmem:[#allocation2 + $0xa50] sm:$0xff] %vm170, 0.0
        %502 = vst.msk [vmem:[#allocation2 + $0xa58] sm:$0xff] %vm170, 0.0
        %503 = vst.msk [vmem:[#allocation2 + $0xa60] sm:$0xff] %vm170, 0.0
        %504 = vst.msk [vmem:[#allocation2 + $0xa68] sm:$0xff] %vm170, 0.0
        %505 = vst.msk [vmem:[#allocation2 + $0xa70] sm:$0xff] %vm170, 0.0
        %506 = vst.msk [vmem:[#allocation2 + $0xa78] sm:$0xff] %vm170, 0.0
        %507 = vst.msk [vmem:[#allocation2 + $0xa80] sm:$0xff] %vm170, 0.0
        %508 = vst.msk [vmem:[#allocation2 + $0xa88] sm:$0xff] %vm170, 0.0
        %509 = vst.msk [vmem:[#allocation2 + $0xa90] sm:$0xff] %vm170, 0.0
        %510 = vst.msk [vmem:[#allocation2 + $0xa98] sm:$0xff] %vm170, 0.0
        %511 = vst.msk [vmem:[#allocation2 + $0xaa0] sm:$0xff] %vm170, 0.0
        %512 = vst.msk [vmem:[#allocation2 + $0xaa8] sm:$0xff] %vm170, 0.0
        %513 = vst.msk [vmem:[#allocation2 + $0xab0] sm:$0xff] %vm170, 0.0
        %514 = vst.msk [vmem:[#allocation2 + $0xab8] sm:$0xff] %vm170, 0.0
        %515 = vst.msk [vmem:[#allocation2 + $0xac0] sm:$0xff] %vm170, 0.0
        %516 = vst.msk [vmem:[#allocation2 + $0xac8] sm:$0xff] %vm170, 0.0
        %517 = vst.msk [vmem:[#allocation2 + $0xad0] sm:$0xff] %vm170, 0.0
        %518 = vst.msk [vmem:[#allocation2 + $0xad8] sm:$0xff] %vm170, 0.0
        %519 = vst.msk [vmem:[#allocation2 + $0xae0] sm:$0xff] %vm170, 0.0
        %520 = vst.msk [vmem:[#allocation2 + $0xae8] sm:$0xff] %vm170, 0.0
        %521 = vst.msk [vmem:[#allocation2 + $0xaf0] sm:$0xff] %vm170, 0.0
        %522 = vst.msk [vmem:[#allocation2 + $0xaf8] sm:$0xff] %vm170, 0.0
        %523 = vst.msk [vmem:[#allocation2 + $0xb00] sm:$0xff] %vm170, 0.0
        %524 = vst.msk [vmem:[#allocation2 + $0xb08] sm:$0xff] %vm170, 0.0
        %525 = vst.msk [vmem:[#allocation2 + $0xb10] sm:$0xff] %vm170, 0.0
        %526 = vst.msk [vmem:[#allocation2 + $0xb18] sm:$0xff] %vm170, 0.0
        %527 = vst.msk [vmem:[#allocation2 + $0xb20] sm:$0xff] %vm170, 0.0
        %528 = vst.msk [vmem:[#allocation2 + $0xb28] sm:$0xff] %vm170, 0.0
        %529 = vst.msk [vmem:[#allocation2 + $0xb30] sm:$0xff] %vm170, 0.0
        %530 = vst.msk [vmem:[#allocation2 + $0xb38] sm:$0xff] %vm170, 0.0
        %531 = vst.msk [vmem:[#allocation2 + $0xb40] sm:$0xff] %vm170, 0.0
        %532 = vst.msk [vmem:[#allocation2 + $0xb48] sm:$0xff] %vm170, 0.0
        %533 = vst.msk [vmem:[#allocation2 + $0xb50] sm:$0xff] %vm170, 0.0
        %534 = vst.msk [vmem:[#allocation2 + $0xb58] sm:$0xff] %vm170, 0.0
        %535 = vst.msk [vmem:[#allocation2 + $0xb60] sm:$0xff] %vm170, 0.0
        %536 = vst.msk [vmem:[#allocation2 + $0xb68] sm:$0xff] %vm170, 0.0
        %537 = vst.msk [vmem:[#allocation2 + $0xb70] sm:$0xff] %vm170, 0.0
        %538 = vst.msk [vmem:[#allocation2 + $0xb78] sm:$0xff] %vm170, 0.0
        %539 = vst.msk [vmem:[#allocation2 + $0xb80] sm:$0xff] %vm170, 0.0
        %540 = vst.msk [vmem:[#allocation2 + $0xb88] sm:$0xff] %vm170, 0.0
        %541 = vst.msk [vmem:[#allocation2 + $0xb90] sm:$0xff] %vm170, 0.0
        %542 = vst.msk [vmem:[#allocation2 + $0xb98] sm:$0xff] %vm170, 0.0
        %543 = vst.msk [vmem:[#allocation2 + $0xba0] sm:$0xff] %vm170, 0.0
        %544 = vst.msk [vmem:[#allocation2 + $0xba8] sm:$0xff] %vm170, 0.0
        %545 = vst.msk [vmem:[#allocation2 + $0xbb0] sm:$0xff] %vm170, 0.0
        %546 = vst.msk [vmem:[#allocation2 + $0xbb8] sm:$0xff] %vm170, 0.0
        %547 = vst.msk [vmem:[#allocation2 + $0xbc0] sm:$0xff] %vm170, 0.0
        %548 = vst.msk [vmem:[#allocation2 + $0xbc8] sm:$0xff] %vm170, 0.0
        %549 = vst.msk [vmem:[#allocation2 + $0xbd0] sm:$0xff] %vm170, 0.0
        %550 = vst.msk [vmem:[#allocation2 + $0xbd8] sm:$0xff] %vm170, 0.0
        %551 = vst.msk [vmem:[#allocation2 + $0xbe0] sm:$0xff] %vm170, 0.0
        %552 = vst.msk [vmem:[#allocation2 + $0xbe8] sm:$0xff] %vm170, 0.0
        %553 = vst.msk [vmem:[#allocation2 + $0xbf0] sm:$0xff] %vm170, 0.0
        %554 = vst.msk [vmem:[#allocation2 + $0xbf8] sm:$0xff] %vm170, 0.0
        %555 = vst.msk [vmem:[#allocation2 + $0xc00] sm:$0xff] %vm170, 0.0
        %556 = vst.msk [vmem:[#allocation2 + $0xc08] sm:$0xff] %vm170, 0.0
        %557 = vst.msk [vmem:[#allocation2 + $0xc10] sm:$0xff] %vm170, 0.0
        %558 = vst.msk [vmem:[#allocation2 + $0xc18] sm:$0xff] %vm170, 0.0
        %559 = vst.msk [vmem:[#allocation2 + $0xc20] sm:$0xff] %vm170, 0.0
        %560 = vst.msk [vmem:[#allocation2 + $0xc28] sm:$0xff] %vm170, 0.0
        %561 = vst.msk [vmem:[#allocation2 + $0xc30] sm:$0xff] %vm170, 0.0
        %562 = vst.msk [vmem:[#allocation2 + $0xc38] sm:$0xff] %vm170, 0.0
        %563 = vst.msk [vmem:[#allocation2 + $0xc40] sm:$0xff] %vm170, 0.0
        %564 = vst.msk [vmem:[#allocation2 + $0xc48] sm:$0xff] %vm170, 0.0
        %565 = vst.msk [vmem:[#allocation2 + $0xc50] sm:$0xff] %vm170, 0.0
        %566 = vst.msk [vmem:[#allocation2 + $0xc58] sm:$0xff] %vm170, 0.0
        %567 = vst.msk [vmem:[#allocation2 + $0xc60] sm:$0xff] %vm170, 0.0
        %568 = vst.msk [vmem:[#allocation2 + $0xc68] sm:$0xff] %vm170, 0.0
        %569 = vst.msk [vmem:[#allocation2 + $0xc70] sm:$0xff] %vm170, 0.0
        %570 = vst.msk [vmem:[#allocation2 + $0xc78] sm:$0xff] %vm170, 0.0
        %571 = vst.msk [vmem:[#allocation2 + $0xc80] sm:$0xff] %vm170, 0.0
        %572 = vst.msk [vmem:[#allocation2 + $0xc88] sm:$0xff] %vm170, 0.0
        %573 = vst.msk [vmem:[#allocation2 + $0xc90] sm:$0xff] %vm170, 0.0
        %574 = vst.msk [vmem:[#allocation2 + $0xc98] sm:$0xff] %vm170, 0.0
        %575 = vst.msk [vmem:[#allocation2 + $0xca0] sm:$0xff] %vm170, 0.0
        %576 = vst.msk [vmem:[#allocation2 + $0xca8] sm:$0xff] %vm170, 0.0
        %577 = vst.msk [vmem:[#allocation2 + $0xcb0] sm:$0xff] %vm170, 0.0
        %578 = vst.msk [vmem:[#allocation2 + $0xcb8] sm:$0xff] %vm170, 0.0
        %579 = vst.msk [vmem:[#allocation2 + $0xcc0] sm:$0xff] %vm170, 0.0
        %580 = vst.msk [vmem:[#allocation2 + $0xcc8] sm:$0xff] %vm170, 0.0
        %581 = vst.msk [vmem:[#allocation2 + $0xcd0] sm:$0xff] %vm170, 0.0
        %582 = vst.msk [vmem:[#allocation2 + $0xcd8] sm:$0xff] %vm170, 0.0
        %583 = vst.msk [vmem:[#allocation2 + $0xce0] sm:$0xff] %vm170, 0.0
        %584 = vst.msk [vmem:[#allocation2 + $0xce8] sm:$0xff] %vm170, 0.0
        %585 = vst.msk [vmem:[#allocation2 + $0xcf0] sm:$0xff] %vm170, 0.0
        %586 = vst.msk [vmem:[#allocation2 + $0xcf8] sm:$0xff] %vm170, 0.0
        %587 = vst.msk [vmem:[#allocation2 + $0xd00] sm:$0xff] %vm170, 0.0
        %588 = vst.msk [vmem:[#allocation2 + $0xd08] sm:$0xff] %vm170, 0.0
        %589 = vst.msk [vmem:[#allocation2 + $0xd10] sm:$0xff] %vm170, 0.0
        %590 = vst.msk [vmem:[#allocation2 + $0xd18] sm:$0xff] %vm170, 0.0
        %591 = vst.msk [vmem:[#allocation2 + $0xd20] sm:$0xff] %vm170, 0.0
        %592 = vst.msk [vmem:[#allocation2 + $0xd28] sm:$0xff] %vm170, 0.0
        %593 = vst.msk [vmem:[#allocation2 + $0xd30] sm:$0xff] %vm170, 0.0
        %594 = vst.msk [vmem:[#allocation2 + $0xd38] sm:$0xff] %vm170, 0.0
        %595 = vst.msk [vmem:[#allocation2 + $0xd40] sm:$0xff] %vm170, 0.0
        %596 = vst.msk [vmem:[#allocation2 + $0xd48] sm:$0xff] %vm170, 0.0
        %597 = vst.msk [vmem:[#allocation2 + $0xd50] sm:$0xff] %vm170, 0.0
        %598 = vst.msk [vmem:[#allocation2 + $0xd58] sm:$0xff] %vm170, 0.0
        %599 = vst.msk [vmem:[#allocation2 + $0xd60] sm:$0xff] %vm170, 0.0
        %600 = vst.msk [vmem:[#allocation2 + $0xd68] sm:$0xff] %vm170, 0.0
        %601 = vst.msk [vmem:[#allocation2 + $0xd70] sm:$0xff] %vm170, 0.0
        %602 = vst.msk [vmem:[#allocation2 + $0xd78] sm:$0xff] %vm170, 0.0
        %603 = vst.msk [vmem:[#allocation2 + $0xd80] sm:$0xff] %vm170, 0.0
        %604 = vst.msk [vmem:[#allocation2 + $0xd88] sm:$0xff] %vm170, 0.0
        %605 = vst.msk [vmem:[#allocation2 + $0xd90] sm:$0xff] %vm170, 0.0
        %606 = vst.msk [vmem:[#allocation2 + $0xd98] sm:$0xff] %vm170, 0.0
        %607 = vst.msk [vmem:[#allocation2 + $0xda0] sm:$0xff] %vm170, 0.0
        %608 = vst.msk [vmem:[#allocation2 + $0xda8] sm:$0xff] %vm170, 0.0
        %609 = vst.msk [vmem:[#allocation2 + $0xdb0] sm:$0xff] %vm170, 0.0
        %610 = vst.msk [vmem:[#allocation2 + $0xdb8] sm:$0xff] %vm170, 0.0
        %611 = vst.msk [vmem:[#allocation2 + $0xdc0] sm:$0xff] %vm170, 0.0
        %612 = vst.msk [vmem:[#allocation2 + $0xdc8] sm:$0xff] %vm170, 0.0
        %613 = vst.msk [vmem:[#allocation2 + $0xdd0] sm:$0xff] %vm170, 0.0
        %614 = vst.msk [vmem:[#allocation2 + $0xdd8] sm:$0xff] %vm170, 0.0
        %615 = vst.msk [vmem:[#allocation2 + $0xde0] sm:$0xff] %vm170, 0.0
        %616 = vst.msk [vmem:[#allocation2 + $0xde8] sm:$0xff] %vm170, 0.0
        %617 = vst.msk [vmem:[#allocation2 + $0xdf0] sm:$0xff] %vm170, 0.0
        %618 = vst.msk [vmem:[#allocation2 + $0xdf8] sm:$0xff] %vm170, 0.0
        %619 = vst.msk [vmem:[#allocation2 + $0xe00] sm:$0xff] %vm170, 0.0
        %620 = vst.msk [vmem:[#allocation2 + $0xe08] sm:$0xff] %vm170, 0.0
        %621 = vst.msk [vmem:[#allocation2 + $0xe10] sm:$0xff] %vm170, 0.0
        %622 = vst.msk [vmem:[#allocation2 + $0xe18] sm:$0xff] %vm170, 0.0
        %623 = vst.msk [vmem:[#allocation2 + $0xe20] sm:$0xff] %vm170, 0.0
        %624 = vst.msk [vmem:[#allocation2 + $0xe28] sm:$0xff] %vm170, 0.0
        %625 = vst.msk [vmem:[#allocation2 + $0xe30] sm:$0xff] %vm170, 0.0
        %626 = vst.msk [vmem:[#allocation2 + $0xe38] sm:$0xff] %vm170, 0.0
        %627 = vst.msk [vmem:[#allocation2 + $0xe40] sm:$0xff] %vm170, 0.0
        %628 = vst.msk [vmem:[#allocation2 + $0xe48] sm:$0xff] %vm170, 0.0
        %629 = vst.msk [vmem:[#allocation2 + $0xe50] sm:$0xff] %vm170, 0.0
        %630 = vst.msk [vmem:[#allocation2 + $0xe58] sm:$0xff] %vm170, 0.0
        %631 = vst.msk [vmem:[#allocation2 + $0xe60] sm:$0xff] %vm170, 0.0
        %632 = vst.msk [vmem:[#allocation2 + $0xe68] sm:$0xff] %vm170, 0.0
        %633 = vst.msk [vmem:[#allocation2 + $0xe70] sm:$0xff] %vm170, 0.0
        %634 = vst.msk [vmem:[#allocation2 + $0xe78] sm:$0xff] %vm170, 0.0
        %635 = vst.msk [vmem:[#allocation2 + $0xe80] sm:$0xff] %vm170, 0.0
        %636 = vst.msk [vmem:[#allocation2 + $0xe88] sm:$0xff] %vm170, 0.0
        %637 = vst.msk [vmem:[#allocation2 + $0xe90] sm:$0xff] %vm170, 0.0
        %638 = vst.msk [vmem:[#allocation2 + $0xe98] sm:$0xff] %vm170, 0.0
        %639 = vst.msk [vmem:[#allocation2 + $0xea0] sm:$0xff] %vm170, 0.0
        %640 = vst.msk [vmem:[#allocation2 + $0xea8] sm:$0xff] %vm170, 0.0
        %641 = vst.msk [vmem:[#allocation2 + $0xeb0] sm:$0xff] %vm170, 0.0
        %642 = vst.msk [vmem:[#allocation2 + $0xeb8] sm:$0xff] %vm170, 0.0
        %643 = vst.msk [vmem:[#allocation2 + $0xec0] sm:$0xff] %vm170, 0.0
        %644 = vst.msk [vmem:[#allocation2 + $0xec8] sm:$0xff] %vm170, 0.0
        %645 = vst.msk [vmem:[#allocation2 + $0xed0] sm:$0xff] %vm170, 0.0
        %646 = vst.msk [vmem:[#allocation2 + $0xed8] sm:$0xff] %vm170, 0.0
        %647 = vst.msk [vmem:[#allocation2 + $0xee0] sm:$0xff] %vm170, 0.0
        %648 = vst.msk [vmem:[#allocation2 + $0xee8] sm:$0xff] %vm170, 0.0
        %649 = vst.msk [vmem:[#allocation2 + $0xef0] sm:$0xff] %vm170, 0.0
        %650 = vst.msk [vmem:[#allocation2 + $0xef8] sm:$0xff] %vm170, 0.0
        %651 = vst.msk [vmem:[#allocation2 + $0xf00] sm:$0xff] %vm170, 0.0
        %652 = vst.msk [vmem:[#allocation2 + $0xf08] sm:$0xff] %vm170, 0.0
        %653 = vst.msk [vmem:[#allocation2 + $0xf10] sm:$0xff] %vm170, 0.0
        %654 = vst.msk [vmem:[#allocation2 + $0xf18] sm:$0xff] %vm170, 0.0
        %655 = vst.msk [vmem:[#allocation2 + $0xf20] sm:$0xff] %vm170, 0.0
        %656 = vst.msk [vmem:[#allocation2 + $0xf28] sm:$0xff] %vm170, 0.0
        %657 = vst.msk [vmem:[#allocation2 + $0xf30] sm:$0xff] %vm170, 0.0
        %658 = vst.msk [vmem:[#allocation2 + $0xf38] sm:$0xff] %vm170, 0.0
        %659 = vst.msk [vmem:[#allocation2 + $0xf40] sm:$0xff] %vm170, 0.0
        %660 = vst.msk [vmem:[#allocation2 + $0xf48] sm:$0xff] %vm170, 0.0
        %661 = vst.msk [vmem:[#allocation2 + $0xf50] sm:$0xff] %vm170, 0.0
        %662 = vst.msk [vmem:[#allocation2 + $0xf58] sm:$0xff] %vm170, 0.0
        %663 = vst.msk [vmem:[#allocation2 + $0xf60] sm:$0xff] %vm170, 0.0
        %664 = vst.msk [vmem:[#allocation2 + $0xf68] sm:$0xff] %vm170, 0.0
        %665 = vst.msk [vmem:[#allocation2 + $0xf70] sm:$0xff] %vm170, 0.0
        %666 = vst.msk [vmem:[#allocation2 + $0xf78] sm:$0xff] %vm170, 0.0
        %667 = vst.msk [vmem:[#allocation2 + $0xf80] sm:$0xff] %vm170, 0.0
        %668 = vst.msk [vmem:[#allocation2 + $0xf88] sm:$0xff] %vm170, 0.0
        %669 = vst.msk [vmem:[#allocation2 + $0xf90] sm:$0xff] %vm170, 0.0
        %670 = vst.msk [vmem:[#allocation2 + $0xf98] sm:$0xff] %vm170, 0.0
        %671 = vst.msk [vmem:[#allocation2 + $0xfa0] sm:$0xff] %vm170, 0.0
        %672 = vst.msk [vmem:[#allocation2 + $0xfa8] sm:$0xff] %vm170, 0.0
        %673 = vst.msk [vmem:[#allocation2 + $0xfb0] sm:$0xff] %vm170, 0.0
        %674 = vst.msk [vmem:[#allocation2 + $0xfb8] sm:$0xff] %vm170, 0.0
        %675 = vst.msk [vmem:[#allocation2 + $0xfc0] sm:$0xff] %vm170, 0.0
        %676 = vst.msk [vmem:[#allocation2 + $0xfc8] sm:$0xff] %vm170, 0.0
        %677 = vst.msk [vmem:[#allocation2 + $0xfd0] sm:$0xff] %vm170, 0.0
        %678 = vst.msk [vmem:[#allocation2 + $0xfd8] sm:$0xff] %vm170, 0.0
        %679 = vst.msk [vmem:[#allocation2 + $0xfe0] sm:$0xff] %vm170, 0.0
        %680 = vst.msk [vmem:[#allocation2 + $0xfe8] sm:$0xff] %vm170, 0.0
        %681 = vst.msk [vmem:[#allocation2 + $0xff0] sm:$0xff] %vm170, 0.0
        %682 = vst.msk [vmem:[#allocation2 + $0xff8] sm:$0xff] %vm170, 0.0
        %v683 = vld [vmem:[%s168] sm:$0xf]
        %v684 = vld [vmem:[%s168 + $0x4] sm:$0xf]
        %v685 = vld [vmem:[%s168 + $0x8] sm:$0xf]
        %v686 = vld [vmem:[%s168 + $0xc] sm:$0xf]
        %v687 = vld [vmem:[%s168 + $0x10] sm:$0xf]
        %v688 = vld [vmem:[%s168 + $0x14] sm:$0xf]
        %v689 = vld [vmem:[%s168 + $0x18] sm:$0xf]
        %v690 = vld [vmem:[%s168 + $0x1c] sm:$0xf]
        %v691 = vld [vmem:[%s168 + $0x20] sm:$0xf]
        %v692 = vld [vmem:[%s168 + $0x24] sm:$0xf]
        %v693 = vld [vmem:[%s168 + $0x28] sm:$0xf]
        %v694 = vld [vmem:[%s168 + $0x2c] sm:$0xf]
        %v695 = vld [vmem:[%s168 + $0x30] sm:$0xf]
        %v696 = vld [vmem:[%s168 + $0x34] sm:$0xf]
        %v697 = vld [vmem:[%s168 + $0x38] sm:$0xf]
        %v698 = vld [vmem:[%s168 + $0x3c] sm:$0xf]
        %v699 = vld [vmem:[%s168 + $0x40] sm:$0xf]
        %v700 = vld [vmem:[%s168 + $0x44] sm:$0xf]
        %v701 = vld [vmem:[%s168 + $0x48] sm:$0xf]
        %v702 = vld [vmem:[%s168 + $0x4c] sm:$0xf]
        %v703 = vld [vmem:[%s168 + $0x50] sm:$0xf]
        %v704 = vld [vmem:[%s168 + $0x54] sm:$0xf]
        %v705 = vld [vmem:[%s168 + $0x58] sm:$0xf]
        %v706 = vld [vmem:[%s168 + $0x5c] sm:$0xf]
        %v707 = vld [vmem:[%s168 + $0x60] sm:$0xf]
        %v708 = vld [vmem:[%s168 + $0x64] sm:$0xf]
        %v709 = vld [vmem:[%s168 + $0x68] sm:$0xf]
        %v710 = vld [vmem:[%s168 + $0x6c] sm:$0xf]
        %v711 = vld [vmem:[%s168 + $0x70] sm:$0xf]
        %v712 = vld [vmem:[%s168 + $0x74] sm:$0xf]
        %v713 = vld [vmem:[%s168 + $0x78] sm:$0xf]
        %v714 = vld [vmem:[%s168 + $0x7c] sm:$0xf]
        %v715 = vunpack.c.l.bf16 %v683
        %v716 = vunpack.c.l.bf16 %v684
        %v717 = vunpack.c.l.bf16 %v685
        %v718 = vunpack.c.l.bf16 %v686
        %v719 = vunpack.c.l.bf16 %v687
        %v720 = vunpack.c.l.bf16 %v688
        %v721 = vunpack.c.l.bf16 %v689
        %v722 = vunpack.c.l.bf16 %v690
        %v723 = vunpack.c.l.bf16 %v691
        %v724 = vunpack.c.l.bf16 %v692
        %v725 = vunpack.c.l.bf16 %v693
        %v726 = vunpack.c.l.bf16 %v694
        %v727 = vunpack.c.l.bf16 %v695
        %v728 = vunpack.c.l.bf16 %v696
        %v729 = vunpack.c.l.bf16 %v697
        %v730 = vunpack.c.l.bf16 %v698
        %v731 = vunpack.c.l.bf16 %v699
        %v732 = vunpack.c.l.bf16 %v700
        %v733 = vunpack.c.l.bf16 %v701
        %v734 = vunpack.c.l.bf16 %v702
        %v735 = vunpack.c.l.bf16 %v703
        %v736 = vunpack.c.l.bf16 %v704
        %v737 = vunpack.c.l.bf16 %v705
        %v738 = vunpack.c.l.bf16 %v706
        %v739 = vunpack.c.l.bf16 %v707
        %v740 = vunpack.c.l.bf16 %v708
        %v741 = vunpack.c.l.bf16 %v709
        %v742 = vunpack.c.l.bf16 %v710
        %v743 = vunpack.c.l.bf16 %v711
        %v744 = vunpack.c.l.bf16 %v712
        %v745 = vunpack.c.l.bf16 %v713
        %v746 = vunpack.c.l.bf16 %v714
        %s747 = scalar_lea.vmem [#allocation2], 1536
        %748 = vst.msk [vmem:[%s747 + $0x18] sm:$0xff] %vm170, %v715
        %749 = vst.msk [vmem:[%s747 + $0x20] sm:$0xff] %vm170, %v716
        %750 = vst.msk [vmem:[%s747 + $0x58] sm:$0xff] %vm170, %v717
        %751 = vst.msk [vmem:[%s747 + $0x60] sm:$0xff] %vm170, %v718
        %752 = vst.msk [vmem:[%s747 + $0x98] sm:$0xff] %vm170, %v719
        %753 = vst.msk [vmem:[%s747 + $0xa0] sm:$0xff] %vm170, %v720
        %754 = vst.msk [vmem:[%s747 + $0xd8] sm:$0xff] %vm170, %v721
        %755 = vst.msk [vmem:[%s747 + $0xe0] sm:$0xff] %vm170, %v722
        %756 = vst.msk [vmem:[%s747 + $0x118] sm:$0xff] %vm170, %v723
        %757 = vst.msk [vmem:[%s747 + $0x120] sm:$0xff] %vm170, %v724
        %758 = vst.msk [vmem:[%s747 + $0x158] sm:$0xff] %vm170, %v725
        %759 = vst.msk [vmem:[%s747 + $0x160] sm:$0xff] %vm170, %v726
        %760 = vst.msk [vmem:[%s747 + $0x198] sm:$0xff] %vm170, %v727
        %761 = vst.msk [vmem:[%s747 + $0x1a0] sm:$0xff] %vm170, %v728
        %762 = vst.msk [vmem:[%s747 + $0x1d8] sm:$0xff] %vm170, %v729
        %763 = vst.msk [vmem:[%s747 + $0x1e0] sm:$0xff] %vm170, %v730
        %764 = vst.msk [vmem:[%s747 + $0x218] sm:$0xff] %vm170, %v731
        %765 = vst.msk [vmem:[%s747 + $0x220] sm:$0xff] %vm170, %v732
        %766 = vst.msk [vmem:[%s747 + $0x258] sm:$0xff] %vm170, %v733
        %767 = vst.msk [vmem:[%s747 + $0x260] sm:$0xff] %vm170, %v734
        %768 = vst.msk [vmem:[%s747 + $0x298] sm:$0xff] %vm170, %v735
        %769 = vst.msk [vmem:[%s747 + $0x2a0] sm:$0xff] %vm170, %v736
        %770 = vst.msk [vmem:[%s747 + $0x2d8] sm:$0xff] %vm170, %v737
        %771 = vst.msk [vmem:[%s747 + $0x2e0] sm:$0xff] %vm170, %v738
        %772 = vst.msk [vmem:[%s747 + $0x318] sm:$0xff] %vm170, %v739
        %773 = vst.msk [vmem:[%s747 + $0x320] sm:$0xff] %vm170, %v740
        %774 = vst.msk [vmem:[%s747 + $0x358] sm:$0xff] %vm170, %v741
        %775 = vst.msk [vmem:[%s747 + $0x360] sm:$0xff] %vm170, %v742
        %776 = vst.msk [vmem:[%s747 + $0x398] sm:$0xff] %vm170, %v743
        %777 = vst.msk [vmem:[%s747 + $0x3a0] sm:$0xff] %vm170, %v744
        %778 = vst.msk [vmem:[%s747 + $0x3d8] sm:$0xff] %vm170, %v745
        %779 = vst.msk [vmem:[%s747 + $0x3e0] sm:$0xff] %vm170, %v746
        %s780 = scalar_lea.vmem [#allocation2], 1152
        %v781 = vld [vmem:[%s780 + $0x12] sm:$0xff]
        %v782 = vld [vmem:[%s780 + $0x1a] sm:$0xff]
        %v783 = vld [vmem:[%s780 + $0x52] sm:$0xff]
        %v784 = vld [vmem:[%s780 + $0x5a] sm:$0xff]
        %v785 = vld [vmem:[%s780 + $0x92] sm:$0xff]
        %v786 = vld [vmem:[%s780 + $0x9a] sm:$0xff]
        %v787 = vld [vmem:[%s780 + $0xd2] sm:$0xff]
        %v788 = vld [vmem:[%s780 + $0xda] sm:$0xff]
        %v789 = vld [vmem:[%s780 + $0x112] sm:$0xff]
        %v790 = vld [vmem:[%s780 + $0x11a] sm:$0xff]
        %v791 = vld [vmem:[%s780 + $0x152] sm:$0xff]
        %v792 = vld [vmem:[%s780 + $0x15a] sm:$0xff]
        %v793 = vld [vmem:[%s780 + $0x192] sm:$0xff]
        %v794 = vld [vmem:[%s780 + $0x19a] sm:$0xff]
        %v795 = vld [vmem:[%s780 + $0x1d2] sm:$0xff]
        %v796 = vld [vmem:[%s780 + $0x1da] sm:$0xff]
        %v797 = vld [vmem:[%s780 + $0x212] sm:$0xff]
        %v798 = vld [vmem:[%s780 + $0x21a] sm:$0xff]
        %v799 = vld [vmem:[%s780 + $0x252] sm:$0xff]
        %v800 = vld [vmem:[%s780 + $0x25a] sm:$0xff]
        %v801 = vld [vmem:[%s780 + $0x292] sm:$0xff]
        %v802 = vld [vmem:[%s780 + $0x29a] sm:$0xff]
        %v803 = vld [vmem:[%s780 + $0x2d2] sm:$0xff]
        %v804 = vld [vmem:[%s780 + $0x2da] sm:$0xff]
        %v805 = vld [vmem:[%s780 + $0x312] sm:$0xff]
        %v806 = vld [vmem:[%s780 + $0x31a] sm:$0xff]
        %v807 = vld [vmem:[%s780 + $0x352] sm:$0xff]
        %v808 = vld [vmem:[%s780 + $0x35a] sm:$0xff]
        %v809 = vld [vmem:[%s780 + $0x392] sm:$0xff]
        %v810 = vld [vmem:[%s780 + $0x39a] sm:$0xff]
        %v811 = vld [vmem:[%s780 + $0x3d2] sm:$0xff]
        %v812 = vld [vmem:[%s780 + $0x3da] sm:$0xff]
        %v813 = vld [vmem:[%s780 + $0x18] sm:$0xff]
        %v814 = vld [vmem:[%s780 + $0x20] sm:$0xff]
        %v815 = vld [vmem:[%s780 + $0x58] sm:$0xff]
        %v816 = vld [vmem:[%s780 + $0x60] sm:$0xff]
        %v817 = vld [vmem:[%s780 + $0x98] sm:$0xff]
        %v818 = vld [vmem:[%s780 + $0xa0] sm:$0xff]
        %v819 = vld [vmem:[%s780 + $0xd8] sm:$0xff]
        %v820 = vld [vmem:[%s780 + $0xe0] sm:$0xff]
        %v821 = vld [vmem:[%s780 + $0x118] sm:$0xff]
        %v822 = vld [vmem:[%s780 + $0x120] sm:$0xff]
        %v823 = vld [vmem:[%s780 + $0x158] sm:$0xff]
        %v824 = vld [vmem:[%s780 + $0x160] sm:$0xff]
        %v825 = vld [vmem:[%s780 + $0x198] sm:$0xff]
        %v826 = vld [vmem:[%s780 + $0x1a0] sm:$0xff]
        %v827 = vld [vmem:[%s780 + $0x1d8] sm:$0xff]
        %v828 = vld [vmem:[%s780 + $0x1e0] sm:$0xff]
        %v829 = vld [vmem:[%s780 + $0x218] sm:$0xff]
        %v830 = vld [vmem:[%s780 + $0x220] sm:$0xff]
        %v831 = vld [vmem:[%s780 + $0x258] sm:$0xff]
        %v832 = vld [vmem:[%s780 + $0x260] sm:$0xff]
        %v833 = vld [vmem:[%s780 + $0x298] sm:$0xff]
        %v834 = vld [vmem:[%s780 + $0x2a0] sm:$0xff]
        %v835 = vld [vmem:[%s780 + $0x2d8] sm:$0xff]
        %v836 = vld [vmem:[%s780 + $0x2e0] sm:$0xff]
        %v837 = vld [vmem:[%s780 + $0x318] sm:$0xff]
        %v838 = vld [vmem:[%s780 + $0x320] sm:$0xff]
        %v839 = vld [vmem:[%s780 + $0x358] sm:$0xff]
        %v840 = vld [vmem:[%s780 + $0x360] sm:$0xff]
        %v841 = vld [vmem:[%s780 + $0x398] sm:$0xff]
        %v842 = vld [vmem:[%s780 + $0x3a0] sm:$0xff]
        %v843 = vld [vmem:[%s780 + $0x3d8] sm:$0xff]
        %v844 = vld [vmem:[%s780 + $0x3e0] sm:$0xff]
        %v845 = vld [vmem:[%s780 + $0x1e] sm:$0xff]
        %v846 = vld [vmem:[%s780 + $0x26] sm:$0xff]
        %v847 = vld [vmem:[%s780 + $0x5e] sm:$0xff]
        %v848 = vld [vmem:[%s780 + $0x66] sm:$0xff]
        %v849 = vld [vmem:[%s780 + $0x9e] sm:$0xff]
        %v850 = vld [vmem:[%s780 + $0xa6] sm:$0xff]
        %v851 = vld [vmem:[%s780 + $0xde] sm:$0xff]
        %v852 = vld [vmem:[%s780 + $0xe6] sm:$0xff]
        %v853 = vld [vmem:[%s780 + $0x11e] sm:$0xff]
        %v854 = vld [vmem:[%s780 + $0x126] sm:$0xff]
        %v855 = vld [vmem:[%s780 + $0x15e] sm:$0xff]
        %v856 = vld [vmem:[%s780 + $0x166] sm:$0xff]
        %v857 = vld [vmem:[%s780 + $0x19e] sm:$0xff]
        %v858 = vld [vmem:[%s780 + $0x1a6] sm:$0xff]
        %v859 = vld [vmem:[%s780 + $0x1de] sm:$0xff]
        %v860 = vld [vmem:[%s780 + $0x1e6] sm:$0xff]
        %v861 = vld [vmem:[%s780 + $0x21e] sm:$0xff]
        %v862 = vld [vmem:[%s780 + $0x226] sm:$0xff]
        %v863 = vld [vmem:[%s780 + $0x25e] sm:$0xff]
        %v864 = vld [vmem:[%s780 + $0x266] sm:$0xff]
        %v865 = vld [vmem:[%s780 + $0x29e] sm:$0xff]
        %v866 = vld [vmem:[%s780 + $0x2a6] sm:$0xff]
        %v867 = vld [vmem:[%s780 + $0x2de] sm:$0xff]
        %v868 = vld [vmem:[%s780 + $0x2e6] sm:$0xff]
        %v869 = vld [vmem:[%s780 + $0x31e] sm:$0xff]
        %v870 = vld [vmem:[%s780 + $0x326] sm:$0xff]
        %v871 = vld [vmem:[%s780 + $0x35e] sm:$0xff]
        %v872 = vld [vmem:[%s780 + $0x366] sm:$0xff]
        %v873 = vld [vmem:[%s780 + $0x39e] sm:$0xff]
        %v874 = vld [vmem:[%s780 + $0x3a6] sm:$0xff]
        %v875 = vld [vmem:[%s780 + $0x3de] sm:$0xff]
        %v876 = vld [vmem:[%s780 + $0x3e6] sm:$0xff]
        %v877 = vld [vmem:[%s747 + $0x12] sm:$0xff]
        %v878 = vld [vmem:[%s747 + $0x1a] sm:$0xff]
        %v879 = vld [vmem:[%s747 + $0x52] sm:$0xff]
        %v880 = vld [vmem:[%s747 + $0x5a] sm:$0xff]
        %v881 = vld [vmem:[%s747 + $0x92] sm:$0xff]
        %v882 = vld [vmem:[%s747 + $0x9a] sm:$0xff]
        %v883 = vld [vmem:[%s747 + $0xd2] sm:$0xff]
        %v884 = vld [vmem:[%s747 + $0xda] sm:$0xff]
        %v885 = vld [vmem:[%s747 + $0x112] sm:$0xff]
        %v886 = vld [vmem:[%s747 + $0x11a] sm:$0xff]
        %v887 = vld [vmem:[%s747 + $0x152] sm:$0xff]
        %v888 = vld [vmem:[%s747 + $0x15a] sm:$0xff]
        %v889 = vld [vmem:[%s747 + $0x192] sm:$0xff]
        %v890 = vld [vmem:[%s747 + $0x19a] sm:$0xff]
        %v891 = vld [vmem:[%s747 + $0x1d2] sm:$0xff]
        %v892 = vld [vmem:[%s747 + $0x1da] sm:$0xff]
        %v893 = vld [vmem:[%s747 + $0x212] sm:$0xff]
        %v894 = vld [vmem:[%s747 + $0x21a] sm:$0xff]
        %v895 = vld [vmem:[%s747 + $0x252] sm:$0xff]
        %v896 = vld [vmem:[%s747 + $0x25a] sm:$0xff]
        %v897 = vld [vmem:[%s747 + $0x292] sm:$0xff]
        %v898 = vld [vmem:[%s747 + $0x29a] sm:$0xff]
        %v899 = vld [vmem:[%s747 + $0x2d2] sm:$0xff]
        %v900 = vld [vmem:[%s747 + $0x2da] sm:$0xff]
        %v901 = vld [vmem:[%s747 + $0x312] sm:$0xff]
        %v902 = vld [vmem:[%s747 + $0x31a] sm:$0xff]
        %v903 = vld [vmem:[%s747 + $0x352] sm:$0xff]
        %v904 = vld [vmem:[%s747 + $0x35a] sm:$0xff]
        %v905 = vld [vmem:[%s747 + $0x392] sm:$0xff]
        %v906 = vld [vmem:[%s747 + $0x39a] sm:$0xff]
        %v907 = vld [vmem:[%s747 + $0x3d2] sm:$0xff]
        %v908 = vld [vmem:[%s747 + $0x3da] sm:$0xff]
        %v909 = vld [vmem:[%s747 + $0x18] sm:$0xff]
        %v910 = vld [vmem:[%s747 + $0x20] sm:$0xff]
        %v911 = vld [vmem:[%s747 + $0x58] sm:$0xff]
        %v912 = vld [vmem:[%s747 + $0x60] sm:$0xff]
        %v913 = vld [vmem:[%s747 + $0x98] sm:$0xff]
        %v914 = vld [vmem:[%s747 + $0xa0] sm:$0xff]
        %v915 = vld [vmem:[%s747 + $0xd8] sm:$0xff]
        %v916 = vld [vmem:[%s747 + $0xe0] sm:$0xff]
        %v917 = vld [vmem:[%s747 + $0x118] sm:$0xff]
        %v918 = vld [vmem:[%s747 + $0x120] sm:$0xff]
        %v919 = vld [vmem:[%s747 + $0x158] sm:$0xff]
        %v920 = vld [vmem:[%s747 + $0x160] sm:$0xff]
        %v921 = vld [vmem:[%s747 + $0x198] sm:$0xff]
        %v922 = vld [vmem:[%s747 + $0x1a0] sm:$0xff]
        %v923 = vld [vmem:[%s747 + $0x1d8] sm:$0xff]
        %v924 = vld [vmem:[%s747 + $0x1e0] sm:$0xff]
        %v925 = vld [vmem:[%s747 + $0x218] sm:$0xff]
        %v926 = vld [vmem:[%s747 + $0x220] sm:$0xff]
        %v927 = vld [vmem:[%s747 + $0x258] sm:$0xff]
        %v928 = vld [vmem:[%s747 + $0x260] sm:$0xff]
        %v929 = vld [vmem:[%s747 + $0x298] sm:$0xff]
        %v930 = vld [vmem:[%s747 + $0x2a0] sm:$0xff]
        %v931 = vld [vmem:[%s747 + $0x2d8] sm:$0xff]
        %v932 = vld [vmem:[%s747 + $0x2e0] sm:$0xff]
        %v933 = vld [vmem:[%s747 + $0x318] sm:$0xff]
        %v934 = vld [vmem:[%s747 + $0x320] sm:$0xff]
        %v935 = vld [vmem:[%s747 + $0x358] sm:$0xff]
        %v936 = vld [vmem:[%s747 + $0x360] sm:$0xff]
        %v937 = vld [vmem:[%s747 + $0x398] sm:$0xff]
        %v938 = vld [vmem:[%s747 + $0x3a0] sm:$0xff]
        %v939 = vld [vmem:[%s747 + $0x3d8] sm:$0xff]
        %v940 = vld [vmem:[%s747 + $0x3e0] sm:$0xff]
        %v941 = vld [vmem:[%s747 + $0x1e] sm:$0xff]
        %v942 = vld [vmem:[%s747 + $0x26] sm:$0xff]
        %v943 = vld [vmem:[%s747 + $0x5e] sm:$0xff]
        %v944 = vld [vmem:[%s747 + $0x66] sm:$0xff]
        %v945 = vld [vmem:[%s747 + $0x9e] sm:$0xff]
        %v946 = vld [vmem:[%s747 + $0xa6] sm:$0xff]
        %v947 = vld [vmem:[%s747 + $0xde] sm:$0xff]
        %v948 = vld [vmem:[%s747 + $0xe6] sm:$0xff]
        %v949 = vld [vmem:[%s747 + $0x11e] sm:$0xff]
        %v950 = vld [vmem:[%s747 + $0x126] sm:$0xff]
        %v951 = vld [vmem:[%s747 + $0x15e] sm:$0xff]
        %v952 = vld [vmem:[%s747 + $0x166] sm:$0xff]
        %v953 = vld [vmem:[%s747 + $0x19e] sm:$0xff]
        %v954 = vld [vmem:[%s747 + $0x1a6] sm:$0xff]
        %v955 = vld [vmem:[%s747 + $0x1de] sm:$0xff]
        %v956 = vld [vmem:[%s747 + $0x1e6] sm:$0xff]
        %v957 = vld [vmem:[%s747 + $0x21e] sm:$0xff]
        %v958 = vld [vmem:[%s747 + $0x226] sm:$0xff]
        %v959 = vld [vmem:[%s747 + $0x25e] sm:$0xff]
        %v960 = vld [vmem:[%s747 + $0x266] sm:$0xff]
        %v961 = vld [vmem:[%s747 + $0x29e] sm:$0xff]
        %v962 = vld [vmem:[%s747 + $0x2a6] sm:$0xff]
        %v963 = vld [vmem:[%s747 + $0x2de] sm:$0xff]
        %v964 = vld [vmem:[%s747 + $0x2e6] sm:$0xff]
        %v965 = vld [vmem:[%s747 + $0x31e] sm:$0xff]
        %v966 = vld [vmem:[%s747 + $0x326] sm:$0xff]
        %v967 = vld [vmem:[%s747 + $0x35e] sm:$0xff]
        %v968 = vld [vmem:[%s747 + $0x366] sm:$0xff]
        %v969 = vld [vmem:[%s747 + $0x39e] sm:$0xff]
        %v970 = vld [vmem:[%s747 + $0x3a6] sm:$0xff]
        %v971 = vld [vmem:[%s747 + $0x3de] sm:$0xff]
        %v972 = vld [vmem:[%s747 + $0x3e6] sm:$0xff]
        %s973 = scalar_lea.vmem [#allocation2], 1920
        %v974 = vld [vmem:[%s973 + $0x12] sm:$0xff]
        %v975 = vld [vmem:[%s973 + $0x1a] sm:$0xff]
        %v976 = vld [vmem:[%s973 + $0x52] sm:$0xff]
        %v977 = vld [vmem:[%s973 + $0x5a] sm:$0xff]
        %v978 = vld [vmem:[%s973 + $0x92] sm:$0xff]
        %v979 = vld [vmem:[%s973 + $0x9a] sm:$0xff]
        %v980 = vld [vmem:[%s973 + $0xd2] sm:$0xff]
        %v981 = vld [vmem:[%s973 + $0xda] sm:$0xff]
        %v982 = vld [vmem:[%s973 + $0x112] sm:$0xff]
        %v983 = vld [vmem:[%s973 + $0x11a] sm:$0xff]
        %v984 = vld [vmem:[%s973 + $0x152] sm:$0xff]
        %v985 = vld [vmem:[%s973 + $0x15a] sm:$0xff]
        %v986 = vld [vmem:[%s973 + $0x192] sm:$0xff]
        %v987 = vld [vmem:[%s973 + $0x19a] sm:$0xff]
        %v988 = vld [vmem:[%s973 + $0x1d2] sm:$0xff]
        %v989 = vld [vmem:[%s973 + $0x1da] sm:$0xff]
        %v990 = vld [vmem:[%s973 + $0x212] sm:$0xff]
        %v991 = vld [vmem:[%s973 + $0x21a] sm:$0xff]
        %v992 = vld [vmem:[%s973 + $0x252] sm:$0xff]
        %v993 = vld [vmem:[%s973 + $0x25a] sm:$0xff]
        %v994 = vld [vmem:[%s973 + $0x292] sm:$0xff]
        %v995 = vld [vmem:[%s973 + $0x29a] sm:$0xff]
        %v996 = vld [vmem:[%s973 + $0x2d2] sm:$0xff]
        %v997 = vld [vmem:[%s973 + $0x2da] sm:$0xff]
        %v998 = vld [vmem:[%s973 + $0x312] sm:$0xff]
        %v999 = vld [vmem:[%s973 + $0x31a] sm:$0xff]
        %v1000 = vld [vmem:[%s973 + $0x352] sm:$0xff]
        %v1001 = vld [vmem:[%s973 + $0x35a] sm:$0xff]
        %v1002 = vld [vmem:[%s973 + $0x392] sm:$0xff]
        %v1003 = vld [vmem:[%s973 + $0x39a] sm:$0xff]
        %v1004 = vld [vmem:[%s973 + $0x3d2] sm:$0xff]
        %v1005 = vld [vmem:[%s973 + $0x3da] sm:$0xff]
        %v1006 = vld [vmem:[%s973 + $0x18] sm:$0xff]
        %v1007 = vld [vmem:[%s973 + $0x20] sm:$0xff]
        %v1008 = vld [vmem:[%s973 + $0x58] sm:$0xff]
        %v1009 = vld [vmem:[%s973 + $0x60] sm:$0xff]
        %v1010 = vld [vmem:[%s973 + $0x98] sm:$0xff]
        %v1011 = vld [vmem:[%s973 + $0xa0] sm:$0xff]
        %v1012 = vld [vmem:[%s973 + $0xd8] sm:$0xff]
        %v1013 = vld [vmem:[%s973 + $0xe0] sm:$0xff]
        %v1014 = vld [vmem:[%s973 + $0x118] sm:$0xff]
        %v1015 = vld [vmem:[%s973 + $0x120] sm:$0xff]
        %v1016 = vld [vmem:[%s973 + $0x158] sm:$0xff]
        %v1017 = vld [vmem:[%s973 + $0x160] sm:$0xff]
        %v1018 = vld [vmem:[%s973 + $0x198] sm:$0xff]
        %v1019 = vld [vmem:[%s973 + $0x1a0] sm:$0xff]
        %v1020 = vld [vmem:[%s973 + $0x1d8] sm:$0xff]
        %v1021 = vld [vmem:[%s973 + $0x1e0] sm:$0xff]
        %v1022 = vld [vmem:[%s973 + $0x218] sm:$0xff]
        %v1023 = vld [vmem:[%s973 + $0x220] sm:$0xff]
        %v1024 = vld [vmem:[%s973 + $0x258] sm:$0xff]
        %v1025 = vld [vmem:[%s973 + $0x260] sm:$0xff]
        %v1026 = vld [vmem:[%s973 + $0x298] sm:$0xff]
        %v1027 = vld [vmem:[%s973 + $0x2a0] sm:$0xff]
        %v1028 = vld [vmem:[%s973 + $0x2d8] sm:$0xff]
        %v1029 = vld [vmem:[%s973 + $0x2e0] sm:$0xff]
        %v1030 = vld [vmem:[%s973 + $0x318] sm:$0xff]
        %v1031 = vld [vmem:[%s973 + $0x320] sm:$0xff]
        %v1032 = vld [vmem:[%s973 + $0x358] sm:$0xff]
        %v1033 = vld [vmem:[%s973 + $0x360] sm:$0xff]
        %v1034 = vld [vmem:[%s973 + $0x398] sm:$0xff]
        %v1035 = vld [vmem:[%s973 + $0x3a0] sm:$0xff]
        %v1036 = vld [vmem:[%s973 + $0x3d8] sm:$0xff]
        %v1037 = vld [vmem:[%s973 + $0x3e0] sm:$0xff]
        %v1038 = vld [vmem:[%s973 + $0x1e] sm:$0xff]
        %v1039 = vld [vmem:[%s973 + $0x26] sm:$0xff]
        %v1040 = vld [vmem:[%s973 + $0x5e] sm:$0xff]
        %v1041 = vld [vmem:[%s973 + $0x66] sm:$0xff]
        %v1042 = vld [vmem:[%s973 + $0x9e] sm:$0xff]
        %v1043 = vld [vmem:[%s973 + $0xa6] sm:$0xff]
        %v1044 = vld [vmem:[%s973 + $0xde] sm:$0xff]
        %v1045 = vld [vmem:[%s973 + $0xe6] sm:$0xff]
        %v1046 = vld [vmem:[%s973 + $0x11e] sm:$0xff]
        %v1047 = vld [vmem:[%s973 + $0x126] sm:$0xff]
        %v1048 = vld [vmem:[%s973 + $0x15e] sm:$0xff]
        %v1049 = vld [vmem:[%s973 + $0x166] sm:$0xff]
        %v1050 = vld [vmem:[%s973 + $0x19e] sm:$0xff]
        %v1051 = vld [vmem:[%s973 + $0x1a6] sm:$0xff]
        %v1052 = vld [vmem:[%s973 + $0x1de] sm:$0xff]
        %v1053 = vld [vmem:[%s973 + $0x1e6] sm:$0xff]
        %v1054 = vld [vmem:[%s973 + $0x21e] sm:$0xff]
        %v1055 = vld [vmem:[%s973 + $0x226] sm:$0xff]
        %v1056 = vld [vmem:[%s973 + $0x25e] sm:$0xff]
        %v1057 = vld [vmem:[%s973 + $0x266] sm:$0xff]
        %v1058 = vld [vmem:[%s973 + $0x29e] sm:$0xff]
        %v1059 = vld [vmem:[%s973 + $0x2a6] sm:$0xff]
        %v1060 = vld [vmem:[%s973 + $0x2de] sm:$0xff]
        %v1061 = vld [vmem:[%s973 + $0x2e6] sm:$0xff]
        %v1062 = vld [vmem:[%s973 + $0x31e] sm:$0xff]
        %v1063 = vld [vmem:[%s973 + $0x326] sm:$0xff]
        %v1064 = vld [vmem:[%s973 + $0x35e] sm:$0xff]
        %v1065 = vld [vmem:[%s973 + $0x366] sm:$0xff]
        %v1066 = vld [vmem:[%s973 + $0x39e] sm:$0xff]
        %v1067 = vld [vmem:[%s973 + $0x3a6] sm:$0xff]
        %v1068 = vld [vmem:[%s973 + $0x3de] sm:$0xff]
        %v1069 = vld [vmem:[%s973 + $0x3e6] sm:$0xff]
        %s1070 = scalar_lea.vmem [#allocation2], 768
        %v1071 = vld [vmem:[%s1070 + $0xc] sm:$0xff]
        %v1072 = vld [vmem:[%s1070 + $0x14] sm:$0xff]
        %v1073 = vld [vmem:[%s1070 + $0x4c] sm:$0xff]
        %v1074 = vld [vmem:[%s1070 + $0x54] sm:$0xff]
        %v1075 = vld [vmem:[%s1070 + $0x8c] sm:$0xff]
        %v1076 = vld [vmem:[%s1070 + $0x94] sm:$0xff]
        %v1077 = vld [vmem:[%s1070 + $0xcc] sm:$0xff]
        %v1078 = vld [vmem:[%s1070 + $0xd4] sm:$0xff]
        %v1079 = vld [vmem:[%s1070 + $0x10c] sm:$0xff]
        %v1080 = vld [vmem:[%s1070 + $0x114] sm:$0xff]
        %v1081 = vld [vmem:[%s1070 + $0x14c] sm:$0xff]
        %v1082 = vld [vmem:[%s1070 + $0x154] sm:$0xff]
        %v1083 = vld [vmem:[%s1070 + $0x18c] sm:$0xff]
        %v1084 = vld [vmem:[%s1070 + $0x194] sm:$0xff]
        %v1085 = vld [vmem:[%s1070 + $0x1cc] sm:$0xff]
        %v1086 = vld [vmem:[%s1070 + $0x1d4] sm:$0xff]
        %v1087 = vld [vmem:[%s1070 + $0x20c] sm:$0xff]
        %v1088 = vld [vmem:[%s1070 + $0x214] sm:$0xff]
        %v1089 = vld [vmem:[%s1070 + $0x24c] sm:$0xff]
        %v1090 = vld [vmem:[%s1070 + $0x254] sm:$0xff]
        %v1091 = vld [vmem:[%s1070 + $0x28c] sm:$0xff]
        %v1092 = vld [vmem:[%s1070 + $0x294] sm:$0xff]
        %v1093 = vld [vmem:[%s1070 + $0x2cc] sm:$0xff]
        %v1094 = vld [vmem:[%s1070 + $0x2d4] sm:$0xff]
        %v1095 = vld [vmem:[%s1070 + $0x30c] sm:$0xff]
        %v1096 = vld [vmem:[%s1070 + $0x314] sm:$0xff]
        %v1097 = vld [vmem:[%s1070 + $0x34c] sm:$0xff]
        %v1098 = vld [vmem:[%s1070 + $0x354] sm:$0xff]
        %v1099 = vld [vmem:[%s1070 + $0x38c] sm:$0xff]
        %v1100 = vld [vmem:[%s1070 + $0x394] sm:$0xff]
        %v1101 = vld [vmem:[%s1070 + $0x3cc] sm:$0xff]
        %v1102 = vld [vmem:[%s1070 + $0x3d4] sm:$0xff]
        %v1103 = vld [vmem:[%s1070 + $0x18] sm:$0xff]
        %v1104 = vld [vmem:[%s1070 + $0x20] sm:$0xff]
        %v1105 = vld [vmem:[%s1070 + $0x58] sm:$0xff]
        %v1106 = vld [vmem:[%s1070 + $0x60] sm:$0xff]
        %v1107 = vld [vmem:[%s1070 + $0x98] sm:$0xff]
        %v1108 = vld [vmem:[%s1070 + $0xa0] sm:$0xff]
        %v1109 = vld [vmem:[%s1070 + $0xd8] sm:$0xff]
        %v1110 = vld [vmem:[%s1070 + $0xe0] sm:$0xff]
        %v1111 = vld [vmem:[%s1070 + $0x118] sm:$0xff]
        %v1112 = vld [vmem:[%s1070 + $0x120] sm:$0xff]
        %v1113 = vld [vmem:[%s1070 + $0x158] sm:$0xff]
        %v1114 = vld [vmem:[%s1070 + $0x160] sm:$0xff]
        %v1115 = vld [vmem:[%s1070 + $0x198] sm:$0xff]
        %v1116 = vld [vmem:[%s1070 + $0x1a0] sm:$0xff]
        %v1117 = vld [vmem:[%s1070 + $0x1d8] sm:$0xff]
        %v1118 = vld [vmem:[%s1070 + $0x1e0] sm:$0xff]
        %v1119 = vld [vmem:[%s1070 + $0x218] sm:$0xff]
        %v1120 = vld [vmem:[%s1070 + $0x220] sm:$0xff]
        %v1121 = vld [vmem:[%s1070 + $0x258] sm:$0xff]
        %v1122 = vld [vmem:[%s1070 + $0x260] sm:$0xff]
        %v1123 = vld [vmem:[%s1070 + $0x298] sm:$0xff]
        %v1124 = vld [vmem:[%s1070 + $0x2a0] sm:$0xff]
        %v1125 = vld [vmem:[%s1070 + $0x2d8] sm:$0xff]
        %v1126 = vld [vmem:[%s1070 + $0x2e0] sm:$0xff]
        %v1127 = vld [vmem:[%s1070 + $0x318] sm:$0xff]
        %v1128 = vld [vmem:[%s1070 + $0x320] sm:$0xff]
        %v1129 = vld [vmem:[%s1070 + $0x358] sm:$0xff]
        %v1130 = vld [vmem:[%s1070 + $0x360] sm:$0xff]
        %v1131 = vld [vmem:[%s1070 + $0x398] sm:$0xff]
        %v1132 = vld [vmem:[%s1070 + $0x3a0] sm:$0xff]
        %v1133 = vld [vmem:[%s1070 + $0x3d8] sm:$0xff]
        %v1134 = vld [vmem:[%s1070 + $0x3e0] sm:$0xff]
        %v1135 = vld [vmem:[%s1070 + $0x24] sm:$0xff]
        %v1136 = vld [vmem:[%s1070 + $0x2c] sm:$0xff]
        %v1137 = vld [vmem:[%s1070 + $0x64] sm:$0xff]
        %v1138 = vld [vmem:[%s1070 + $0x6c] sm:$0xff]
        %v1139 = vld [vmem:[%s1070 + $0xa4] sm:$0xff]
        %v1140 = vld [vmem:[%s1070 + $0xac] sm:$0xff]
        %v1141 = vld [vmem:[%s1070 + $0xe4] sm:$0xff]
        %v1142 = vld [vmem:[%s1070 + $0xec] sm:$0xff]
        %v1143 = vld [vmem:[%s1070 + $0x124] sm:$0xff]
        %v1144 = vld [vmem:[%s1070 + $0x12c] sm:$0xff]
        %v1145 = vld [vmem:[%s1070 + $0x164] sm:$0xff]
        %v1146 = vld [vmem:[%s1070 + $0x16c] sm:$0xff]
        %v1147 = vld [vmem:[%s1070 + $0x1a4] sm:$0xff]
        %v1148 = vld [vmem:[%s1070 + $0x1ac] sm:$0xff]
        %v1149 = vld [vmem:[%s1070 + $0x1e4] sm:$0xff]
        %v1150 = vld [vmem:[%s1070 + $0x1ec] sm:$0xff]
        %v1151 = vld [vmem:[%s1070 + $0x224] sm:$0xff]
        %v1152 = vld [vmem:[%s1070 + $0x22c] sm:$0xff]
        %v1153 = vld [vmem:[%s1070 + $0x264] sm:$0xff]
        %v1154 = vld [vmem:[%s1070 + $0x26c] sm:$0xff]
        %v1155 = vld [vmem:[%s1070 + $0x2a4] sm:$0xff]
        %v1156 = vld [vmem:[%s1070 + $0x2ac] sm:$0xff]
        %v1157 = vld [vmem:[%s1070 + $0x2e4] sm:$0xff]
        %v1158 = vld [vmem:[%s1070 + $0x2ec] sm:$0xff]
        %v1159 = vld [vmem:[%s1070 + $0x324] sm:$0xff]
        %v1160 = vld [vmem:[%s1070 + $0x32c] sm:$0xff]
        %v1161 = vld [vmem:[%s1070 + $0x364] sm:$0xff]
        %v1162 = vld [vmem:[%s1070 + $0x36c] sm:$0xff]
        %v1163 = vld [vmem:[%s1070 + $0x3a4] sm:$0xff]
        %v1164 = vld [vmem:[%s1070 + $0x3ac] sm:$0xff]
        %v1165 = vld [vmem:[%s1070 + $0x3e4] sm:$0xff]
        %v1166 = vld [vmem:[%s1070 + $0x3ec] sm:$0xff]
        %v1167 = vld [vmem:[%s747 + $0xc] sm:$0xff]
        %v1168 = vld [vmem:[%s747 + $0x14] sm:$0xff]
        %v1169 = vld [vmem:[%s747 + $0x4c] sm:$0xff]
        %v1170 = vld [vmem:[%s747 + $0x54] sm:$0xff]
        %v1171 = vld [vmem:[%s747 + $0x8c] sm:$0xff]
        %v1172 = vld [vmem:[%s747 + $0x94] sm:$0xff]
        %v1173 = vld [vmem:[%s747 + $0xcc] sm:$0xff]
        %v1174 = vld [vmem:[%s747 + $0xd4] sm:$0xff]
        %v1175 = vld [vmem:[%s747 + $0x10c] sm:$0xff]
        %v1176 = vld [vmem:[%s747 + $0x114] sm:$0xff]
        %v1177 = vld [vmem:[%s747 + $0x14c] sm:$0xff]
        %v1178 = vld [vmem:[%s747 + $0x154] sm:$0xff]
        %v1179 = vld [vmem:[%s747 + $0x18c] sm:$0xff]
        %v1180 = vld [vmem:[%s747 + $0x194] sm:$0xff]
        %v1181 = vld [vmem:[%s747 + $0x1cc] sm:$0xff]
        %v1182 = vld [vmem:[%s747 + $0x1d4] sm:$0xff]
        %v1183 = vld [vmem:[%s747 + $0x20c] sm:$0xff]
        %v1184 = vld [vmem:[%s747 + $0x214] sm:$0xff]
        %v1185 = vld [vmem:[%s747 + $0x24c] sm:$0xff]
        %v1186 = vld [vmem:[%s747 + $0x254] sm:$0xff]
        %v1187 = vld [vmem:[%s747 + $0x28c] sm:$0xff]
        %v1188 = vld [vmem:[%s747 + $0x294] sm:$0xff]
        %v1189 = vld [vmem:[%s747 + $0x2cc] sm:$0xff]
        %v1190 = vld [vmem:[%s747 + $0x2d4] sm:$0xff]
        %v1191 = vld [vmem:[%s747 + $0x30c] sm:$0xff]
        %v1192 = vld [vmem:[%s747 + $0x314] sm:$0xff]
        %v1193 = vld [vmem:[%s747 + $0x34c] sm:$0xff]
        %v1194 = vld [vmem:[%s747 + $0x354] sm:$0xff]
        %v1195 = vld [vmem:[%s747 + $0x38c] sm:$0xff]
        %v1196 = vld [vmem:[%s747 + $0x394] sm:$0xff]
        %v1197 = vld [vmem:[%s747 + $0x3cc] sm:$0xff]
        %v1198 = vld [vmem:[%s747 + $0x3d4] sm:$0xff]
        %v1199 = vld [vmem:[%s747 + $0x24] sm:$0xff]
        %v1200 = vld [vmem:[%s747 + $0x2c] sm:$0xff]
        %v1201 = vld [vmem:[%s747 + $0x64] sm:$0xff]
        %v1202 = vld [vmem:[%s747 + $0x6c] sm:$0xff]
        %v1203 = vld [vmem:[%s747 + $0xa4] sm:$0xff]
        %v1204 = vld [vmem:[%s747 + $0xac] sm:$0xff]
        %v1205 = vld [vmem:[%s747 + $0xe4] sm:$0xff]
        %v1206 = vld [vmem:[%s747 + $0xec] sm:$0xff]
        %v1207 = vld [vmem:[%s747 + $0x124] sm:$0xff]
        %v1208 = vld [vmem:[%s747 + $0x12c] sm:$0xff]
        %v1209 = vld [vmem:[%s747 + $0x164] sm:$0xff]
        %v1210 = vld [vmem:[%s747 + $0x16c] sm:$0xff]
        %v1211 = vld [vmem:[%s747 + $0x1a4] sm:$0xff]
        %v1212 = vld [vmem:[%s747 + $0x1ac] sm:$0xff]
        %v1213 = vld [vmem:[%s747 + $0x1e4] sm:$0xff]
        %v1214 = vld [vmem:[%s747 + $0x1ec] sm:$0xff]
        %v1215 = vld [vmem:[%s747 + $0x224] sm:$0xff]
        %v1216 = vld [vmem:[%s747 + $0x22c] sm:$0xff]
        %v1217 = vld [vmem:[%s747 + $0x264] sm:$0xff]
        %v1218 = vld [vmem:[%s747 + $0x26c] sm:$0xff]
        %v1219 = vld [vmem:[%s747 + $0x2a4] sm:$0xff]
        %v1220 = vld [vmem:[%s747 + $0x2ac] sm:$0xff]
        %v1221 = vld [vmem:[%s747 + $0x2e4] sm:$0xff]
        %v1222 = vld [vmem:[%s747 + $0x2ec] sm:$0xff]
        %v1223 = vld [vmem:[%s747 + $0x324] sm:$0xff]
        %v1224 = vld [vmem:[%s747 + $0x32c] sm:$0xff]
        %v1225 = vld [vmem:[%s747 + $0x364] sm:$0xff]
        %v1226 = vld [vmem:[%s747 + $0x36c] sm:$0xff]
        %v1227 = vld [vmem:[%s747 + $0x3a4] sm:$0xff]
        %v1228 = vld [vmem:[%s747 + $0x3ac] sm:$0xff]
        %v1229 = vld [vmem:[%s747 + $0x3e4] sm:$0xff]
        %v1230 = vld [vmem:[%s747 + $0x3ec] sm:$0xff]
        %s1231 = scalar_lea.vmem [#allocation2], 2304
        %v1232 = vld [vmem:[%s1231 + $0xc] sm:$0xff]
        %v1233 = vld [vmem:[%s1231 + $0x14] sm:$0xff]
        %v1234 = vld [vmem:[%s1231 + $0x4c] sm:$0xff]
        %v1235 = vld [vmem:[%s1231 + $0x54] sm:$0xff]
        %v1236 = vld [vmem:[%s1231 + $0x8c] sm:$0xff]
        %v1237 = vld [vmem:[%s1231 + $0x94] sm:$0xff]
        %v1238 = vld [vmem:[%s1231 + $0xcc] sm:$0xff]
        %v1239 = vld [vmem:[%s1231 + $0xd4] sm:$0xff]
        %v1240 = vld [vmem:[%s1231 + $0x10c] sm:$0xff]
        %v1241 = vld [vmem:[%s1231 + $0x114] sm:$0xff]
        %v1242 = vld [vmem:[%s1231 + $0x14c] sm:$0xff]
        %v1243 = vld [vmem:[%s1231 + $0x154] sm:$0xff]
        %v1244 = vld [vmem:[%s1231 + $0x18c] sm:$0xff]
        %v1245 = vld [vmem:[%s1231 + $0x194] sm:$0xff]
        %v1246 = vld [vmem:[%s1231 + $0x1cc] sm:$0xff]
        %v1247 = vld [vmem:[%s1231 + $0x1d4] sm:$0xff]
        %v1248 = vld [vmem:[%s1231 + $0x20c] sm:$0xff]
        %v1249 = vld [vmem:[%s1231 + $0x214] sm:$0xff]
        %v1250 = vld [vmem:[%s1231 + $0x24c] sm:$0xff]
        %v1251 = vld [vmem:[%s1231 + $0x254] sm:$0xff]
        %v1252 = vld [vmem:[%s1231 + $0x28c] sm:$0xff]
        %v1253 = vld [vmem:[%s1231 + $0x294] sm:$0xff]
        %v1254 = vld [vmem:[%s1231 + $0x2cc] sm:$0xff]
        %v1255 = vld [vmem:[%s1231 + $0x2d4] sm:$0xff]
        %v1256 = vld [vmem:[%s1231 + $0x30c] sm:$0xff]
        %v1257 = vld [vmem:[%s1231 + $0x314] sm:$0xff]
        %v1258 = vld [vmem:[%s1231 + $0x34c] sm:$0xff]
        %v1259 = vld [vmem:[%s1231 + $0x354] sm:$0xff]
        %v1260 = vld [vmem:[%s1231 + $0x38c] sm:$0xff]
        %v1261 = vld [vmem:[%s1231 + $0x394] sm:$0xff]
        %v1262 = vld [vmem:[%s1231 + $0x3cc] sm:$0xff]
        %v1263 = vld [vmem:[%s1231 + $0x3d4] sm:$0xff]
        %v1264 = vld [vmem:[%s1231 + $0x18] sm:$0xff]
        %v1265 = vld [vmem:[%s1231 + $0x20] sm:$0xff]
        %v1266 = vld [vmem:[%s1231 + $0x58] sm:$0xff]
        %v1267 = vld [vmem:[%s1231 + $0x60] sm:$0xff]
        %v1268 = vld [vmem:[%s1231 + $0x98] sm:$0xff]
        %v1269 = vld [vmem:[%s1231 + $0xa0] sm:$0xff]
        %v1270 = vld [vmem:[%s1231 + $0xd8] sm:$0xff]
        %v1271 = vld [vmem:[%s1231 + $0xe0] sm:$0xff]
        %v1272 = vld [vmem:[%s1231 + $0x118] sm:$0xff]
        %v1273 = vld [vmem:[%s1231 + $0x120] sm:$0xff]
        %v1274 = vld [vmem:[%s1231 + $0x158] sm:$0xff]
        %v1275 = vld [vmem:[%s1231 + $0x160] sm:$0xff]
        %v1276 = vld [vmem:[%s1231 + $0x198] sm:$0xff]
        %v1277 = vld [vmem:[%s1231 + $0x1a0] sm:$0xff]
        %v1278 = vld [vmem:[%s1231 + $0x1d8] sm:$0xff]
        %v1279 = vld [vmem:[%s1231 + $0x1e0] sm:$0xff]
        %v1280 = vld [vmem:[%s1231 + $0x218] sm:$0xff]
        %v1281 = vld [vmem:[%s1231 + $0x220] sm:$0xff]
        %v1282 = vld [vmem:[%s1231 + $0x258] sm:$0xff]
        %v1283 = vld [vmem:[%s1231 + $0x260] sm:$0xff]
        %v1284 = vld [vmem:[%s1231 + $0x298] sm:$0xff]
        %v1285 = vld [vmem:[%s1231 + $0x2a0] sm:$0xff]
        %v1286 = vld [vmem:[%s1231 + $0x2d8] sm:$0xff]
        %v1287 = vld [vmem:[%s1231 + $0x2e0] sm:$0xff]
        %v1288 = vld [vmem:[%s1231 + $0x318] sm:$0xff]
        %v1289 = vld [vmem:[%s1231 + $0x320] sm:$0xff]
        %v1290 = vld [vmem:[%s1231 + $0x358] sm:$0xff]
        %v1291 = vld [vmem:[%s1231 + $0x360] sm:$0xff]
        %v1292 = vld [vmem:[%s1231 + $0x398] sm:$0xff]
        %v1293 = vld [vmem:[%s1231 + $0x3a0] sm:$0xff]
        %v1294 = vld [vmem:[%s1231 + $0x3d8] sm:$0xff]
        %v1295 = vld [vmem:[%s1231 + $0x3e0] sm:$0xff]
        %v1296 = vld [vmem:[%s1231 + $0x24] sm:$0xff]
        %v1297 = vld [vmem:[%s1231 + $0x2c] sm:$0xff]
        %v1298 = vld [vmem:[%s1231 + $0x64] sm:$0xff]
        %v1299 = vld [vmem:[%s1231 + $0x6c] sm:$0xff]
        %v1300 = vld [vmem:[%s1231 + $0xa4] sm:$0xff]
        %v1301 = vld [vmem:[%s1231 + $0xac] sm:$0xff]
        %v1302 = vld [vmem:[%s1231 + $0xe4] sm:$0xff]
        %v1303 = vld [vmem:[%s1231 + $0xec] sm:$0xff]
        %v1304 = vld [vmem:[%s1231 + $0x124] sm:$0xff]
        %v1305 = vld [vmem:[%s1231 + $0x12c] sm:$0xff]
        %v1306 = vld [vmem:[%s1231 + $0x164] sm:$0xff]
        %v1307 = vld [vmem:[%s1231 + $0x16c] sm:$0xff]
        %v1308 = vld [vmem:[%s1231 + $0x1a4] sm:$0xff]
        %v1309 = vld [vmem:[%s1231 + $0x1ac] sm:$0xff]
        %v1310 = vld [vmem:[%s1231 + $0x1e4] sm:$0xff]
        %v1311 = vld [vmem:[%s1231 + $0x1ec] sm:$0xff]
        %v1312 = vld [vmem:[%s1231 + $0x224] sm:$0xff]
        %v1313 = vld [vmem:[%s1231 + $0x22c] sm:$0xff]
        %v1314 = vld [vmem:[%s1231 + $0x264] sm:$0xff]
        %v1315 = vld [vmem:[%s1231 + $0x26c] sm:$0xff]
        %v1316 = vld [vmem:[%s1231 + $0x2a4] sm:$0xff]
        %v1317 = vld [vmem:[%s1231 + $0x2ac] sm:$0xff]
        %v1318 = vld [vmem:[%s1231 + $0x2e4] sm:$0xff]
        %v1319 = vld [vmem:[%s1231 + $0x2ec] sm:$0xff]
        %v1320 = vld [vmem:[%s1231 + $0x324] sm:$0xff]
        %v1321 = vld [vmem:[%s1231 + $0x32c] sm:$0xff]
        %v1322 = vld [vmem:[%s1231 + $0x364] sm:$0xff]
        %v1323 = vld [vmem:[%s1231 + $0x36c] sm:$0xff]
        %v1324 = vld [vmem:[%s1231 + $0x3a4] sm:$0xff]
        %v1325 = vld [vmem:[%s1231 + $0x3ac] sm:$0xff]
        %v1326 = vld [vmem:[%s1231 + $0x3e4] sm:$0xff]
        %v1327 = vld [vmem:[%s1231 + $0x3ec] sm:$0xff]
        %s1328 = scalar_lea.vmem [#allocation2], 384
        %v1329 = vld [vmem:[%s1328 + $0x6] sm:$0xff]
        %v1330 = vld [vmem:[%s1328 + $0xe] sm:$0xff]
        %v1331 = vld [vmem:[%s1328 + $0x46] sm:$0xff]
        %v1332 = vld [vmem:[%s1328 + $0x4e] sm:$0xff]
        %v1333 = vld [vmem:[%s1328 + $0x86] sm:$0xff]
        %v1334 = vld [vmem:[%s1328 + $0x8e] sm:$0xff]
        %v1335 = vld [vmem:[%s1328 + $0xc6] sm:$0xff]
        %v1336 = vld [vmem:[%s1328 + $0xce] sm:$0xff]
        %v1337 = vld [vmem:[%s1328 + $0x106] sm:$0xff]
        %v1338 = vld [vmem:[%s1328 + $0x10e] sm:$0xff]
        %v1339 = vld [vmem:[%s1328 + $0x146] sm:$0xff]
        %v1340 = vld [vmem:[%s1328 + $0x14e] sm:$0xff]
        %v1341 = vld [vmem:[%s1328 + $0x186] sm:$0xff]
        %v1342 = vld [vmem:[%s1328 + $0x18e] sm:$0xff]
        %v1343 = vld [vmem:[%s1328 + $0x1c6] sm:$0xff]
        %v1344 = vld [vmem:[%s1328 + $0x1ce] sm:$0xff]
        %v1345 = vld [vmem:[%s1328 + $0x206] sm:$0xff]
        %v1346 = vld [vmem:[%s1328 + $0x20e] sm:$0xff]
        %v1347 = vld [vmem:[%s1328 + $0x246] sm:$0xff]
        %v1348 = vld [vmem:[%s1328 + $0x24e] sm:$0xff]
        %v1349 = vld [vmem:[%s1328 + $0x286] sm:$0xff]
        %v1350 = vld [vmem:[%s1328 + $0x28e] sm:$0xff]
        %v1351 = vld [vmem:[%s1328 + $0x2c6] sm:$0xff]
        %v1352 = vld [vmem:[%s1328 + $0x2ce] sm:$0xff]
        %v1353 = vld [vmem:[%s1328 + $0x306] sm:$0xff]
        %v1354 = vld [vmem:[%s1328 + $0x30e] sm:$0xff]
        %v1355 = vld [vmem:[%s1328 + $0x346] sm:$0xff]
        %v1356 = vld [vmem:[%s1328 + $0x34e] sm:$0xff]
        %v1357 = vld [vmem:[%s1328 + $0x386] sm:$0xff]
        %v1358 = vld [vmem:[%s1328 + $0x38e] sm:$0xff]
        %v1359 = vld [vmem:[%s1328 + $0x3c6] sm:$0xff]
        %v1360 = vld [vmem:[%s1328 + $0x3ce] sm:$0xff]
        %v1361 = vld [vmem:[%s1328 + $0x18] sm:$0xff]
        %v1362 = vld [vmem:[%s1328 + $0x20] sm:$0xff]
        %v1363 = vld [vmem:[%s1328 + $0x58] sm:$0xff]
        %v1364 = vld [vmem:[%s1328 + $0x60] sm:$0xff]
        %v1365 = vld [vmem:[%s1328 + $0x98] sm:$0xff]
        %v1366 = vld [vmem:[%s1328 + $0xa0] sm:$0xff]
        %v1367 = vld [vmem:[%s1328 + $0xd8] sm:$0xff]
        %v1368 = vld [vmem:[%s1328 + $0xe0] sm:$0xff]
        %v1369 = vld [vmem:[%s1328 + $0x118] sm:$0xff]
        %v1370 = vld [vmem:[%s1328 + $0x120] sm:$0xff]
        %v1371 = vld [vmem:[%s1328 + $0x158] sm:$0xff]
        %v1372 = vld [vmem:[%s1328 + $0x160] sm:$0xff]
        %v1373 = vld [vmem:[%s1328 + $0x198] sm:$0xff]
        %v1374 = vld [vmem:[%s1328 + $0x1a0] sm:$0xff]
        %v1375 = vld [vmem:[%s1328 + $0x1d8] sm:$0xff]
        %v1376 = vld [vmem:[%s1328 + $0x1e0] sm:$0xff]
        %v1377 = vld [vmem:[%s1328 + $0x218] sm:$0xff]
        %v1378 = vld [vmem:[%s1328 + $0x220] sm:$0xff]
        %v1379 = vld [vmem:[%s1328 + $0x258] sm:$0xff]
        %v1380 = vld [vmem:[%s1328 + $0x260] sm:$0xff]
        %v1381 = vld [vmem:[%s1328 + $0x298] sm:$0xff]
        %v1382 = vld [vmem:[%s1328 + $0x2a0] sm:$0xff]
        %v1383 = vld [vmem:[%s1328 + $0x2d8] sm:$0xff]
        %v1384 = vld [vmem:[%s1328 + $0x2e0] sm:$0xff]
        %v1385 = vld [vmem:[%s1328 + $0x318] sm:$0xff]
        %v1386 = vld [vmem:[%s1328 + $0x320] sm:$0xff]
        %v1387 = vld [vmem:[%s1328 + $0x358] sm:$0xff]
        %v1388 = vld [vmem:[%s1328 + $0x360] sm:$0xff]
        %v1389 = vld [vmem:[%s1328 + $0x398] sm:$0xff]
        %v1390 = vld [vmem:[%s1328 + $0x3a0] sm:$0xff]
        %v1391 = vld [vmem:[%s1328 + $0x3d8] sm:$0xff]
        %v1392 = vld [vmem:[%s1328 + $0x3e0] sm:$0xff]
        %v1393 = vld [vmem:[%s1328 + $0x2a] sm:$0xff]
        %v1394 = vld [vmem:[%s1328 + $0x32] sm:$0xff]
        %v1395 = vld [vmem:[%s1328 + $0x6a] sm:$0xff]
        %v1396 = vld [vmem:[%s1328 + $0x72] sm:$0xff]
        %v1397 = vld [vmem:[%s1328 + $0xaa] sm:$0xff]
        %v1398 = vld [vmem:[%s1328 + $0xb2] sm:$0xff]
        %v1399 = vld [vmem:[%s1328 + $0xea] sm:$0xff]
        %v1400 = vld [vmem:[%s1328 + $0xf2] sm:$0xff]
        %v1401 = vld [vmem:[%s1328 + $0x12a] sm:$0xff]
        %v1402 = vld [vmem:[%s1328 + $0x132] sm:$0xff]
        %v1403 = vld [vmem:[%s1328 + $0x16a] sm:$0xff]
        %v1404 = vld [vmem:[%s1328 + $0x172] sm:$0xff]
        %v1405 = vld [vmem:[%s1328 + $0x1aa] sm:$0xff]
        %v1406 = vld [vmem:[%s1328 + $0x1b2] sm:$0xff]
        %v1407 = vld [vmem:[%s1328 + $0x1ea] sm:$0xff]
        %v1408 = vld [vmem:[%s1328 + $0x1f2] sm:$0xff]
        %v1409 = vld [vmem:[%s1328 + $0x22a] sm:$0xff]
        %v1410 = vld [vmem:[%s1328 + $0x232] sm:$0xff]
        %v1411 = vld [vmem:[%s1328 + $0x26a] sm:$0xff]
        %v1412 = vld [vmem:[%s1328 + $0x272] sm:$0xff]
        %v1413 = vld [vmem:[%s1328 + $0x2aa] sm:$0xff]
        %v1414 = vld [vmem:[%s1328 + $0x2b2] sm:$0xff]
        %v1415 = vld [vmem:[%s1328 + $0x2ea] sm:$0xff]
        %v1416 = vld [vmem:[%s1328 + $0x2f2] sm:$0xff]
        %v1417 = vld [vmem:[%s1328 + $0x32a] sm:$0xff]
        %v1418 = vld [vmem:[%s1328 + $0x332] sm:$0xff]
        %v1419 = vld [vmem:[%s1328 + $0x36a] sm:$0xff]
        %v1420 = vld [vmem:[%s1328 + $0x372] sm:$0xff]
        %v1421 = vld [vmem:[%s1328 + $0x3aa] sm:$0xff]
        %v1422 = vld [vmem:[%s1328 + $0x3b2] sm:$0xff]
        %v1423 = vld [vmem:[%s1328 + $0x3ea] sm:$0xff]
        %v1424 = vld [vmem:[%s1328 + $0x3f2] sm:$0xff]
        %v1425 = vld [vmem:[%s747 + $0x6] sm:$0xff]
        %v1426 = vld [vmem:[%s747 + $0xe] sm:$0xff]
        %v1427 = vld [vmem:[%s747 + $0x46] sm:$0xff]
        %v1428 = vld [vmem:[%s747 + $0x4e] sm:$0xff]
        %v1429 = vld [vmem:[%s747 + $0x86] sm:$0xff]
        %v1430 = vld [vmem:[%s747 + $0x8e] sm:$0xff]
        %v1431 = vld [vmem:[%s747 + $0xc6] sm:$0xff]
        %v1432 = vld [vmem:[%s747 + $0xce] sm:$0xff]
        %v1433 = vld [vmem:[%s747 + $0x106] sm:$0xff]
        %v1434 = vld [vmem:[%s747 + $0x10e] sm:$0xff]
        %v1435 = vld [vmem:[%s747 + $0x146] sm:$0xff]
        %v1436 = vld [vmem:[%s747 + $0x14e] sm:$0xff]
        %v1437 = vld [vmem:[%s747 + $0x186] sm:$0xff]
        %v1438 = vld [vmem:[%s747 + $0x18e] sm:$0xff]
        %v1439 = vld [vmem:[%s747 + $0x1c6] sm:$0xff]
        %v1440 = vld [vmem:[%s747 + $0x1ce] sm:$0xff]
        %v1441 = vld [vmem:[%s747 + $0x206] sm:$0xff]
        %v1442 = vld [vmem:[%s747 + $0x20e] sm:$0xff]
        %v1443 = vld [vmem:[%s747 + $0x246] sm:$0xff]
        %v1444 = vld [vmem:[%s747 + $0x24e] sm:$0xff]
        %v1445 = vld [vmem:[%s747 + $0x286] sm:$0xff]
        %v1446 = vld [vmem:[%s747 + $0x28e] sm:$0xff]
        %v1447 = vld [vmem:[%s747 + $0x2c6] sm:$0xff]
        %v1448 = vld [vmem:[%s747 + $0x2ce] sm:$0xff]
        %v1449 = vld [vmem:[%s747 + $0x306] sm:$0xff]
        %v1450 = vld [vmem:[%s747 + $0x30e] sm:$0xff]
        %v1451 = vld [vmem:[%s747 + $0x346] sm:$0xff]
        %v1452 = vld [vmem:[%s747 + $0x34e] sm:$0xff]
        %v1453 = vld [vmem:[%s747 + $0x386] sm:$0xff]
        %v1454 = vld [vmem:[%s747 + $0x38e] sm:$0xff]
        %v1455 = vld [vmem:[%s747 + $0x3c6] sm:$0xff]
        %v1456 = vld [vmem:[%s747 + $0x3ce] sm:$0xff]
        %v1457 = vld [vmem:[%s747 + $0x2a] sm:$0xff]
        %v1458 = vld [vmem:[%s747 + $0x32] sm:$0xff]
        %v1459 = vld [vmem:[%s747 + $0x6a] sm:$0xff]
        %v1460 = vld [vmem:[%s747 + $0x72] sm:$0xff]
        %v1461 = vld [vmem:[%s747 + $0xaa] sm:$0xff]
        %v1462 = vld [vmem:[%s747 + $0xb2] sm:$0xff]
        %v1463 = vld [vmem:[%s747 + $0xea] sm:$0xff]
        %v1464 = vld [vmem:[%s747 + $0xf2] sm:$0xff]
        %v1465 = vld [vmem:[%s747 + $0x12a] sm:$0xff]
        %v1466 = vld [vmem:[%s747 + $0x132] sm:$0xff]
        %v1467 = vld [vmem:[%s747 + $0x16a] sm:$0xff]
        %v1468 = vld [vmem:[%s747 + $0x172] sm:$0xff]
        %v1469 = vld [vmem:[%s747 + $0x1aa] sm:$0xff]
        %v1470 = vld [vmem:[%s747 + $0x1b2] sm:$0xff]
        %v1471 = vld [vmem:[%s747 + $0x1ea] sm:$0xff]
        %v1472 = vld [vmem:[%s747 + $0x1f2] sm:$0xff]
        %v1473 = vld [vmem:[%s747 + $0x22a] sm:$0xff]
        %v1474 = vld [vmem:[%s747 + $0x232] sm:$0xff]
        %v1475 = vld [vmem:[%s747 + $0x26a] sm:$0xff]
        %v1476 = vld [vmem:[%s747 + $0x272] sm:$0xff]
        %v1477 = vld [vmem:[%s747 + $0x2aa] sm:$0xff]
        %v1478 = vld [vmem:[%s747 + $0x2b2] sm:$0xff]
        %v1479 = vld [vmem:[%s747 + $0x2ea] sm:$0xff]
        %v1480 = vld [vmem:[%s747 + $0x2f2] sm:$0xff]
        %v1481 = vld [vmem:[%s747 + $0x32a] sm:$0xff]
        %v1482 = vld [vmem:[%s747 + $0x332] sm:$0xff]
        %v1483 = vld [vmem:[%s747 + $0x36a] sm:$0xff]
        %v1484 = vld [vmem:[%s747 + $0x372] sm:$0xff]
        %v1485 = vld [vmem:[%s747 + $0x3aa] sm:$0xff]
        %v1486 = vld [vmem:[%s747 + $0x3b2] sm:$0xff]
        %v1487 = vld [vmem:[%s747 + $0x3ea] sm:$0xff]
        %v1488 = vld [vmem:[%s747 + $0x3f2] sm:$0xff]
        %s1489 = scalar_lea.vmem [#allocation2], 2688
        %v1490 = vld [vmem:[%s1489 + $0x6] sm:$0xff]
        %v1491 = vld [vmem:[%s1489 + $0xe] sm:$0xff]
        %v1492 = vld [vmem:[%s1489 + $0x46] sm:$0xff]
        %v1493 = vld [vmem:[%s1489 + $0x4e] sm:$0xff]
        %v1494 = vld [vmem:[%s1489 + $0x86] sm:$0xff]
        %v1495 = vld [vmem:[%s1489 + $0x8e] sm:$0xff]
        %v1496 = vld [vmem:[%s1489 + $0xc6] sm:$0xff]
        %v1497 = vld [vmem:[%s1489 + $0xce] sm:$0xff]
        %v1498 = vld [vmem:[%s1489 + $0x106] sm:$0xff]
        %v1499 = vld [vmem:[%s1489 + $0x10e] sm:$0xff]
        %v1500 = vld [vmem:[%s1489 + $0x146] sm:$0xff]
        %v1501 = vld [vmem:[%s1489 + $0x14e] sm:$0xff]
        %v1502 = vld [vmem:[%s1489 + $0x186] sm:$0xff]
        %v1503 = vld [vmem:[%s1489 + $0x18e] sm:$0xff]
        %v1504 = vld [vmem:[%s1489 + $0x1c6] sm:$0xff]
        %v1505 = vld [vmem:[%s1489 + $0x1ce] sm:$0xff]
        %v1506 = vld [vmem:[%s1489 + $0x206] sm:$0xff]
        %v1507 = vld [vmem:[%s1489 + $0x20e] sm:$0xff]
        %v1508 = vld [vmem:[%s1489 + $0x246] sm:$0xff]
        %v1509 = vld [vmem:[%s1489 + $0x24e] sm:$0xff]
        %v1510 = vld [vmem:[%s1489 + $0x286] sm:$0xff]
        %v1511 = vld [vmem:[%s1489 + $0x28e] sm:$0xff]
        %v1512 = vld [vmem:[%s1489 + $0x2c6] sm:$0xff]
        %v1513 = vld [vmem:[%s1489 + $0x2ce] sm:$0xff]
        %v1514 = vld [vmem:[%s1489 + $0x306] sm:$0xff]
        %v1515 = vld [vmem:[%s1489 + $0x30e] sm:$0xff]
        %v1516 = vld [vmem:[%s1489 + $0x346] sm:$0xff]
        %v1517 = vld [vmem:[%s1489 + $0x34e] sm:$0xff]
        %v1518 = vld [vmem:[%s1489 + $0x386] sm:$0xff]
        %v1519 = vld [vmem:[%s1489 + $0x38e] sm:$0xff]
        %v1520 = vld [vmem:[%s1489 + $0x3c6] sm:$0xff]
        %v1521 = vld [vmem:[%s1489 + $0x3ce] sm:$0xff]
        %v1522 = vld [vmem:[%s1489 + $0x18] sm:$0xff]
        %v1523 = vld [vmem:[%s1489 + $0x20] sm:$0xff]
        %v1524 = vld [vmem:[%s1489 + $0x58] sm:$0xff]
        %v1525 = vld [vmem:[%s1489 + $0x60] sm:$0xff]
        %v1526 = vld [vmem:[%s1489 + $0x98] sm:$0xff]
        %v1527 = vld [vmem:[%s1489 + $0xa0] sm:$0xff]
        %v1528 = vld [vmem:[%s1489 + $0xd8] sm:$0xff]
        %v1529 = vld [vmem:[%s1489 + $0xe0] sm:$0xff]
        %v1530 = vld [vmem:[%s1489 + $0x118] sm:$0xff]
        %v1531 = vld [vmem:[%s1489 + $0x120] sm:$0xff]
        %v1532 = vld [vmem:[%s1489 + $0x158] sm:$0xff]
        %v1533 = vld [vmem:[%s1489 + $0x160] sm:$0xff]
        %v1534 = vld [vmem:[%s1489 + $0x198] sm:$0xff]
        %v1535 = vld [vmem:[%s1489 + $0x1a0] sm:$0xff]
        %v1536 = vld [vmem:[%s1489 + $0x1d8] sm:$0xff]
        %v1537 = vld [vmem:[%s1489 + $0x1e0] sm:$0xff]
        %v1538 = vld [vmem:[%s1489 + $0x218] sm:$0xff]
        %v1539 = vld [vmem:[%s1489 + $0x220] sm:$0xff]
        %v1540 = vld [vmem:[%s1489 + $0x258] sm:$0xff]
        %v1541 = vld [vmem:[%s1489 + $0x260] sm:$0xff]
        %v1542 = vld [vmem:[%s1489 + $0x298] sm:$0xff]
        %v1543 = vld [vmem:[%s1489 + $0x2a0] sm:$0xff]
        %v1544 = vld [vmem:[%s1489 + $0x2d8] sm:$0xff]
        %v1545 = vld [vmem:[%s1489 + $0x2e0] sm:$0xff]
        %v1546 = vld [vmem:[%s1489 + $0x318] sm:$0xff]
        %v1547 = vld [vmem:[%s1489 + $0x320] sm:$0xff]
        %v1548 = vld [vmem:[%s1489 + $0x358] sm:$0xff]
        %v1549 = vld [vmem:[%s1489 + $0x360] sm:$0xff]
        %v1550 = vld [vmem:[%s1489 + $0x398] sm:$0xff]
        %v1551 = vld [vmem:[%s1489 + $0x3a0] sm:$0xff]
        %v1552 = vld [vmem:[%s1489 + $0x3d8] sm:$0xff]
        %v1553 = vld [vmem:[%s1489 + $0x3e0] sm:$0xff]
        %v1554 = vld [vmem:[%s1489 + $0x2a] sm:$0xff]
        %v1555 = vld [vmem:[%s1489 + $0x32] sm:$0xff]
        %v1556 = vld [vmem:[%s1489 + $0x6a] sm:$0xff]
        %v1557 = vld [vmem:[%s1489 + $0x72] sm:$0xff]
        %v1558 = vld [vmem:[%s1489 + $0xaa] sm:$0xff]
        %v1559 = vld [vmem:[%s1489 + $0xb2] sm:$0xff]
        %v1560 = vld [vmem:[%s1489 + $0xea] sm:$0xff]
        %v1561 = vld [vmem:[%s1489 + $0xf2] sm:$0xff]
        %v1562 = vld [vmem:[%s1489 + $0x12a] sm:$0xff]
        %v1563 = vld [vmem:[%s1489 + $0x132] sm:$0xff]
        %v1564 = vld [vmem:[%s1489 + $0x16a] sm:$0xff]
        %v1565 = vld [vmem:[%s1489 + $0x172] sm:$0xff]
        %v1566 = vld [vmem:[%s1489 + $0x1aa] sm:$0xff]
        %v1567 = vld [vmem:[%s1489 + $0x1b2] sm:$0xff]
        %v1568 = vld [vmem:[%s1489 + $0x1ea] sm:$0xff]
        %v1569 = vld [vmem:[%s1489 + $0x1f2] sm:$0xff]
        %v1570 = vld [vmem:[%s1489 + $0x22a] sm:$0xff]
        %v1571 = vld [vmem:[%s1489 + $0x232] sm:$0xff]
        %v1572 = vld [vmem:[%s1489 + $0x26a] sm:$0xff]
        %v1573 = vld [vmem:[%s1489 + $0x272] sm:$0xff]
        %v1574 = vld [vmem:[%s1489 + $0x2aa] sm:$0xff]
        %v1575 = vld [vmem:[%s1489 + $0x2b2] sm:$0xff]
        %v1576 = vld [vmem:[%s1489 + $0x2ea] sm:$0xff]
        %v1577 = vld [vmem:[%s1489 + $0x2f2] sm:$0xff]
        %v1578 = vld [vmem:[%s1489 + $0x32a] sm:$0xff]
        %v1579 = vld [vmem:[%s1489 + $0x332] sm:$0xff]
        %v1580 = vld [vmem:[%s1489 + $0x36a] sm:$0xff]
        %v1581 = vld [vmem:[%s1489 + $0x372] sm:$0xff]
        %v1582 = vld [vmem:[%s1489 + $0x3aa] sm:$0xff]
        %v1583 = vld [vmem:[%s1489 + $0x3b2] sm:$0xff]
        %v1584 = vld [vmem:[%s1489 + $0x3ea] sm:$0xff]
        %v1585 = vld [vmem:[%s1489 + $0x3f2] sm:$0xff]
        %v1586 = vld [vmem:[#allocation2] sm:$0xff]
        %v1587 = vld [vmem:[#allocation2 + $0x8] sm:$0xff]
        %v1588 = vld [vmem:[#allocation2 + $0x40] sm:$0xff]
        %v1589 = vld [vmem:[#allocation2 + $0x48] sm:$0xff]
        %v1590 = vld [vmem:[#allocation2 + $0x80] sm:$0xff]
        %v1591 = vld [vmem:[#allocation2 + $0x88] sm:$0xff]
        %v1592 = vld [vmem:[#allocation2 + $0xc0] sm:$0xff]
        %v1593 = vld [vmem:[#allocation2 + $0xc8] sm:$0xff]
        %v1594 = vld [vmem:[#allocation2 + $0x100] sm:$0xff]
        %v1595 = vld [vmem:[#allocation2 + $0x108] sm:$0xff]
        %v1596 = vld [vmem:[#allocation2 + $0x140] sm:$0xff]
        %v1597 = vld [vmem:[#allocation2 + $0x148] sm:$0xff]
        %v1598 = vld [vmem:[#allocation2 + $0x180] sm:$0xff]
        %v1599 = vld [vmem:[#allocation2 + $0x188] sm:$0xff]
        %v1600 = vld [vmem:[#allocation2 + $0x1c0] sm:$0xff]
        %v1601 = vld [vmem:[#allocation2 + $0x1c8] sm:$0xff]
        %v1602 = vld [vmem:[#allocation2 + $0x200] sm:$0xff]
        %v1603 = vld [vmem:[#allocation2 + $0x208] sm:$0xff]
        %v1604 = vld [vmem:[#allocation2 + $0x240] sm:$0xff]
        %v1605 = vld [vmem:[#allocation2 + $0x248] sm:$0xff]
        %v1606 = vld [vmem:[#allocation2 + $0x280] sm:$0xff]
        %v1607 = vld [vmem:[#allocation2 + $0x288] sm:$0xff]
        %v1608 = vld [vmem:[#allocation2 + $0x2c0] sm:$0xff]
        %v1609 = vld [vmem:[#allocation2 + $0x2c8] sm:$0xff]
        %v1610 = vld [vmem:[#allocation2 + $0x300] sm:$0xff]
        %v1611 = vld [vmem:[#allocation2 + $0x308] sm:$0xff]
        %v1612 = vld [vmem:[#allocation2 + $0x340] sm:$0xff]
        %v1613 = vld [vmem:[#allocation2 + $0x348] sm:$0xff]
        %v1614 = vld [vmem:[#allocation2 + $0x380] sm:$0xff]
        %v1615 = vld [vmem:[#allocation2 + $0x388] sm:$0xff]
        %v1616 = vld [vmem:[#allocation2 + $0x3c0] sm:$0xff]
        %v1617 = vld [vmem:[#allocation2 + $0x3c8] sm:$0xff]
        %v1618 = vld [vmem:[#allocation2 + $0x18] sm:$0xff]
        %v1619 = vld [vmem:[#allocation2 + $0x20] sm:$0xff]
        %v1620 = vld [vmem:[#allocation2 + $0x58] sm:$0xff]
        %v1621 = vld [vmem:[#allocation2 + $0x60] sm:$0xff]
        %v1622 = vld [vmem:[#allocation2 + $0x98] sm:$0xff]
        %v1623 = vld [vmem:[#allocation2 + $0xa0] sm:$0xff]
        %v1624 = vld [vmem:[#allocation2 + $0xd8] sm:$0xff]
        %v1625 = vld [vmem:[#allocation2 + $0xe0] sm:$0xff]
        %v1626 = vld [vmem:[#allocation2 + $0x118] sm:$0xff]
        %v1627 = vld [vmem:[#allocation2 + $0x120] sm:$0xff]
        %v1628 = vld [vmem:[#allocation2 + $0x158] sm:$0xff]
        %v1629 = vld [vmem:[#allocation2 + $0x160] sm:$0xff]
        %v1630 = vld [vmem:[#allocation2 + $0x198] sm:$0xff]
        %v1631 = vld [vmem:[#allocation2 + $0x1a0] sm:$0xff]
        %v1632 = vld [vmem:[#allocation2 + $0x1d8] sm:$0xff]
        %v1633 = vld [vmem:[#allocation2 + $0x1e0] sm:$0xff]
        %v1634 = vld [vmem:[#allocation2 + $0x218] sm:$0xff]
        %v1635 = vld [vmem:[#allocation2 + $0x220] sm:$0xff]
        %v1636 = vld [vmem:[#allocation2 + $0x258] sm:$0xff]
        %v1637 = vld [vmem:[#allocation2 + $0x260] sm:$0xff]
        %v1638 = vld [vmem:[#allocation2 + $0x298] sm:$0xff]
        %v1639 = vld [vmem:[#allocation2 + $0x2a0] sm:$0xff]
        %v1640 = vld [vmem:[#allocation2 + $0x2d8] sm:$0xff]
        %v1641 = vld [vmem:[#allocation2 + $0x2e0] sm:$0xff]
        %v1642 = vld [vmem:[#allocation2 + $0x318] sm:$0xff]
        %v1643 = vld [vmem:[#allocation2 + $0x320] sm:$0xff]
        %v1644 = vld [vmem:[#allocation2 + $0x358] sm:$0xff]
        %v1645 = vld [vmem:[#allocation2 + $0x360] sm:$0xff]
        %v1646 = vld [vmem:[#allocation2 + $0x398] sm:$0xff]
        %v1647 = vld [vmem:[#allocation2 + $0x3a0] sm:$0xff]
        %v1648 = vld [vmem:[#allocation2 + $0x3d8] sm:$0xff]
        %v1649 = vld [vmem:[#allocation2 + $0x3e0] sm:$0xff]
        %v1650 = vld [vmem:[#allocation2 + $0x30] sm:$0xff]
        %v1651 = vld [vmem:[#allocation2 + $0x38] sm:$0xff]
        %v1652 = vld [vmem:[#allocation2 + $0x70] sm:$0xff]
        %v1653 = vld [vmem:[#allocation2 + $0x78] sm:$0xff]
        %v1654 = vld [vmem:[#allocation2 + $0xb0] sm:$0xff]
        %v1655 = vld [vmem:[#allocation2 + $0xb8] sm:$0xff]
        %v1656 = vld [vmem:[#allocation2 + $0xf0] sm:$0xff]
        %v1657 = vld [vmem:[#allocation2 + $0xf8] sm:$0xff]
        %v1658 = vld [vmem:[#allocation2 + $0x130] sm:$0xff]
        %v1659 = vld [vmem:[#allocation2 + $0x138] sm:$0xff]
        %v1660 = vld [vmem:[#allocation2 + $0x170] sm:$0xff]
        %v1661 = vld [vmem:[#allocation2 + $0x178] sm:$0xff]
        %v1662 = vld [vmem:[#allocation2 + $0x1b0] sm:$0xff]
        %v1663 = vld [vmem:[#allocation2 + $0x1b8] sm:$0xff]
        %v1664 = vld [vmem:[#allocation2 + $0x1f0] sm:$0xff]
        %v1665 = vld [vmem:[#allocation2 + $0x1f8] sm:$0xff]
        %v1666 = vld [vmem:[#allocation2 + $0x230] sm:$0xff]
        %v1667 = vld [vmem:[#allocation2 + $0x238] sm:$0xff]
        %v1668 = vld [vmem:[#allocation2 + $0x270] sm:$0xff]
        %v1669 = vld [vmem:[#allocation2 + $0x278] sm:$0xff]
        %v1670 = vld [vmem:[#allocation2 + $0x2b0] sm:$0xff]
        %v1671 = vld [vmem:[#allocation2 + $0x2b8] sm:$0xff]
        %v1672 = vld [vmem:[#allocation2 + $0x2f0] sm:$0xff]
        %v1673 = vld [vmem:[#allocation2 + $0x2f8] sm:$0xff]
        %v1674 = vld [vmem:[#allocation2 + $0x330] sm:$0xff]
        %v1675 = vld [vmem:[#allocation2 + $0x338] sm:$0xff]
        %v1676 = vld [vmem:[#allocation2 + $0x370] sm:$0xff]
        %v1677 = vld [vmem:[#allocation2 + $0x378] sm:$0xff]
        %v1678 = vld [vmem:[#allocation2 + $0x3b0] sm:$0xff]
        %v1679 = vld [vmem:[#allocation2 + $0x3b8] sm:$0xff]
        %v1680 = vld [vmem:[#allocation2 + $0x3f0] sm:$0xff]
        %v1681 = vld [vmem:[#allocation2 + $0x3f8] sm:$0xff]
        %v1682 = vld [vmem:[%s747] sm:$0xff]
        %v1683 = vld [vmem:[%s747 + $0x8] sm:$0xff]
        %v1684 = vld [vmem:[%s747 + $0x40] sm:$0xff]
        %v1685 = vld [vmem:[%s747 + $0x48] sm:$0xff]
        %v1686 = vld [vmem:[%s747 + $0x80] sm:$0xff]
        %v1687 = vld [vmem:[%s747 + $0x88] sm:$0xff]
        %v1688 = vld [vmem:[%s747 + $0xc0] sm:$0xff]
        %v1689 = vld [vmem:[%s747 + $0xc8] sm:$0xff]
        %v1690 = vld [vmem:[%s747 + $0x100] sm:$0xff]
        %v1691 = vld [vmem:[%s747 + $0x108] sm:$0xff]
        %v1692 = vld [vmem:[%s747 + $0x140] sm:$0xff]
        %v1693 = vld [vmem:[%s747 + $0x148] sm:$0xff]
        %v1694 = vld [vmem:[%s747 + $0x180] sm:$0xff]
        %v1695 = vld [vmem:[%s747 + $0x188] sm:$0xff]
        %v1696 = vld [vmem:[%s747 + $0x1c0] sm:$0xff]
        %v1697 = vld [vmem:[%s747 + $0x1c8] sm:$0xff]
        %v1698 = vld [vmem:[%s747 + $0x200] sm:$0xff]
        %v1699 = vld [vmem:[%s747 + $0x208] sm:$0xff]
        %v1700 = vld [vmem:[%s747 + $0x240] sm:$0xff]
        %v1701 = vld [vmem:[%s747 + $0x248] sm:$0xff]
        %v1702 = vld [vmem:[%s747 + $0x280] sm:$0xff]
        %v1703 = vld [vmem:[%s747 + $0x288] sm:$0xff]
        %v1704 = vld [vmem:[%s747 + $0x2c0] sm:$0xff]
        %v1705 = vld [vmem:[%s747 + $0x2c8] sm:$0xff]
        %v1706 = vld [vmem:[%s747 + $0x300] sm:$0xff]
        %v1707 = vld [vmem:[%s747 + $0x308] sm:$0xff]
        %v1708 = vld [vmem:[%s747 + $0x340] sm:$0xff]
        %v1709 = vld [vmem:[%s747 + $0x348] sm:$0xff]
        %v1710 = vld [vmem:[%s747 + $0x380] sm:$0xff]
        %v1711 = vld [vmem:[%s747 + $0x388] sm:$0xff]
        %v1712 = vld [vmem:[%s747 + $0x3c0] sm:$0xff]
        %v1713 = vld [vmem:[%s747 + $0x3c8] sm:$0xff]
        %v1714 = vld [vmem:[%s747 + $0x30] sm:$0xff]
        %v1715 = vld [vmem:[%s747 + $0x38] sm:$0xff]
        %v1716 = vld [vmem:[%s747 + $0x70] sm:$0xff]
        %v1717 = vld [vmem:[%s747 + $0x78] sm:$0xff]
        %v1718 = vld [vmem:[%s747 + $0xb0] sm:$0xff]
        %v1719 = vld [vmem:[%s747 + $0xb8] sm:$0xff]
        %v1720 = vld [vmem:[%s747 + $0xf0] sm:$0xff]
        %v1721 = vld [vmem:[%s747 + $0xf8] sm:$0xff]
        %v1722 = vld [vmem:[%s747 + $0x130] sm:$0xff]
        %v1723 = vld [vmem:[%s747 + $0x138] sm:$0xff]
        %v1724 = vld [vmem:[%s747 + $0x170] sm:$0xff]
        %v1725 = vld [vmem:[%s747 + $0x178] sm:$0xff]
        %v1726 = vld [vmem:[%s747 + $0x1b0] sm:$0xff]
        %v1727 = vld [vmem:[%s747 + $0x1b8] sm:$0xff]
        %v1728 = vld [vmem:[%s747 + $0x1f0] sm:$0xff]
        %v1729 = vld [vmem:[%s747 + $0x1f8] sm:$0xff]
        %v1730 = vld [vmem:[%s747 + $0x230] sm:$0xff]
        %v1731 = vld [vmem:[%s747 + $0x238] sm:$0xff]
        %v1732 = vld [vmem:[%s747 + $0x270] sm:$0xff]
        %v1733 = vld [vmem:[%s747 + $0x278] sm:$0xff]
        %v1734 = vld [vmem:[%s747 + $0x2b0] sm:$0xff]
        %v1735 = vld [vmem:[%s747 + $0x2b8] sm:$0xff]
        %v1736 = vld [vmem:[%s747 + $0x2f0] sm:$0xff]
        %v1737 = vld [vmem:[%s747 + $0x2f8] sm:$0xff]
        %v1738 = vld [vmem:[%s747 + $0x330] sm:$0xff]
        %v1739 = vld [vmem:[%s747 + $0x338] sm:$0xff]
        %v1740 = vld [vmem:[%s747 + $0x370] sm:$0xff]
        %v1741 = vld [vmem:[%s747 + $0x378] sm:$0xff]
        %v1742 = vld [vmem:[%s747 + $0x3b0] sm:$0xff]
        %v1743 = vld [vmem:[%s747 + $0x3b8] sm:$0xff]
        %v1744 = vld [vmem:[%s747 + $0x3f0] sm:$0xff]
        %v1745 = vld [vmem:[%s747 + $0x3f8] sm:$0xff]
        %s1746 = scalar_lea.vmem [#allocation2], 3072
        %v1747 = vld [vmem:[%s1746] sm:$0xff]
        %v1748 = vld [vmem:[%s1746 + $0x8] sm:$0xff]
        %v1749 = vld [vmem:[%s1746 + $0x40] sm:$0xff]
        %v1750 = vld [vmem:[%s1746 + $0x48] sm:$0xff]
        %v1751 = vld [vmem:[%s1746 + $0x80] sm:$0xff]
        %v1752 = vld [vmem:[%s1746 + $0x88] sm:$0xff]
        %v1753 = vld [vmem:[%s1746 + $0xc0] sm:$0xff]
        %v1754 = vld [vmem:[%s1746 + $0xc8] sm:$0xff]
        %v1755 = vld [vmem:[%s1746 + $0x100] sm:$0xff]
        %v1756 = vld [vmem:[%s1746 + $0x108] sm:$0xff]
        %v1757 = vld [vmem:[%s1746 + $0x140] sm:$0xff]
        %v1758 = vld [vmem:[%s1746 + $0x148] sm:$0xff]
        %v1759 = vld [vmem:[%s1746 + $0x180] sm:$0xff]
        %v1760 = vld [vmem:[%s1746 + $0x188] sm:$0xff]
        %v1761 = vld [vmem:[%s1746 + $0x1c0] sm:$0xff]
        %v1762 = vld [vmem:[%s1746 + $0x1c8] sm:$0xff]
        %v1763 = vld [vmem:[%s1746 + $0x200] sm:$0xff]
        %v1764 = vld [vmem:[%s1746 + $0x208] sm:$0xff]
        %v1765 = vld [vmem:[%s1746 + $0x240] sm:$0xff]
        %v1766 = vld [vmem:[%s1746 + $0x248] sm:$0xff]
        %v1767 = vld [vmem:[%s1746 + $0x280] sm:$0xff]
        %v1768 = vld [vmem:[%s1746 + $0x288] sm:$0xff]
        %v1769 = vld [vmem:[%s1746 + $0x2c0] sm:$0xff]
        %v1770 = vld [vmem:[%s1746 + $0x2c8] sm:$0xff]
        %v1771 = vld [vmem:[%s1746 + $0x300] sm:$0xff]
        %v1772 = vld [vmem:[%s1746 + $0x308] sm:$0xff]
        %v1773 = vld [vmem:[%s1746 + $0x340] sm:$0xff]
        %v1774 = vld [vmem:[%s1746 + $0x348] sm:$0xff]
        %v1775 = vld [vmem:[%s1746 + $0x380] sm:$0xff]
        %v1776 = vld [vmem:[%s1746 + $0x388] sm:$0xff]
        %v1777 = vld [vmem:[%s1746 + $0x3c0] sm:$0xff]
        %v1778 = vld [vmem:[%s1746 + $0x3c8] sm:$0xff]
        %v1779 = vld [vmem:[%s1746 + $0x18] sm:$0xff]
        %v1780 = vld [vmem:[%s1746 + $0x20] sm:$0xff]
        %v1781 = vld [vmem:[%s1746 + $0x58] sm:$0xff]
        %v1782 = vld [vmem:[%s1746 + $0x60] sm:$0xff]
        %v1783 = vld [vmem:[%s1746 + $0x98] sm:$0xff]
        %v1784 = vld [vmem:[%s1746 + $0xa0] sm:$0xff]
        %v1785 = vld [vmem:[%s1746 + $0xd8] sm:$0xff]
        %v1786 = vld [vmem:[%s1746 + $0xe0] sm:$0xff]
        %v1787 = vld [vmem:[%s1746 + $0x118] sm:$0xff]
        %v1788 = vld [vmem:[%s1746 + $0x120] sm:$0xff]
        %v1789 = vld [vmem:[%s1746 + $0x158] sm:$0xff]
        %v1790 = vld [vmem:[%s1746 + $0x160] sm:$0xff]
        %v1791 = vld [vmem:[%s1746 + $0x198] sm:$0xff]
        %v1792 = vld [vmem:[%s1746 + $0x1a0] sm:$0xff]
        %v1793 = vld [vmem:[%s1746 + $0x1d8] sm:$0xff]
        %v1794 = vld [vmem:[%s1746 + $0x1e0] sm:$0xff]
        %v1795 = vld [vmem:[%s1746 + $0x218] sm:$0xff]
        %v1796 = vld [vmem:[%s1746 + $0x220] sm:$0xff]
        %v1797 = vld [vmem:[%s1746 + $0x258] sm:$0xff]
        %v1798 = vld [vmem:[%s1746 + $0x260] sm:$0xff]
        %v1799 = vld [vmem:[%s1746 + $0x298] sm:$0xff]
        %v1800 = vld [vmem:[%s1746 + $0x2a0] sm:$0xff]
        %v1801 = vld [vmem:[%s1746 + $0x2d8] sm:$0xff]
        %v1802 = vld [vmem:[%s1746 + $0x2e0] sm:$0xff]
        %v1803 = vld [vmem:[%s1746 + $0x318] sm:$0xff]
        %v1804 = vld [vmem:[%s1746 + $0x320] sm:$0xff]
        %v1805 = vld [vmem:[%s1746 + $0x358] sm:$0xff]
        %v1806 = vld [vmem:[%s1746 + $0x360] sm:$0xff]
        %v1807 = vld [vmem:[%s1746 + $0x398] sm:$0xff]
        %v1808 = vld [vmem:[%s1746 + $0x3a0] sm:$0xff]
        %v1809 = vld [vmem:[%s1746 + $0x3d8] sm:$0xff]
        %v1810 = vld [vmem:[%s1746 + $0x3e0] sm:$0xff]
        %v1811 = vld [vmem:[%s1746 + $0x30] sm:$0xff]
        %v1812 = vld [vmem:[%s1746 + $0x38] sm:$0xff]
        %v1813 = vld [vmem:[%s1746 + $0x70] sm:$0xff]
        %v1814 = vld [vmem:[%s1746 + $0x78] sm:$0xff]
        %v1815 = vld [vmem:[%s1746 + $0xb0] sm:$0xff]
        %v1816 = vld [vmem:[%s1746 + $0xb8] sm:$0xff]
        %v1817 = vld [vmem:[%s1746 + $0xf0] sm:$0xff]
        %v1818 = vld [vmem:[%s1746 + $0xf8] sm:$0xff]
        %v1819 = vld [vmem:[%s1746 + $0x130] sm:$0xff]
        %v1820 = vld [vmem:[%s1746 + $0x138] sm:$0xff]
        %v1821 = vld [vmem:[%s1746 + $0x170] sm:$0xff]
        %v1822 = vld [vmem:[%s1746 + $0x178] sm:$0xff]
        %v1823 = vld [vmem:[%s1746 + $0x1b0] sm:$0xff]
        %v1824 = vld [vmem:[%s1746 + $0x1b8] sm:$0xff]
        %v1825 = vld [vmem:[%s1746 + $0x1f0] sm:$0xff]
        %v1826 = vld [vmem:[%s1746 + $0x1f8] sm:$0xff]
        %v1827 = vld [vmem:[%s1746 + $0x230] sm:$0xff]
        %v1828 = vld [vmem:[%s1746 + $0x238] sm:$0xff]
        %v1829 = vld [vmem:[%s1746 + $0x270] sm:$0xff]
        %v1830 = vld [vmem:[%s1746 + $0x278] sm:$0xff]
        %v1831 = vld [vmem:[%s1746 + $0x2b0] sm:$0xff]
        %v1832 = vld [vmem:[%s1746 + $0x2b8] sm:$0xff]
        %v1833 = vld [vmem:[%s1746 + $0x2f0] sm:$0xff]
        %v1834 = vld [vmem:[%s1746 + $0x2f8] sm:$0xff]
        %v1835 = vld [vmem:[%s1746 + $0x330] sm:$0xff]
        %v1836 = vld [vmem:[%s1746 + $0x338] sm:$0xff]
        %v1837 = vld [vmem:[%s1746 + $0x370] sm:$0xff]
        %v1838 = vld [vmem:[%s1746 + $0x378] sm:$0xff]
        %v1839 = vld [vmem:[%s1746 + $0x3b0] sm:$0xff]
        %v1840 = vld [vmem:[%s1746 + $0x3b8] sm:$0xff]
        %v1841 = vld [vmem:[%s1746 + $0x3f0] sm:$0xff]
        %v1842 = vld [vmem:[%s1746 + $0x3f8] sm:$0xff]
        %1875 = vrot.lane.b32.xlu0 %v813, 4
        %v1876 = vpop.permute.xlu0 %1875
        %1877 = vrot.lane.b32.xlu0 %v814, 4
        %v1878 = vpop.permute.xlu0 %1877
        %1879 = vrot.lane.b32.xlu0 %v815, 4
        %v1880 = vpop.permute.xlu0 %1879
        %1881 = vrot.lane.b32.xlu0 %v816, 4
        %v1882 = vpop.permute.xlu0 %1881
        %1883 = vrot.lane.b32.xlu0 %v817, 4
        %v1884 = vpop.permute.xlu0 %1883
        %1885 = vrot.lane.b32.xlu0 %v818, 4
        %v1886 = vpop.permute.xlu0 %1885
        %1887 = vrot.lane.b32.xlu0 %v819, 4
        %v1888 = vpop.permute.xlu0 %1887
        %1889 = vrot.lane.b32.xlu0 %v820, 4
        %v1890 = vpop.permute.xlu0 %1889
        %1891 = vrot.lane.b32.xlu0 %v821, 4
        %v1892 = vpop.permute.xlu0 %1891
        %1893 = vrot.lane.b32.xlu0 %v822, 4
        %v1894 = vpop.permute.xlu0 %1893
        %1895 = vrot.lane.b32.xlu0 %v823, 4
        %v1896 = vpop.permute.xlu0 %1895
        %1897 = vrot.lane.b32.xlu0 %v824, 4
        %v1898 = vpop.permute.xlu0 %1897
        %1899 = vrot.lane.b32.xlu0 %v825, 4
        %v1900 = vpop.permute.xlu0 %1899
        %1901 = vrot.lane.b32.xlu0 %v826, 4
        %v1902 = vpop.permute.xlu0 %1901
        %1903 = vrot.lane.b32.xlu0 %v827, 4
        %v1904 = vpop.permute.xlu0 %1903
        %1905 = vrot.lane.b32.xlu0 %v828, 4
        %v1906 = vpop.permute.xlu0 %1905
        %1907 = vrot.lane.b32.xlu0 %v829, 4
        %v1908 = vpop.permute.xlu0 %1907
        %1909 = vrot.lane.b32.xlu0 %v830, 4
        %v1910 = vpop.permute.xlu0 %1909
        %1911 = vrot.lane.b32.xlu0 %v831, 4
        %v1912 = vpop.permute.xlu0 %1911
        %1913 = vrot.lane.b32.xlu0 %v832, 4
        %v1914 = vpop.permute.xlu0 %1913
        %1915 = vrot.lane.b32.xlu0 %v833, 4
        %v1916 = vpop.permute.xlu0 %1915
        %1917 = vrot.lane.b32.xlu0 %v834, 4
        %v1918 = vpop.permute.xlu0 %1917
        %1919 = vrot.lane.b32.xlu0 %v835, 4
        %v1920 = vpop.permute.xlu0 %1919
        %1921 = vrot.lane.b32.xlu0 %v836, 4
        %v1922 = vpop.permute.xlu0 %1921
        %1923 = vrot.lane.b32.xlu0 %v837, 4
        %v1924 = vpop.permute.xlu0 %1923
        %1925 = vrot.lane.b32.xlu0 %v838, 4
        %v1926 = vpop.permute.xlu0 %1925
        %1927 = vrot.lane.b32.xlu0 %v839, 4
        %v1928 = vpop.permute.xlu0 %1927
        %1929 = vrot.lane.b32.xlu0 %v840, 4
        %v1930 = vpop.permute.xlu0 %1929
        %1931 = vrot.lane.b32.xlu0 %v841, 4
        %v1932 = vpop.permute.xlu0 %1931
        %1933 = vrot.lane.b32.xlu0 %v842, 4
        %v1934 = vpop.permute.xlu0 %1933
        %1935 = vrot.lane.b32.xlu0 %v843, 4
        %v1936 = vpop.permute.xlu0 %1935
        %1937 = vrot.lane.b32.xlu0 %v844, 4
        %v1938 = vpop.permute.xlu0 %1937
        %2003 = vrot.lane.b32.xlu0 %v845, 8
        %v2004 = vpop.permute.xlu0 %2003
        %2005 = vrot.lane.b32.xlu0 %v846, 8
        %v2006 = vpop.permute.xlu0 %2005
        %2007 = vrot.lane.b32.xlu0 %v847, 8
        %v2008 = vpop.permute.xlu0 %2007
        %2009 = vrot.lane.b32.xlu0 %v848, 8
        %v2010 = vpop.permute.xlu0 %2009
        %2011 = vrot.lane.b32.xlu0 %v849, 8
        %v2012 = vpop.permute.xlu0 %2011
        %2013 = vrot.lane.b32.xlu0 %v850, 8
        %v2014 = vpop.permute.xlu0 %2013
        %2015 = vrot.lane.b32.xlu0 %v851, 8
        %v2016 = vpop.permute.xlu0 %2015
        %2017 = vrot.lane.b32.xlu0 %v852, 8
        %v2018 = vpop.permute.xlu0 %2017
        %2019 = vrot.lane.b32.xlu0 %v853, 8
        %v2020 = vpop.permute.xlu0 %2019
        %2021 = vrot.lane.b32.xlu0 %v854, 8
        %v2022 = vpop.permute.xlu0 %2021
        %2023 = vrot.lane.b32.xlu0 %v855, 8
        %v2024 = vpop.permute.xlu0 %2023
        %2025 = vrot.lane.b32.xlu0 %v856, 8
        %v2026 = vpop.permute.xlu0 %2025
        %2027 = vrot.lane.b32.xlu0 %v857, 8
        %v2028 = vpop.permute.xlu0 %2027
        %2029 = vrot.lane.b32.xlu0 %v858, 8
        %v2030 = vpop.permute.xlu0 %2029
        %2031 = vrot.lane.b32.xlu0 %v859, 8
        %v2032 = vpop.permute.xlu0 %2031
        %2033 = vrot.lane.b32.xlu0 %v860, 8
        %v2034 = vpop.permute.xlu0 %2033
        %2035 = vrot.lane.b32.xlu0 %v861, 8
        %v2036 = vpop.permute.xlu0 %2035
        %2037 = vrot.lane.b32.xlu0 %v862, 8
        %v2038 = vpop.permute.xlu0 %2037
        %2039 = vrot.lane.b32.xlu0 %v863, 8
        %v2040 = vpop.permute.xlu0 %2039
        %2041 = vrot.lane.b32.xlu0 %v864, 8
        %v2042 = vpop.permute.xlu0 %2041
        %2043 = vrot.lane.b32.xlu0 %v865, 8
        %v2044 = vpop.permute.xlu0 %2043
        %2045 = vrot.lane.b32.xlu0 %v866, 8
        %v2046 = vpop.permute.xlu0 %2045
        %2047 = vrot.lane.b32.xlu0 %v867, 8
        %v2048 = vpop.permute.xlu0 %2047
        %2049 = vrot.lane.b32.xlu0 %v868, 8
        %v2050 = vpop.permute.xlu0 %2049
        %2051 = vrot.lane.b32.xlu0 %v869, 8
        %v2052 = vpop.permute.xlu0 %2051
        %2053 = vrot.lane.b32.xlu0 %v870, 8
        %v2054 = vpop.permute.xlu0 %2053
        %2055 = vrot.lane.b32.xlu0 %v871, 8
        %v2056 = vpop.permute.xlu0 %2055
        %2057 = vrot.lane.b32.xlu0 %v872, 8
        %v2058 = vpop.permute.xlu0 %2057
        %2059 = vrot.lane.b32.xlu0 %v873, 8
        %v2060 = vpop.permute.xlu0 %2059
        %2061 = vrot.lane.b32.xlu0 %v874, 8
        %v2062 = vpop.permute.xlu0 %2061
        %2063 = vrot.lane.b32.xlu0 %v875, 8
        %v2064 = vpop.permute.xlu0 %2063
        %2065 = vrot.lane.b32.xlu0 %v876, 8
        %v2066 = vpop.permute.xlu0 %2065
        %2131 = vrot.lane.b32.xlu0 %v877, 12
        %v2132 = vpop.permute.xlu0 %2131
        %2133 = vrot.lane.b32.xlu0 %v878, 12
        %v2134 = vpop.permute.xlu0 %2133
        %2135 = vrot.lane.b32.xlu0 %v879, 12
        %v2136 = vpop.permute.xlu0 %2135
        %2137 = vrot.lane.b32.xlu0 %v880, 12
        %v2138 = vpop.permute.xlu0 %2137
        %2139 = vrot.lane.b32.xlu0 %v881, 12
        %v2140 = vpop.permute.xlu0 %2139
        %2141 = vrot.lane.b32.xlu0 %v882, 12
        %v2142 = vpop.permute.xlu0 %2141
        %2143 = vrot.lane.b32.xlu0 %v883, 12
        %v2144 = vpop.permute.xlu0 %2143
        %2145 = vrot.lane.b32.xlu0 %v884, 12
        %v2146 = vpop.permute.xlu0 %2145
        %2147 = vrot.lane.b32.xlu0 %v885, 12
        %v2148 = vpop.permute.xlu0 %2147
        %2149 = vrot.lane.b32.xlu0 %v886, 12
        %v2150 = vpop.permute.xlu0 %2149
        %2151 = vrot.lane.b32.xlu0 %v887, 12
        %v2152 = vpop.permute.xlu0 %2151
        %2153 = vrot.lane.b32.xlu0 %v888, 12
        %v2154 = vpop.permute.xlu0 %2153
        %2155 = vrot.lane.b32.xlu0 %v889, 12
        %v2156 = vpop.permute.xlu0 %2155
        %2157 = vrot.lane.b32.xlu0 %v890, 12
        %v2158 = vpop.permute.xlu0 %2157
        %2159 = vrot.lane.b32.xlu0 %v891, 12
        %v2160 = vpop.permute.xlu0 %2159
        %2161 = vrot.lane.b32.xlu0 %v892, 12
        %v2162 = vpop.permute.xlu0 %2161
        %2163 = vrot.lane.b32.xlu0 %v893, 12
        %v2164 = vpop.permute.xlu0 %2163
        %2165 = vrot.lane.b32.xlu0 %v894, 12
        %v2166 = vpop.permute.xlu0 %2165
        %2167 = vrot.lane.b32.xlu0 %v895, 12
        %v2168 = vpop.permute.xlu0 %2167
        %2169 = vrot.lane.b32.xlu0 %v896, 12
        %v2170 = vpop.permute.xlu0 %2169
        %2171 = vrot.lane.b32.xlu0 %v897, 12
        %v2172 = vpop.permute.xlu0 %2171
        %2173 = vrot.lane.b32.xlu0 %v898, 12
        %v2174 = vpop.permute.xlu0 %2173
        %2175 = vrot.lane.b32.xlu0 %v899, 12
        %v2176 = vpop.permute.xlu0 %2175
        %2177 = vrot.lane.b32.xlu0 %v900, 12
        %v2178 = vpop.permute.xlu0 %2177
        %2179 = vrot.lane.b32.xlu0 %v901, 12
        %v2180 = vpop.permute.xlu0 %2179
        %2181 = vrot.lane.b32.xlu0 %v902, 12
        %v2182 = vpop.permute.xlu0 %2181
        %2183 = vrot.lane.b32.xlu0 %v903, 12
        %v2184 = vpop.permute.xlu0 %2183
        %2185 = vrot.lane.b32.xlu0 %v904, 12
        %v2186 = vpop.permute.xlu0 %2185
        %2187 = vrot.lane.b32.xlu0 %v905, 12
        %v2188 = vpop.permute.xlu0 %2187
        %2189 = vrot.lane.b32.xlu0 %v906, 12
        %v2190 = vpop.permute.xlu0 %2189
        %2191 = vrot.lane.b32.xlu0 %v907, 12
        %v2192 = vpop.permute.xlu0 %2191
        %2193 = vrot.lane.b32.xlu0 %v908, 12
        %v2194 = vpop.permute.xlu0 %2193
        %2259 = vrot.lane.b32.xlu0 %v909, 16
        %v2260 = vpop.permute.xlu0 %2259
        %2261 = vrot.lane.b32.xlu0 %v910, 16
        %v2262 = vpop.permute.xlu0 %2261
        %2263 = vrot.lane.b32.xlu0 %v911, 16
        %v2264 = vpop.permute.xlu0 %2263
        %2265 = vrot.lane.b32.xlu0 %v912, 16
        %v2266 = vpop.permute.xlu0 %2265
        %2267 = vrot.lane.b32.xlu0 %v913, 16
        %v2268 = vpop.permute.xlu0 %2267
        %2269 = vrot.lane.b32.xlu0 %v914, 16
        %v2270 = vpop.permute.xlu0 %2269
        %2271 = vrot.lane.b32.xlu0 %v915, 16
        %v2272 = vpop.permute.xlu0 %2271
        %2273 = vrot.lane.b32.xlu0 %v916, 16
        %v2274 = vpop.permute.xlu0 %2273
        %2275 = vrot.lane.b32.xlu0 %v917, 16
        %v2276 = vpop.permute.xlu0 %2275
        %2277 = vrot.lane.b32.xlu0 %v918, 16
        %v2278 = vpop.permute.xlu0 %2277
        %2279 = vrot.lane.b32.xlu0 %v919, 16
        %v2280 = vpop.permute.xlu0 %2279
        %2281 = vrot.lane.b32.xlu0 %v920, 16
        %v2282 = vpop.permute.xlu0 %2281
        %2283 = vrot.lane.b32.xlu0 %v921, 16
        %v2284 = vpop.permute.xlu0 %2283
        %2285 = vrot.lane.b32.xlu0 %v922, 16
        %v2286 = vpop.permute.xlu0 %2285
        %2287 = vrot.lane.b32.xlu0 %v923, 16
        %v2288 = vpop.permute.xlu0 %2287
        %2289 = vrot.lane.b32.xlu0 %v924, 16
        %v2290 = vpop.permute.xlu0 %2289
        %2291 = vrot.lane.b32.xlu0 %v925, 16
        %v2292 = vpop.permute.xlu0 %2291
        %2293 = vrot.lane.b32.xlu0 %v926, 16
        %v2294 = vpop.permute.xlu0 %2293
        %2295 = vrot.lane.b32.xlu0 %v927, 16
        %v2296 = vpop.permute.xlu0 %2295
        %2297 = vrot.lane.b32.xlu0 %v928, 16
        %v2298 = vpop.permute.xlu0 %2297
        %2299 = vrot.lane.b32.xlu0 %v929, 16
        %v2300 = vpop.permute.xlu0 %2299
        %2301 = vrot.lane.b32.xlu0 %v930, 16
        %v2302 = vpop.permute.xlu0 %2301
        %2303 = vrot.lane.b32.xlu0 %v931, 16
        %v2304 = vpop.permute.xlu0 %2303
        %2305 = vrot.lane.b32.xlu0 %v932, 16
        %v2306 = vpop.permute.xlu0 %2305
        %2307 = vrot.lane.b32.xlu0 %v933, 16
        %v2308 = vpop.permute.xlu0 %2307
        %2309 = vrot.lane.b32.xlu0 %v934, 16
        %v2310 = vpop.permute.xlu0 %2309
        %2311 = vrot.lane.b32.xlu0 %v935, 16
        %v2312 = vpop.permute.xlu0 %2311
        %2313 = vrot.lane.b32.xlu0 %v936, 16
        %v2314 = vpop.permute.xlu0 %2313
        %2315 = vrot.lane.b32.xlu0 %v937, 16
        %v2316 = vpop.permute.xlu0 %2315
        %2317 = vrot.lane.b32.xlu0 %v938, 16
        %v2318 = vpop.permute.xlu0 %2317
        %2319 = vrot.lane.b32.xlu0 %v939, 16
        %v2320 = vpop.permute.xlu0 %2319
        %2321 = vrot.lane.b32.xlu0 %v940, 16
        %v2322 = vpop.permute.xlu0 %2321
        %2387 = vrot.lane.b32.xlu0 %v941, 20
        %v2388 = vpop.permute.xlu0 %2387
        %2389 = vrot.lane.b32.xlu0 %v942, 20
        %v2390 = vpop.permute.xlu0 %2389
        %2391 = vrot.lane.b32.xlu0 %v943, 20
        %v2392 = vpop.permute.xlu0 %2391
        %2393 = vrot.lane.b32.xlu0 %v944, 20
        %v2394 = vpop.permute.xlu0 %2393
        %2395 = vrot.lane.b32.xlu0 %v945, 20
        %v2396 = vpop.permute.xlu0 %2395
        %2397 = vrot.lane.b32.xlu0 %v946, 20
        %v2398 = vpop.permute.xlu0 %2397
        %2399 = vrot.lane.b32.xlu0 %v947, 20
        %v2400 = vpop.permute.xlu0 %2399
        %2401 = vrot.lane.b32.xlu0 %v948, 20
        %v2402 = vpop.permute.xlu0 %2401
        %2403 = vrot.lane.b32.xlu0 %v949, 20
        %v2404 = vpop.permute.xlu0 %2403
        %2405 = vrot.lane.b32.xlu0 %v950, 20
        %v2406 = vpop.permute.xlu0 %2405
        %2407 = vrot.lane.b32.xlu0 %v951, 20
        %v2408 = vpop.permute.xlu0 %2407
        %2409 = vrot.lane.b32.xlu0 %v952, 20
        %v2410 = vpop.permute.xlu0 %2409
        %2411 = vrot.lane.b32.xlu0 %v953, 20
        %v2412 = vpop.permute.xlu0 %2411
        %2413 = vrot.lane.b32.xlu0 %v954, 20
        %v2414 = vpop.permute.xlu0 %2413
        %2415 = vrot.lane.b32.xlu0 %v955, 20
        %v2416 = vpop.permute.xlu0 %2415
        %2417 = vrot.lane.b32.xlu0 %v956, 20
        %v2418 = vpop.permute.xlu0 %2417
        %2419 = vrot.lane.b32.xlu0 %v957, 20
        %v2420 = vpop.permute.xlu0 %2419
        %2421 = vrot.lane.b32.xlu0 %v958, 20
        %v2422 = vpop.permute.xlu0 %2421
        %2423 = vrot.lane.b32.xlu0 %v959, 20
        %v2424 = vpop.permute.xlu0 %2423
        %2425 = vrot.lane.b32.xlu0 %v960, 20
        %v2426 = vpop.permute.xlu0 %2425
        %2427 = vrot.lane.b32.xlu0 %v961, 20
        %v2428 = vpop.permute.xlu0 %2427
        %2429 = vrot.lane.b32.xlu0 %v962, 20
        %v2430 = vpop.permute.xlu0 %2429
        %2431 = vrot.lane.b32.xlu0 %v963, 20
        %v2432 = vpop.permute.xlu0 %2431
        %2433 = vrot.lane.b32.xlu0 %v964, 20
        %v2434 = vpop.permute.xlu0 %2433
        %2435 = vrot.lane.b32.xlu0 %v965, 20
        %v2436 = vpop.permute.xlu0 %2435
        %2437 = vrot.lane.b32.xlu0 %v966, 20
        %v2438 = vpop.permute.xlu0 %2437
        %2439 = vrot.lane.b32.xlu0 %v967, 20
        %v2440 = vpop.permute.xlu0 %2439
        %2441 = vrot.lane.b32.xlu0 %v968, 20
        %v2442 = vpop.permute.xlu0 %2441
        %2443 = vrot.lane.b32.xlu0 %v969, 20
        %v2444 = vpop.permute.xlu0 %2443
        %2445 = vrot.lane.b32.xlu0 %v970, 20
        %v2446 = vpop.permute.xlu0 %2445
        %2447 = vrot.lane.b32.xlu0 %v971, 20
        %v2448 = vpop.permute.xlu0 %2447
        %2449 = vrot.lane.b32.xlu0 %v972, 20
        %v2450 = vpop.permute.xlu0 %2449
        %2515 = vrot.lane.b32.xlu0 %v974, 24
        %v2516 = vpop.permute.xlu0 %2515
        %2517 = vrot.lane.b32.xlu0 %v975, 24
        %v2518 = vpop.permute.xlu0 %2517
        %2519 = vrot.lane.b32.xlu0 %v976, 24
        %v2520 = vpop.permute.xlu0 %2519
        %2521 = vrot.lane.b32.xlu0 %v977, 24
        %v2522 = vpop.permute.xlu0 %2521
        %2523 = vrot.lane.b32.xlu0 %v978, 24
        %v2524 = vpop.permute.xlu0 %2523
        %2525 = vrot.lane.b32.xlu0 %v979, 24
        %v2526 = vpop.permute.xlu0 %2525
        %2527 = vrot.lane.b32.xlu0 %v980, 24
        %v2528 = vpop.permute.xlu0 %2527
        %2529 = vrot.lane.b32.xlu0 %v981, 24
        %v2530 = vpop.permute.xlu0 %2529
        %2531 = vrot.lane.b32.xlu0 %v982, 24
        %v2532 = vpop.permute.xlu0 %2531
        %2533 = vrot.lane.b32.xlu0 %v983, 24
        %v2534 = vpop.permute.xlu0 %2533
        %2535 = vrot.lane.b32.xlu0 %v984, 24
        %v2536 = vpop.permute.xlu0 %2535
        %2537 = vrot.lane.b32.xlu0 %v985, 24
        %v2538 = vpop.permute.xlu0 %2537
        %2539 = vrot.lane.b32.xlu0 %v986, 24
        %v2540 = vpop.permute.xlu0 %2539
        %2541 = vrot.lane.b32.xlu0 %v987, 24
        %v2542 = vpop.permute.xlu0 %2541
        %2543 = vrot.lane.b32.xlu0 %v988, 24
        %v2544 = vpop.permute.xlu0 %2543
        %2545 = vrot.lane.b32.xlu0 %v989, 24
        %v2546 = vpop.permute.xlu0 %2545
        %2547 = vrot.lane.b32.xlu0 %v990, 24
        %v2548 = vpop.permute.xlu0 %2547
        %2549 = vrot.lane.b32.xlu0 %v991, 24
        %v2550 = vpop.permute.xlu0 %2549
        %2551 = vrot.lane.b32.xlu0 %v992, 24
        %v2552 = vpop.permute.xlu0 %2551
        %2553 = vrot.lane.b32.xlu0 %v993, 24
        %v2554 = vpop.permute.xlu0 %2553
        %2555 = vrot.lane.b32.xlu0 %v994, 24
        %v2556 = vpop.permute.xlu0 %2555
        %2557 = vrot.lane.b32.xlu0 %v995, 24
        %v2558 = vpop.permute.xlu0 %2557
        %2559 = vrot.lane.b32.xlu0 %v996, 24
        %v2560 = vpop.permute.xlu0 %2559
        %2561 = vrot.lane.b32.xlu0 %v997, 24
        %v2562 = vpop.permute.xlu0 %2561
        %2563 = vrot.lane.b32.xlu0 %v998, 24
        %v2564 = vpop.permute.xlu0 %2563
        %2565 = vrot.lane.b32.xlu0 %v999, 24
        %v2566 = vpop.permute.xlu0 %2565
        %2567 = vrot.lane.b32.xlu0 %v1000, 24
        %v2568 = vpop.permute.xlu0 %2567
        %2569 = vrot.lane.b32.xlu0 %v1001, 24
        %v2570 = vpop.permute.xlu0 %2569
        %2571 = vrot.lane.b32.xlu0 %v1002, 24
        %v2572 = vpop.permute.xlu0 %2571
        %2573 = vrot.lane.b32.xlu0 %v1003, 24
        %v2574 = vpop.permute.xlu0 %2573
        %2575 = vrot.lane.b32.xlu0 %v1004, 24
        %v2576 = vpop.permute.xlu0 %2575
        %2577 = vrot.lane.b32.xlu0 %v1005, 24
        %v2578 = vpop.permute.xlu0 %2577
        %2643 = vrot.lane.b32.xlu0 %v1006, 28
        %v2644 = vpop.permute.xlu0 %2643
        %2645 = vrot.lane.b32.xlu0 %v1007, 28
        %v2646 = vpop.permute.xlu0 %2645
        %2647 = vrot.lane.b32.xlu0 %v1008, 28
        %v2648 = vpop.permute.xlu0 %2647
        %2649 = vrot.lane.b32.xlu0 %v1009, 28
        %v2650 = vpop.permute.xlu0 %2649
        %2651 = vrot.lane.b32.xlu0 %v1010, 28
        %v2652 = vpop.permute.xlu0 %2651
        %2653 = vrot.lane.b32.xlu0 %v1011, 28
        %v2654 = vpop.permute.xlu0 %2653
        %2655 = vrot.lane.b32.xlu0 %v1012, 28
        %v2656 = vpop.permute.xlu0 %2655
        %2657 = vrot.lane.b32.xlu0 %v1013, 28
        %v2658 = vpop.permute.xlu0 %2657
        %2659 = vrot.lane.b32.xlu0 %v1014, 28
        %v2660 = vpop.permute.xlu0 %2659
        %2661 = vrot.lane.b32.xlu0 %v1015, 28
        %v2662 = vpop.permute.xlu0 %2661
        %2663 = vrot.lane.b32.xlu0 %v1016, 28
        %v2664 = vpop.permute.xlu0 %2663
        %2665 = vrot.lane.b32.xlu0 %v1017, 28
        %v2666 = vpop.permute.xlu0 %2665
        %2667 = vrot.lane.b32.xlu0 %v1018, 28
        %v2668 = vpop.permute.xlu0 %2667
        %2669 = vrot.lane.b32.xlu0 %v1019, 28
        %v2670 = vpop.permute.xlu0 %2669
        %2671 = vrot.lane.b32.xlu0 %v1020, 28
        %v2672 = vpop.permute.xlu0 %2671
        %2673 = vrot.lane.b32.xlu0 %v1021, 28
        %v2674 = vpop.permute.xlu0 %2673
        %2675 = vrot.lane.b32.xlu0 %v1022, 28
        %v2676 = vpop.permute.xlu0 %2675
        %2677 = vrot.lane.b32.xlu0 %v1023, 28
        %v2678 = vpop.permute.xlu0 %2677
        %2679 = vrot.lane.b32.xlu0 %v1024, 28
        %v2680 = vpop.permute.xlu0 %2679
        %2681 = vrot.lane.b32.xlu0 %v1025, 28
        %v2682 = vpop.permute.xlu0 %2681
        %2683 = vrot.lane.b32.xlu0 %v1026, 28
        %v2684 = vpop.permute.xlu0 %2683
        %2685 = vrot.lane.b32.xlu0 %v1027, 28
        %v2686 = vpop.permute.xlu0 %2685
        %2687 = vrot.lane.b32.xlu0 %v1028, 28
        %v2688 = vpop.permute.xlu0 %2687
        %2689 = vrot.lane.b32.xlu0 %v1029, 28
        %v2690 = vpop.permute.xlu0 %2689
        %2691 = vrot.lane.b32.xlu0 %v1030, 28
        %v2692 = vpop.permute.xlu0 %2691
        %2693 = vrot.lane.b32.xlu0 %v1031, 28
        %v2694 = vpop.permute.xlu0 %2693
        %2695 = vrot.lane.b32.xlu0 %v1032, 28
        %v2696 = vpop.permute.xlu0 %2695
        %2697 = vrot.lane.b32.xlu0 %v1033, 28
        %v2698 = vpop.permute.xlu0 %2697
        %2699 = vrot.lane.b32.xlu0 %v1034, 28
        %v2700 = vpop.permute.xlu0 %2699
        %2701 = vrot.lane.b32.xlu0 %v1035, 28
        %v2702 = vpop.permute.xlu0 %2701
        %2703 = vrot.lane.b32.xlu0 %v1036, 28
        %v2704 = vpop.permute.xlu0 %2703
        %2705 = vrot.lane.b32.xlu0 %v1037, 28
        %v2706 = vpop.permute.xlu0 %2705
        %2771 = vrot.lane.b32.xlu0 %v1038, 32
        %v2772 = vpop.permute.xlu0 %2771
        %2773 = vrot.lane.b32.xlu0 %v1039, 32
        %v2774 = vpop.permute.xlu0 %2773
        %2775 = vrot.lane.b32.xlu0 %v1040, 32
        %v2776 = vpop.permute.xlu0 %2775
        %2777 = vrot.lane.b32.xlu0 %v1041, 32
        %v2778 = vpop.permute.xlu0 %2777
        %2779 = vrot.lane.b32.xlu0 %v1042, 32
        %v2780 = vpop.permute.xlu0 %2779
        %2781 = vrot.lane.b32.xlu0 %v1043, 32
        %v2782 = vpop.permute.xlu0 %2781
        %2783 = vrot.lane.b32.xlu0 %v1044, 32
        %v2784 = vpop.permute.xlu0 %2783
        %2785 = vrot.lane.b32.xlu0 %v1045, 32
        %v2786 = vpop.permute.xlu0 %2785
        %2787 = vrot.lane.b32.xlu0 %v1046, 32
        %v2788 = vpop.permute.xlu0 %2787
        %2789 = vrot.lane.b32.xlu0 %v1047, 32
        %v2790 = vpop.permute.xlu0 %2789
        %2791 = vrot.lane.b32.xlu0 %v1048, 32
        %v2792 = vpop.permute.xlu0 %2791
        %2793 = vrot.lane.b32.xlu0 %v1049, 32
        %v2794 = vpop.permute.xlu0 %2793
        %2795 = vrot.lane.b32.xlu0 %v1050, 32
        %v2796 = vpop.permute.xlu0 %2795
        %2797 = vrot.lane.b32.xlu0 %v1051, 32
        %v2798 = vpop.permute.xlu0 %2797
        %2799 = vrot.lane.b32.xlu0 %v1052, 32
        %v2800 = vpop.permute.xlu0 %2799
        %2801 = vrot.lane.b32.xlu0 %v1053, 32
        %v2802 = vpop.permute.xlu0 %2801
        %2803 = vrot.lane.b32.xlu0 %v1054, 32
        %v2804 = vpop.permute.xlu0 %2803
        %2805 = vrot.lane.b32.xlu0 %v1055, 32
        %v2806 = vpop.permute.xlu0 %2805
        %2807 = vrot.lane.b32.xlu0 %v1056, 32
        %v2808 = vpop.permute.xlu0 %2807
        %2809 = vrot.lane.b32.xlu0 %v1057, 32
        %v2810 = vpop.permute.xlu0 %2809
        %2811 = vrot.lane.b32.xlu0 %v1058, 32
        %v2812 = vpop.permute.xlu0 %2811
        %2813 = vrot.lane.b32.xlu0 %v1059, 32
        %v2814 = vpop.permute.xlu0 %2813
        %2815 = vrot.lane.b32.xlu0 %v1060, 32
        %v2816 = vpop.permute.xlu0 %2815
        %2817 = vrot.lane.b32.xlu0 %v1061, 32
        %v2818 = vpop.permute.xlu0 %2817
        %2819 = vrot.lane.b32.xlu0 %v1062, 32
        %v2820 = vpop.permute.xlu0 %2819
        %2821 = vrot.lane.b32.xlu0 %v1063, 32
        %v2822 = vpop.permute.xlu0 %2821
        %2823 = vrot.lane.b32.xlu0 %v1064, 32
        %v2824 = vpop.permute.xlu0 %2823
        %2825 = vrot.lane.b32.xlu0 %v1065, 32
        %v2826 = vpop.permute.xlu0 %2825
        %2827 = vrot.lane.b32.xlu0 %v1066, 32
        %v2828 = vpop.permute.xlu0 %2827
        %2829 = vrot.lane.b32.xlu0 %v1067, 32
        %v2830 = vpop.permute.xlu0 %2829
        %2831 = vrot.lane.b32.xlu0 %v1068, 32
        %v2832 = vpop.permute.xlu0 %2831
        %2833 = vrot.lane.b32.xlu0 %v1069, 32
        %v2834 = vpop.permute.xlu0 %2833
        %2899 = vrot.lane.b32.xlu0 %v1071, 36
        %v2900 = vpop.permute.xlu0 %2899
        %2901 = vrot.lane.b32.xlu0 %v1072, 36
        %v2902 = vpop.permute.xlu0 %2901
        %2903 = vrot.lane.b32.xlu0 %v1073, 36
        %v2904 = vpop.permute.xlu0 %2903
        %2905 = vrot.lane.b32.xlu0 %v1074, 36
        %v2906 = vpop.permute.xlu0 %2905
        %2907 = vrot.lane.b32.xlu0 %v1075, 36
        %v2908 = vpop.permute.xlu0 %2907
        %2909 = vrot.lane.b32.xlu0 %v1076, 36
        %v2910 = vpop.permute.xlu0 %2909
        %2911 = vrot.lane.b32.xlu0 %v1077, 36
        %v2912 = vpop.permute.xlu0 %2911
        %2913 = vrot.lane.b32.xlu0 %v1078, 36
        %v2914 = vpop.permute.xlu0 %2913
        %2915 = vrot.lane.b32.xlu0 %v1079, 36
        %v2916 = vpop.permute.xlu0 %2915
        %2917 = vrot.lane.b32.xlu0 %v1080, 36
        %v2918 = vpop.permute.xlu0 %2917
        %2919 = vrot.lane.b32.xlu0 %v1081, 36
        %v2920 = vpop.permute.xlu0 %2919
        %2921 = vrot.lane.b32.xlu0 %v1082, 36
        %v2922 = vpop.permute.xlu0 %2921
        %2923 = vrot.lane.b32.xlu0 %v1083, 36
        %v2924 = vpop.permute.xlu0 %2923
        %2925 = vrot.lane.b32.xlu0 %v1084, 36
        %v2926 = vpop.permute.xlu0 %2925
        %2927 = vrot.lane.b32.xlu0 %v1085, 36
        %v2928 = vpop.permute.xlu0 %2927
        %2929 = vrot.lane.b32.xlu0 %v1086, 36
        %v2930 = vpop.permute.xlu0 %2929
        %2931 = vrot.lane.b32.xlu0 %v1087, 36
        %v2932 = vpop.permute.xlu0 %2931
        %2933 = vrot.lane.b32.xlu0 %v1088, 36
        %v2934 = vpop.permute.xlu0 %2933
        %2935 = vrot.lane.b32.xlu0 %v1089, 36
        %v2936 = vpop.permute.xlu0 %2935
        %2937 = vrot.lane.b32.xlu0 %v1090, 36
        %v2938 = vpop.permute.xlu0 %2937
        %2939 = vrot.lane.b32.xlu0 %v1091, 36
        %v2940 = vpop.permute.xlu0 %2939
        %2941 = vrot.lane.b32.xlu0 %v1092, 36
        %v2942 = vpop.permute.xlu0 %2941
        %2943 = vrot.lane.b32.xlu0 %v1093, 36
        %v2944 = vpop.permute.xlu0 %2943
        %2945 = vrot.lane.b32.xlu0 %v1094, 36
        %v2946 = vpop.permute.xlu0 %2945
        %2947 = vrot.lane.b32.xlu0 %v1095, 36
        %v2948 = vpop.permute.xlu0 %2947
        %2949 = vrot.lane.b32.xlu0 %v1096, 36
        %v2950 = vpop.permute.xlu0 %2949
        %2951 = vrot.lane.b32.xlu0 %v1097, 36
        %v2952 = vpop.permute.xlu0 %2951
        %2953 = vrot.lane.b32.xlu0 %v1098, 36
        %v2954 = vpop.permute.xlu0 %2953
        %2955 = vrot.lane.b32.xlu0 %v1099, 36
        %v2956 = vpop.permute.xlu0 %2955
        %2957 = vrot.lane.b32.xlu0 %v1100, 36
        %v2958 = vpop.permute.xlu0 %2957
        %2959 = vrot.lane.b32.xlu0 %v1101, 36
        %v2960 = vpop.permute.xlu0 %2959
        %2961 = vrot.lane.b32.xlu0 %v1102, 36
        %v2962 = vpop.permute.xlu0 %2961
        %3027 = vrot.lane.b32.xlu0 %v1103, 40
        %v3028 = vpop.permute.xlu0 %3027
        %3029 = vrot.lane.b32.xlu0 %v1104, 40
        %v3030 = vpop.permute.xlu0 %3029
        %3031 = vrot.lane.b32.xlu0 %v1105, 40
        %v3032 = vpop.permute.xlu0 %3031
        %3033 = vrot.lane.b32.xlu0 %v1106, 40
        %v3034 = vpop.permute.xlu0 %3033
        %3035 = vrot.lane.b32.xlu0 %v1107, 40
        %v3036 = vpop.permute.xlu0 %3035
        %3037 = vrot.lane.b32.xlu0 %v1108, 40
        %v3038 = vpop.permute.xlu0 %3037
        %3039 = vrot.lane.b32.xlu0 %v1109, 40
        %v3040 = vpop.permute.xlu0 %3039
        %3041 = vrot.lane.b32.xlu0 %v1110, 40
        %v3042 = vpop.permute.xlu0 %3041
        %3043 = vrot.lane.b32.xlu0 %v1111, 40
        %v3044 = vpop.permute.xlu0 %3043
        %3045 = vrot.lane.b32.xlu0 %v1112, 40
        %v3046 = vpop.permute.xlu0 %3045
        %3047 = vrot.lane.b32.xlu0 %v1113, 40
        %v3048 = vpop.permute.xlu0 %3047
        %3049 = vrot.lane.b32.xlu0 %v1114, 40
        %v3050 = vpop.permute.xlu0 %3049
        %3051 = vrot.lane.b32.xlu0 %v1115, 40
        %v3052 = vpop.permute.xlu0 %3051
        %3053 = vrot.lane.b32.xlu0 %v1116, 40
        %v3054 = vpop.permute.xlu0 %3053
        %3055 = vrot.lane.b32.xlu0 %v1117, 40
        %v3056 = vpop.permute.xlu0 %3055
        %3057 = vrot.lane.b32.xlu0 %v1118, 40
        %v3058 = vpop.permute.xlu0 %3057
        %3059 = vrot.lane.b32.xlu0 %v1119, 40
        %v3060 = vpop.permute.xlu0 %3059
        %3061 = vrot.lane.b32.xlu0 %v1120, 40
        %v3062 = vpop.permute.xlu0 %3061
        %3063 = vrot.lane.b32.xlu0 %v1121, 40
        %v3064 = vpop.permute.xlu0 %3063
        %3065 = vrot.lane.b32.xlu0 %v1122, 40
        %v3066 = vpop.permute.xlu0 %3065
        %3067 = vrot.lane.b32.xlu0 %v1123, 40
        %v3068 = vpop.permute.xlu0 %3067
        %3069 = vrot.lane.b32.xlu0 %v1124, 40
        %v3070 = vpop.permute.xlu0 %3069
        %3071 = vrot.lane.b32.xlu0 %v1125, 40
        %v3072 = vpop.permute.xlu0 %3071
        %3073 = vrot.lane.b32.xlu0 %v1126, 40
        %v3074 = vpop.permute.xlu0 %3073
        %3075 = vrot.lane.b32.xlu0 %v1127, 40
        %v3076 = vpop.permute.xlu0 %3075
        %3077 = vrot.lane.b32.xlu0 %v1128, 40
        %v3078 = vpop.permute.xlu0 %3077
        %3079 = vrot.lane.b32.xlu0 %v1129, 40
        %v3080 = vpop.permute.xlu0 %3079
        %3081 = vrot.lane.b32.xlu0 %v1130, 40
        %v3082 = vpop.permute.xlu0 %3081
        %3083 = vrot.lane.b32.xlu0 %v1131, 40
        %v3084 = vpop.permute.xlu0 %3083
        %3085 = vrot.lane.b32.xlu0 %v1132, 40
        %v3086 = vpop.permute.xlu0 %3085
        %3087 = vrot.lane.b32.xlu0 %v1133, 40
        %v3088 = vpop.permute.xlu0 %3087
        %3089 = vrot.lane.b32.xlu0 %v1134, 40
        %v3090 = vpop.permute.xlu0 %3089
        %3155 = vrot.lane.b32.xlu0 %v1135, 44
        %v3156 = vpop.permute.xlu0 %3155
        %3157 = vrot.lane.b32.xlu0 %v1136, 44
        %v3158 = vpop.permute.xlu0 %3157
        %3159 = vrot.lane.b32.xlu0 %v1137, 44
        %v3160 = vpop.permute.xlu0 %3159
        %3161 = vrot.lane.b32.xlu0 %v1138, 44
        %v3162 = vpop.permute.xlu0 %3161
        %3163 = vrot.lane.b32.xlu0 %v1139, 44
        %v3164 = vpop.permute.xlu0 %3163
        %3165 = vrot.lane.b32.xlu0 %v1140, 44
        %v3166 = vpop.permute.xlu0 %3165
        %3167 = vrot.lane.b32.xlu0 %v1141, 44
        %v3168 = vpop.permute.xlu0 %3167
        %3169 = vrot.lane.b32.xlu0 %v1142, 44
        %v3170 = vpop.permute.xlu0 %3169
        %3171 = vrot.lane.b32.xlu0 %v1143, 44
        %v3172 = vpop.permute.xlu0 %3171
        %3173 = vrot.lane.b32.xlu0 %v1144, 44
        %v3174 = vpop.permute.xlu0 %3173
        %3175 = vrot.lane.b32.xlu0 %v1145, 44
        %v3176 = vpop.permute.xlu0 %3175
        %3177 = vrot.lane.b32.xlu0 %v1146, 44
        %v3178 = vpop.permute.xlu0 %3177
        %3179 = vrot.lane.b32.xlu0 %v1147, 44
        %v3180 = vpop.permute.xlu0 %3179
        %3181 = vrot.lane.b32.xlu0 %v1148, 44
        %v3182 = vpop.permute.xlu0 %3181
        %3183 = vrot.lane.b32.xlu0 %v1149, 44
        %v3184 = vpop.permute.xlu0 %3183
        %3185 = vrot.lane.b32.xlu0 %v1150, 44
        %v3186 = vpop.permute.xlu0 %3185
        %3187 = vrot.lane.b32.xlu0 %v1151, 44
        %v3188 = vpop.permute.xlu0 %3187
        %3189 = vrot.lane.b32.xlu0 %v1152, 44
        %v3190 = vpop.permute.xlu0 %3189
        %3191 = vrot.lane.b32.xlu0 %v1153, 44
        %v3192 = vpop.permute.xlu0 %3191
        %3193 = vrot.lane.b32.xlu0 %v1154, 44
        %v3194 = vpop.permute.xlu0 %3193
        %3195 = vrot.lane.b32.xlu0 %v1155, 44
        %v3196 = vpop.permute.xlu0 %3195
        %3197 = vrot.lane.b32.xlu0 %v1156, 44
        %v3198 = vpop.permute.xlu0 %3197
        %3199 = vrot.lane.b32.xlu0 %v1157, 44
        %v3200 = vpop.permute.xlu0 %3199
        %3201 = vrot.lane.b32.xlu0 %v1158, 44
        %v3202 = vpop.permute.xlu0 %3201
        %3203 = vrot.lane.b32.xlu0 %v1159, 44
        %v3204 = vpop.permute.xlu0 %3203
        %3205 = vrot.lane.b32.xlu0 %v1160, 44
        %v3206 = vpop.permute.xlu0 %3205
        %3207 = vrot.lane.b32.xlu0 %v1161, 44
        %v3208 = vpop.permute.xlu0 %3207
        %3209 = vrot.lane.b32.xlu0 %v1162, 44
        %v3210 = vpop.permute.xlu0 %3209
        %3211 = vrot.lane.b32.xlu0 %v1163, 44
        %v3212 = vpop.permute.xlu0 %3211
        %3213 = vrot.lane.b32.xlu0 %v1164, 44
        %v3214 = vpop.permute.xlu0 %3213
        %3215 = vrot.lane.b32.xlu0 %v1165, 44
        %v3216 = vpop.permute.xlu0 %3215
        %3217 = vrot.lane.b32.xlu0 %v1166, 44
        %v3218 = vpop.permute.xlu0 %3217
        %3283 = vrot.lane.b32.xlu0 %v1167, 48
        %v3284 = vpop.permute.xlu0 %3283
        %3285 = vrot.lane.b32.xlu0 %v1168, 48
        %v3286 = vpop.permute.xlu0 %3285
        %3287 = vrot.lane.b32.xlu0 %v1169, 48
        %v3288 = vpop.permute.xlu0 %3287
        %3289 = vrot.lane.b32.xlu0 %v1170, 48
        %v3290 = vpop.permute.xlu0 %3289
        %3291 = vrot.lane.b32.xlu0 %v1171, 48
        %v3292 = vpop.permute.xlu0 %3291
        %3293 = vrot.lane.b32.xlu0 %v1172, 48
        %v3294 = vpop.permute.xlu0 %3293
        %3295 = vrot.lane.b32.xlu0 %v1173, 48
        %v3296 = vpop.permute.xlu0 %3295
        %3297 = vrot.lane.b32.xlu0 %v1174, 48
        %v3298 = vpop.permute.xlu0 %3297
        %3299 = vrot.lane.b32.xlu0 %v1175, 48
        %v3300 = vpop.permute.xlu0 %3299
        %3301 = vrot.lane.b32.xlu0 %v1176, 48
        %v3302 = vpop.permute.xlu0 %3301
        %3303 = vrot.lane.b32.xlu0 %v1177, 48
        %v3304 = vpop.permute.xlu0 %3303
        %3305 = vrot.lane.b32.xlu0 %v1178, 48
        %v3306 = vpop.permute.xlu0 %3305
        %3307 = vrot.lane.b32.xlu0 %v1179, 48
        %v3308 = vpop.permute.xlu0 %3307
        %3309 = vrot.lane.b32.xlu0 %v1180, 48
        %v3310 = vpop.permute.xlu0 %3309
        %3311 = vrot.lane.b32.xlu0 %v1181, 48
        %v3312 = vpop.permute.xlu0 %3311
        %3313 = vrot.lane.b32.xlu0 %v1182, 48
        %v3314 = vpop.permute.xlu0 %3313
        %3315 = vrot.lane.b32.xlu0 %v1183, 48
        %v3316 = vpop.permute.xlu0 %3315
        %3317 = vrot.lane.b32.xlu0 %v1184, 48
        %v3318 = vpop.permute.xlu0 %3317
        %3319 = vrot.lane.b32.xlu0 %v1185, 48
        %v3320 = vpop.permute.xlu0 %3319
        %3321 = vrot.lane.b32.xlu0 %v1186, 48
        %v3322 = vpop.permute.xlu0 %3321
        %3323 = vrot.lane.b32.xlu0 %v1187, 48
        %v3324 = vpop.permute.xlu0 %3323
        %3325 = vrot.lane.b32.xlu0 %v1188, 48
        %v3326 = vpop.permute.xlu0 %3325
        %3327 = vrot.lane.b32.xlu0 %v1189, 48
        %v3328 = vpop.permute.xlu0 %3327
        %3329 = vrot.lane.b32.xlu0 %v1190, 48
        %v3330 = vpop.permute.xlu0 %3329
        %3331 = vrot.lane.b32.xlu0 %v1191, 48
        %v3332 = vpop.permute.xlu0 %3331
        %3333 = vrot.lane.b32.xlu0 %v1192, 48
        %v3334 = vpop.permute.xlu0 %3333
        %3335 = vrot.lane.b32.xlu0 %v1193, 48
        %v3336 = vpop.permute.xlu0 %3335
        %3337 = vrot.lane.b32.xlu0 %v1194, 48
        %v3338 = vpop.permute.xlu0 %3337
        %3339 = vrot.lane.b32.xlu0 %v1195, 48
        %v3340 = vpop.permute.xlu0 %3339
        %3341 = vrot.lane.b32.xlu0 %v1196, 48
        %v3342 = vpop.permute.xlu0 %3341
        %3343 = vrot.lane.b32.xlu0 %v1197, 48
        %v3344 = vpop.permute.xlu0 %3343
        %3345 = vrot.lane.b32.xlu0 %v1198, 48
        %v3346 = vpop.permute.xlu0 %3345
        %3379 = vrot.lane.b32.xlu0 %v909, 52
        %v3380 = vpop.permute.xlu0 %3379
        %3381 = vrot.lane.b32.xlu0 %v910, 52
        %v3382 = vpop.permute.xlu0 %3381
        %3383 = vrot.lane.b32.xlu0 %v911, 52
        %v3384 = vpop.permute.xlu0 %3383
        %3385 = vrot.lane.b32.xlu0 %v912, 52
        %v3386 = vpop.permute.xlu0 %3385
        %3387 = vrot.lane.b32.xlu0 %v913, 52
        %v3388 = vpop.permute.xlu0 %3387
        %3389 = vrot.lane.b32.xlu0 %v914, 52
        %v3390 = vpop.permute.xlu0 %3389
        %3391 = vrot.lane.b32.xlu0 %v915, 52
        %v3392 = vpop.permute.xlu0 %3391
        %3393 = vrot.lane.b32.xlu0 %v916, 52
        %v3394 = vpop.permute.xlu0 %3393
        %3395 = vrot.lane.b32.xlu0 %v917, 52
        %v3396 = vpop.permute.xlu0 %3395
        %3397 = vrot.lane.b32.xlu0 %v918, 52
        %v3398 = vpop.permute.xlu0 %3397
        %3399 = vrot.lane.b32.xlu0 %v919, 52
        %v3400 = vpop.permute.xlu0 %3399
        %3401 = vrot.lane.b32.xlu0 %v920, 52
        %v3402 = vpop.permute.xlu0 %3401
        %3403 = vrot.lane.b32.xlu0 %v921, 52
        %v3404 = vpop.permute.xlu0 %3403
        %3405 = vrot.lane.b32.xlu0 %v922, 52
        %v3406 = vpop.permute.xlu0 %3405
        %3407 = vrot.lane.b32.xlu0 %v923, 52
        %v3408 = vpop.permute.xlu0 %3407
        %3409 = vrot.lane.b32.xlu0 %v924, 52
        %v3410 = vpop.permute.xlu0 %3409
        %3411 = vrot.lane.b32.xlu0 %v925, 52
        %v3412 = vpop.permute.xlu0 %3411
        %3413 = vrot.lane.b32.xlu0 %v926, 52
        %v3414 = vpop.permute.xlu0 %3413
        %3415 = vrot.lane.b32.xlu0 %v927, 52
        %v3416 = vpop.permute.xlu0 %3415
        %3417 = vrot.lane.b32.xlu0 %v928, 52
        %v3418 = vpop.permute.xlu0 %3417
        %3419 = vrot.lane.b32.xlu0 %v929, 52
        %v3420 = vpop.permute.xlu0 %3419
        %3421 = vrot.lane.b32.xlu0 %v930, 52
        %v3422 = vpop.permute.xlu0 %3421
        %3423 = vrot.lane.b32.xlu0 %v931, 52
        %v3424 = vpop.permute.xlu0 %3423
        %3425 = vrot.lane.b32.xlu0 %v932, 52
        %v3426 = vpop.permute.xlu0 %3425
        %3427 = vrot.lane.b32.xlu0 %v933, 52
        %v3428 = vpop.permute.xlu0 %3427
        %3429 = vrot.lane.b32.xlu0 %v934, 52
        %v3430 = vpop.permute.xlu0 %3429
        %3431 = vrot.lane.b32.xlu0 %v935, 52
        %v3432 = vpop.permute.xlu0 %3431
        %3433 = vrot.lane.b32.xlu0 %v936, 52
        %v3434 = vpop.permute.xlu0 %3433
        %3435 = vrot.lane.b32.xlu0 %v937, 52
        %v3436 = vpop.permute.xlu0 %3435
        %3437 = vrot.lane.b32.xlu0 %v938, 52
        %v3438 = vpop.permute.xlu0 %3437
        %3439 = vrot.lane.b32.xlu0 %v939, 52
        %v3440 = vpop.permute.xlu0 %3439
        %3441 = vrot.lane.b32.xlu0 %v940, 52
        %v3442 = vpop.permute.xlu0 %3441
        %3507 = vrot.lane.b32.xlu0 %v1199, 56
        %v3508 = vpop.permute.xlu0 %3507
        %3509 = vrot.lane.b32.xlu0 %v1200, 56
        %v3510 = vpop.permute.xlu0 %3509
        %3511 = vrot.lane.b32.xlu0 %v1201, 56
        %v3512 = vpop.permute.xlu0 %3511
        %3513 = vrot.lane.b32.xlu0 %v1202, 56
        %v3514 = vpop.permute.xlu0 %3513
        %3515 = vrot.lane.b32.xlu0 %v1203, 56
        %v3516 = vpop.permute.xlu0 %3515
        %3517 = vrot.lane.b32.xlu0 %v1204, 56
        %v3518 = vpop.permute.xlu0 %3517
        %3519 = vrot.lane.b32.xlu0 %v1205, 56
        %v3520 = vpop.permute.xlu0 %3519
        %3521 = vrot.lane.b32.xlu0 %v1206, 56
        %v3522 = vpop.permute.xlu0 %3521
        %3523 = vrot.lane.b32.xlu0 %v1207, 56
        %v3524 = vpop.permute.xlu0 %3523
        %3525 = vrot.lane.b32.xlu0 %v1208, 56
        %v3526 = vpop.permute.xlu0 %3525
        %3527 = vrot.lane.b32.xlu0 %v1209, 56
        %v3528 = vpop.permute.xlu0 %3527
        %3529 = vrot.lane.b32.xlu0 %v1210, 56
        %v3530 = vpop.permute.xlu0 %3529
        %3531 = vrot.lane.b32.xlu0 %v1211, 56
        %v3532 = vpop.permute.xlu0 %3531
        %3533 = vrot.lane.b32.xlu0 %v1212, 56
        %v3534 = vpop.permute.xlu0 %3533
        %3535 = vrot.lane.b32.xlu0 %v1213, 56
        %v3536 = vpop.permute.xlu0 %3535
        %3537 = vrot.lane.b32.xlu0 %v1214, 56
        %v3538 = vpop.permute.xlu0 %3537
        %3539 = vrot.lane.b32.xlu0 %v1215, 56
        %v3540 = vpop.permute.xlu0 %3539
        %3541 = vrot.lane.b32.xlu0 %v1216, 56
        %v3542 = vpop.permute.xlu0 %3541
        %3543 = vrot.lane.b32.xlu0 %v1217, 56
        %v3544 = vpop.permute.xlu0 %3543
        %3545 = vrot.lane.b32.xlu0 %v1218, 56
        %v3546 = vpop.permute.xlu0 %3545
        %3547 = vrot.lane.b32.xlu0 %v1219, 56
        %v3548 = vpop.permute.xlu0 %3547
        %3549 = vrot.lane.b32.xlu0 %v1220, 56
        %v3550 = vpop.permute.xlu0 %3549
        %3551 = vrot.lane.b32.xlu0 %v1221, 56
        %v3552 = vpop.permute.xlu0 %3551
        %3553 = vrot.lane.b32.xlu0 %v1222, 56
        %v3554 = vpop.permute.xlu0 %3553
        %3555 = vrot.lane.b32.xlu0 %v1223, 56
        %v3556 = vpop.permute.xlu0 %3555
        %3557 = vrot.lane.b32.xlu0 %v1224, 56
        %v3558 = vpop.permute.xlu0 %3557
        %3559 = vrot.lane.b32.xlu0 %v1225, 56
        %v3560 = vpop.permute.xlu0 %3559
        %3561 = vrot.lane.b32.xlu0 %v1226, 56
        %v3562 = vpop.permute.xlu0 %3561
        %3563 = vrot.lane.b32.xlu0 %v1227, 56
        %v3564 = vpop.permute.xlu0 %3563
        %3565 = vrot.lane.b32.xlu0 %v1228, 56
        %v3566 = vpop.permute.xlu0 %3565
        %3567 = vrot.lane.b32.xlu0 %v1229, 56
        %v3568 = vpop.permute.xlu0 %3567
        %3569 = vrot.lane.b32.xlu0 %v1230, 56
        %v3570 = vpop.permute.xlu0 %3569
        %3635 = vrot.lane.b32.xlu0 %v1232, 60
        %v3636 = vpop.permute.xlu0 %3635
        %3637 = vrot.lane.b32.xlu0 %v1233, 60
        %v3638 = vpop.permute.xlu0 %3637
        %3639 = vrot.lane.b32.xlu0 %v1234, 60
        %v3640 = vpop.permute.xlu0 %3639
        %3641 = vrot.lane.b32.xlu0 %v1235, 60
        %v3642 = vpop.permute.xlu0 %3641
        %3643 = vrot.lane.b32.xlu0 %v1236, 60
        %v3644 = vpop.permute.xlu0 %3643
        %3645 = vrot.lane.b32.xlu0 %v1237, 60
        %v3646 = vpop.permute.xlu0 %3645
        %3647 = vrot.lane.b32.xlu0 %v1238, 60
        %v3648 = vpop.permute.xlu0 %3647
        %3649 = vrot.lane.b32.xlu0 %v1239, 60
        %v3650 = vpop.permute.xlu0 %3649
        %3651 = vrot.lane.b32.xlu0 %v1240, 60
        %v3652 = vpop.permute.xlu0 %3651
        %3653 = vrot.lane.b32.xlu0 %v1241, 60
        %v3654 = vpop.permute.xlu0 %3653
        %3655 = vrot.lane.b32.xlu0 %v1242, 60
        %v3656 = vpop.permute.xlu0 %3655
        %3657 = vrot.lane.b32.xlu0 %v1243, 60
        %v3658 = vpop.permute.xlu0 %3657
        %3659 = vrot.lane.b32.xlu0 %v1244, 60
        %v3660 = vpop.permute.xlu0 %3659
        %3661 = vrot.lane.b32.xlu0 %v1245, 60
        %v3662 = vpop.permute.xlu0 %3661
        %3663 = vrot.lane.b32.xlu0 %v1246, 60
        %v3664 = vpop.permute.xlu0 %3663
        %3665 = vrot.lane.b32.xlu0 %v1247, 60
        %v3666 = vpop.permute.xlu0 %3665
        %3667 = vrot.lane.b32.xlu0 %v1248, 60
        %v3668 = vpop.permute.xlu0 %3667
        %3669 = vrot.lane.b32.xlu0 %v1249, 60
        %v3670 = vpop.permute.xlu0 %3669
        %3671 = vrot.lane.b32.xlu0 %v1250, 60
        %v3672 = vpop.permute.xlu0 %3671
        %3673 = vrot.lane.b32.xlu0 %v1251, 60
        %v3674 = vpop.permute.xlu0 %3673
        %3675 = vrot.lane.b32.xlu0 %v1252, 60
        %v3676 = vpop.permute.xlu0 %3675
        %3677 = vrot.lane.b32.xlu0 %v1253, 60
        %v3678 = vpop.permute.xlu0 %3677
        %3679 = vrot.lane.b32.xlu0 %v1254, 60
        %v3680 = vpop.permute.xlu0 %3679
        %3681 = vrot.lane.b32.xlu0 %v1255, 60
        %v3682 = vpop.permute.xlu0 %3681
        %3683 = vrot.lane.b32.xlu0 %v1256, 60
        %v3684 = vpop.permute.xlu0 %3683
        %3685 = vrot.lane.b32.xlu0 %v1257, 60
        %v3686 = vpop.permute.xlu0 %3685
        %3687 = vrot.lane.b32.xlu0 %v1258, 60
        %v3688 = vpop.permute.xlu0 %3687
        %3689 = vrot.lane.b32.xlu0 %v1259, 60
        %v3690 = vpop.permute.xlu0 %3689
        %3691 = vrot.lane.b32.xlu0 %v1260, 60
        %v3692 = vpop.permute.xlu0 %3691
        %3693 = vrot.lane.b32.xlu0 %v1261, 60
        %v3694 = vpop.permute.xlu0 %3693
        %3695 = vrot.lane.b32.xlu0 %v1262, 60
        %v3696 = vpop.permute.xlu0 %3695
        %3697 = vrot.lane.b32.xlu0 %v1263, 60
        %v3698 = vpop.permute.xlu0 %3697
        %v3731 = vsel %vm170, %v781, %v1876
        %v3732 = vsel %vm170, %v782, %v1878
        %v3733 = vsel %vm170, %v783, %v1880
        %v3734 = vsel %vm170, %v784, %v1882
        %v3735 = vsel %vm170, %v785, %v1884
        %v3736 = vsel %vm170, %v786, %v1886
        %v3737 = vsel %vm170, %v787, %v1888
        %v3738 = vsel %vm170, %v788, %v1890
        %v3739 = vsel %vm170, %v789, %v1892
        %v3740 = vsel %vm170, %v790, %v1894
        %v3741 = vsel %vm170, %v791, %v1896
        %v3742 = vsel %vm170, %v792, %v1898
        %v3743 = vsel %vm170, %v793, %v1900
        %v3744 = vsel %vm170, %v794, %v1902
        %v3745 = vsel %vm170, %v795, %v1904
        %v3746 = vsel %vm170, %v796, %v1906
        %v3747 = vsel %vm170, %v797, %v1908
        %v3748 = vsel %vm170, %v798, %v1910
        %v3749 = vsel %vm170, %v799, %v1912
        %v3750 = vsel %vm170, %v800, %v1914
        %v3751 = vsel %vm170, %v801, %v1916
        %v3752 = vsel %vm170, %v802, %v1918
        %v3753 = vsel %vm170, %v803, %v1920
        %v3754 = vsel %vm170, %v804, %v1922
        %v3755 = vsel %vm170, %v805, %v1924
        %v3756 = vsel %vm170, %v806, %v1926
        %v3757 = vsel %vm170, %v807, %v1928
        %v3758 = vsel %vm170, %v808, %v1930
        %v3759 = vsel %vm170, %v809, %v1932
        %v3760 = vsel %vm170, %v810, %v1934
        %v3761 = vsel %vm170, %v811, %v1936
        %v3762 = vsel %vm170, %v812, %v1938
        %vm3763 = vcmask 64512
        %v3764 = vsel %vm3763, %v3731, %v2004
        %v3765 = vsel %vm3763, %v3732, %v2006
        %v3766 = vsel %vm3763, %v3733, %v2008
        %v3767 = vsel %vm3763, %v3734, %v2010
        %v3768 = vsel %vm3763, %v3735, %v2012
        %v3769 = vsel %vm3763, %v3736, %v2014
        %v3770 = vsel %vm3763, %v3737, %v2016
        %v3771 = vsel %vm3763, %v3738, %v2018
        %v3772 = vsel %vm3763, %v3739, %v2020
        %v3773 = vsel %vm3763, %v3740, %v2022
        %v3774 = vsel %vm3763, %v3741, %v2024
        %v3775 = vsel %vm3763, %v3742, %v2026
        %v3776 = vsel %vm3763, %v3743, %v2028
        %v3777 = vsel %vm3763, %v3744, %v2030
        %v3778 = vsel %vm3763, %v3745, %v2032
        %v3779 = vsel %vm3763, %v3746, %v2034
        %v3780 = vsel %vm3763, %v3747, %v2036
        %v3781 = vsel %vm3763, %v3748, %v2038
        %v3782 = vsel %vm3763, %v3749, %v2040
        %v3783 = vsel %vm3763, %v3750, %v2042
        %v3784 = vsel %vm3763, %v3751, %v2044
        %v3785 = vsel %vm3763, %v3752, %v2046
        %v3786 = vsel %vm3763, %v3753, %v2048
        %v3787 = vsel %vm3763, %v3754, %v2050
        %v3788 = vsel %vm3763, %v3755, %v2052
        %v3789 = vsel %vm3763, %v3756, %v2054
        %v3790 = vsel %vm3763, %v3757, %v2056
        %v3791 = vsel %vm3763, %v3758, %v2058
        %v3792 = vsel %vm3763, %v3759, %v2060
        %v3793 = vsel %vm3763, %v3760, %v2062
        %v3794 = vsel %vm3763, %v3761, %v2064
        %v3795 = vsel %vm3763, %v3762, %v2066
        %vm3796 = vcmask 97280
        %v3797 = vsel %vm3796, %v3764, %v2132
        %v3798 = vsel %vm3796, %v3765, %v2134
        %v3799 = vsel %vm3796, %v3766, %v2136
        %v3800 = vsel %vm3796, %v3767, %v2138
        %v3801 = vsel %vm3796, %v3768, %v2140
        %v3802 = vsel %vm3796, %v3769, %v2142
        %v3803 = vsel %vm3796, %v3770, %v2144
        %v3804 = vsel %vm3796, %v3771, %v2146
        %v3805 = vsel %vm3796, %v3772, %v2148
        %v3806 = vsel %vm3796, %v3773, %v2150
        %v3807 = vsel %vm3796, %v3774, %v2152
        %v3808 = vsel %vm3796, %v3775, %v2154
        %v3809 = vsel %vm3796, %v3776, %v2156
        %v3810 = vsel %vm3796, %v3777, %v2158
        %v3811 = vsel %vm3796, %v3778, %v2160
        %v3812 = vsel %vm3796, %v3779, %v2162
        %v3813 = vsel %vm3796, %v3780, %v2164
        %v3814 = vsel %vm3796, %v3781, %v2166
        %v3815 = vsel %vm3796, %v3782, %v2168
        %v3816 = vsel %vm3796, %v3783, %v2170
        %v3817 = vsel %vm3796, %v3784, %v2172
        %v3818 = vsel %vm3796, %v3785, %v2174
        %v3819 = vsel %vm3796, %v3786, %v2176
        %v3820 = vsel %vm3796, %v3787, %v2178
        %v3821 = vsel %vm3796, %v3788, %v2180
        %v3822 = vsel %vm3796, %v3789, %v2182
        %v3823 = vsel %vm3796, %v3790, %v2184
        %v3824 = vsel %vm3796, %v3791, %v2186
        %v3825 = vsel %vm3796, %v3792, %v2188
        %v3826 = vsel %vm3796, %v3793, %v2190
        %v3827 = vsel %vm3796, %v3794, %v2192
        %v3828 = vsel %vm3796, %v3795, %v2194
        %vm3829 = vcmask 130048
        %v3830 = vsel %vm3829, %v3797, %v2260
        %v3831 = vsel %vm3829, %v3798, %v2262
        %v3832 = vsel %vm3829, %v3799, %v2264
        %v3833 = vsel %vm3829, %v3800, %v2266
        %v3834 = vsel %vm3829, %v3801, %v2268
        %v3835 = vsel %vm3829, %v3802, %v2270
        %v3836 = vsel %vm3829, %v3803, %v2272
        %v3837 = vsel %vm3829, %v3804, %v2274
        %v3838 = vsel %vm3829, %v3805, %v2276
        %v3839 = vsel %vm3829, %v3806, %v2278
        %v3840 = vsel %vm3829, %v3807, %v2280
        %v3841 = vsel %vm3829, %v3808, %v2282
        %v3842 = vsel %vm3829, %v3809, %v2284
        %v3843 = vsel %vm3829, %v3810, %v2286
        %v3844 = vsel %vm3829, %v3811, %v2288
        %v3845 = vsel %vm3829, %v3812, %v2290
        %v3846 = vsel %vm3829, %v3813, %v2292
        %v3847 = vsel %vm3829, %v3814, %v2294
        %v3848 = vsel %vm3829, %v3815, %v2296
        %v3849 = vsel %vm3829, %v3816, %v2298
        %v3850 = vsel %vm3829, %v3817, %v2300
        %v3851 = vsel %vm3829, %v3818, %v2302
        %v3852 = vsel %vm3829, %v3819, %v2304
        %v3853 = vsel %vm3829, %v3820, %v2306
        %v3854 = vsel %vm3829, %v3821, %v2308
        %v3855 = vsel %vm3829, %v3822, %v2310
        %v3856 = vsel %vm3829, %v3823, %v2312
        %v3857 = vsel %vm3829, %v3824, %v2314
        %v3858 = vsel %vm3829, %v3825, %v2316
        %v3859 = vsel %vm3829, %v3826, %v2318
        %v3860 = vsel %vm3829, %v3827, %v2320
        %v3861 = vsel %vm3829, %v3828, %v2322
        %vm3862 = vcmask 162816
        %v3863 = vsel %vm3862, %v3830, %v2388
        %v3864 = vsel %vm3862, %v3831, %v2390
        %v3865 = vsel %vm3862, %v3832, %v2392
        %v3866 = vsel %vm3862, %v3833, %v2394
        %v3867 = vsel %vm3862, %v3834, %v2396
        %v3868 = vsel %vm3862, %v3835, %v2398
        %v3869 = vsel %vm3862, %v3836, %v2400
        %v3870 = vsel %vm3862, %v3837, %v2402
        %v3871 = vsel %vm3862, %v3838, %v2404
        %v3872 = vsel %vm3862, %v3839, %v2406
        %v3873 = vsel %vm3862, %v3840, %v2408
        %v3874 = vsel %vm3862, %v3841, %v2410
        %v3875 = vsel %vm3862, %v3842, %v2412
        %v3876 = vsel %vm3862, %v3843, %v2414
        %v3877 = vsel %vm3862, %v3844, %v2416
        %v3878 = vsel %vm3862, %v3845, %v2418
        %v3879 = vsel %vm3862, %v3846, %v2420
        %v3880 = vsel %vm3862, %v3847, %v2422
        %v3881 = vsel %vm3862, %v3848, %v2424
        %v3882 = vsel %vm3862, %v3849, %v2426
        %v3883 = vsel %vm3862, %v3850, %v2428
        %v3884 = vsel %vm3862, %v3851, %v2430
        %v3885 = vsel %vm3862, %v3852, %v2432
        %v3886 = vsel %vm3862, %v3853, %v2434
        %v3887 = vsel %vm3862, %v3854, %v2436
        %v3888 = vsel %vm3862, %v3855, %v2438
        %v3889 = vsel %vm3862, %v3856, %v2440
        %v3890 = vsel %vm3862, %v3857, %v2442
        %v3891 = vsel %vm3862, %v3858, %v2444
        %v3892 = vsel %vm3862, %v3859, %v2446
        %v3893 = vsel %vm3862, %v3860, %v2448
        %v3894 = vsel %vm3862, %v3861, %v2450
        %vm3895 = vcmask 195584
        %v3896 = vsel %vm3895, %v3863, %v2516
        %v3897 = vsel %vm3895, %v3864, %v2518
        %v3898 = vsel %vm3895, %v3865, %v2520
        %v3899 = vsel %vm3895, %v3866, %v2522
        %v3900 = vsel %vm3895, %v3867, %v2524
        %v3901 = vsel %vm3895, %v3868, %v2526
        %v3902 = vsel %vm3895, %v3869, %v2528
        %v3903 = vsel %vm3895, %v3870, %v2530
        %v3904 = vsel %vm3895, %v3871, %v2532
        %v3905 = vsel %vm3895, %v3872, %v2534
        %v3906 = vsel %vm3895, %v3873, %v2536
        %v3907 = vsel %vm3895, %v3874, %v2538
        %v3908 = vsel %vm3895, %v3875, %v2540
        %v3909 = vsel %vm3895, %v3876, %v2542
        %v3910 = vsel %vm3895, %v3877, %v2544
        %v3911 = vsel %vm3895, %v3878, %v2546
        %v3912 = vsel %vm3895, %v3879, %v2548
        %v3913 = vsel %vm3895, %v3880, %v2550
        %v3914 = vsel %vm3895, %v3881, %v2552
        %v3915 = vsel %vm3895, %v3882, %v2554
        %v3916 = vsel %vm3895, %v3883, %v2556
        %v3917 = vsel %vm3895, %v3884, %v2558
        %v3918 = vsel %vm3895, %v3885, %v2560
        %v3919 = vsel %vm3895, %v3886, %v2562
        %v3920 = vsel %vm3895, %v3887, %v2564
        %v3921 = vsel %vm3895, %v3888, %v2566
        %v3922 = vsel %vm3895, %v3889, %v2568
        %v3923 = vsel %vm3895, %v3890, %v2570
        %v3924 = vsel %vm3895, %v3891, %v2572
        %v3925 = vsel %vm3895, %v3892, %v2574
        %v3926 = vsel %vm3895, %v3893, %v2576
        %v3927 = vsel %vm3895, %v3894, %v2578
        %vm3928 = vcmask 228352
        %v3929 = vsel %vm3928, %v3896, %v2644
        %v3930 = vsel %vm3928, %v3897, %v2646
        %v3931 = vsel %vm3928, %v3898, %v2648
        %v3932 = vsel %vm3928, %v3899, %v2650
        %v3933 = vsel %vm3928, %v3900, %v2652
        %v3934 = vsel %vm3928, %v3901, %v2654
        %v3935 = vsel %vm3928, %v3902, %v2656
        %v3936 = vsel %vm3928, %v3903, %v2658
        %v3937 = vsel %vm3928, %v3904, %v2660
        %v3938 = vsel %vm3928, %v3905, %v2662
        %v3939 = vsel %vm3928, %v3906, %v2664
        %v3940 = vsel %vm3928, %v3907, %v2666
        %v3941 = vsel %vm3928, %v3908, %v2668
        %v3942 = vsel %vm3928, %v3909, %v2670
        %v3943 = vsel %vm3928, %v3910, %v2672
        %v3944 = vsel %vm3928, %v3911, %v2674
        %v3945 = vsel %vm3928, %v3912, %v2676
        %v3946 = vsel %vm3928, %v3913, %v2678
        %v3947 = vsel %vm3928, %v3914, %v2680
        %v3948 = vsel %vm3928, %v3915, %v2682
        %v3949 = vsel %vm3928, %v3916, %v2684
        %v3950 = vsel %vm3928, %v3917, %v2686
        %v3951 = vsel %vm3928, %v3918, %v2688
        %v3952 = vsel %vm3928, %v3919, %v2690
        %v3953 = vsel %vm3928, %v3920, %v2692
        %v3954 = vsel %vm3928, %v3921, %v2694
        %v3955 = vsel %vm3928, %v3922, %v2696
        %v3956 = vsel %vm3928, %v3923, %v2698
        %v3957 = vsel %vm3928, %v3924, %v2700
        %v3958 = vsel %vm3928, %v3925, %v2702
        %v3959 = vsel %vm3928, %v3926, %v2704
        %v3960 = vsel %vm3928, %v3927, %v2706
        %vm3961 = vcmask 261120
        %v3962 = vsel %vm3961, %v3929, %v2772
        %v3963 = vsel %vm3961, %v3930, %v2774
        %v3964 = vsel %vm3961, %v3931, %v2776
        %v3965 = vsel %vm3961, %v3932, %v2778
        %v3966 = vsel %vm3961, %v3933, %v2780
        %v3967 = vsel %vm3961, %v3934, %v2782
        %v3968 = vsel %vm3961, %v3935, %v2784
        %v3969 = vsel %vm3961, %v3936, %v2786
        %v3970 = vsel %vm3961, %v3937, %v2788
        %v3971 = vsel %vm3961, %v3938, %v2790
        %v3972 = vsel %vm3961, %v3939, %v2792
        %v3973 = vsel %vm3961, %v3940, %v2794
        %v3974 = vsel %vm3961, %v3941, %v2796
        %v3975 = vsel %vm3961, %v3942, %v2798
        %v3976 = vsel %vm3961, %v3943, %v2800
        %v3977 = vsel %vm3961, %v3944, %v2802
        %v3978 = vsel %vm3961, %v3945, %v2804
        %v3979 = vsel %vm3961, %v3946, %v2806
        %v3980 = vsel %vm3961, %v3947, %v2808
        %v3981 = vsel %vm3961, %v3948, %v2810
        %v3982 = vsel %vm3961, %v3949, %v2812
        %v3983 = vsel %vm3961, %v3950, %v2814
        %v3984 = vsel %vm3961, %v3951, %v2816
        %v3985 = vsel %vm3961, %v3952, %v2818
        %v3986 = vsel %vm3961, %v3953, %v2820
        %v3987 = vsel %vm3961, %v3954, %v2822
        %v3988 = vsel %vm3961, %v3955, %v2824
        %v3989 = vsel %vm3961, %v3956, %v2826
        %v3990 = vsel %vm3961, %v3957, %v2828
        %v3991 = vsel %vm3961, %v3958, %v2830
        %v3992 = vsel %vm3961, %v3959, %v2832
        %v3993 = vsel %vm3961, %v3960, %v2834
        %vm3994 = vcmask 293888
        %v3995 = vsel %vm3994, %v3962, %v2900
        %v3996 = vsel %vm3994, %v3963, %v2902
        %v3997 = vsel %vm3994, %v3964, %v2904
        %v3998 = vsel %vm3994, %v3965, %v2906
        %v3999 = vsel %vm3994, %v3966, %v2908
        %v4000 = vsel %vm3994, %v3967, %v2910
        %v4001 = vsel %vm3994, %v3968, %v2912
        %v4002 = vsel %vm3994, %v3969, %v2914
        %v4003 = vsel %vm3994, %v3970, %v2916
        %v4004 = vsel %vm3994, %v3971, %v2918
        %v4005 = vsel %vm3994, %v3972, %v2920
        %v4006 = vsel %vm3994, %v3973, %v2922
        %v4007 = vsel %vm3994, %v3974, %v2924
        %v4008 = vsel %vm3994, %v3975, %v2926
        %v4009 = vsel %vm3994, %v3976, %v2928
        %v4010 = vsel %vm3994, %v3977, %v2930
        %v4011 = vsel %vm3994, %v3978, %v2932
        %v4012 = vsel %vm3994, %v3979, %v2934
        %v4013 = vsel %vm3994, %v3980, %v2936
        %v4014 = vsel %vm3994, %v3981, %v2938
        %v4015 = vsel %vm3994, %v3982, %v2940
        %v4016 = vsel %vm3994, %v3983, %v2942
        %v4017 = vsel %vm3994, %v3984, %v2944
        %v4018 = vsel %vm3994, %v3985, %v2946
        %v4019 = vsel %vm3994, %v3986, %v2948
        %v4020 = vsel %vm3994, %v3987, %v2950
        %v4021 = vsel %vm3994, %v3988, %v2952
        %v4022 = vsel %vm3994, %v3989, %v2954
        %v4023 = vsel %vm3994, %v3990, %v2956
        %v4024 = vsel %vm3994, %v3991, %v2958
        %v4025 = vsel %vm3994, %v3992, %v2960
        %v4026 = vsel %vm3994, %v3993, %v2962
        %vm4027 = vcmask 326656
        %v4028 = vsel %vm4027, %v3995, %v3028
        %v4029 = vsel %vm4027, %v3996, %v3030
        %v4030 = vsel %vm4027, %v3997, %v3032
        %v4031 = vsel %vm4027, %v3998, %v3034
        %v4032 = vsel %vm4027, %v3999, %v3036
        %v4033 = vsel %vm4027, %v4000, %v3038
        %v4034 = vsel %vm4027, %v4001, %v3040
        %v4035 = vsel %vm4027, %v4002, %v3042
        %v4036 = vsel %vm4027, %v4003, %v3044
        %v4037 = vsel %vm4027, %v4004, %v3046
        %v4038 = vsel %vm4027, %v4005, %v3048
        %v4039 = vsel %vm4027, %v4006, %v3050
        %v4040 = vsel %vm4027, %v4007, %v3052
        %v4041 = vsel %vm4027, %v4008, %v3054
        %v4042 = vsel %vm4027, %v4009, %v3056
        %v4043 = vsel %vm4027, %v4010, %v3058
        %v4044 = vsel %vm4027, %v4011, %v3060
        %v4045 = vsel %vm4027, %v4012, %v3062
        %v4046 = vsel %vm4027, %v4013, %v3064
        %v4047 = vsel %vm4027, %v4014, %v3066
        %v4048 = vsel %vm4027, %v4015, %v3068
        %v4049 = vsel %vm4027, %v4016, %v3070
        %v4050 = vsel %vm4027, %v4017, %v3072
        %v4051 = vsel %vm4027, %v4018, %v3074
        %v4052 = vsel %vm4027, %v4019, %v3076
        %v4053 = vsel %vm4027, %v4020, %v3078
        %v4054 = vsel %vm4027, %v4021, %v3080
        %v4055 = vsel %vm4027, %v4022, %v3082
        %v4056 = vsel %vm4027, %v4023, %v3084
        %v4057 = vsel %vm4027, %v4024, %v3086
        %v4058 = vsel %vm4027, %v4025, %v3088
        %v4059 = vsel %vm4027, %v4026, %v3090
        %vm4060 = vcmask 359424
        %v4061 = vsel %vm4060, %v4028, %v3156
        %v4062 = vsel %vm4060, %v4029, %v3158
        %v4063 = vsel %vm4060, %v4030, %v3160
        %v4064 = vsel %vm4060, %v4031, %v3162
        %v4065 = vsel %vm4060, %v4032, %v3164
        %v4066 = vsel %vm4060, %v4033, %v3166
        %v4067 = vsel %vm4060, %v4034, %v3168
        %v4068 = vsel %vm4060, %v4035, %v3170
        %v4069 = vsel %vm4060, %v4036, %v3172
        %v4070 = vsel %vm4060, %v4037, %v3174
        %v4071 = vsel %vm4060, %v4038, %v3176
        %v4072 = vsel %vm4060, %v4039, %v3178
        %v4073 = vsel %vm4060, %v4040, %v3180
        %v4074 = vsel %vm4060, %v4041, %v3182
        %v4075 = vsel %vm4060, %v4042, %v3184
        %v4076 = vsel %vm4060, %v4043, %v3186
        %v4077 = vsel %vm4060, %v4044, %v3188
        %v4078 = vsel %vm4060, %v4045, %v3190
        %v4079 = vsel %vm4060, %v4046, %v3192
        %v4080 = vsel %vm4060, %v4047, %v3194
        %v4081 = vsel %vm4060, %v4048, %v3196
        %v4082 = vsel %vm4060, %v4049, %v3198
        %v4083 = vsel %vm4060, %v4050, %v3200
        %v4084 = vsel %vm4060, %v4051, %v3202
        %v4085 = vsel %vm4060, %v4052, %v3204
        %v4086 = vsel %vm4060, %v4053, %v3206
        %v4087 = vsel %vm4060, %v4054, %v3208
        %v4088 = vsel %vm4060, %v4055, %v3210
        %v4089 = vsel %vm4060, %v4056, %v3212
        %v4090 = vsel %vm4060, %v4057, %v3214
        %v4091 = vsel %vm4060, %v4058, %v3216
        %v4092 = vsel %vm4060, %v4059, %v3218
        %vm4093 = vcmask 392192
        %v4094 = vsel %vm4093, %v4061, %v3284
        %v4095 = vsel %vm4093, %v4062, %v3286
        %v4096 = vsel %vm4093, %v4063, %v3288
        %v4097 = vsel %vm4093, %v4064, %v3290
        %v4098 = vsel %vm4093, %v4065, %v3292
        %v4099 = vsel %vm4093, %v4066, %v3294
        %v4100 = vsel %vm4093, %v4067, %v3296
        %v4101 = vsel %vm4093, %v4068, %v3298
        %v4102 = vsel %vm4093, %v4069, %v3300
        %v4103 = vsel %vm4093, %v4070, %v3302
        %v4104 = vsel %vm4093, %v4071, %v3304
        %v4105 = vsel %vm4093, %v4072, %v3306
        %v4106 = vsel %vm4093, %v4073, %v3308
        %v4107 = vsel %vm4093, %v4074, %v3310
        %v4108 = vsel %vm4093, %v4075, %v3312
        %v4109 = vsel %vm4093, %v4076, %v3314
        %v4110 = vsel %vm4093, %v4077, %v3316
        %v4111 = vsel %vm4093, %v4078, %v3318
        %v4112 = vsel %vm4093, %v4079, %v3320
        %v4113 = vsel %vm4093, %v4080, %v3322
        %v4114 = vsel %vm4093, %v4081, %v3324
        %v4115 = vsel %vm4093, %v4082, %v3326
        %v4116 = vsel %vm4093, %v4083, %v3328
        %v4117 = vsel %vm4093, %v4084, %v3330
        %v4118 = vsel %vm4093, %v4085, %v3332
        %v4119 = vsel %vm4093, %v4086, %v3334
        %v4120 = vsel %vm4093, %v4087, %v3336
        %v4121 = vsel %vm4093, %v4088, %v3338
        %v4122 = vsel %vm4093, %v4089, %v3340
        %v4123 = vsel %vm4093, %v4090, %v3342
        %v4124 = vsel %vm4093, %v4091, %v3344
        %v4125 = vsel %vm4093, %v4092, %v3346
        %vm4126 = vcmask 424960
        %v4127 = vsel %vm4126, %v4094, %v3380
        %v4128 = vsel %vm4126, %v4095, %v3382
        %v4129 = vsel %vm4126, %v4096, %v3384
        %v4130 = vsel %vm4126, %v4097, %v3386
        %v4131 = vsel %vm4126, %v4098, %v3388
        %v4132 = vsel %vm4126, %v4099, %v3390
        %v4133 = vsel %vm4126, %v4100, %v3392
        %v4134 = vsel %vm4126, %v4101, %v3394
        %v4135 = vsel %vm4126, %v4102, %v3396
        %v4136 = vsel %vm4126, %v4103, %v3398
        %v4137 = vsel %vm4126, %v4104, %v3400
        %v4138 = vsel %vm4126, %v4105, %v3402
        %v4139 = vsel %vm4126, %v4106, %v3404
        %v4140 = vsel %vm4126, %v4107, %v3406
        %v4141 = vsel %vm4126, %v4108, %v3408
        %v4142 = vsel %vm4126, %v4109, %v3410
        %v4143 = vsel %vm4126, %v4110, %v3412
        %v4144 = vsel %vm4126, %v4111, %v3414
        %v4145 = vsel %vm4126, %v4112, %v3416
        %v4146 = vsel %vm4126, %v4113, %v3418
        %v4147 = vsel %vm4126, %v4114, %v3420
        %v4148 = vsel %vm4126, %v4115, %v3422
        %v4149 = vsel %vm4126, %v4116, %v3424
        %v4150 = vsel %vm4126, %v4117, %v3426
        %v4151 = vsel %vm4126, %v4118, %v3428
        %v4152 = vsel %vm4126, %v4119, %v3430
        %v4153 = vsel %vm4126, %v4120, %v3432
        %v4154 = vsel %vm4126, %v4121, %v3434
        %v4155 = vsel %vm4126, %v4122, %v3436
        %v4156 = vsel %vm4126, %v4123, %v3438
        %v4157 = vsel %vm4126, %v4124, %v3440
        %v4158 = vsel %vm4126, %v4125, %v3442
        %vm4159 = vcmask 457728
        %v4160 = vsel %vm4159, %v4127, %v3508
        %v4161 = vsel %vm4159, %v4128, %v3510
        %v4162 = vsel %vm4159, %v4129, %v3512
        %v4163 = vsel %vm4159, %v4130, %v3514
        %v4164 = vsel %vm4159, %v4131, %v3516
        %v4165 = vsel %vm4159, %v4132, %v3518
        %v4166 = vsel %vm4159, %v4133, %v3520
        %v4167 = vsel %vm4159, %v4134, %v3522
        %v4168 = vsel %vm4159, %v4135, %v3524
        %v4169 = vsel %vm4159, %v4136, %v3526
        %v4170 = vsel %vm4159, %v4137, %v3528
        %v4171 = vsel %vm4159, %v4138, %v3530
        %v4172 = vsel %vm4159, %v4139, %v3532
        %v4173 = vsel %vm4159, %v4140, %v3534
        %v4174 = vsel %vm4159, %v4141, %v3536
        %v4175 = vsel %vm4159, %v4142, %v3538
        %v4176 = vsel %vm4159, %v4143, %v3540
        %v4177 = vsel %vm4159, %v4144, %v3542
        %v4178 = vsel %vm4159, %v4145, %v3544
        %v4179 = vsel %vm4159, %v4146, %v3546
        %v4180 = vsel %vm4159, %v4147, %v3548
        %v4181 = vsel %vm4159, %v4148, %v3550
        %v4182 = vsel %vm4159, %v4149, %v3552
        %v4183 = vsel %vm4159, %v4150, %v3554
        %v4184 = vsel %vm4159, %v4151, %v3556
        %v4185 = vsel %vm4159, %v4152, %v3558
        %v4186 = vsel %vm4159, %v4153, %v3560
        %v4187 = vsel %vm4159, %v4154, %v3562
        %v4188 = vsel %vm4159, %v4155, %v3564
        %v4189 = vsel %vm4159, %v4156, %v3566
        %v4190 = vsel %vm4159, %v4157, %v3568
        %v4191 = vsel %vm4159, %v4158, %v3570
        %vm4192 = vcmask 490496
        %v4193 = vsel %vm4192, %v4160, %v3636
        %v4194 = vsel %vm4192, %v4161, %v3638
        %v4195 = vsel %vm4192, %v4162, %v3640
        %v4196 = vsel %vm4192, %v4163, %v3642
        %v4197 = vsel %vm4192, %v4164, %v3644
        %v4198 = vsel %vm4192, %v4165, %v3646
        %v4199 = vsel %vm4192, %v4166, %v3648
        %v4200 = vsel %vm4192, %v4167, %v3650
        %v4201 = vsel %vm4192, %v4168, %v3652
        %v4202 = vsel %vm4192, %v4169, %v3654
        %v4203 = vsel %vm4192, %v4170, %v3656
        %v4204 = vsel %vm4192, %v4171, %v3658
        %v4205 = vsel %vm4192, %v4172, %v3660
        %v4206 = vsel %vm4192, %v4173, %v3662
        %v4207 = vsel %vm4192, %v4174, %v3664
        %v4208 = vsel %vm4192, %v4175, %v3666
        %v4209 = vsel %vm4192, %v4176, %v3668
        %v4210 = vsel %vm4192, %v4177, %v3670
        %v4211 = vsel %vm4192, %v4178, %v3672
        %v4212 = vsel %vm4192, %v4179, %v3674
        %v4213 = vsel %vm4192, %v4180, %v3676
        %v4214 = vsel %vm4192, %v4181, %v3678
        %v4215 = vsel %vm4192, %v4182, %v3680
        %v4216 = vsel %vm4192, %v4183, %v3682
        %v4217 = vsel %vm4192, %v4184, %v3684
        %v4218 = vsel %vm4192, %v4185, %v3686
        %v4219 = vsel %vm4192, %v4186, %v3688
        %v4220 = vsel %vm4192, %v4187, %v3690
        %v4221 = vsel %vm4192, %v4188, %v3692
        %v4222 = vsel %vm4192, %v4189, %v3694
        %v4223 = vsel %vm4192, %v4190, %v3696
        %v4224 = vsel %vm4192, %v4191, %v3698
        %4257 = vrot.lane.b32.xlu0 %v1296, 4
        %v4258 = vpop.permute.xlu0 %4257
        %4259 = vrot.lane.b32.xlu0 %v1297, 4
        %v4260 = vpop.permute.xlu0 %4259
        %4261 = vrot.lane.b32.xlu0 %v1298, 4
        %v4262 = vpop.permute.xlu0 %4261
        %4263 = vrot.lane.b32.xlu0 %v1299, 4
        %v4264 = vpop.permute.xlu0 %4263
        %4265 = vrot.lane.b32.xlu0 %v1300, 4
        %v4266 = vpop.permute.xlu0 %4265
        %4267 = vrot.lane.b32.xlu0 %v1301, 4
        %v4268 = vpop.permute.xlu0 %4267
        %4269 = vrot.lane.b32.xlu0 %v1302, 4
        %v4270 = vpop.permute.xlu0 %4269
        %4271 = vrot.lane.b32.xlu0 %v1303, 4
        %v4272 = vpop.permute.xlu0 %4271
        %4273 = vrot.lane.b32.xlu0 %v1304, 4
        %v4274 = vpop.permute.xlu0 %4273
        %4275 = vrot.lane.b32.xlu0 %v1305, 4
        %v4276 = vpop.permute.xlu0 %4275
        %4277 = vrot.lane.b32.xlu0 %v1306, 4
        %v4278 = vpop.permute.xlu0 %4277
        %4279 = vrot.lane.b32.xlu0 %v1307, 4
        %v4280 = vpop.permute.xlu0 %4279
        %4281 = vrot.lane.b32.xlu0 %v1308, 4
        %v4282 = vpop.permute.xlu0 %4281
        %4283 = vrot.lane.b32.xlu0 %v1309, 4
        %v4284 = vpop.permute.xlu0 %4283
        %4285 = vrot.lane.b32.xlu0 %v1310, 4
        %v4286 = vpop.permute.xlu0 %4285
        %4287 = vrot.lane.b32.xlu0 %v1311, 4
        %v4288 = vpop.permute.xlu0 %4287
        %4289 = vrot.lane.b32.xlu0 %v1312, 4
        %v4290 = vpop.permute.xlu0 %4289
        %4291 = vrot.lane.b32.xlu0 %v1313, 4
        %v4292 = vpop.permute.xlu0 %4291
        %4293 = vrot.lane.b32.xlu0 %v1314, 4
        %v4294 = vpop.permute.xlu0 %4293
        %4295 = vrot.lane.b32.xlu0 %v1315, 4
        %v4296 = vpop.permute.xlu0 %4295
        %4297 = vrot.lane.b32.xlu0 %v1316, 4
        %v4298 = vpop.permute.xlu0 %4297
        %4299 = vrot.lane.b32.xlu0 %v1317, 4
        %v4300 = vpop.permute.xlu0 %4299
        %4301 = vrot.lane.b32.xlu0 %v1318, 4
        %v4302 = vpop.permute.xlu0 %4301
        %4303 = vrot.lane.b32.xlu0 %v1319, 4
        %v4304 = vpop.permute.xlu0 %4303
        %4305 = vrot.lane.b32.xlu0 %v1320, 4
        %v4306 = vpop.permute.xlu0 %4305
        %4307 = vrot.lane.b32.xlu0 %v1321, 4
        %v4308 = vpop.permute.xlu0 %4307
        %4309 = vrot.lane.b32.xlu0 %v1322, 4
        %v4310 = vpop.permute.xlu0 %4309
        %4311 = vrot.lane.b32.xlu0 %v1323, 4
        %v4312 = vpop.permute.xlu0 %4311
        %4313 = vrot.lane.b32.xlu0 %v1324, 4
        %v4314 = vpop.permute.xlu0 %4313
        %4315 = vrot.lane.b32.xlu0 %v1325, 4
        %v4316 = vpop.permute.xlu0 %4315
        %4317 = vrot.lane.b32.xlu0 %v1326, 4
        %v4318 = vpop.permute.xlu0 %4317
        %4319 = vrot.lane.b32.xlu0 %v1327, 4
        %v4320 = vpop.permute.xlu0 %4319
        %4385 = vrot.lane.b32.xlu0 %v1329, 8
        %v4386 = vpop.permute.xlu0 %4385
        %4387 = vrot.lane.b32.xlu0 %v1330, 8
        %v4388 = vpop.permute.xlu0 %4387
        %4389 = vrot.lane.b32.xlu0 %v1331, 8
        %v4390 = vpop.permute.xlu0 %4389
        %4391 = vrot.lane.b32.xlu0 %v1332, 8
        %v4392 = vpop.permute.xlu0 %4391
        %4393 = vrot.lane.b32.xlu0 %v1333, 8
        %v4394 = vpop.permute.xlu0 %4393
        %4395 = vrot.lane.b32.xlu0 %v1334, 8
        %v4396 = vpop.permute.xlu0 %4395
        %4397 = vrot.lane.b32.xlu0 %v1335, 8
        %v4398 = vpop.permute.xlu0 %4397
        %4399 = vrot.lane.b32.xlu0 %v1336, 8
        %v4400 = vpop.permute.xlu0 %4399
        %4401 = vrot.lane.b32.xlu0 %v1337, 8
        %v4402 = vpop.permute.xlu0 %4401
        %4403 = vrot.lane.b32.xlu0 %v1338, 8
        %v4404 = vpop.permute.xlu0 %4403
        %4405 = vrot.lane.b32.xlu0 %v1339, 8
        %v4406 = vpop.permute.xlu0 %4405
        %4407 = vrot.lane.b32.xlu0 %v1340, 8
        %v4408 = vpop.permute.xlu0 %4407
        %4409 = vrot.lane.b32.xlu0 %v1341, 8
        %v4410 = vpop.permute.xlu0 %4409
        %4411 = vrot.lane.b32.xlu0 %v1342, 8
        %v4412 = vpop.permute.xlu0 %4411
        %4413 = vrot.lane.b32.xlu0 %v1343, 8
        %v4414 = vpop.permute.xlu0 %4413
        %4415 = vrot.lane.b32.xlu0 %v1344, 8
        %v4416 = vpop.permute.xlu0 %4415
        %4417 = vrot.lane.b32.xlu0 %v1345, 8
        %v4418 = vpop.permute.xlu0 %4417
        %4419 = vrot.lane.b32.xlu0 %v1346, 8
        %v4420 = vpop.permute.xlu0 %4419
        %4421 = vrot.lane.b32.xlu0 %v1347, 8
        %v4422 = vpop.permute.xlu0 %4421
        %4423 = vrot.lane.b32.xlu0 %v1348, 8
        %v4424 = vpop.permute.xlu0 %4423
        %4425 = vrot.lane.b32.xlu0 %v1349, 8
        %v4426 = vpop.permute.xlu0 %4425
        %4427 = vrot.lane.b32.xlu0 %v1350, 8
        %v4428 = vpop.permute.xlu0 %4427
        %4429 = vrot.lane.b32.xlu0 %v1351, 8
        %v4430 = vpop.permute.xlu0 %4429
        %4431 = vrot.lane.b32.xlu0 %v1352, 8
        %v4432 = vpop.permute.xlu0 %4431
        %4433 = vrot.lane.b32.xlu0 %v1353, 8
        %v4434 = vpop.permute.xlu0 %4433
        %4435 = vrot.lane.b32.xlu0 %v1354, 8
        %v4436 = vpop.permute.xlu0 %4435
        %4437 = vrot.lane.b32.xlu0 %v1355, 8
        %v4438 = vpop.permute.xlu0 %4437
        %4439 = vrot.lane.b32.xlu0 %v1356, 8
        %v4440 = vpop.permute.xlu0 %4439
        %4441 = vrot.lane.b32.xlu0 %v1357, 8
        %v4442 = vpop.permute.xlu0 %4441
        %4443 = vrot.lane.b32.xlu0 %v1358, 8
        %v4444 = vpop.permute.xlu0 %4443
        %4445 = vrot.lane.b32.xlu0 %v1359, 8
        %v4446 = vpop.permute.xlu0 %4445
        %4447 = vrot.lane.b32.xlu0 %v1360, 8
        %v4448 = vpop.permute.xlu0 %4447
        %4513 = vrot.lane.b32.xlu0 %v1361, 12
        %v4514 = vpop.permute.xlu0 %4513
        %4515 = vrot.lane.b32.xlu0 %v1362, 12
        %v4516 = vpop.permute.xlu0 %4515
        %4517 = vrot.lane.b32.xlu0 %v1363, 12
        %v4518 = vpop.permute.xlu0 %4517
        %4519 = vrot.lane.b32.xlu0 %v1364, 12
        %v4520 = vpop.permute.xlu0 %4519
        %4521 = vrot.lane.b32.xlu0 %v1365, 12
        %v4522 = vpop.permute.xlu0 %4521
        %4523 = vrot.lane.b32.xlu0 %v1366, 12
        %v4524 = vpop.permute.xlu0 %4523
        %4525 = vrot.lane.b32.xlu0 %v1367, 12
        %v4526 = vpop.permute.xlu0 %4525
        %4527 = vrot.lane.b32.xlu0 %v1368, 12
        %v4528 = vpop.permute.xlu0 %4527
        %4529 = vrot.lane.b32.xlu0 %v1369, 12
        %v4530 = vpop.permute.xlu0 %4529
        %4531 = vrot.lane.b32.xlu0 %v1370, 12
        %v4532 = vpop.permute.xlu0 %4531
        %4533 = vrot.lane.b32.xlu0 %v1371, 12
        %v4534 = vpop.permute.xlu0 %4533
        %4535 = vrot.lane.b32.xlu0 %v1372, 12
        %v4536 = vpop.permute.xlu0 %4535
        %4537 = vrot.lane.b32.xlu0 %v1373, 12
        %v4538 = vpop.permute.xlu0 %4537
        %4539 = vrot.lane.b32.xlu0 %v1374, 12
        %v4540 = vpop.permute.xlu0 %4539
        %4541 = vrot.lane.b32.xlu0 %v1375, 12
        %v4542 = vpop.permute.xlu0 %4541
        %4543 = vrot.lane.b32.xlu0 %v1376, 12
        %v4544 = vpop.permute.xlu0 %4543
        %4545 = vrot.lane.b32.xlu0 %v1377, 12
        %v4546 = vpop.permute.xlu0 %4545
        %4547 = vrot.lane.b32.xlu0 %v1378, 12
        %v4548 = vpop.permute.xlu0 %4547
        %4549 = vrot.lane.b32.xlu0 %v1379, 12
        %v4550 = vpop.permute.xlu0 %4549
        %4551 = vrot.lane.b32.xlu0 %v1380, 12
        %v4552 = vpop.permute.xlu0 %4551
        %4553 = vrot.lane.b32.xlu0 %v1381, 12
        %v4554 = vpop.permute.xlu0 %4553
        %4555 = vrot.lane.b32.xlu0 %v1382, 12
        %v4556 = vpop.permute.xlu0 %4555
        %4557 = vrot.lane.b32.xlu0 %v1383, 12
        %v4558 = vpop.permute.xlu0 %4557
        %4559 = vrot.lane.b32.xlu0 %v1384, 12
        %v4560 = vpop.permute.xlu0 %4559
        %4561 = vrot.lane.b32.xlu0 %v1385, 12
        %v4562 = vpop.permute.xlu0 %4561
        %4563 = vrot.lane.b32.xlu0 %v1386, 12
        %v4564 = vpop.permute.xlu0 %4563
        %4565 = vrot.lane.b32.xlu0 %v1387, 12
        %v4566 = vpop.permute.xlu0 %4565
        %4567 = vrot.lane.b32.xlu0 %v1388, 12
        %v4568 = vpop.permute.xlu0 %4567
        %4569 = vrot.lane.b32.xlu0 %v1389, 12
        %v4570 = vpop.permute.xlu0 %4569
        %4571 = vrot.lane.b32.xlu0 %v1390, 12
        %v4572 = vpop.permute.xlu0 %4571
        %4573 = vrot.lane.b32.xlu0 %v1391, 12
        %v4574 = vpop.permute.xlu0 %4573
        %4575 = vrot.lane.b32.xlu0 %v1392, 12
        %v4576 = vpop.permute.xlu0 %4575
        %4641 = vrot.lane.b32.xlu0 %v1393, 16
        %v4642 = vpop.permute.xlu0 %4641
        %4643 = vrot.lane.b32.xlu0 %v1394, 16
        %v4644 = vpop.permute.xlu0 %4643
        %4645 = vrot.lane.b32.xlu0 %v1395, 16
        %v4646 = vpop.permute.xlu0 %4645
        %4647 = vrot.lane.b32.xlu0 %v1396, 16
        %v4648 = vpop.permute.xlu0 %4647
        %4649 = vrot.lane.b32.xlu0 %v1397, 16
        %v4650 = vpop.permute.xlu0 %4649
        %4651 = vrot.lane.b32.xlu0 %v1398, 16
        %v4652 = vpop.permute.xlu0 %4651
        %4653 = vrot.lane.b32.xlu0 %v1399, 16
        %v4654 = vpop.permute.xlu0 %4653
        %4655 = vrot.lane.b32.xlu0 %v1400, 16
        %v4656 = vpop.permute.xlu0 %4655
        %4657 = vrot.lane.b32.xlu0 %v1401, 16
        %v4658 = vpop.permute.xlu0 %4657
        %4659 = vrot.lane.b32.xlu0 %v1402, 16
        %v4660 = vpop.permute.xlu0 %4659
        %4661 = vrot.lane.b32.xlu0 %v1403, 16
        %v4662 = vpop.permute.xlu0 %4661
        %4663 = vrot.lane.b32.xlu0 %v1404, 16
        %v4664 = vpop.permute.xlu0 %4663
        %4665 = vrot.lane.b32.xlu0 %v1405, 16
        %v4666 = vpop.permute.xlu0 %4665
        %4667 = vrot.lane.b32.xlu0 %v1406, 16
        %v4668 = vpop.permute.xlu0 %4667
        %4669 = vrot.lane.b32.xlu0 %v1407, 16
        %v4670 = vpop.permute.xlu0 %4669
        %4671 = vrot.lane.b32.xlu0 %v1408, 16
        %v4672 = vpop.permute.xlu0 %4671
        %4673 = vrot.lane.b32.xlu0 %v1409, 16
        %v4674 = vpop.permute.xlu0 %4673
        %4675 = vrot.lane.b32.xlu0 %v1410, 16
        %v4676 = vpop.permute.xlu0 %4675
        %4677 = vrot.lane.b32.xlu0 %v1411, 16
        %v4678 = vpop.permute.xlu0 %4677
        %4679 = vrot.lane.b32.xlu0 %v1412, 16
        %v4680 = vpop.permute.xlu0 %4679
        %4681 = vrot.lane.b32.xlu0 %v1413, 16
        %v4682 = vpop.permute.xlu0 %4681
        %4683 = vrot.lane.b32.xlu0 %v1414, 16
        %v4684 = vpop.permute.xlu0 %4683
        %4685 = vrot.lane.b32.xlu0 %v1415, 16
        %v4686 = vpop.permute.xlu0 %4685
        %4687 = vrot.lane.b32.xlu0 %v1416, 16
        %v4688 = vpop.permute.xlu0 %4687
        %4689 = vrot.lane.b32.xlu0 %v1417, 16
        %v4690 = vpop.permute.xlu0 %4689
        %4691 = vrot.lane.b32.xlu0 %v1418, 16
        %v4692 = vpop.permute.xlu0 %4691
        %4693 = vrot.lane.b32.xlu0 %v1419, 16
        %v4694 = vpop.permute.xlu0 %4693
        %4695 = vrot.lane.b32.xlu0 %v1420, 16
        %v4696 = vpop.permute.xlu0 %4695
        %4697 = vrot.lane.b32.xlu0 %v1421, 16
        %v4698 = vpop.permute.xlu0 %4697
        %4699 = vrot.lane.b32.xlu0 %v1422, 16
        %v4700 = vpop.permute.xlu0 %4699
        %4701 = vrot.lane.b32.xlu0 %v1423, 16
        %v4702 = vpop.permute.xlu0 %4701
        %4703 = vrot.lane.b32.xlu0 %v1424, 16
        %v4704 = vpop.permute.xlu0 %4703
        %4769 = vrot.lane.b32.xlu0 %v1425, 20
        %v4770 = vpop.permute.xlu0 %4769
        %4771 = vrot.lane.b32.xlu0 %v1426, 20
        %v4772 = vpop.permute.xlu0 %4771
        %4773 = vrot.lane.b32.xlu0 %v1427, 20
        %v4774 = vpop.permute.xlu0 %4773
        %4775 = vrot.lane.b32.xlu0 %v1428, 20
        %v4776 = vpop.permute.xlu0 %4775
        %4777 = vrot.lane.b32.xlu0 %v1429, 20
        %v4778 = vpop.permute.xlu0 %4777
        %4779 = vrot.lane.b32.xlu0 %v1430, 20
        %v4780 = vpop.permute.xlu0 %4779
        %4781 = vrot.lane.b32.xlu0 %v1431, 20
        %v4782 = vpop.permute.xlu0 %4781
        %4783 = vrot.lane.b32.xlu0 %v1432, 20
        %v4784 = vpop.permute.xlu0 %4783
        %4785 = vrot.lane.b32.xlu0 %v1433, 20
        %v4786 = vpop.permute.xlu0 %4785
        %4787 = vrot.lane.b32.xlu0 %v1434, 20
        %v4788 = vpop.permute.xlu0 %4787
        %4789 = vrot.lane.b32.xlu0 %v1435, 20
        %v4790 = vpop.permute.xlu0 %4789
        %4791 = vrot.lane.b32.xlu0 %v1436, 20
        %v4792 = vpop.permute.xlu0 %4791
        %4793 = vrot.lane.b32.xlu0 %v1437, 20
        %v4794 = vpop.permute.xlu0 %4793
        %4795 = vrot.lane.b32.xlu0 %v1438, 20
        %v4796 = vpop.permute.xlu0 %4795
        %4797 = vrot.lane.b32.xlu0 %v1439, 20
        %v4798 = vpop.permute.xlu0 %4797
        %4799 = vrot.lane.b32.xlu0 %v1440, 20
        %v4800 = vpop.permute.xlu0 %4799
        %4801 = vrot.lane.b32.xlu0 %v1441, 20
        %v4802 = vpop.permute.xlu0 %4801
        %4803 = vrot.lane.b32.xlu0 %v1442, 20
        %v4804 = vpop.permute.xlu0 %4803
        %4805 = vrot.lane.b32.xlu0 %v1443, 20
        %v4806 = vpop.permute.xlu0 %4805
        %4807 = vrot.lane.b32.xlu0 %v1444, 20
        %v4808 = vpop.permute.xlu0 %4807
        %4809 = vrot.lane.b32.xlu0 %v1445, 20
        %v4810 = vpop.permute.xlu0 %4809
        %4811 = vrot.lane.b32.xlu0 %v1446, 20
        %v4812 = vpop.permute.xlu0 %4811
        %4813 = vrot.lane.b32.xlu0 %v1447, 20
        %v4814 = vpop.permute.xlu0 %4813
        %4815 = vrot.lane.b32.xlu0 %v1448, 20
        %v4816 = vpop.permute.xlu0 %4815
        %4817 = vrot.lane.b32.xlu0 %v1449, 20
        %v4818 = vpop.permute.xlu0 %4817
        %4819 = vrot.lane.b32.xlu0 %v1450, 20
        %v4820 = vpop.permute.xlu0 %4819
        %4821 = vrot.lane.b32.xlu0 %v1451, 20
        %v4822 = vpop.permute.xlu0 %4821
        %4823 = vrot.lane.b32.xlu0 %v1452, 20
        %v4824 = vpop.permute.xlu0 %4823
        %4825 = vrot.lane.b32.xlu0 %v1453, 20
        %v4826 = vpop.permute.xlu0 %4825
        %4827 = vrot.lane.b32.xlu0 %v1454, 20
        %v4828 = vpop.permute.xlu0 %4827
        %4829 = vrot.lane.b32.xlu0 %v1455, 20
        %v4830 = vpop.permute.xlu0 %4829
        %4831 = vrot.lane.b32.xlu0 %v1456, 20
        %v4832 = vpop.permute.xlu0 %4831
        %4865 = vrot.lane.b32.xlu0 %v909, 24
        %v4866 = vpop.permute.xlu0 %4865
        %4867 = vrot.lane.b32.xlu0 %v910, 24
        %v4868 = vpop.permute.xlu0 %4867
        %4869 = vrot.lane.b32.xlu0 %v911, 24
        %v4870 = vpop.permute.xlu0 %4869
        %4871 = vrot.lane.b32.xlu0 %v912, 24
        %v4872 = vpop.permute.xlu0 %4871
        %4873 = vrot.lane.b32.xlu0 %v913, 24
        %v4874 = vpop.permute.xlu0 %4873
        %4875 = vrot.lane.b32.xlu0 %v914, 24
        %v4876 = vpop.permute.xlu0 %4875
        %4877 = vrot.lane.b32.xlu0 %v915, 24
        %v4878 = vpop.permute.xlu0 %4877
        %4879 = vrot.lane.b32.xlu0 %v916, 24
        %v4880 = vpop.permute.xlu0 %4879
        %4881 = vrot.lane.b32.xlu0 %v917, 24
        %v4882 = vpop.permute.xlu0 %4881
        %4883 = vrot.lane.b32.xlu0 %v918, 24
        %v4884 = vpop.permute.xlu0 %4883
        %4885 = vrot.lane.b32.xlu0 %v919, 24
        %v4886 = vpop.permute.xlu0 %4885
        %4887 = vrot.lane.b32.xlu0 %v920, 24
        %v4888 = vpop.permute.xlu0 %4887
        %4889 = vrot.lane.b32.xlu0 %v921, 24
        %v4890 = vpop.permute.xlu0 %4889
        %4891 = vrot.lane.b32.xlu0 %v922, 24
        %v4892 = vpop.permute.xlu0 %4891
        %4893 = vrot.lane.b32.xlu0 %v923, 24
        %v4894 = vpop.permute.xlu0 %4893
        %4895 = vrot.lane.b32.xlu0 %v924, 24
        %v4896 = vpop.permute.xlu0 %4895
        %4897 = vrot.lane.b32.xlu0 %v925, 24
        %v4898 = vpop.permute.xlu0 %4897
        %4899 = vrot.lane.b32.xlu0 %v926, 24
        %v4900 = vpop.permute.xlu0 %4899
        %4901 = vrot.lane.b32.xlu0 %v927, 24
        %v4902 = vpop.permute.xlu0 %4901
        %4903 = vrot.lane.b32.xlu0 %v928, 24
        %v4904 = vpop.permute.xlu0 %4903
        %4905 = vrot.lane.b32.xlu0 %v929, 24
        %v4906 = vpop.permute.xlu0 %4905
        %4907 = vrot.lane.b32.xlu0 %v930, 24
        %v4908 = vpop.permute.xlu0 %4907
        %4909 = vrot.lane.b32.xlu0 %v931, 24
        %v4910 = vpop.permute.xlu0 %4909
        %4911 = vrot.lane.b32.xlu0 %v932, 24
        %v4912 = vpop.permute.xlu0 %4911
        %4913 = vrot.lane.b32.xlu0 %v933, 24
        %v4914 = vpop.permute.xlu0 %4913
        %4915 = vrot.lane.b32.xlu0 %v934, 24
        %v4916 = vpop.permute.xlu0 %4915
        %4917 = vrot.lane.b32.xlu0 %v935, 24
        %v4918 = vpop.permute.xlu0 %4917
        %4919 = vrot.lane.b32.xlu0 %v936, 24
        %v4920 = vpop.permute.xlu0 %4919
        %4921 = vrot.lane.b32.xlu0 %v937, 24
        %v4922 = vpop.permute.xlu0 %4921
        %4923 = vrot.lane.b32.xlu0 %v938, 24
        %v4924 = vpop.permute.xlu0 %4923
        %4925 = vrot.lane.b32.xlu0 %v939, 24
        %v4926 = vpop.permute.xlu0 %4925
        %4927 = vrot.lane.b32.xlu0 %v940, 24
        %v4928 = vpop.permute.xlu0 %4927
        %4993 = vrot.lane.b32.xlu0 %v1457, 28
        %v4994 = vpop.permute.xlu0 %4993
        %4995 = vrot.lane.b32.xlu0 %v1458, 28
        %v4996 = vpop.permute.xlu0 %4995
        %4997 = vrot.lane.b32.xlu0 %v1459, 28
        %v4998 = vpop.permute.xlu0 %4997
        %4999 = vrot.lane.b32.xlu0 %v1460, 28
        %v5000 = vpop.permute.xlu0 %4999
        %5001 = vrot.lane.b32.xlu0 %v1461, 28
        %v5002 = vpop.permute.xlu0 %5001
        %5003 = vrot.lane.b32.xlu0 %v1462, 28
        %v5004 = vpop.permute.xlu0 %5003
        %5005 = vrot.lane.b32.xlu0 %v1463, 28
        %v5006 = vpop.permute.xlu0 %5005
        %5007 = vrot.lane.b32.xlu0 %v1464, 28
        %v5008 = vpop.permute.xlu0 %5007
        %5009 = vrot.lane.b32.xlu0 %v1465, 28
        %v5010 = vpop.permute.xlu0 %5009
        %5011 = vrot.lane.b32.xlu0 %v1466, 28
        %v5012 = vpop.permute.xlu0 %5011
        %5013 = vrot.lane.b32.xlu0 %v1467, 28
        %v5014 = vpop.permute.xlu0 %5013
        %5015 = vrot.lane.b32.xlu0 %v1468, 28
        %v5016 = vpop.permute.xlu0 %5015
        %5017 = vrot.lane.b32.xlu0 %v1469, 28
        %v5018 = vpop.permute.xlu0 %5017
        %5019 = vrot.lane.b32.xlu0 %v1470, 28
        %v5020 = vpop.permute.xlu0 %5019
        %5021 = vrot.lane.b32.xlu0 %v1471, 28
        %v5022 = vpop.permute.xlu0 %5021
        %5023 = vrot.lane.b32.xlu0 %v1472, 28
        %v5024 = vpop.permute.xlu0 %5023
        %5025 = vrot.lane.b32.xlu0 %v1473, 28
        %v5026 = vpop.permute.xlu0 %5025
        %5027 = vrot.lane.b32.xlu0 %v1474, 28
        %v5028 = vpop.permute.xlu0 %5027
        %5029 = vrot.lane.b32.xlu0 %v1475, 28
        %v5030 = vpop.permute.xlu0 %5029
        %5031 = vrot.lane.b32.xlu0 %v1476, 28
        %v5032 = vpop.permute.xlu0 %5031
        %5033 = vrot.lane.b32.xlu0 %v1477, 28
        %v5034 = vpop.permute.xlu0 %5033
        %5035 = vrot.lane.b32.xlu0 %v1478, 28
        %v5036 = vpop.permute.xlu0 %5035
        %5037 = vrot.lane.b32.xlu0 %v1479, 28
        %v5038 = vpop.permute.xlu0 %5037
        %5039 = vrot.lane.b32.xlu0 %v1480, 28
        %v5040 = vpop.permute.xlu0 %5039
        %5041 = vrot.lane.b32.xlu0 %v1481, 28
        %v5042 = vpop.permute.xlu0 %5041
        %5043 = vrot.lane.b32.xlu0 %v1482, 28
        %v5044 = vpop.permute.xlu0 %5043
        %5045 = vrot.lane.b32.xlu0 %v1483, 28
        %v5046 = vpop.permute.xlu0 %5045
        %5047 = vrot.lane.b32.xlu0 %v1484, 28
        %v5048 = vpop.permute.xlu0 %5047
        %5049 = vrot.lane.b32.xlu0 %v1485, 28
        %v5050 = vpop.permute.xlu0 %5049
        %5051 = vrot.lane.b32.xlu0 %v1486, 28
        %v5052 = vpop.permute.xlu0 %5051
        %5053 = vrot.lane.b32.xlu0 %v1487, 28
        %v5054 = vpop.permute.xlu0 %5053
        %5055 = vrot.lane.b32.xlu0 %v1488, 28
        %v5056 = vpop.permute.xlu0 %5055
        %5121 = vrot.lane.b32.xlu0 %v1490, 32
        %v5122 = vpop.permute.xlu0 %5121
        %5123 = vrot.lane.b32.xlu0 %v1491, 32
        %v5124 = vpop.permute.xlu0 %5123
        %5125 = vrot.lane.b32.xlu0 %v1492, 32
        %v5126 = vpop.permute.xlu0 %5125
        %5127 = vrot.lane.b32.xlu0 %v1493, 32
        %v5128 = vpop.permute.xlu0 %5127
        %5129 = vrot.lane.b32.xlu0 %v1494, 32
        %v5130 = vpop.permute.xlu0 %5129
        %5131 = vrot.lane.b32.xlu0 %v1495, 32
        %v5132 = vpop.permute.xlu0 %5131
        %5133 = vrot.lane.b32.xlu0 %v1496, 32
        %v5134 = vpop.permute.xlu0 %5133
        %5135 = vrot.lane.b32.xlu0 %v1497, 32
        %v5136 = vpop.permute.xlu0 %5135
        %5137 = vrot.lane.b32.xlu0 %v1498, 32
        %v5138 = vpop.permute.xlu0 %5137
        %5139 = vrot.lane.b32.xlu0 %v1499, 32
        %v5140 = vpop.permute.xlu0 %5139
        %5141 = vrot.lane.b32.xlu0 %v1500, 32
        %v5142 = vpop.permute.xlu0 %5141
        %5143 = vrot.lane.b32.xlu0 %v1501, 32
        %v5144 = vpop.permute.xlu0 %5143
        %5145 = vrot.lane.b32.xlu0 %v1502, 32
        %v5146 = vpop.permute.xlu0 %5145
        %5147 = vrot.lane.b32.xlu0 %v1503, 32
        %v5148 = vpop.permute.xlu0 %5147
        %5149 = vrot.lane.b32.xlu0 %v1504, 32
        %v5150 = vpop.permute.xlu0 %5149
        %5151 = vrot.lane.b32.xlu0 %v1505, 32
        %v5152 = vpop.permute.xlu0 %5151
        %5153 = vrot.lane.b32.xlu0 %v1506, 32
        %v5154 = vpop.permute.xlu0 %5153
        %5155 = vrot.lane.b32.xlu0 %v1507, 32
        %v5156 = vpop.permute.xlu0 %5155
        %5157 = vrot.lane.b32.xlu0 %v1508, 32
        %v5158 = vpop.permute.xlu0 %5157
        %5159 = vrot.lane.b32.xlu0 %v1509, 32
        %v5160 = vpop.permute.xlu0 %5159
        %5161 = vrot.lane.b32.xlu0 %v1510, 32
        %v5162 = vpop.permute.xlu0 %5161
        %5163 = vrot.lane.b32.xlu0 %v1511, 32
        %v5164 = vpop.permute.xlu0 %5163
        %5165 = vrot.lane.b32.xlu0 %v1512, 32
        %v5166 = vpop.permute.xlu0 %5165
        %5167 = vrot.lane.b32.xlu0 %v1513, 32
        %v5168 = vpop.permute.xlu0 %5167
        %5169 = vrot.lane.b32.xlu0 %v1514, 32
        %v5170 = vpop.permute.xlu0 %5169
        %5171 = vrot.lane.b32.xlu0 %v1515, 32
        %v5172 = vpop.permute.xlu0 %5171
        %5173 = vrot.lane.b32.xlu0 %v1516, 32
        %v5174 = vpop.permute.xlu0 %5173
        %5175 = vrot.lane.b32.xlu0 %v1517, 32
        %v5176 = vpop.permute.xlu0 %5175
        %5177 = vrot.lane.b32.xlu0 %v1518, 32
        %v5178 = vpop.permute.xlu0 %5177
        %5179 = vrot.lane.b32.xlu0 %v1519, 32
        %v5180 = vpop.permute.xlu0 %5179
        %5181 = vrot.lane.b32.xlu0 %v1520, 32
        %v5182 = vpop.permute.xlu0 %5181
        %5183 = vrot.lane.b32.xlu0 %v1521, 32
        %v5184 = vpop.permute.xlu0 %5183
        %5249 = vrot.lane.b32.xlu0 %v1522, 36
        %v5250 = vpop.permute.xlu0 %5249
        %5251 = vrot.lane.b32.xlu0 %v1523, 36
        %v5252 = vpop.permute.xlu0 %5251
        %5253 = vrot.lane.b32.xlu0 %v1524, 36
        %v5254 = vpop.permute.xlu0 %5253
        %5255 = vrot.lane.b32.xlu0 %v1525, 36
        %v5256 = vpop.permute.xlu0 %5255
        %5257 = vrot.lane.b32.xlu0 %v1526, 36
        %v5258 = vpop.permute.xlu0 %5257
        %5259 = vrot.lane.b32.xlu0 %v1527, 36
        %v5260 = vpop.permute.xlu0 %5259
        %5261 = vrot.lane.b32.xlu0 %v1528, 36
        %v5262 = vpop.permute.xlu0 %5261
        %5263 = vrot.lane.b32.xlu0 %v1529, 36
        %v5264 = vpop.permute.xlu0 %5263
        %5265 = vrot.lane.b32.xlu0 %v1530, 36
        %v5266 = vpop.permute.xlu0 %5265
        %5267 = vrot.lane.b32.xlu0 %v1531, 36
        %v5268 = vpop.permute.xlu0 %5267
        %5269 = vrot.lane.b32.xlu0 %v1532, 36
        %v5270 = vpop.permute.xlu0 %5269
        %5271 = vrot.lane.b32.xlu0 %v1533, 36
        %v5272 = vpop.permute.xlu0 %5271
        %5273 = vrot.lane.b32.xlu0 %v1534, 36
        %v5274 = vpop.permute.xlu0 %5273
        %5275 = vrot.lane.b32.xlu0 %v1535, 36
        %v5276 = vpop.permute.xlu0 %5275
        %5277 = vrot.lane.b32.xlu0 %v1536, 36
        %v5278 = vpop.permute.xlu0 %5277
        %5279 = vrot.lane.b32.xlu0 %v1537, 36
        %v5280 = vpop.permute.xlu0 %5279
        %5281 = vrot.lane.b32.xlu0 %v1538, 36
        %v5282 = vpop.permute.xlu0 %5281
        %5283 = vrot.lane.b32.xlu0 %v1539, 36
        %v5284 = vpop.permute.xlu0 %5283
        %5285 = vrot.lane.b32.xlu0 %v1540, 36
        %v5286 = vpop.permute.xlu0 %5285
        %5287 = vrot.lane.b32.xlu0 %v1541, 36
        %v5288 = vpop.permute.xlu0 %5287
        %5289 = vrot.lane.b32.xlu0 %v1542, 36
        %v5290 = vpop.permute.xlu0 %5289
        %5291 = vrot.lane.b32.xlu0 %v1543, 36
        %v5292 = vpop.permute.xlu0 %5291
        %5293 = vrot.lane.b32.xlu0 %v1544, 36
        %v5294 = vpop.permute.xlu0 %5293
        %5295 = vrot.lane.b32.xlu0 %v1545, 36
        %v5296 = vpop.permute.xlu0 %5295
        %5297 = vrot.lane.b32.xlu0 %v1546, 36
        %v5298 = vpop.permute.xlu0 %5297
        %5299 = vrot.lane.b32.xlu0 %v1547, 36
        %v5300 = vpop.permute.xlu0 %5299
        %5301 = vrot.lane.b32.xlu0 %v1548, 36
        %v5302 = vpop.permute.xlu0 %5301
        %5303 = vrot.lane.b32.xlu0 %v1549, 36
        %v5304 = vpop.permute.xlu0 %5303
        %5305 = vrot.lane.b32.xlu0 %v1550, 36
        %v5306 = vpop.permute.xlu0 %5305
        %5307 = vrot.lane.b32.xlu0 %v1551, 36
        %v5308 = vpop.permute.xlu0 %5307
        %5309 = vrot.lane.b32.xlu0 %v1552, 36
        %v5310 = vpop.permute.xlu0 %5309
        %5311 = vrot.lane.b32.xlu0 %v1553, 36
        %v5312 = vpop.permute.xlu0 %5311
        %5377 = vrot.lane.b32.xlu0 %v1554, 40
        %v5378 = vpop.permute.xlu0 %5377
        %5379 = vrot.lane.b32.xlu0 %v1555, 40
        %v5380 = vpop.permute.xlu0 %5379
        %5381 = vrot.lane.b32.xlu0 %v1556, 40
        %v5382 = vpop.permute.xlu0 %5381
        %5383 = vrot.lane.b32.xlu0 %v1557, 40
        %v5384 = vpop.permute.xlu0 %5383
        %5385 = vrot.lane.b32.xlu0 %v1558, 40
        %v5386 = vpop.permute.xlu0 %5385
        %5387 = vrot.lane.b32.xlu0 %v1559, 40
        %v5388 = vpop.permute.xlu0 %5387
        %5389 = vrot.lane.b32.xlu0 %v1560, 40
        %v5390 = vpop.permute.xlu0 %5389
        %5391 = vrot.lane.b32.xlu0 %v1561, 40
        %v5392 = vpop.permute.xlu0 %5391
        %5393 = vrot.lane.b32.xlu0 %v1562, 40
        %v5394 = vpop.permute.xlu0 %5393
        %5395 = vrot.lane.b32.xlu0 %v1563, 40
        %v5396 = vpop.permute.xlu0 %5395
        %5397 = vrot.lane.b32.xlu0 %v1564, 40
        %v5398 = vpop.permute.xlu0 %5397
        %5399 = vrot.lane.b32.xlu0 %v1565, 40
        %v5400 = vpop.permute.xlu0 %5399
        %5401 = vrot.lane.b32.xlu0 %v1566, 40
        %v5402 = vpop.permute.xlu0 %5401
        %5403 = vrot.lane.b32.xlu0 %v1567, 40
        %v5404 = vpop.permute.xlu0 %5403
        %5405 = vrot.lane.b32.xlu0 %v1568, 40
        %v5406 = vpop.permute.xlu0 %5405
        %5407 = vrot.lane.b32.xlu0 %v1569, 40
        %v5408 = vpop.permute.xlu0 %5407
        %5409 = vrot.lane.b32.xlu0 %v1570, 40
        %v5410 = vpop.permute.xlu0 %5409
        %5411 = vrot.lane.b32.xlu0 %v1571, 40
        %v5412 = vpop.permute.xlu0 %5411
        %5413 = vrot.lane.b32.xlu0 %v1572, 40
        %v5414 = vpop.permute.xlu0 %5413
        %5415 = vrot.lane.b32.xlu0 %v1573, 40
        %v5416 = vpop.permute.xlu0 %5415
        %5417 = vrot.lane.b32.xlu0 %v1574, 40
        %v5418 = vpop.permute.xlu0 %5417
        %5419 = vrot.lane.b32.xlu0 %v1575, 40
        %v5420 = vpop.permute.xlu0 %5419
        %5421 = vrot.lane.b32.xlu0 %v1576, 40
        %v5422 = vpop.permute.xlu0 %5421
        %5423 = vrot.lane.b32.xlu0 %v1577, 40
        %v5424 = vpop.permute.xlu0 %5423
        %5425 = vrot.lane.b32.xlu0 %v1578, 40
        %v5426 = vpop.permute.xlu0 %5425
        %5427 = vrot.lane.b32.xlu0 %v1579, 40
        %v5428 = vpop.permute.xlu0 %5427
        %5429 = vrot.lane.b32.xlu0 %v1580, 40
        %v5430 = vpop.permute.xlu0 %5429
        %5431 = vrot.lane.b32.xlu0 %v1581, 40
        %v5432 = vpop.permute.xlu0 %5431
        %5433 = vrot.lane.b32.xlu0 %v1582, 40
        %v5434 = vpop.permute.xlu0 %5433
        %5435 = vrot.lane.b32.xlu0 %v1583, 40
        %v5436 = vpop.permute.xlu0 %5435
        %5437 = vrot.lane.b32.xlu0 %v1584, 40
        %v5438 = vpop.permute.xlu0 %5437
        %5439 = vrot.lane.b32.xlu0 %v1585, 40
        %v5440 = vpop.permute.xlu0 %5439
        %5505 = vrot.lane.b32.xlu0 %v1586, 44
        %v5506 = vpop.permute.xlu0 %5505
        %5507 = vrot.lane.b32.xlu0 %v1587, 44
        %v5508 = vpop.permute.xlu0 %5507
        %5509 = vrot.lane.b32.xlu0 %v1588, 44
        %v5510 = vpop.permute.xlu0 %5509
        %5511 = vrot.lane.b32.xlu0 %v1589, 44
        %v5512 = vpop.permute.xlu0 %5511
        %5513 = vrot.lane.b32.xlu0 %v1590, 44
        %v5514 = vpop.permute.xlu0 %5513
        %5515 = vrot.lane.b32.xlu0 %v1591, 44
        %v5516 = vpop.permute.xlu0 %5515
        %5517 = vrot.lane.b32.xlu0 %v1592, 44
        %v5518 = vpop.permute.xlu0 %5517
        %5519 = vrot.lane.b32.xlu0 %v1593, 44
        %v5520 = vpop.permute.xlu0 %5519
        %5521 = vrot.lane.b32.xlu0 %v1594, 44
        %v5522 = vpop.permute.xlu0 %5521
        %5523 = vrot.lane.b32.xlu0 %v1595, 44
        %v5524 = vpop.permute.xlu0 %5523
        %5525 = vrot.lane.b32.xlu0 %v1596, 44
        %v5526 = vpop.permute.xlu0 %5525
        %5527 = vrot.lane.b32.xlu0 %v1597, 44
        %v5528 = vpop.permute.xlu0 %5527
        %5529 = vrot.lane.b32.xlu0 %v1598, 44
        %v5530 = vpop.permute.xlu0 %5529
        %5531 = vrot.lane.b32.xlu0 %v1599, 44
        %v5532 = vpop.permute.xlu0 %5531
        %5533 = vrot.lane.b32.xlu0 %v1600, 44
        %v5534 = vpop.permute.xlu0 %5533
        %5535 = vrot.lane.b32.xlu0 %v1601, 44
        %v5536 = vpop.permute.xlu0 %5535
        %5537 = vrot.lane.b32.xlu0 %v1602, 44
        %v5538 = vpop.permute.xlu0 %5537
        %5539 = vrot.lane.b32.xlu0 %v1603, 44
        %v5540 = vpop.permute.xlu0 %5539
        %5541 = vrot.lane.b32.xlu0 %v1604, 44
        %v5542 = vpop.permute.xlu0 %5541
        %5543 = vrot.lane.b32.xlu0 %v1605, 44
        %v5544 = vpop.permute.xlu0 %5543
        %5545 = vrot.lane.b32.xlu0 %v1606, 44
        %v5546 = vpop.permute.xlu0 %5545
        %5547 = vrot.lane.b32.xlu0 %v1607, 44
        %v5548 = vpop.permute.xlu0 %5547
        %5549 = vrot.lane.b32.xlu0 %v1608, 44
        %v5550 = vpop.permute.xlu0 %5549
        %5551 = vrot.lane.b32.xlu0 %v1609, 44
        %v5552 = vpop.permute.xlu0 %5551
        %5553 = vrot.lane.b32.xlu0 %v1610, 44
        %v5554 = vpop.permute.xlu0 %5553
        %5555 = vrot.lane.b32.xlu0 %v1611, 44
        %v5556 = vpop.permute.xlu0 %5555
        %5557 = vrot.lane.b32.xlu0 %v1612, 44
        %v5558 = vpop.permute.xlu0 %5557
        %5559 = vrot.lane.b32.xlu0 %v1613, 44
        %v5560 = vpop.permute.xlu0 %5559
        %5561 = vrot.lane.b32.xlu0 %v1614, 44
        %v5562 = vpop.permute.xlu0 %5561
        %5563 = vrot.lane.b32.xlu0 %v1615, 44
        %v5564 = vpop.permute.xlu0 %5563
        %5565 = vrot.lane.b32.xlu0 %v1616, 44
        %v5566 = vpop.permute.xlu0 %5565
        %5567 = vrot.lane.b32.xlu0 %v1617, 44
        %v5568 = vpop.permute.xlu0 %5567
        %5633 = vrot.lane.b32.xlu0 %v1618, 48
        %v5634 = vpop.permute.xlu0 %5633
        %5635 = vrot.lane.b32.xlu0 %v1619, 48
        %v5636 = vpop.permute.xlu0 %5635
        %5637 = vrot.lane.b32.xlu0 %v1620, 48
        %v5638 = vpop.permute.xlu0 %5637
        %5639 = vrot.lane.b32.xlu0 %v1621, 48
        %v5640 = vpop.permute.xlu0 %5639
        %5641 = vrot.lane.b32.xlu0 %v1622, 48
        %v5642 = vpop.permute.xlu0 %5641
        %5643 = vrot.lane.b32.xlu0 %v1623, 48
        %v5644 = vpop.permute.xlu0 %5643
        %5645 = vrot.lane.b32.xlu0 %v1624, 48
        %v5646 = vpop.permute.xlu0 %5645
        %5647 = vrot.lane.b32.xlu0 %v1625, 48
        %v5648 = vpop.permute.xlu0 %5647
        %5649 = vrot.lane.b32.xlu0 %v1626, 48
        %v5650 = vpop.permute.xlu0 %5649
        %5651 = vrot.lane.b32.xlu0 %v1627, 48
        %v5652 = vpop.permute.xlu0 %5651
        %5653 = vrot.lane.b32.xlu0 %v1628, 48
        %v5654 = vpop.permute.xlu0 %5653
        %5655 = vrot.lane.b32.xlu0 %v1629, 48
        %v5656 = vpop.permute.xlu0 %5655
        %5657 = vrot.lane.b32.xlu0 %v1630, 48
        %v5658 = vpop.permute.xlu0 %5657
        %5659 = vrot.lane.b32.xlu0 %v1631, 48
        %v5660 = vpop.permute.xlu0 %5659
        %5661 = vrot.lane.b32.xlu0 %v1632, 48
        %v5662 = vpop.permute.xlu0 %5661
        %5663 = vrot.lane.b32.xlu0 %v1633, 48
        %v5664 = vpop.permute.xlu0 %5663
        %5665 = vrot.lane.b32.xlu0 %v1634, 48
        %v5666 = vpop.permute.xlu0 %5665
        %5667 = vrot.lane.b32.xlu0 %v1635, 48
        %v5668 = vpop.permute.xlu0 %5667
        %5669 = vrot.lane.b32.xlu0 %v1636, 48
        %v5670 = vpop.permute.xlu0 %5669
        %5671 = vrot.lane.b32.xlu0 %v1637, 48
        %v5672 = vpop.permute.xlu0 %5671
        %5673 = vrot.lane.b32.xlu0 %v1638, 48
        %v5674 = vpop.permute.xlu0 %5673
        %5675 = vrot.lane.b32.xlu0 %v1639, 48
        %v5676 = vpop.permute.xlu0 %5675
        %5677 = vrot.lane.b32.xlu0 %v1640, 48
        %v5678 = vpop.permute.xlu0 %5677
        %5679 = vrot.lane.b32.xlu0 %v1641, 48
        %v5680 = vpop.permute.xlu0 %5679
        %5681 = vrot.lane.b32.xlu0 %v1642, 48
        %v5682 = vpop.permute.xlu0 %5681
        %5683 = vrot.lane.b32.xlu0 %v1643, 48
        %v5684 = vpop.permute.xlu0 %5683
        %5685 = vrot.lane.b32.xlu0 %v1644, 48
        %v5686 = vpop.permute.xlu0 %5685
        %5687 = vrot.lane.b32.xlu0 %v1645, 48
        %v5688 = vpop.permute.xlu0 %5687
        %5689 = vrot.lane.b32.xlu0 %v1646, 48
        %v5690 = vpop.permute.xlu0 %5689
        %5691 = vrot.lane.b32.xlu0 %v1647, 48
        %v5692 = vpop.permute.xlu0 %5691
        %5693 = vrot.lane.b32.xlu0 %v1648, 48
        %v5694 = vpop.permute.xlu0 %5693
        %5695 = vrot.lane.b32.xlu0 %v1649, 48
        %v5696 = vpop.permute.xlu0 %5695
        %5761 = vrot.lane.b32.xlu0 %v1650, 52
        %v5762 = vpop.permute.xlu0 %5761
        %5763 = vrot.lane.b32.xlu0 %v1651, 52
        %v5764 = vpop.permute.xlu0 %5763
        %5765 = vrot.lane.b32.xlu0 %v1652, 52
        %v5766 = vpop.permute.xlu0 %5765
        %5767 = vrot.lane.b32.xlu0 %v1653, 52
        %v5768 = vpop.permute.xlu0 %5767
        %5769 = vrot.lane.b32.xlu0 %v1654, 52
        %v5770 = vpop.permute.xlu0 %5769
        %5771 = vrot.lane.b32.xlu0 %v1655, 52
        %v5772 = vpop.permute.xlu0 %5771
        %5773 = vrot.lane.b32.xlu0 %v1656, 52
        %v5774 = vpop.permute.xlu0 %5773
        %5775 = vrot.lane.b32.xlu0 %v1657, 52
        %v5776 = vpop.permute.xlu0 %5775
        %5777 = vrot.lane.b32.xlu0 %v1658, 52
        %v5778 = vpop.permute.xlu0 %5777
        %5779 = vrot.lane.b32.xlu0 %v1659, 52
        %v5780 = vpop.permute.xlu0 %5779
        %5781 = vrot.lane.b32.xlu0 %v1660, 52
        %v5782 = vpop.permute.xlu0 %5781
        %5783 = vrot.lane.b32.xlu0 %v1661, 52
        %v5784 = vpop.permute.xlu0 %5783
        %5785 = vrot.lane.b32.xlu0 %v1662, 52
        %v5786 = vpop.permute.xlu0 %5785
        %5787 = vrot.lane.b32.xlu0 %v1663, 52
        %v5788 = vpop.permute.xlu0 %5787
        %5789 = vrot.lane.b32.xlu0 %v1664, 52
        %v5790 = vpop.permute.xlu0 %5789
        %5791 = vrot.lane.b32.xlu0 %v1665, 52
        %v5792 = vpop.permute.xlu0 %5791
        %5793 = vrot.lane.b32.xlu0 %v1666, 52
        %v5794 = vpop.permute.xlu0 %5793
        %5795 = vrot.lane.b32.xlu0 %v1667, 52
        %v5796 = vpop.permute.xlu0 %5795
        %5797 = vrot.lane.b32.xlu0 %v1668, 52
        %v5798 = vpop.permute.xlu0 %5797
        %5799 = vrot.lane.b32.xlu0 %v1669, 52
        %v5800 = vpop.permute.xlu0 %5799
        %5801 = vrot.lane.b32.xlu0 %v1670, 52
        %v5802 = vpop.permute.xlu0 %5801
        %5803 = vrot.lane.b32.xlu0 %v1671, 52
        %v5804 = vpop.permute.xlu0 %5803
        %5805 = vrot.lane.b32.xlu0 %v1672, 52
        %v5806 = vpop.permute.xlu0 %5805
        %5807 = vrot.lane.b32.xlu0 %v1673, 52
        %v5808 = vpop.permute.xlu0 %5807
        %5809 = vrot.lane.b32.xlu0 %v1674, 52
        %v5810 = vpop.permute.xlu0 %5809
        %5811 = vrot.lane.b32.xlu0 %v1675, 52
        %v5812 = vpop.permute.xlu0 %5811
        %5813 = vrot.lane.b32.xlu0 %v1676, 52
        %v5814 = vpop.permute.xlu0 %5813
        %5815 = vrot.lane.b32.xlu0 %v1677, 52
        %v5816 = vpop.permute.xlu0 %5815
        %5817 = vrot.lane.b32.xlu0 %v1678, 52
        %v5818 = vpop.permute.xlu0 %5817
        %5819 = vrot.lane.b32.xlu0 %v1679, 52
        %v5820 = vpop.permute.xlu0 %5819
        %5821 = vrot.lane.b32.xlu0 %v1680, 52
        %v5822 = vpop.permute.xlu0 %5821
        %5823 = vrot.lane.b32.xlu0 %v1681, 52
        %v5824 = vpop.permute.xlu0 %5823
        %5889 = vrot.lane.b32.xlu0 %v1682, 56
        %v5890 = vpop.permute.xlu0 %5889
        %5891 = vrot.lane.b32.xlu0 %v1683, 56
        %v5892 = vpop.permute.xlu0 %5891
        %5893 = vrot.lane.b32.xlu0 %v1684, 56
        %v5894 = vpop.permute.xlu0 %5893
        %5895 = vrot.lane.b32.xlu0 %v1685, 56
        %v5896 = vpop.permute.xlu0 %5895
        %5897 = vrot.lane.b32.xlu0 %v1686, 56
        %v5898 = vpop.permute.xlu0 %5897
        %5899 = vrot.lane.b32.xlu0 %v1687, 56
        %v5900 = vpop.permute.xlu0 %5899
        %5901 = vrot.lane.b32.xlu0 %v1688, 56
        %v5902 = vpop.permute.xlu0 %5901
        %5903 = vrot.lane.b32.xlu0 %v1689, 56
        %v5904 = vpop.permute.xlu0 %5903
        %5905 = vrot.lane.b32.xlu0 %v1690, 56
        %v5906 = vpop.permute.xlu0 %5905
        %5907 = vrot.lane.b32.xlu0 %v1691, 56
        %v5908 = vpop.permute.xlu0 %5907
        %5909 = vrot.lane.b32.xlu0 %v1692, 56
        %v5910 = vpop.permute.xlu0 %5909
        %5911 = vrot.lane.b32.xlu0 %v1693, 56
        %v5912 = vpop.permute.xlu0 %5911
        %5913 = vrot.lane.b32.xlu0 %v1694, 56
        %v5914 = vpop.permute.xlu0 %5913
        %5915 = vrot.lane.b32.xlu0 %v1695, 56
        %v5916 = vpop.permute.xlu0 %5915
        %5917 = vrot.lane.b32.xlu0 %v1696, 56
        %v5918 = vpop.permute.xlu0 %5917
        %5919 = vrot.lane.b32.xlu0 %v1697, 56
        %v5920 = vpop.permute.xlu0 %5919
        %5921 = vrot.lane.b32.xlu0 %v1698, 56
        %v5922 = vpop.permute.xlu0 %5921
        %5923 = vrot.lane.b32.xlu0 %v1699, 56
        %v5924 = vpop.permute.xlu0 %5923
        %5925 = vrot.lane.b32.xlu0 %v1700, 56
        %v5926 = vpop.permute.xlu0 %5925
        %5927 = vrot.lane.b32.xlu0 %v1701, 56
        %v5928 = vpop.permute.xlu0 %5927
        %5929 = vrot.lane.b32.xlu0 %v1702, 56
        %v5930 = vpop.permute.xlu0 %5929
        %5931 = vrot.lane.b32.xlu0 %v1703, 56
        %v5932 = vpop.permute.xlu0 %5931
        %5933 = vrot.lane.b32.xlu0 %v1704, 56
        %v5934 = vpop.permute.xlu0 %5933
        %5935 = vrot.lane.b32.xlu0 %v1705, 56
        %v5936 = vpop.permute.xlu0 %5935
        %5937 = vrot.lane.b32.xlu0 %v1706, 56
        %v5938 = vpop.permute.xlu0 %5937
        %5939 = vrot.lane.b32.xlu0 %v1707, 56
        %v5940 = vpop.permute.xlu0 %5939
        %5941 = vrot.lane.b32.xlu0 %v1708, 56
        %v5942 = vpop.permute.xlu0 %5941
        %5943 = vrot.lane.b32.xlu0 %v1709, 56
        %v5944 = vpop.permute.xlu0 %5943
        %5945 = vrot.lane.b32.xlu0 %v1710, 56
        %v5946 = vpop.permute.xlu0 %5945
        %5947 = vrot.lane.b32.xlu0 %v1711, 56
        %v5948 = vpop.permute.xlu0 %5947
        %5949 = vrot.lane.b32.xlu0 %v1712, 56
        %v5950 = vpop.permute.xlu0 %5949
        %5951 = vrot.lane.b32.xlu0 %v1713, 56
        %v5952 = vpop.permute.xlu0 %5951
        %5985 = vrot.lane.b32.xlu0 %v909, 60
        %v5986 = vpop.permute.xlu0 %5985
        %5987 = vrot.lane.b32.xlu0 %v910, 60
        %v5988 = vpop.permute.xlu0 %5987
        %5989 = vrot.lane.b32.xlu0 %v911, 60
        %v5990 = vpop.permute.xlu0 %5989
        %5991 = vrot.lane.b32.xlu0 %v912, 60
        %v5992 = vpop.permute.xlu0 %5991
        %5993 = vrot.lane.b32.xlu0 %v913, 60
        %v5994 = vpop.permute.xlu0 %5993
        %5995 = vrot.lane.b32.xlu0 %v914, 60
        %v5996 = vpop.permute.xlu0 %5995
        %5997 = vrot.lane.b32.xlu0 %v915, 60
        %v5998 = vpop.permute.xlu0 %5997
        %5999 = vrot.lane.b32.xlu0 %v916, 60
        %v6000 = vpop.permute.xlu0 %5999
        %6001 = vrot.lane.b32.xlu0 %v917, 60
        %v6002 = vpop.permute.xlu0 %6001
        %6003 = vrot.lane.b32.xlu0 %v918, 60
        %v6004 = vpop.permute.xlu0 %6003
        %6005 = vrot.lane.b32.xlu0 %v919, 60
        %v6006 = vpop.permute.xlu0 %6005
        %6007 = vrot.lane.b32.xlu0 %v920, 60
        %v6008 = vpop.permute.xlu0 %6007
        %6009 = vrot.lane.b32.xlu0 %v921, 60
        %v6010 = vpop.permute.xlu0 %6009
        %6011 = vrot.lane.b32.xlu0 %v922, 60
        %v6012 = vpop.permute.xlu0 %6011
        %6013 = vrot.lane.b32.xlu0 %v923, 60
        %v6014 = vpop.permute.xlu0 %6013
        %6015 = vrot.lane.b32.xlu0 %v924, 60
        %v6016 = vpop.permute.xlu0 %6015
        %6017 = vrot.lane.b32.xlu0 %v925, 60
        %v6018 = vpop.permute.xlu0 %6017
        %6019 = vrot.lane.b32.xlu0 %v926, 60
        %v6020 = vpop.permute.xlu0 %6019
        %6021 = vrot.lane.b32.xlu0 %v927, 60
        %v6022 = vpop.permute.xlu0 %6021
        %6023 = vrot.lane.b32.xlu0 %v928, 60
        %v6024 = vpop.permute.xlu0 %6023
        %6025 = vrot.lane.b32.xlu0 %v929, 60
        %v6026 = vpop.permute.xlu0 %6025
        %6027 = vrot.lane.b32.xlu0 %v930, 60
        %v6028 = vpop.permute.xlu0 %6027
        %6029 = vrot.lane.b32.xlu0 %v931, 60
        %v6030 = vpop.permute.xlu0 %6029
        %6031 = vrot.lane.b32.xlu0 %v932, 60
        %v6032 = vpop.permute.xlu0 %6031
        %6033 = vrot.lane.b32.xlu0 %v933, 60
        %v6034 = vpop.permute.xlu0 %6033
        %6035 = vrot.lane.b32.xlu0 %v934, 60
        %v6036 = vpop.permute.xlu0 %6035
        %6037 = vrot.lane.b32.xlu0 %v935, 60
        %v6038 = vpop.permute.xlu0 %6037
        %6039 = vrot.lane.b32.xlu0 %v936, 60
        %v6040 = vpop.permute.xlu0 %6039
        %6041 = vrot.lane.b32.xlu0 %v937, 60
        %v6042 = vpop.permute.xlu0 %6041
        %6043 = vrot.lane.b32.xlu0 %v938, 60
        %v6044 = vpop.permute.xlu0 %6043
        %6045 = vrot.lane.b32.xlu0 %v939, 60
        %v6046 = vpop.permute.xlu0 %6045
        %6047 = vrot.lane.b32.xlu0 %v940, 60
        %v6048 = vpop.permute.xlu0 %6047
        %v6081 = vsel %vm170, %v1264, %v4258
        %v6082 = vsel %vm170, %v1265, %v4260
        %v6083 = vsel %vm170, %v1266, %v4262
        %v6084 = vsel %vm170, %v1267, %v4264
        %v6085 = vsel %vm170, %v1268, %v4266
        %v6086 = vsel %vm170, %v1269, %v4268
        %v6087 = vsel %vm170, %v1270, %v4270
        %v6088 = vsel %vm170, %v1271, %v4272
        %v6089 = vsel %vm170, %v1272, %v4274
        %v6090 = vsel %vm170, %v1273, %v4276
        %v6091 = vsel %vm170, %v1274, %v4278
        %v6092 = vsel %vm170, %v1275, %v4280
        %v6093 = vsel %vm170, %v1276, %v4282
        %v6094 = vsel %vm170, %v1277, %v4284
        %v6095 = vsel %vm170, %v1278, %v4286
        %v6096 = vsel %vm170, %v1279, %v4288
        %v6097 = vsel %vm170, %v1280, %v4290
        %v6098 = vsel %vm170, %v1281, %v4292
        %v6099 = vsel %vm170, %v1282, %v4294
        %v6100 = vsel %vm170, %v1283, %v4296
        %v6101 = vsel %vm170, %v1284, %v4298
        %v6102 = vsel %vm170, %v1285, %v4300
        %v6103 = vsel %vm170, %v1286, %v4302
        %v6104 = vsel %vm170, %v1287, %v4304
        %v6105 = vsel %vm170, %v1288, %v4306
        %v6106 = vsel %vm170, %v1289, %v4308
        %v6107 = vsel %vm170, %v1290, %v4310
        %v6108 = vsel %vm170, %v1291, %v4312
        %v6109 = vsel %vm170, %v1292, %v4314
        %v6110 = vsel %vm170, %v1293, %v4316
        %v6111 = vsel %vm170, %v1294, %v4318
        %v6112 = vsel %vm170, %v1295, %v4320
        %v6113 = vsel %vm3763, %v6081, %v4386
        %v6114 = vsel %vm3763, %v6082, %v4388
        %v6115 = vsel %vm3763, %v6083, %v4390
        %v6116 = vsel %vm3763, %v6084, %v4392
        %v6117 = vsel %vm3763, %v6085, %v4394
        %v6118 = vsel %vm3763, %v6086, %v4396
        %v6119 = vsel %vm3763, %v6087, %v4398
        %v6120 = vsel %vm3763, %v6088, %v4400
        %v6121 = vsel %vm3763, %v6089, %v4402
        %v6122 = vsel %vm3763, %v6090, %v4404
        %v6123 = vsel %vm3763, %v6091, %v4406
        %v6124 = vsel %vm3763, %v6092, %v4408
        %v6125 = vsel %vm3763, %v6093, %v4410
        %v6126 = vsel %vm3763, %v6094, %v4412
        %v6127 = vsel %vm3763, %v6095, %v4414
        %v6128 = vsel %vm3763, %v6096, %v4416
        %v6129 = vsel %vm3763, %v6097, %v4418
        %v6130 = vsel %vm3763, %v6098, %v4420
        %v6131 = vsel %vm3763, %v6099, %v4422
        %v6132 = vsel %vm3763, %v6100, %v4424
        %v6133 = vsel %vm3763, %v6101, %v4426
        %v6134 = vsel %vm3763, %v6102, %v4428
        %v6135 = vsel %vm3763, %v6103, %v4430
        %v6136 = vsel %vm3763, %v6104, %v4432
        %v6137 = vsel %vm3763, %v6105, %v4434
        %v6138 = vsel %vm3763, %v6106, %v4436
        %v6139 = vsel %vm3763, %v6107, %v4438
        %v6140 = vsel %vm3763, %v6108, %v4440
        %v6141 = vsel %vm3763, %v6109, %v4442
        %v6142 = vsel %vm3763, %v6110, %v4444
        %v6143 = vsel %vm3763, %v6111, %v4446
        %v6144 = vsel %vm3763, %v6112, %v4448
        %v6145 = vsel %vm3796, %v6113, %v4514
        %v6146 = vsel %vm3796, %v6114, %v4516
        %v6147 = vsel %vm3796, %v6115, %v4518
        %v6148 = vsel %vm3796, %v6116, %v4520
        %v6149 = vsel %vm3796, %v6117, %v4522
        %v6150 = vsel %vm3796, %v6118, %v4524
        %v6151 = vsel %vm3796, %v6119, %v4526
        %v6152 = vsel %vm3796, %v6120, %v4528
        %v6153 = vsel %vm3796, %v6121, %v4530
        %v6154 = vsel %vm3796, %v6122, %v4532
        %v6155 = vsel %vm3796, %v6123, %v4534
        %v6156 = vsel %vm3796, %v6124, %v4536
        %v6157 = vsel %vm3796, %v6125, %v4538
        %v6158 = vsel %vm3796, %v6126, %v4540
        %v6159 = vsel %vm3796, %v6127, %v4542
        %v6160 = vsel %vm3796, %v6128, %v4544
        %v6161 = vsel %vm3796, %v6129, %v4546
        %v6162 = vsel %vm3796, %v6130, %v4548
        %v6163 = vsel %vm3796, %v6131, %v4550
        %v6164 = vsel %vm3796, %v6132, %v4552
        %v6165 = vsel %vm3796, %v6133, %v4554
        %v6166 = vsel %vm3796, %v6134, %v4556
        %v6167 = vsel %vm3796, %v6135, %v4558
        %v6168 = vsel %vm3796, %v6136, %v4560
        %v6169 = vsel %vm3796, %v6137, %v4562
        %v6170 = vsel %vm3796, %v6138, %v4564
        %v6171 = vsel %vm3796, %v6139, %v4566
        %v6172 = vsel %vm3796, %v6140, %v4568
        %v6173 = vsel %vm3796, %v6141, %v4570
        %v6174 = vsel %vm3796, %v6142, %v4572
        %v6175 = vsel %vm3796, %v6143, %v4574
        %v6176 = vsel %vm3796, %v6144, %v4576
        %v6177 = vsel %vm3829, %v6145, %v4642
        %v6178 = vsel %vm3829, %v6146, %v4644
        %v6179 = vsel %vm3829, %v6147, %v4646
        %v6180 = vsel %vm3829, %v6148, %v4648
        %v6181 = vsel %vm3829, %v6149, %v4650
        %v6182 = vsel %vm3829, %v6150, %v4652
        %v6183 = vsel %vm3829, %v6151, %v4654
        %v6184 = vsel %vm3829, %v6152, %v4656
        %v6185 = vsel %vm3829, %v6153, %v4658
        %v6186 = vsel %vm3829, %v6154, %v4660
        %v6187 = vsel %vm3829, %v6155, %v4662
        %v6188 = vsel %vm3829, %v6156, %v4664
        %v6189 = vsel %vm3829, %v6157, %v4666
        %v6190 = vsel %vm3829, %v6158, %v4668
        %v6191 = vsel %vm3829, %v6159, %v4670
        %v6192 = vsel %vm3829, %v6160, %v4672
        %v6193 = vsel %vm3829, %v6161, %v4674
        %v6194 = vsel %vm3829, %v6162, %v4676
        %v6195 = vsel %vm3829, %v6163, %v4678
        %v6196 = vsel %vm3829, %v6164, %v4680
        %v6197 = vsel %vm3829, %v6165, %v4682
        %v6198 = vsel %vm3829, %v6166, %v4684
        %v6199 = vsel %vm3829, %v6167, %v4686
        %v6200 = vsel %vm3829, %v6168, %v4688
        %v6201 = vsel %vm3829, %v6169, %v4690
        %v6202 = vsel %vm3829, %v6170, %v4692
        %v6203 = vsel %vm3829, %v6171, %v4694
        %v6204 = vsel %vm3829, %v6172, %v4696
        %v6205 = vsel %vm3829, %v6173, %v4698
        %v6206 = vsel %vm3829, %v6174, %v4700
        %v6207 = vsel %vm3829, %v6175, %v4702
        %v6208 = vsel %vm3829, %v6176, %v4704
        %v6209 = vsel %vm3862, %v6177, %v4770
        %v6210 = vsel %vm3862, %v6178, %v4772
        %v6211 = vsel %vm3862, %v6179, %v4774
        %v6212 = vsel %vm3862, %v6180, %v4776
        %v6213 = vsel %vm3862, %v6181, %v4778
        %v6214 = vsel %vm3862, %v6182, %v4780
        %v6215 = vsel %vm3862, %v6183, %v4782
        %v6216 = vsel %vm3862, %v6184, %v4784
        %v6217 = vsel %vm3862, %v6185, %v4786
        %v6218 = vsel %vm3862, %v6186, %v4788
        %v6219 = vsel %vm3862, %v6187, %v4790
        %v6220 = vsel %vm3862, %v6188, %v4792
        %v6221 = vsel %vm3862, %v6189, %v4794
        %v6222 = vsel %vm3862, %v6190, %v4796
        %v6223 = vsel %vm3862, %v6191, %v4798
        %v6224 = vsel %vm3862, %v6192, %v4800
        %v6225 = vsel %vm3862, %v6193, %v4802
        %v6226 = vsel %vm3862, %v6194, %v4804
        %v6227 = vsel %vm3862, %v6195, %v4806
        %v6228 = vsel %vm3862, %v6196, %v4808
        %v6229 = vsel %vm3862, %v6197, %v4810
        %v6230 = vsel %vm3862, %v6198, %v4812
        %v6231 = vsel %vm3862, %v6199, %v4814
        %v6232 = vsel %vm3862, %v6200, %v4816
        %v6233 = vsel %vm3862, %v6201, %v4818
        %v6234 = vsel %vm3862, %v6202, %v4820
        %v6235 = vsel %vm3862, %v6203, %v4822
        %v6236 = vsel %vm3862, %v6204, %v4824
        %v6237 = vsel %vm3862, %v6205, %v4826
        %v6238 = vsel %vm3862, %v6206, %v4828
        %v6239 = vsel %vm3862, %v6207, %v4830
        %v6240 = vsel %vm3862, %v6208, %v4832
        %v6241 = vsel %vm3895, %v6209, %v4866
        %v6242 = vsel %vm3895, %v6210, %v4868
        %v6243 = vsel %vm3895, %v6211, %v4870
        %v6244 = vsel %vm3895, %v6212, %v4872
        %v6245 = vsel %vm3895, %v6213, %v4874
        %v6246 = vsel %vm3895, %v6214, %v4876
        %v6247 = vsel %vm3895, %v6215, %v4878
        %v6248 = vsel %vm3895, %v6216, %v4880
        %v6249 = vsel %vm3895, %v6217, %v4882
        %v6250 = vsel %vm3895, %v6218, %v4884
        %v6251 = vsel %vm3895, %v6219, %v4886
        %v6252 = vsel %vm3895, %v6220, %v4888
        %v6253 = vsel %vm3895, %v6221, %v4890
        %v6254 = vsel %vm3895, %v6222, %v4892
        %v6255 = vsel %vm3895, %v6223, %v4894
        %v6256 = vsel %vm3895, %v6224, %v4896
        %v6257 = vsel %vm3895, %v6225, %v4898
        %v6258 = vsel %vm3895, %v6226, %v4900
        %v6259 = vsel %vm3895, %v6227, %v4902
        %v6260 = vsel %vm3895, %v6228, %v4904
        %v6261 = vsel %vm3895, %v6229, %v4906
        %v6262 = vsel %vm3895, %v6230, %v4908
        %v6263 = vsel %vm3895, %v6231, %v4910
        %v6264 = vsel %vm3895, %v6232, %v4912
        %v6265 = vsel %vm3895, %v6233, %v4914
        %v6266 = vsel %vm3895, %v6234, %v4916
        %v6267 = vsel %vm3895, %v6235, %v4918
        %v6268 = vsel %vm3895, %v6236, %v4920
        %v6269 = vsel %vm3895, %v6237, %v4922
        %v6270 = vsel %vm3895, %v6238, %v4924
        %v6271 = vsel %vm3895, %v6239, %v4926
        %v6272 = vsel %vm3895, %v6240, %v4928
        %v6273 = vsel %vm3928, %v6241, %v4994
        %v6274 = vsel %vm3928, %v6242, %v4996
        %v6275 = vsel %vm3928, %v6243, %v4998
        %v6276 = vsel %vm3928, %v6244, %v5000
        %v6277 = vsel %vm3928, %v6245, %v5002
        %v6278 = vsel %vm3928, %v6246, %v5004
        %v6279 = vsel %vm3928, %v6247, %v5006
        %v6280 = vsel %vm3928, %v6248, %v5008
        %v6281 = vsel %vm3928, %v6249, %v5010
        %v6282 = vsel %vm3928, %v6250, %v5012
        %v6283 = vsel %vm3928, %v6251, %v5014
        %v6284 = vsel %vm3928, %v6252, %v5016
        %v6285 = vsel %vm3928, %v6253, %v5018
        %v6286 = vsel %vm3928, %v6254, %v5020
        %v6287 = vsel %vm3928, %v6255, %v5022
        %v6288 = vsel %vm3928, %v6256, %v5024
        %v6289 = vsel %vm3928, %v6257, %v5026
        %v6290 = vsel %vm3928, %v6258, %v5028
        %v6291 = vsel %vm3928, %v6259, %v5030
        %v6292 = vsel %vm3928, %v6260, %v5032
        %v6293 = vsel %vm3928, %v6261, %v5034
        %v6294 = vsel %vm3928, %v6262, %v5036
        %v6295 = vsel %vm3928, %v6263, %v5038
        %v6296 = vsel %vm3928, %v6264, %v5040
        %v6297 = vsel %vm3928, %v6265, %v5042
        %v6298 = vsel %vm3928, %v6266, %v5044
        %v6299 = vsel %vm3928, %v6267, %v5046
        %v6300 = vsel %vm3928, %v6268, %v5048
        %v6301 = vsel %vm3928, %v6269, %v5050
        %v6302 = vsel %vm3928, %v6270, %v5052
        %v6303 = vsel %vm3928, %v6271, %v5054
        %v6304 = vsel %vm3928, %v6272, %v5056
        %v6305 = vsel %vm3961, %v6273, %v5122
        %v6306 = vsel %vm3961, %v6274, %v5124
        %v6307 = vsel %vm3961, %v6275, %v5126
        %v6308 = vsel %vm3961, %v6276, %v5128
        %v6309 = vsel %vm3961, %v6277, %v5130
        %v6310 = vsel %vm3961, %v6278, %v5132
        %v6311 = vsel %vm3961, %v6279, %v5134
        %v6312 = vsel %vm3961, %v6280, %v5136
        %v6313 = vsel %vm3961, %v6281, %v5138
        %v6314 = vsel %vm3961, %v6282, %v5140
        %v6315 = vsel %vm3961, %v6283, %v5142
        %v6316 = vsel %vm3961, %v6284, %v5144
        %v6317 = vsel %vm3961, %v6285, %v5146
        %v6318 = vsel %vm3961, %v6286, %v5148
        %v6319 = vsel %vm3961, %v6287, %v5150
        %v6320 = vsel %vm3961, %v6288, %v5152
        %v6321 = vsel %vm3961, %v6289, %v5154
        %v6322 = vsel %vm3961, %v6290, %v5156
        %v6323 = vsel %vm3961, %v6291, %v5158
        %v6324 = vsel %vm3961, %v6292, %v5160
        %v6325 = vsel %vm3961, %v6293, %v5162
        %v6326 = vsel %vm3961, %v6294, %v5164
        %v6327 = vsel %vm3961, %v6295, %v5166
        %v6328 = vsel %vm3961, %v6296, %v5168
        %v6329 = vsel %vm3961, %v6297, %v5170
        %v6330 = vsel %vm3961, %v6298, %v5172
        %v6331 = vsel %vm3961, %v6299, %v5174
        %v6332 = vsel %vm3961, %v6300, %v5176
        %v6333 = vsel %vm3961, %v6301, %v5178
        %v6334 = vsel %vm3961, %v6302, %v5180
        %v6335 = vsel %vm3961, %v6303, %v5182
        %v6336 = vsel %vm3961, %v6304, %v5184
        %v6337 = vsel %vm3994, %v6305, %v5250
        %v6338 = vsel %vm3994, %v6306, %v5252
        %v6339 = vsel %vm3994, %v6307, %v5254
        %v6340 = vsel %vm3994, %v6308, %v5256
        %v6341 = vsel %vm3994, %v6309, %v5258
        %v6342 = vsel %vm3994, %v6310, %v5260
        %v6343 = vsel %vm3994, %v6311, %v5262
        %v6344 = vsel %vm3994, %v6312, %v5264
        %v6345 = vsel %vm3994, %v6313, %v5266
        %v6346 = vsel %vm3994, %v6314, %v5268
        %v6347 = vsel %vm3994, %v6315, %v5270
        %v6348 = vsel %vm3994, %v6316, %v5272
        %v6349 = vsel %vm3994, %v6317, %v5274
        %v6350 = vsel %vm3994, %v6318, %v5276
        %v6351 = vsel %vm3994, %v6319, %v5278
        %v6352 = vsel %vm3994, %v6320, %v5280
        %v6353 = vsel %vm3994, %v6321, %v5282
        %v6354 = vsel %vm3994, %v6322, %v5284
        %v6355 = vsel %vm3994, %v6323, %v5286
        %v6356 = vsel %vm3994, %v6324, %v5288
        %v6357 = vsel %vm3994, %v6325, %v5290
        %v6358 = vsel %vm3994, %v6326, %v5292
        %v6359 = vsel %vm3994, %v6327, %v5294
        %v6360 = vsel %vm3994, %v6328, %v5296
        %v6361 = vsel %vm3994, %v6329, %v5298
        %v6362 = vsel %vm3994, %v6330, %v5300
        %v6363 = vsel %vm3994, %v6331, %v5302
        %v6364 = vsel %vm3994, %v6332, %v5304
        %v6365 = vsel %vm3994, %v6333, %v5306
        %v6366 = vsel %vm3994, %v6334, %v5308
        %v6367 = vsel %vm3994, %v6335, %v5310
        %v6368 = vsel %vm3994, %v6336, %v5312
        %v6369 = vsel %vm4027, %v6337, %v5378
        %v6370 = vsel %vm4027, %v6338, %v5380
        %v6371 = vsel %vm4027, %v6339, %v5382
        %v6372 = vsel %vm4027, %v6340, %v5384
        %v6373 = vsel %vm4027, %v6341, %v5386
        %v6374 = vsel %vm4027, %v6342, %v5388
        %v6375 = vsel %vm4027, %v6343, %v5390
        %v6376 = vsel %vm4027, %v6344, %v5392
        %v6377 = vsel %vm4027, %v6345, %v5394
        %v6378 = vsel %vm4027, %v6346, %v5396
        %v6379 = vsel %vm4027, %v6347, %v5398
        %v6380 = vsel %vm4027, %v6348, %v5400
        %v6381 = vsel %vm4027, %v6349, %v5402
        %v6382 = vsel %vm4027, %v6350, %v5404
        %v6383 = vsel %vm4027, %v6351, %v5406
        %v6384 = vsel %vm4027, %v6352, %v5408
        %v6385 = vsel %vm4027, %v6353, %v5410
        %v6386 = vsel %vm4027, %v6354, %v5412
        %v6387 = vsel %vm4027, %v6355, %v5414
        %v6388 = vsel %vm4027, %v6356, %v5416
        %v6389 = vsel %vm4027, %v6357, %v5418
        %v6390 = vsel %vm4027, %v6358, %v5420
        %v6391 = vsel %vm4027, %v6359, %v5422
        %v6392 = vsel %vm4027, %v6360, %v5424
        %v6393 = vsel %vm4027, %v6361, %v5426
        %v6394 = vsel %vm4027, %v6362, %v5428
        %v6395 = vsel %vm4027, %v6363, %v5430
        %v6396 = vsel %vm4027, %v6364, %v5432
        %v6397 = vsel %vm4027, %v6365, %v5434
        %v6398 = vsel %vm4027, %v6366, %v5436
        %v6399 = vsel %vm4027, %v6367, %v5438
        %v6400 = vsel %vm4027, %v6368, %v5440
        %v6401 = vsel %vm4060, %v6369, %v5506
        %v6402 = vsel %vm4060, %v6370, %v5508
        %v6403 = vsel %vm4060, %v6371, %v5510
        %v6404 = vsel %vm4060, %v6372, %v5512
        %v6405 = vsel %vm4060, %v6373, %v5514
        %v6406 = vsel %vm4060, %v6374, %v5516
        %v6407 = vsel %vm4060, %v6375, %v5518
        %v6408 = vsel %vm4060, %v6376, %v5520
        %v6409 = vsel %vm4060, %v6377, %v5522
        %v6410 = vsel %vm4060, %v6378, %v5524
        %v6411 = vsel %vm4060, %v6379, %v5526
        %v6412 = vsel %vm4060, %v6380, %v5528
        %v6413 = vsel %vm4060, %v6381, %v5530
        %v6414 = vsel %vm4060, %v6382, %v5532
        %v6415 = vsel %vm4060, %v6383, %v5534
        %v6416 = vsel %vm4060, %v6384, %v5536
        %v6417 = vsel %vm4060, %v6385, %v5538
        %v6418 = vsel %vm4060, %v6386, %v5540
        %v6419 = vsel %vm4060, %v6387, %v5542
        %v6420 = vsel %vm4060, %v6388, %v5544
        %v6421 = vsel %vm4060, %v6389, %v5546
        %v6422 = vsel %vm4060, %v6390, %v5548
        %v6423 = vsel %vm4060, %v6391, %v5550
        %v6424 = vsel %vm4060, %v6392, %v5552
        %v6425 = vsel %vm4060, %v6393, %v5554
        %v6426 = vsel %vm4060, %v6394, %v5556
        %v6427 = vsel %vm4060, %v6395, %v5558
        %v6428 = vsel %vm4060, %v6396, %v5560
        %v6429 = vsel %vm4060, %v6397, %v5562
        %v6430 = vsel %vm4060, %v6398, %v5564
        %v6431 = vsel %vm4060, %v6399, %v5566
        %v6432 = vsel %vm4060, %v6400, %v5568
        %v6433 = vsel %vm4093, %v6401, %v5634
        %v6434 = vsel %vm4093, %v6402, %v5636
        %v6435 = vsel %vm4093, %v6403, %v5638
        %v6436 = vsel %vm4093, %v6404, %v5640
        %v6437 = vsel %vm4093, %v6405, %v5642
        %v6438 = vsel %vm4093, %v6406, %v5644
        %v6439 = vsel %vm4093, %v6407, %v5646
        %v6440 = vsel %vm4093, %v6408, %v5648
        %v6441 = vsel %vm4093, %v6409, %v5650
        %v6442 = vsel %vm4093, %v6410, %v5652
        %v6443 = vsel %vm4093, %v6411, %v5654
        %v6444 = vsel %vm4093, %v6412, %v5656
        %v6445 = vsel %vm4093, %v6413, %v5658
        %v6446 = vsel %vm4093, %v6414, %v5660
        %v6447 = vsel %vm4093, %v6415, %v5662
        %v6448 = vsel %vm4093, %v6416, %v5664
        %v6449 = vsel %vm4093, %v6417, %v5666
        %v6450 = vsel %vm4093, %v6418, %v5668
        %v6451 = vsel %vm4093, %v6419, %v5670
        %v6452 = vsel %vm4093, %v6420, %v5672
        %v6453 = vsel %vm4093, %v6421, %v5674
        %v6454 = vsel %vm4093, %v6422, %v5676
        %v6455 = vsel %vm4093, %v6423, %v5678
        %v6456 = vsel %vm4093, %v6424, %v5680
        %v6457 = vsel %vm4093, %v6425, %v5682
        %v6458 = vsel %vm4093, %v6426, %v5684
        %v6459 = vsel %vm4093, %v6427, %v5686
        %v6460 = vsel %vm4093, %v6428, %v5688
        %v6461 = vsel %vm4093, %v6429, %v5690
        %v6462 = vsel %vm4093, %v6430, %v5692
        %v6463 = vsel %vm4093, %v6431, %v5694
        %v6464 = vsel %vm4093, %v6432, %v5696
        %v6465 = vsel %vm4126, %v6433, %v5762
        %v6466 = vsel %vm4126, %v6434, %v5764
        %v6467 = vsel %vm4126, %v6435, %v5766
        %v6468 = vsel %vm4126, %v6436, %v5768
        %v6469 = vsel %vm4126, %v6437, %v5770
        %v6470 = vsel %vm4126, %v6438, %v5772
        %v6471 = vsel %vm4126, %v6439, %v5774
        %v6472 = vsel %vm4126, %v6440, %v5776
        %v6473 = vsel %vm4126, %v6441, %v5778
        %v6474 = vsel %vm4126, %v6442, %v5780
        %v6475 = vsel %vm4126, %v6443, %v5782
        %v6476 = vsel %vm4126, %v6444, %v5784
        %v6477 = vsel %vm4126, %v6445, %v5786
        %v6478 = vsel %vm4126, %v6446, %v5788
        %v6479 = vsel %vm4126, %v6447, %v5790
        %v6480 = vsel %vm4126, %v6448, %v5792
        %v6481 = vsel %vm4126, %v6449, %v5794
        %v6482 = vsel %vm4126, %v6450, %v5796
        %v6483 = vsel %vm4126, %v6451, %v5798
        %v6484 = vsel %vm4126, %v6452, %v5800
        %v6485 = vsel %vm4126, %v6453, %v5802
        %v6486 = vsel %vm4126, %v6454, %v5804
        %v6487 = vsel %vm4126, %v6455, %v5806
        %v6488 = vsel %vm4126, %v6456, %v5808
        %v6489 = vsel %vm4126, %v6457, %v5810
        %v6490 = vsel %vm4126, %v6458, %v5812
        %v6491 = vsel %vm4126, %v6459, %v5814
        %v6492 = vsel %vm4126, %v6460, %v5816
        %v6493 = vsel %vm4126, %v6461, %v5818
        %v6494 = vsel %vm4126, %v6462, %v5820
        %v6495 = vsel %vm4126, %v6463, %v5822
        %v6496 = vsel %vm4126, %v6464, %v5824
        %v6497 = vsel %vm4159, %v6465, %v5890
        %v6498 = vsel %vm4159, %v6466, %v5892
        %v6499 = vsel %vm4159, %v6467, %v5894
        %v6500 = vsel %vm4159, %v6468, %v5896
        %v6501 = vsel %vm4159, %v6469, %v5898
        %v6502 = vsel %vm4159, %v6470, %v5900
        %v6503 = vsel %vm4159, %v6471, %v5902
        %v6504 = vsel %vm4159, %v6472, %v5904
        %v6505 = vsel %vm4159, %v6473, %v5906
        %v6506 = vsel %vm4159, %v6474, %v5908
        %v6507 = vsel %vm4159, %v6475, %v5910
        %v6508 = vsel %vm4159, %v6476, %v5912
        %v6509 = vsel %vm4159, %v6477, %v5914
        %v6510 = vsel %vm4159, %v6478, %v5916
        %v6511 = vsel %vm4159, %v6479, %v5918
        %v6512 = vsel %vm4159, %v6480, %v5920
        %v6513 = vsel %vm4159, %v6481, %v5922
        %v6514 = vsel %vm4159, %v6482, %v5924
        %v6515 = vsel %vm4159, %v6483, %v5926
        %v6516 = vsel %vm4159, %v6484, %v5928
        %v6517 = vsel %vm4159, %v6485, %v5930
        %v6518 = vsel %vm4159, %v6486, %v5932
        %v6519 = vsel %vm4159, %v6487, %v5934
        %v6520 = vsel %vm4159, %v6488, %v5936
        %v6521 = vsel %vm4159, %v6489, %v5938
        %v6522 = vsel %vm4159, %v6490, %v5940
        %v6523 = vsel %vm4159, %v6491, %v5942
        %v6524 = vsel %vm4159, %v6492, %v5944
        %v6525 = vsel %vm4159, %v6493, %v5946
        %v6526 = vsel %vm4159, %v6494, %v5948
        %v6527 = vsel %vm4159, %v6495, %v5950
        %v6528 = vsel %vm4159, %v6496, %v5952
        %v6529 = vsel %vm4192, %v6497, %v5986
        %v6530 = vsel %vm4192, %v6498, %v5988
        %v6531 = vsel %vm4192, %v6499, %v5990
        %v6532 = vsel %vm4192, %v6500, %v5992
        %v6533 = vsel %vm4192, %v6501, %v5994
        %v6534 = vsel %vm4192, %v6502, %v5996
        %v6535 = vsel %vm4192, %v6503, %v5998
        %v6536 = vsel %vm4192, %v6504, %v6000
        %v6537 = vsel %vm4192, %v6505, %v6002
        %v6538 = vsel %vm4192, %v6506, %v6004
        %v6539 = vsel %vm4192, %v6507, %v6006
        %v6540 = vsel %vm4192, %v6508, %v6008
        %v6541 = vsel %vm4192, %v6509, %v6010
        %v6542 = vsel %vm4192, %v6510, %v6012
        %v6543 = vsel %vm4192, %v6511, %v6014
        %v6544 = vsel %vm4192, %v6512, %v6016
        %v6545 = vsel %vm4192, %v6513, %v6018
        %v6546 = vsel %vm4192, %v6514, %v6020
        %v6547 = vsel %vm4192, %v6515, %v6022
        %v6548 = vsel %vm4192, %v6516, %v6024
        %v6549 = vsel %vm4192, %v6517, %v6026
        %v6550 = vsel %vm4192, %v6518, %v6028
        %v6551 = vsel %vm4192, %v6519, %v6030
        %v6552 = vsel %vm4192, %v6520, %v6032
        %v6553 = vsel %vm4192, %v6521, %v6034
        %v6554 = vsel %vm4192, %v6522, %v6036
        %v6555 = vsel %vm4192, %v6523, %v6038
        %v6556 = vsel %vm4192, %v6524, %v6040
        %v6557 = vsel %vm4192, %v6525, %v6042
        %v6558 = vsel %vm4192, %v6526, %v6044
        %v6559 = vsel %vm4192, %v6527, %v6046
        %v6560 = vsel %vm4192, %v6528, %v6048
        %6593 = vrot.lane.b32.xlu0 %v1747, 4
        %v6594 = vpop.permute.xlu0 %6593
        %6595 = vrot.lane.b32.xlu0 %v1748, 4
        %v6596 = vpop.permute.xlu0 %6595
        %6597 = vrot.lane.b32.xlu0 %v1749, 4
        %v6598 = vpop.permute.xlu0 %6597
        %6599 = vrot.lane.b32.xlu0 %v1750, 4
        %v6600 = vpop.permute.xlu0 %6599
        %6601 = vrot.lane.b32.xlu0 %v1751, 4
        %v6602 = vpop.permute.xlu0 %6601
        %6603 = vrot.lane.b32.xlu0 %v1752, 4
        %v6604 = vpop.permute.xlu0 %6603
        %6605 = vrot.lane.b32.xlu0 %v1753, 4
        %v6606 = vpop.permute.xlu0 %6605
        %6607 = vrot.lane.b32.xlu0 %v1754, 4
        %v6608 = vpop.permute.xlu0 %6607
        %6609 = vrot.lane.b32.xlu0 %v1755, 4
        %v6610 = vpop.permute.xlu0 %6609
        %6611 = vrot.lane.b32.xlu0 %v1756, 4
        %v6612 = vpop.permute.xlu0 %6611
        %6613 = vrot.lane.b32.xlu0 %v1757, 4
        %v6614 = vpop.permute.xlu0 %6613
        %6615 = vrot.lane.b32.xlu0 %v1758, 4
        %v6616 = vpop.permute.xlu0 %6615
        %6617 = vrot.lane.b32.xlu0 %v1759, 4
        %v6618 = vpop.permute.xlu0 %6617
        %6619 = vrot.lane.b32.xlu0 %v1760, 4
        %v6620 = vpop.permute.xlu0 %6619
        %6621 = vrot.lane.b32.xlu0 %v1761, 4
        %v6622 = vpop.permute.xlu0 %6621
        %6623 = vrot.lane.b32.xlu0 %v1762, 4
        %v6624 = vpop.permute.xlu0 %6623
        %6625 = vrot.lane.b32.xlu0 %v1763, 4
        %v6626 = vpop.permute.xlu0 %6625
        %6627 = vrot.lane.b32.xlu0 %v1764, 4
        %v6628 = vpop.permute.xlu0 %6627
        %6629 = vrot.lane.b32.xlu0 %v1765, 4
        %v6630 = vpop.permute.xlu0 %6629
        %6631 = vrot.lane.b32.xlu0 %v1766, 4
        %v6632 = vpop.permute.xlu0 %6631
        %6633 = vrot.lane.b32.xlu0 %v1767, 4
        %v6634 = vpop.permute.xlu0 %6633
        %6635 = vrot.lane.b32.xlu0 %v1768, 4
        %v6636 = vpop.permute.xlu0 %6635
        %6637 = vrot.lane.b32.xlu0 %v1769, 4
        %v6638 = vpop.permute.xlu0 %6637
        %6639 = vrot.lane.b32.xlu0 %v1770, 4
        %v6640 = vpop.permute.xlu0 %6639
        %6641 = vrot.lane.b32.xlu0 %v1771, 4
        %v6642 = vpop.permute.xlu0 %6641
        %6643 = vrot.lane.b32.xlu0 %v1772, 4
        %v6644 = vpop.permute.xlu0 %6643
        %6645 = vrot.lane.b32.xlu0 %v1773, 4
        %v6646 = vpop.permute.xlu0 %6645
        %6647 = vrot.lane.b32.xlu0 %v1774, 4
        %v6648 = vpop.permute.xlu0 %6647
        %6649 = vrot.lane.b32.xlu0 %v1775, 4
        %v6650 = vpop.permute.xlu0 %6649
        %6651 = vrot.lane.b32.xlu0 %v1776, 4
        %v6652 = vpop.permute.xlu0 %6651
        %6653 = vrot.lane.b32.xlu0 %v1777, 4
        %v6654 = vpop.permute.xlu0 %6653
        %6655 = vrot.lane.b32.xlu0 %v1778, 4
        %v6656 = vpop.permute.xlu0 %6655
        %6721 = vrot.lane.b32.xlu0 %v1779, 8
        %v6722 = vpop.permute.xlu0 %6721
        %6723 = vrot.lane.b32.xlu0 %v1780, 8
        %v6724 = vpop.permute.xlu0 %6723
        %6725 = vrot.lane.b32.xlu0 %v1781, 8
        %v6726 = vpop.permute.xlu0 %6725
        %6727 = vrot.lane.b32.xlu0 %v1782, 8
        %v6728 = vpop.permute.xlu0 %6727
        %6729 = vrot.lane.b32.xlu0 %v1783, 8
        %v6730 = vpop.permute.xlu0 %6729
        %6731 = vrot.lane.b32.xlu0 %v1784, 8
        %v6732 = vpop.permute.xlu0 %6731
        %6733 = vrot.lane.b32.xlu0 %v1785, 8
        %v6734 = vpop.permute.xlu0 %6733
        %6735 = vrot.lane.b32.xlu0 %v1786, 8
        %v6736 = vpop.permute.xlu0 %6735
        %6737 = vrot.lane.b32.xlu0 %v1787, 8
        %v6738 = vpop.permute.xlu0 %6737
        %6739 = vrot.lane.b32.xlu0 %v1788, 8
        %v6740 = vpop.permute.xlu0 %6739
        %6741 = vrot.lane.b32.xlu0 %v1789, 8
        %v6742 = vpop.permute.xlu0 %6741
        %6743 = vrot.lane.b32.xlu0 %v1790, 8
        %v6744 = vpop.permute.xlu0 %6743
        %6745 = vrot.lane.b32.xlu0 %v1791, 8
        %v6746 = vpop.permute.xlu0 %6745
        %6747 = vrot.lane.b32.xlu0 %v1792, 8
        %v6748 = vpop.permute.xlu0 %6747
        %6749 = vrot.lane.b32.xlu0 %v1793, 8
        %v6750 = vpop.permute.xlu0 %6749
        %6751 = vrot.lane.b32.xlu0 %v1794, 8
        %v6752 = vpop.permute.xlu0 %6751
        %6753 = vrot.lane.b32.xlu0 %v1795, 8
        %v6754 = vpop.permute.xlu0 %6753
        %6755 = vrot.lane.b32.xlu0 %v1796, 8
        %v6756 = vpop.permute.xlu0 %6755
        %6757 = vrot.lane.b32.xlu0 %v1797, 8
        %v6758 = vpop.permute.xlu0 %6757
        %6759 = vrot.lane.b32.xlu0 %v1798, 8
        %v6760 = vpop.permute.xlu0 %6759
        %6761 = vrot.lane.b32.xlu0 %v1799, 8
        %v6762 = vpop.permute.xlu0 %6761
        %6763 = vrot.lane.b32.xlu0 %v1800, 8
        %v6764 = vpop.permute.xlu0 %6763
        %6765 = vrot.lane.b32.xlu0 %v1801, 8
        %v6766 = vpop.permute.xlu0 %6765
        %6767 = vrot.lane.b32.xlu0 %v1802, 8
        %v6768 = vpop.permute.xlu0 %6767
        %6769 = vrot.lane.b32.xlu0 %v1803, 8
        %v6770 = vpop.permute.xlu0 %6769
        %6771 = vrot.lane.b32.xlu0 %v1804, 8
        %v6772 = vpop.permute.xlu0 %6771
        %6773 = vrot.lane.b32.xlu0 %v1805, 8
        %v6774 = vpop.permute.xlu0 %6773
        %6775 = vrot.lane.b32.xlu0 %v1806, 8
        %v6776 = vpop.permute.xlu0 %6775
        %6777 = vrot.lane.b32.xlu0 %v1807, 8
        %v6778 = vpop.permute.xlu0 %6777
        %6779 = vrot.lane.b32.xlu0 %v1808, 8
        %v6780 = vpop.permute.xlu0 %6779
        %6781 = vrot.lane.b32.xlu0 %v1809, 8
        %v6782 = vpop.permute.xlu0 %6781
        %6783 = vrot.lane.b32.xlu0 %v1810, 8
        %v6784 = vpop.permute.xlu0 %6783
        %6849 = vrot.lane.b32.xlu0 %v1811, 12
        %v6850 = vpop.permute.xlu0 %6849
        %6851 = vrot.lane.b32.xlu0 %v1812, 12
        %v6852 = vpop.permute.xlu0 %6851
        %6853 = vrot.lane.b32.xlu0 %v1813, 12
        %v6854 = vpop.permute.xlu0 %6853
        %6855 = vrot.lane.b32.xlu0 %v1814, 12
        %v6856 = vpop.permute.xlu0 %6855
        %6857 = vrot.lane.b32.xlu0 %v1815, 12
        %v6858 = vpop.permute.xlu0 %6857
        %6859 = vrot.lane.b32.xlu0 %v1816, 12
        %v6860 = vpop.permute.xlu0 %6859
        %6861 = vrot.lane.b32.xlu0 %v1817, 12
        %v6862 = vpop.permute.xlu0 %6861
        %6863 = vrot.lane.b32.xlu0 %v1818, 12
        %v6864 = vpop.permute.xlu0 %6863
        %6865 = vrot.lane.b32.xlu0 %v1819, 12
        %v6866 = vpop.permute.xlu0 %6865
        %6867 = vrot.lane.b32.xlu0 %v1820, 12
        %v6868 = vpop.permute.xlu0 %6867
        %6869 = vrot.lane.b32.xlu0 %v1821, 12
        %v6870 = vpop.permute.xlu0 %6869
        %6871 = vrot.lane.b32.xlu0 %v1822, 12
        %v6872 = vpop.permute.xlu0 %6871
        %6873 = vrot.lane.b32.xlu0 %v1823, 12
        %v6874 = vpop.permute.xlu0 %6873
        %6875 = vrot.lane.b32.xlu0 %v1824, 12
        %v6876 = vpop.permute.xlu0 %6875
        %6877 = vrot.lane.b32.xlu0 %v1825, 12
        %v6878 = vpop.permute.xlu0 %6877
        %6879 = vrot.lane.b32.xlu0 %v1826, 12
        %v6880 = vpop.permute.xlu0 %6879
        %6881 = vrot.lane.b32.xlu0 %v1827, 12
        %v6882 = vpop.permute.xlu0 %6881
        %6883 = vrot.lane.b32.xlu0 %v1828, 12
        %v6884 = vpop.permute.xlu0 %6883
        %6885 = vrot.lane.b32.xlu0 %v1829, 12
        %v6886 = vpop.permute.xlu0 %6885
        %6887 = vrot.lane.b32.xlu0 %v1830, 12
        %v6888 = vpop.permute.xlu0 %6887
        %6889 = vrot.lane.b32.xlu0 %v1831, 12
        %v6890 = vpop.permute.xlu0 %6889
        %6891 = vrot.lane.b32.xlu0 %v1832, 12
        %v6892 = vpop.permute.xlu0 %6891
        %6893 = vrot.lane.b32.xlu0 %v1833, 12
        %v6894 = vpop.permute.xlu0 %6893
        %6895 = vrot.lane.b32.xlu0 %v1834, 12
        %v6896 = vpop.permute.xlu0 %6895
        %6897 = vrot.lane.b32.xlu0 %v1835, 12
        %v6898 = vpop.permute.xlu0 %6897
        %6899 = vrot.lane.b32.xlu0 %v1836, 12
        %v6900 = vpop.permute.xlu0 %6899
        %6901 = vrot.lane.b32.xlu0 %v1837, 12
        %v6902 = vpop.permute.xlu0 %6901
        %6903 = vrot.lane.b32.xlu0 %v1838, 12
        %v6904 = vpop.permute.xlu0 %6903
        %6905 = vrot.lane.b32.xlu0 %v1839, 12
        %v6906 = vpop.permute.xlu0 %6905
        %6907 = vrot.lane.b32.xlu0 %v1840, 12
        %v6908 = vpop.permute.xlu0 %6907
        %6909 = vrot.lane.b32.xlu0 %v1841, 12
        %v6910 = vpop.permute.xlu0 %6909
        %6911 = vrot.lane.b32.xlu0 %v1842, 12
        %v6912 = vpop.permute.xlu0 %6911
        %v6945 = vsel %vm170, %v1714, %v6594
        %v6946 = vsel %vm170, %v1715, %v6596
        %v6947 = vsel %vm170, %v1716, %v6598
        %v6948 = vsel %vm170, %v1717, %v6600
        %v6949 = vsel %vm170, %v1718, %v6602
        %v6950 = vsel %vm170, %v1719, %v6604
        %v6951 = vsel %vm170, %v1720, %v6606
        %v6952 = vsel %vm170, %v1721, %v6608
        %v6953 = vsel %vm170, %v1722, %v6610
        %v6954 = vsel %vm170, %v1723, %v6612
        %v6955 = vsel %vm170, %v1724, %v6614
        %v6956 = vsel %vm170, %v1725, %v6616
        %v6957 = vsel %vm170, %v1726, %v6618
        %v6958 = vsel %vm170, %v1727, %v6620
        %v6959 = vsel %vm170, %v1728, %v6622
        %v6960 = vsel %vm170, %v1729, %v6624
        %v6961 = vsel %vm170, %v1730, %v6626
        %v6962 = vsel %vm170, %v1731, %v6628
        %v6963 = vsel %vm170, %v1732, %v6630
        %v6964 = vsel %vm170, %v1733, %v6632
        %v6965 = vsel %vm170, %v1734, %v6634
        %v6966 = vsel %vm170, %v1735, %v6636
        %v6967 = vsel %vm170, %v1736, %v6638
        %v6968 = vsel %vm170, %v1737, %v6640
        %v6969 = vsel %vm170, %v1738, %v6642
        %v6970 = vsel %vm170, %v1739, %v6644
        %v6971 = vsel %vm170, %v1740, %v6646
        %v6972 = vsel %vm170, %v1741, %v6648
        %v6973 = vsel %vm170, %v1742, %v6650
        %v6974 = vsel %vm170, %v1743, %v6652
        %v6975 = vsel %vm170, %v1744, %v6654
        %v6976 = vsel %vm170, %v1745, %v6656
        %v6977 = vsel %vm3763, %v6945, %v6722
        %v6978 = vsel %vm3763, %v6946, %v6724
        %v6979 = vsel %vm3763, %v6947, %v6726
        %v6980 = vsel %vm3763, %v6948, %v6728
        %v6981 = vsel %vm3763, %v6949, %v6730
        %v6982 = vsel %vm3763, %v6950, %v6732
        %v6983 = vsel %vm3763, %v6951, %v6734
        %v6984 = vsel %vm3763, %v6952, %v6736
        %v6985 = vsel %vm3763, %v6953, %v6738
        %v6986 = vsel %vm3763, %v6954, %v6740
        %v6987 = vsel %vm3763, %v6955, %v6742
        %v6988 = vsel %vm3763, %v6956, %v6744
        %v6989 = vsel %vm3763, %v6957, %v6746
        %v6990 = vsel %vm3763, %v6958, %v6748
        %v6991 = vsel %vm3763, %v6959, %v6750
        %v6992 = vsel %vm3763, %v6960, %v6752
        %v6993 = vsel %vm3763, %v6961, %v6754
        %v6994 = vsel %vm3763, %v6962, %v6756
        %v6995 = vsel %vm3763, %v6963, %v6758
        %v6996 = vsel %vm3763, %v6964, %v6760
        %v6997 = vsel %vm3763, %v6965, %v6762
        %v6998 = vsel %vm3763, %v6966, %v6764
        %v6999 = vsel %vm3763, %v6967, %v6766
        %v7000 = vsel %vm3763, %v6968, %v6768
        %v7001 = vsel %vm3763, %v6969, %v6770
        %v7002 = vsel %vm3763, %v6970, %v6772
        %v7003 = vsel %vm3763, %v6971, %v6774
        %v7004 = vsel %vm3763, %v6972, %v6776
        %v7005 = vsel %vm3763, %v6973, %v6778
        %v7006 = vsel %vm3763, %v6974, %v6780
        %v7007 = vsel %vm3763, %v6975, %v6782
        %v7008 = vsel %vm3763, %v6976, %v6784
        %v7009 = vsel %vm3796, %v6977, %v6850
        %v7010 = vsel %vm3796, %v6978, %v6852
        %v7011 = vsel %vm3796, %v6979, %v6854
        %v7012 = vsel %vm3796, %v6980, %v6856
        %v7013 = vsel %vm3796, %v6981, %v6858
        %v7014 = vsel %vm3796, %v6982, %v6860
        %v7015 = vsel %vm3796, %v6983, %v6862
        %v7016 = vsel %vm3796, %v6984, %v6864
        %v7017 = vsel %vm3796, %v6985, %v6866
        %v7018 = vsel %vm3796, %v6986, %v6868
        %v7019 = vsel %vm3796, %v6987, %v6870
        %v7020 = vsel %vm3796, %v6988, %v6872
        %v7021 = vsel %vm3796, %v6989, %v6874
        %v7022 = vsel %vm3796, %v6990, %v6876
        %v7023 = vsel %vm3796, %v6991, %v6878
        %v7024 = vsel %vm3796, %v6992, %v6880
        %v7025 = vsel %vm3796, %v6993, %v6882
        %v7026 = vsel %vm3796, %v6994, %v6884
        %v7027 = vsel %vm3796, %v6995, %v6886
        %v7028 = vsel %vm3796, %v6996, %v6888
        %v7029 = vsel %vm3796, %v6997, %v6890
        %v7030 = vsel %vm3796, %v6998, %v6892
        %v7031 = vsel %vm3796, %v6999, %v6894
        %v7032 = vsel %vm3796, %v7000, %v6896
        %v7033 = vsel %vm3796, %v7001, %v6898
        %v7034 = vsel %vm3796, %v7002, %v6900
        %v7035 = vsel %vm3796, %v7003, %v6902
        %v7036 = vsel %vm3796, %v7004, %v6904
        %v7037 = vsel %vm3796, %v7005, %v6906
        %v7038 = vsel %vm3796, %v7006, %v6908
        %v7039 = vsel %vm3796, %v7007, %v6910
        %v7040 = vsel %vm3796, %v7008, %v6912
        %7073 = vrot.lane.b32.xlu0 %v6529, 64
        %v7074 = vpop.permute.xlu0 %7073
        %7075 = vrot.lane.b32.xlu0 %v6530, 64
        %v7076 = vpop.permute.xlu0 %7075
        %7077 = vrot.lane.b32.xlu0 %v6531, 64
        %v7078 = vpop.permute.xlu0 %7077
        %7079 = vrot.lane.b32.xlu0 %v6532, 64
        %v7080 = vpop.permute.xlu0 %7079
        %7081 = vrot.lane.b32.xlu0 %v6533, 64
        %v7082 = vpop.permute.xlu0 %7081
        %7083 = vrot.lane.b32.xlu0 %v6534, 64
        %v7084 = vpop.permute.xlu0 %7083
        %7085 = vrot.lane.b32.xlu0 %v6535, 64
        %v7086 = vpop.permute.xlu0 %7085
        %7087 = vrot.lane.b32.xlu0 %v6536, 64
        %v7088 = vpop.permute.xlu0 %7087
        %7089 = vrot.lane.b32.xlu0 %v6537, 64
        %v7090 = vpop.permute.xlu0 %7089
        %7091 = vrot.lane.b32.xlu0 %v6538, 64
        %v7092 = vpop.permute.xlu0 %7091
        %7093 = vrot.lane.b32.xlu0 %v6539, 64
        %v7094 = vpop.permute.xlu0 %7093
        %7095 = vrot.lane.b32.xlu0 %v6540, 64
        %v7096 = vpop.permute.xlu0 %7095
        %7097 = vrot.lane.b32.xlu0 %v6541, 64
        %v7098 = vpop.permute.xlu0 %7097
        %7099 = vrot.lane.b32.xlu0 %v6542, 64
        %v7100 = vpop.permute.xlu0 %7099
        %7101 = vrot.lane.b32.xlu0 %v6543, 64
        %v7102 = vpop.permute.xlu0 %7101
        %7103 = vrot.lane.b32.xlu0 %v6544, 64
        %v7104 = vpop.permute.xlu0 %7103
        %7105 = vrot.lane.b32.xlu0 %v6545, 64
        %v7106 = vpop.permute.xlu0 %7105
        %7107 = vrot.lane.b32.xlu0 %v6546, 64
        %v7108 = vpop.permute.xlu0 %7107
        %7109 = vrot.lane.b32.xlu0 %v6547, 64
        %v7110 = vpop.permute.xlu0 %7109
        %7111 = vrot.lane.b32.xlu0 %v6548, 64
        %v7112 = vpop.permute.xlu0 %7111
        %7113 = vrot.lane.b32.xlu0 %v6549, 64
        %v7114 = vpop.permute.xlu0 %7113
        %7115 = vrot.lane.b32.xlu0 %v6550, 64
        %v7116 = vpop.permute.xlu0 %7115
        %7117 = vrot.lane.b32.xlu0 %v6551, 64
        %v7118 = vpop.permute.xlu0 %7117
        %7119 = vrot.lane.b32.xlu0 %v6552, 64
        %v7120 = vpop.permute.xlu0 %7119
        %7121 = vrot.lane.b32.xlu0 %v6553, 64
        %v7122 = vpop.permute.xlu0 %7121
        %7123 = vrot.lane.b32.xlu0 %v6554, 64
        %v7124 = vpop.permute.xlu0 %7123
        %7125 = vrot.lane.b32.xlu0 %v6555, 64
        %v7126 = vpop.permute.xlu0 %7125
        %7127 = vrot.lane.b32.xlu0 %v6556, 64
        %v7128 = vpop.permute.xlu0 %7127
        %7129 = vrot.lane.b32.xlu0 %v6557, 64
        %v7130 = vpop.permute.xlu0 %7129
        %7131 = vrot.lane.b32.xlu0 %v6558, 64
        %v7132 = vpop.permute.xlu0 %7131
        %7133 = vrot.lane.b32.xlu0 %v6559, 64
        %v7134 = vpop.permute.xlu0 %7133
        %7135 = vrot.lane.b32.xlu0 %v6560, 64
        %v7136 = vpop.permute.xlu0 %7135
        %vm7169 = vcmask 523264
        %v7170 = vsel %vm7169, %v4193, %v7074
        %v7171 = vsel %vm7169, %v4194, %v7076
        %v7172 = vsel %vm7169, %v4195, %v7078
        %v7173 = vsel %vm7169, %v4196, %v7080
        %v7174 = vsel %vm7169, %v4197, %v7082
        %v7175 = vsel %vm7169, %v4198, %v7084
        %v7176 = vsel %vm7169, %v4199, %v7086
        %v7177 = vsel %vm7169, %v4200, %v7088
        %v7178 = vsel %vm7169, %v4201, %v7090
        %v7179 = vsel %vm7169, %v4202, %v7092
        %v7180 = vsel %vm7169, %v4203, %v7094
        %v7181 = vsel %vm7169, %v4204, %v7096
        %v7182 = vsel %vm7169, %v4205, %v7098
        %v7183 = vsel %vm7169, %v4206, %v7100
        %v7184 = vsel %vm7169, %v4207, %v7102
        %v7185 = vsel %vm7169, %v4208, %v7104
        %v7186 = vsel %vm7169, %v4209, %v7106
        %v7187 = vsel %vm7169, %v4210, %v7108
        %v7188 = vsel %vm7169, %v4211, %v7110
        %v7189 = vsel %vm7169, %v4212, %v7112
        %v7190 = vsel %vm7169, %v4213, %v7114
        %v7191 = vsel %vm7169, %v4214, %v7116
        %v7192 = vsel %vm7169, %v4215, %v7118
        %v7193 = vsel %vm7169, %v4216, %v7120
        %v7194 = vsel %vm7169, %v4217, %v7122
        %v7195 = vsel %vm7169, %v4218, %v7124
        %v7196 = vsel %vm7169, %v4219, %v7126
        %v7197 = vsel %vm7169, %v4220, %v7128
        %v7198 = vsel %vm7169, %v4221, %v7130
        %v7199 = vsel %vm7169, %v4222, %v7132
        %v7200 = vsel %vm7169, %v4223, %v7134
        %v7201 = vsel %vm7169, %v4224, %v7136
        %v7202 = vpack.c.bf16 %v7171, %v7170
        %v7203 = vpack.c.bf16 %v7010, %v7009
        %v7204 = vpack.c.bf16 %v7173, %v7172
        %v7205 = vpack.c.bf16 %v7012, %v7011
        %v7206 = vpack.c.bf16 %v7175, %v7174
        %v7207 = vpack.c.bf16 %v7014, %v7013
        %v7208 = vpack.c.bf16 %v7177, %v7176
        %v7209 = vpack.c.bf16 %v7016, %v7015
        %v7210 = vpack.c.bf16 %v7179, %v7178
        %v7211 = vpack.c.bf16 %v7018, %v7017
        %v7212 = vpack.c.bf16 %v7181, %v7180
        %v7213 = vpack.c.bf16 %v7020, %v7019
        %v7214 = vpack.c.bf16 %v7183, %v7182
        %v7215 = vpack.c.bf16 %v7022, %v7021
        %v7216 = vpack.c.bf16 %v7185, %v7184
        %v7217 = vpack.c.bf16 %v7024, %v7023
        %v7218 = vpack.c.bf16 %v7187, %v7186
        %v7219 = vpack.c.bf16 %v7026, %v7025
        %v7220 = vpack.c.bf16 %v7189, %v7188
        %v7221 = vpack.c.bf16 %v7028, %v7027
        %v7222 = vpack.c.bf16 %v7191, %v7190
        %v7223 = vpack.c.bf16 %v7030, %v7029
        %v7224 = vpack.c.bf16 %v7193, %v7192
        %v7225 = vpack.c.bf16 %v7032, %v7031
        %v7226 = vpack.c.bf16 %v7195, %v7194
        %v7227 = vpack.c.bf16 %v7034, %v7033
        %v7228 = vpack.c.bf16 %v7197, %v7196
        %v7229 = vpack.c.bf16 %v7036, %v7035
        %v7230 = vpack.c.bf16 %v7199, %v7198
        %v7231 = vpack.c.bf16 %v7038, %v7037
        %v7232 = vpack.c.bf16 %v7201, %v7200
        %v7233 = vpack.c.bf16 %v7040, %v7039
        %v7234 = vld [vmem:[%s1] sm:$0xf]
        %v7235 = vld [vmem:[%s1 + $0x4] sm:$0xf]
        %v7236 = vld [vmem:[%s1 + $0x8] sm:$0xf]
        %v7237 = vld [vmem:[%s1 + $0xc] sm:$0xf]
        %v7238 = vld [vmem:[%s1 + $0x10] sm:$0xf]
        %v7239 = vld [vmem:[%s1 + $0x14] sm:$0xf]
        %v7240 = vld [vmem:[%s1 + $0x18] sm:$0xf]
        %v7241 = vld [vmem:[%s1 + $0x1c] sm:$0xf]
        %v7242 = vld [vmem:[%s1 + $0x20] sm:$0xf]
        %v7243 = vld [vmem:[%s1 + $0x24] sm:$0xf]
        %v7244 = vld [vmem:[%s1 + $0x28] sm:$0xf]
        %v7245 = vld [vmem:[%s1 + $0x2c] sm:$0xf]
        %v7246 = vld [vmem:[%s1 + $0x30] sm:$0xf]
        %v7247 = vld [vmem:[%s1 + $0x34] sm:$0xf]
        %v7248 = vld [vmem:[%s1 + $0x38] sm:$0xf]
        %v7249 = vld [vmem:[%s1 + $0x3c] sm:$0xf]
        %v7250 = vld [vmem:[%s1 + $0x40] sm:$0xf]
        %v7251 = vld [vmem:[%s1 + $0x44] sm:$0xf]
        %v7252 = vld [vmem:[%s2] sm:$0x1]
        %v7254 = vperm.slane %v7252, 0
        %v7274 = vunpack.c.l.b16 %v7234
        %v7275 = vunpack.c.l.b16 %v7235
        %v7276 = vunpack.c.l.b16 %v7236
        %v7277 = vunpack.c.l.b16 %v7237
        %v7278 = vunpack.c.l.b16 %v7238
        %v7279 = vunpack.c.l.b16 %v7239
        %v7280 = vunpack.c.l.b16 %v7240
        %v7281 = vunpack.c.l.b16 %v7241
        %v7282 = vunpack.c.l.b16 %v7242
        %v7283 = vunpack.c.l.b16 %v7243
        %v7284 = vunpack.c.l.b16 %v7244
        %v7285 = vunpack.c.l.b16 %v7245
        %v7286 = vunpack.c.l.b16 %v7246
        %v7287 = vunpack.c.l.b16 %v7247
        %v7288 = vunpack.c.l.b16 %v7248
        %v7289 = vunpack.c.l.b16 %v7249
        %v7290 = vunpack.c.l.b16 %v7250
        %v7291 = vunpack.c.l.b16 %v7251
        %v7292 = vpack.c.b16 %v7275, %v7274
        %v7293 = vpack.c.b16 %v7277, %v7276
        %v7294 = vpack.c.b16 %v7279, %v7278
        %v7295 = vpack.c.b16 %v7281, %v7280
        %v7296 = vpack.c.b16 %v7283, %v7282
        %v7297 = vpack.c.b16 %v7285, %v7284
        %v7298 = vpack.c.b16 %v7287, %v7286
        %v7299 = vpack.c.b16 %v7289, %v7288
        %v7300 = vpack.c.b16 %v7291, %v7290
        %v7311 = vsel %vm3829, %v7203, 0
        %v7314 = vsel %vm3829, %v7205, 0
        %v7317 = vsel %vm3829, %v7207, 0
        %v7320 = vsel %vm3829, %v7209, 0
        %v7323 = vsel %vm3829, %v7211, 0
        %v7326 = vsel %vm3829, %v7213, 0
        %v7329 = vsel %vm3829, %v7215, 0
        %v7332 = vsel %vm3829, %v7217, 0
        %v7335 = vsel %vm3829, %v7219, 0
        %v7338 = vsel %vm3829, %v7221, 0
        %v7341 = vsel %vm3829, %v7223, 0
        %v7344 = vsel %vm3829, %v7225, 0
        %v7347 = vsel %vm3829, %v7227, 0
        %v7350 = vsel %vm3829, %v7229, 0
        %v7353 = vsel %vm3829, %v7231, 0
        %v7356 = vsel %vm3829, %v7233, 0
        %7358 = vmatpush.bf16.msra.mxu0 %v7299
        %7359 = vmatpush.bf16.msra.mxu0 %v7298
        %7360 = vmatpush.bf16.msra.mxu0 %v7297
        %7361 = vmatpush.bf16.msra.mxu0 %v7296
        %7362 = vmatpush.bf16.msra.mxu0 %v7295
        %7363 = vmatpush.bf16.msra.mxu0 %v7294
        %7364 = vmatpush.bf16.msra.mxu0 %v7293
        %7365 = vmatpush.bf16.msra.mxu0 %v7292
        %7366 = vmatmul.bf16.gmra.mxu0 %v7202
        %v7367 = vpop.f32.mrf.mxu0
        %v7368 = vadd.f32 %v7254, %v7367
        %v7369 = vpop.f32.mrf.mxu0
        %v7370 = vadd.f32 %v7254, %v7369
        %7371 = vmatmul.bf16.gmra.mxu0 %v7204
        %v7372 = vpop.f32.mrf.mxu0
        %v7373 = vadd.f32 %v7254, %v7372
        %v7374 = vpop.f32.mrf.mxu0
        %v7375 = vadd.f32 %v7254, %v7374
        %7376 = vmatmul.bf16.gmra.mxu0 %v7206
        %v7377 = vpop.f32.mrf.mxu0
        %v7378 = vadd.f32 %v7254, %v7377
        %v7379 = vpop.f32.mrf.mxu0
        %v7380 = vadd.f32 %v7254, %v7379
        %7381 = vmatmul.bf16.gmra.mxu0 %v7208
        %v7382 = vpop.f32.mrf.mxu0
        %v7383 = vadd.f32 %v7254, %v7382
        %v7384 = vpop.f32.mrf.mxu0
        %v7385 = vadd.f32 %v7254, %v7384
        %7386 = vmatmul.bf16.gmra.mxu0 %v7210
        %v7387 = vpop.f32.mrf.mxu0
        %v7388 = vadd.f32 %v7254, %v7387
        %v7389 = vpop.f32.mrf.mxu0
        %v7390 = vadd.f32 %v7254, %v7389
        %7391 = vmatmul.bf16.gmra.mxu0 %v7212
        %v7392 = vpop.f32.mrf.mxu0
        %v7393 = vadd.f32 %v7254, %v7392
        %v7394 = vpop.f32.mrf.mxu0
        %v7395 = vadd.f32 %v7254, %v7394
        %7396 = vmatmul.bf16.gmra.mxu0 %v7214
        %v7397 = vpop.f32.mrf.mxu0
        %v7398 = vadd.f32 %v7254, %v7397
        %v7399 = vpop.f32.mrf.mxu0
        %v7400 = vadd.f32 %v7254, %v7399
        %7401 = vmatmul.bf16.gmra.mxu0 %v7216
        %v7402 = vpop.f32.mrf.mxu0
        %v7403 = vadd.f32 %v7254, %v7402
        %v7404 = vpop.f32.mrf.mxu0
        %v7405 = vadd.f32 %v7254, %v7404
        %7406 = vmatmul.bf16.gmra.mxu0 %v7218
        %v7407 = vpop.f32.mrf.mxu0
        %v7408 = vadd.f32 %v7254, %v7407
        %v7409 = vpop.f32.mrf.mxu0
        %v7410 = vadd.f32 %v7254, %v7409
        %7411 = vmatmul.bf16.gmra.mxu0 %v7220
        %v7412 = vpop.f32.mrf.mxu0
        %v7413 = vadd.f32 %v7254, %v7412
        %v7414 = vpop.f32.mrf.mxu0
        %v7415 = vadd.f32 %v7254, %v7414
        %7416 = vmatmul.bf16.gmra.mxu0 %v7222
        %v7417 = vpop.f32.mrf.mxu0
        %v7418 = vadd.f32 %v7254, %v7417
        %v7419 = vpop.f32.mrf.mxu0
        %v7420 = vadd.f32 %v7254, %v7419
        %7421 = vmatmul.bf16.gmra.mxu0 %v7224
        %v7422 = vpop.f32.mrf.mxu0
        %v7423 = vadd.f32 %v7254, %v7422
        %v7424 = vpop.f32.mrf.mxu0
        %v7425 = vadd.f32 %v7254, %v7424
        %7426 = vmatmul.bf16.gmra.mxu0 %v7226
        %v7427 = vpop.f32.mrf.mxu0
        %v7428 = vadd.f32 %v7254, %v7427
        %v7429 = vpop.f32.mrf.mxu0
        %v7430 = vadd.f32 %v7254, %v7429
        %7431 = vmatmul.bf16.gmra.mxu0 %v7228
        %v7432 = vpop.f32.mrf.mxu0
        %v7433 = vadd.f32 %v7254, %v7432
        %v7434 = vpop.f32.mrf.mxu0
        %v7435 = vadd.f32 %v7254, %v7434
        %7436 = vmatmul.bf16.gmra.mxu0 %v7230
        %v7437 = vpop.f32.mrf.mxu0
        %v7438 = vadd.f32 %v7254, %v7437
        %v7439 = vpop.f32.mrf.mxu0
        %v7440 = vadd.f32 %v7254, %v7439
        %7441 = vmatmul.bf16.gmra.mxu0 %v7232
        %v7442 = vpop.f32.mrf.mxu0
        %v7443 = vadd.f32 %v7254, %v7442
        %v7444 = vpop.f32.mrf.mxu0
        %v7445 = vadd.f32 %v7254, %v7444
        %7446 = vdwg.mxu0
        %7447 = vmatpush.bf16.msra.mxu0 0
        %7448 = vmatpush.bf16.msra.mxu0 0
        %7449 = vmatpush.bf16.msra.mxu0 0
        %7450 = vmatpush.bf16.msra.mxu0 0
        %7451 = vmatpush.bf16.msra.mxu0 0
        %7452 = vmatpush.bf16.msra.mxu0 0
        %7453 = vmatpush.bf16.msra.mxu0 0
        %7454 = vmatpush.bf16.msra.mxu0 %v7300
        %7455 = vmatmul.bf16.gmra.mxu0 %v7311
        %v7456 = vpop.f32.mrf.mxu0
        %v7457 = vadd.f32 %v7368, %v7456
        %v7458 = vpop.f32.mrf.mxu0
        %v7459 = vadd.f32 %v7370, %v7458
        %7460 = vmatmul.bf16.gmra.mxu0 %v7314
        %v7461 = vpop.f32.mrf.mxu0
        %v7462 = vadd.f32 %v7373, %v7461
        %v7463 = vpop.f32.mrf.mxu0
        %v7464 = vadd.f32 %v7375, %v7463
        %7465 = vmatmul.bf16.gmra.mxu0 %v7317
        %v7466 = vpop.f32.mrf.mxu0
        %v7467 = vadd.f32 %v7378, %v7466
        %v7468 = vpop.f32.mrf.mxu0
        %v7469 = vadd.f32 %v7380, %v7468
        %7470 = vmatmul.bf16.gmra.mxu0 %v7320
        %v7471 = vpop.f32.mrf.mxu0
        %v7472 = vadd.f32 %v7383, %v7471
        %v7473 = vpop.f32.mrf.mxu0
        %v7474 = vadd.f32 %v7385, %v7473
        %7475 = vmatmul.bf16.gmra.mxu0 %v7323
        %v7476 = vpop.f32.mrf.mxu0
        %v7477 = vadd.f32 %v7388, %v7476
        %v7478 = vpop.f32.mrf.mxu0
        %v7479 = vadd.f32 %v7390, %v7478
        %7480 = vmatmul.bf16.gmra.mxu0 %v7326
        %v7481 = vpop.f32.mrf.mxu0
        %v7482 = vadd.f32 %v7393, %v7481
        %v7483 = vpop.f32.mrf.mxu0
        %v7484 = vadd.f32 %v7395, %v7483
        %7485 = vmatmul.bf16.gmra.mxu0 %v7329
        %v7486 = vpop.f32.mrf.mxu0
        %v7487 = vadd.f32 %v7398, %v7486
        %v7488 = vpop.f32.mrf.mxu0
        %v7489 = vadd.f32 %v7400, %v7488
        %7490 = vmatmul.bf16.gmra.mxu0 %v7332
        %v7491 = vpop.f32.mrf.mxu0
        %v7492 = vadd.f32 %v7403, %v7491
        %v7493 = vpop.f32.mrf.mxu0
        %v7494 = vadd.f32 %v7405, %v7493
        %7495 = vmatmul.bf16.gmra.mxu0 %v7335
        %v7496 = vpop.f32.mrf.mxu0
        %v7497 = vadd.f32 %v7408, %v7496
        %v7498 = vpop.f32.mrf.mxu0
        %v7499 = vadd.f32 %v7410, %v7498
        %7500 = vmatmul.bf16.gmra.mxu0 %v7338
        %v7501 = vpop.f32.mrf.mxu0
        %v7502 = vadd.f32 %v7413, %v7501
        %v7503 = vpop.f32.mrf.mxu0
        %v7504 = vadd.f32 %v7415, %v7503
        %7505 = vmatmul.bf16.gmra.mxu0 %v7341
        %v7506 = vpop.f32.mrf.mxu0
        %v7507 = vadd.f32 %v7418, %v7506
        %v7508 = vpop.f32.mrf.mxu0
        %v7509 = vadd.f32 %v7420, %v7508
        %7510 = vmatmul.bf16.gmra.mxu0 %v7344
        %v7511 = vpop.f32.mrf.mxu0
        %v7512 = vadd.f32 %v7423, %v7511
        %v7513 = vpop.f32.mrf.mxu0
        %v7514 = vadd.f32 %v7425, %v7513
        %7515 = vmatmul.bf16.gmra.mxu0 %v7347
        %v7516 = vpop.f32.mrf.mxu0
        %v7517 = vadd.f32 %v7428, %v7516
        %v7518 = vpop.f32.mrf.mxu0
        %v7519 = vadd.f32 %v7430, %v7518
        %7520 = vmatmul.bf16.gmra.mxu0 %v7350
        %v7521 = vpop.f32.mrf.mxu0
        %v7522 = vadd.f32 %v7433, %v7521
        %v7523 = vpop.f32.mrf.mxu0
        %v7524 = vadd.f32 %v7435, %v7523
        %7525 = vmatmul.bf16.gmra.mxu0 %v7353
        %v7526 = vpop.f32.mrf.mxu0
        %v7527 = vadd.f32 %v7438, %v7526
        %v7528 = vpop.f32.mrf.mxu0
        %v7529 = vadd.f32 %v7440, %v7528
        %7530 = vmatmul.bf16.gmra.mxu0 %v7356
        %v7531 = vpop.f32.mrf.mxu0
        %v7532 = vadd.f32 %v7443, %v7531
        %v7533 = vpop.f32.mrf.mxu0
        %v7534 = vadd.f32 %v7445, %v7533
        %7535 = vdwg.mxu0
        %7536 = vst [vmem:[%s163] sm:$0xff] %v7457
        %7537 = vst [vmem:[%s163 + $0x8] sm:$0xff] %v7459
        %7538 = vst [vmem:[%s163 + $0x10] sm:$0xff] %v7462
        %7539 = vst [vmem:[%s163 + $0x18] sm:$0xff] %v7464
        %7540 = vst [vmem:[%s163 + $0x20] sm:$0xff] %v7467
        %7541 = vst [vmem:[%s163 + $0x28] sm:$0xff] %v7469
        %7542 = vst [vmem:[%s163 + $0x30] sm:$0xff] %v7472
        %7543 = vst [vmem:[%s163 + $0x38] sm:$0xff] %v7474
        %7544 = vst [vmem:[%s163 + $0x40] sm:$0xff] %v7477
        %7545 = vst [vmem:[%s163 + $0x48] sm:$0xff] %v7479
        %7546 = vst [vmem:[%s163 + $0x50] sm:$0xff] %v7482
        %7547 = vst [vmem:[%s163 + $0x58] sm:$0xff] %v7484
        %7548 = vst [vmem:[%s163 + $0x60] sm:$0xff] %v7487
        %7549 = vst [vmem:[%s163 + $0x68] sm:$0xff] %v7489
        %7550 = vst [vmem:[%s163 + $0x70] sm:$0xff] %v7492
        %7551 = vst [vmem:[%s163 + $0x78] sm:$0xff] %v7494
        %7552 = vst [vmem:[%s163 + $0x80] sm:$0xff] %v7497
        %7553 = vst [vmem:[%s163 + $0x88] sm:$0xff] %v7499
        %7554 = vst [vmem:[%s163 + $0x90] sm:$0xff] %v7502
        %7555 = vst [vmem:[%s163 + $0x98] sm:$0xff] %v7504
        %7556 = vst [vmem:[%s163 + $0xa0] sm:$0xff] %v7507
        %7557 = vst [vmem:[%s163 + $0xa8] sm:$0xff] %v7509
        %7558 = vst [vmem:[%s163 + $0xb0] sm:$0xff] %v7512
        %7559 = vst [vmem:[%s163 + $0xb8] sm:$0xff] %v7514
        %7560 = vst [vmem:[%s163 + $0xc0] sm:$0xff] %v7517
        %7561 = vst [vmem:[%s163 + $0xc8] sm:$0xff] %v7519
        %7562 = vst [vmem:[%s163 + $0xd0] sm:$0xff] %v7522
        %7563 = vst [vmem:[%s163 + $0xd8] sm:$0xff] %v7524
        %7564 = vst [vmem:[%s163 + $0xe0] sm:$0xff] %v7527
        %7565 = vst [vmem:[%s163 + $0xe8] sm:$0xff] %v7529
        %7566 = vst [vmem:[%s163 + $0xf0] sm:$0xff] %v7532
        %7567 = vst [vmem:[%s163 + $0xf8] sm:$0xff] %v7534
        %s7568 = sand.u32 %s93, 1
        %s7569 = scalar_lea.sflag [#allocation4], %s7568
        %s7570 = sand.u32 %s93, 1
        %s7571 = smul.addr %s7570, 256
        %s7572 = scalar_lea.vmem [#allocation3], %s7571
        // Predicated region
        $region33: #{tpu_custom_call.1} parent=31 // pred_check
          %p7573 = pneg %p103
        $region34: #{tpu_custom_call.1} parent=31 // pred_check_branch
          %7575 = sbr.rel (%p7573) target = $region36
        $region35: #{tpu_custom_call.1} parent=31 // pred_region
          %7577 = vsyncadd %s7569, 0
          %s7578 = smul.addr %s17, 32
          %s7579 = smul.addr %s7578, 8
          %s7580 = scalar_lea.hbm %s3, %s7579
          %s7581 = sshll.u32 %s7572, 4
          %s7582 = int_to_ptr.vmem [resolvable:$true] %s7581
          %s7583 = sshll.u32 %s7580, 4
          %s7584 = int_to_ptr.hbm [resolvable:$true] %s7583
          %7589 = dma.vmem_to_hbm [thread:$0]  %s7582, 4096, %s7584, %s7569, 128, 128, 8
        $region36: #{tpu_custom_call.1} parent=31 // pred_fallthru
          _
      $region32: #{tpu_custom_call.1} parent=5 // pred_fallthru
        _
      %p7590 = scmp.le.s32.totalorder 2, %s12
      // Predicated region
      $region37: #{tpu_custom_call.1} parent=5 // pred_check
        %p7591 = pneg %p7590
      $region38: #{tpu_custom_call.1} parent=5 // pred_check_branch
        %7593 = sbr.rel (%p7591) target = $region40
      $region39: #{tpu_custom_call.1} parent=5 // pred_region
        %s7594 = ssub.s32 %s12, 2
        // Predicated region
        $region41: #{tpu_custom_call.1} parent=39 // pred_check
          %p7595 = pneg %p109
        $region42: #{tpu_custom_call.1} parent=39 // pred_check_branch
          %7597 = sbr.rel (%p7595) target = $region44
        $region43: #{tpu_custom_call.1} parent=39 // pred_region
          %s7598 = sand.u32 %s94, 1
          %s7599 = scalar_lea.sflag [#allocation4], %s7598
          %s7600 = sand.u32 %s94, 1
          %s7601 = smul.addr %s7600, 256
          %s7602 = scalar_lea.vmem [#allocation3], %s7601
          %7604 = dma.done %s7599, 4096
        $region44: #{tpu_custom_call.1} parent=39 // pred_fallthru
          _
      $region40: #{tpu_custom_call.1} parent=5 // pred_fallthru
        _
    $region6: #{tpu_custom_call.1} parent=1 // loop_footer
      %s16 = sadd.s32 1, %s12
    $region7: #{tpu_custom_call.1} parent=1 // loop_footer_branch
      %11 = sbr.rel target = $region3
    $region8: #{tpu_custom_call.1} parent=1 // loop_exit
      _
    %7605 = vsyncpa [#allocation4], 1
    %s7606 = scalar_lea.sflag [#allocation4], 1
    %7607 = vsyncpa %s7606, 1

</llo_original>
